<compile_context>
chip_gen: v7x
topology: tpu7x:2x2x1
jax: 0.10.0
libtpu: 0.0.40
codegen_flags: <defaults>
</compile_context>

<pallas_src>
import functools

import jax
import jax.numpy as jnp
from jax.experimental import pallas as pl
from jax.experimental.pallas import tpu as pltpu

LANE = 128
ROW_ALIGN = 16          # bf16 sublane packing (2 rows per sublane)
BN_EPS = 1e-5
OUT_DIM = 750           # fc13 / fc14 width in the PyTorch module


def _round_up(x, m):
    return (x + m - 1) // m * m


def _pad2(a, rows, cols):
    return jnp.pad(a, ((0, rows - a.shape[0]), (0, cols - a.shape[1])))


# --------------------------------------------------------------------------
# Kernel
# --------------------------------------------------------------------------
def fc_net_v2_kernel(x_ref,
                     w1, w2, w3, w4, w5, w6, w7,
                     w13x, w13e, w14, bh_ref, bo_ref,
                     out_ref, *, ng, row_splits):
    """One batch tile of the fused MLP (eval-mode, BN folded, Dropout = id).

    `row_splits` is a static tuple of (row_start, row_count) sub-tiles; the
    sub-tiles form independent dependency chains so MXU pushes of one chain
    can co-issue with the VPU epilogue (bias + ReLU + bf16 cast) of the other.
    `ng` is the (lane-padded) geno width inside the concatenated input block.
    """
    # Independent activation chains (all slices are lane/sublane aligned).
    geno = [x_ref[r0:r0 + rs, :ng] for (r0, rs) in row_splits]
    env = [x_ref[r0:r0 + rs, ng:] for (r0, rs) in row_splits]

    h = list(geno)
    for k, w_ref in enumerate((w1, w2, w3, w4, w5, w6, w7)):
        w = w_ref[...]
        b = bh_ref[k:k + 1, :]                         # (1, dh) f32
        z = [jnp.dot(hc, w, preferred_element_type=jnp.float32) + b for hc in h]
        h = [jnp.maximum(zc, 0.0).astype(w.dtype) for zc in z]

    # fc13 on concat(h, env): two matmuls instead of a lane concatenation.
    wx = w13x[...]
    we = w13e[...]
    b13 = bo_ref[0:1, :]
    z = [jnp.dot(hc, wx, preferred_element_type=jnp.float32)
         + jnp.dot(ec, we, preferred_element_type=jnp.float32) + b13
         for hc, ec in zip(h, env)]
    h = [jnp.maximum(zc, 0.0).astype(wx.dtype) for zc in z]

    # fc14
    w14v = w14[...]
    b14 = bo_ref[1:2, :]
    for (r0, rs), hc in zip(row_splits, h):
        zc = jnp.dot(hc, w14v, preferred_element_type=jnp.float32) + b14
        out_ref[r0:r0 + rs, :] = jnp.maximum(zc, 0.0).astype(out_ref.dtype)


# --------------------------------------------------------------------------
# Parameter handling (PyTorch-style init, BN folding, lane padding)
# --------------------------------------------------------------------------
def init_params(key, num_geno, num_env, reduce_dim, dtype=jnp.float32):
    """Weights pre-transposed to [in, out], plus eval-mode BN statistics."""
    layer_dims = ([(num_geno, reduce_dim)] + [(reduce_dim, reduce_dim)] * 6
                  + [(reduce_dim + num_env, OUT_DIM), (OUT_DIM, OUT_DIM)])
    params = []
    for i, (fan_in, fan_out) in enumerate(layer_dims):
        k = jax.random.fold_in(key, i)
        kw, kb, kg, kbt, km, kv = jax.random.split(k, 6)
        bound = 1.0 / (fan_in ** 0.5)
        params.append(dict(
            w=jax.random.uniform(kw, (fan_in, fan_out), dtype, -bound, bound),
            b=jax.random.uniform(kb, (fan_out,), dtype, -bound, bound),
            gamma=jax.random.uniform(kg, (fan_out,), dtype, 0.8, 1.2),
            beta=0.1 * jax.random.normal(kbt, (fan_out,), dtype),
            mean=0.1 * jax.random.normal(km, (fan_out,), dtype),
            var=jax.random.uniform(kv, (fan_out,), dtype, 0.5, 1.5),
        ))
    return params


def _fold_bn(p):
    """Fold eval-mode BatchNorm into the preceding Linear (W:[in,out], b:[out])."""
    scale = p['gamma'] / jnp.sqrt(p['var'] + BN_EPS)
    w = p['w'] * scale[None, :]
    b = (p['b'] - p['mean']) * scale + p['beta']
    return w, b


def prepare_params(params, num_geno, num_env, compute_dtype=jnp.bfloat16):
    """One-time preprocessing — call OUTSIDE the jitted per-step forward.

    Folds eval-mode BN into the Linears, zero-pads all dims to lane multiples,
    casts weights to bf16, and packs biases into two stacked f32 slabs.
    Returns a flat tuple: (w1..w7, w13_geno, w13_env, w14, bias_hidden, bias_out).
    """
    reduce_dim = params[0]['w'].shape[1]
    dh = _round_up(reduce_dim, LANE)
    dout = _round_up(OUT_DIM, LANE)
    ng_pad = _round_up(num_geno, LANE)
    ne_pad = _round_up(num_env, LANE)

    ws, bh_rows = [], []
    for i in range(7):                                    # fc1 .. fc7
        w, b = _fold_bn(params[i])
        rows = ng_pad if i == 0 else dh
        ws.append(_pad2(w, rows, dh).astype(compute_dtype))
        bh_rows.append(jnp.pad(b, (0, dh - b.shape[0])))
    bh = jnp.pad(jnp.stack(bh_rows), ((0, 1), (0, 0))).astype(jnp.float32)  # (8, dh)

    # fc13: split [reduce_dim + num_env, 750] into geno / env halves.
    w13, b13 = _fold_bn(params[7])
    w13x = _pad2(w13[:reduce_dim, :], dh, dout).astype(compute_dtype)
    w13e = _pad2(w13[reduce_dim:, :], ne_pad, dout).astype(compute_dtype)

    # fc14
    w14, b14 = _fold_bn(params[8])
    w14p = _pad2(w14, dout, dout).astype(compute_dtype)
    bo = jnp.pad(jnp.stack([jnp.pad(b13, (0, dout - OUT_DIM)),
                            jnp.pad(b14, (0, dout - OUT_DIM))]),
                 ((0, 6), (0, 0))).astype(jnp.float32)                      # (8, dout)

    return tuple(ws) + (w13x, w13e, w14p, bh, bo)


# --------------------------------------------------------------------------
# Forward wrapper
# --------------------------------------------------------------------------
def fc_net_v2_forward(x, flat, *, num_geno, batch_tile=256,
                      out_dtype=jnp.float32):
    """x: [B, num_geno + num_env] f32, flat: prepare_params output.
    Returns [B, 750] in out_dtype (f32 by default)."""
    (w1, w2, w3, w4, w5, w6, w7, w13x, w13e, w14, bh, bo) = flat
    B = x.shape[0]
    num_env = x.shape[1] - num_geno
    ng_pad, dh = w1.shape
    ne_pad = w13e.shape[0]
    dout = w14.shape[1]

    # ---- batch tiling: tb multiple of 16; >= 2 grid steps when possible so
    # the "parallel" batch axis can split across v7x's two TensorCores.
    b16 = _round_up(B, ROW_ALIGN)
    tb = min(batch_tile, b16)
    if b16 // tb < 2 and tb >= 32:
        tb = _round_up(pl.cdiv(b16, 2), ROW_ALIGN)
    b_pad = _round_up(B, tb)

    # In-kernel sub-tile interleave (two independent half-tile chains).
    if tb >= 32:
        half = tb // 2
        row_splits = ((0, half), (half, tb - half))
    else:
        row_splits = ((0, tb),)

    # ---- single lane-padded bf16 activation input [b_pad, ng_pad + ne_pad].
    xg = x[:, :num_geno].astype(jnp.bfloat16)
    env = x[:, num_geno:].astype(jnp.bfloat16)
    xin = jnp.concatenate([
        jnp.pad(xg, ((0, b_pad - B), (0, ng_pad - num_geno))),
        jnp.pad(env, ((0, b_pad - B), (0, ne_pad - num_env))),
    ], axis=1)

    grid = (b_pad // tb,)
    in_specs = [pl.BlockSpec((tb, ng_pad + ne_pad), lambda i: (i, 0))]
    # Weights/bias slabs: full shape, constant index_map, single-buffered ->
    # fetched once and VMEM-resident across all grid steps.
    in_specs += [
        pl.BlockSpec(a.shape, lambda i: (0, 0), pipeline_mode=pl.Buffered(1))
        for a in flat
    ]
    out_spec = pl.BlockSpec((tb, dout), lambda i: (i, 0))

    # ---- VMEM budget: single-buffered resident params + double-buffered
    # activation tiles + live intermediates + headroom, capped at ~75% of the
    # generation's physical VMEM (64 MiB v7x, 128 MiB v5e/v6e).
    param_bytes = sum(a.size * a.dtype.itemsize for a in flat)
    act_bytes = 2 * tb * (ng_pad + ne_pad) * 2 + 2 * tb * dout * 4
    live_bytes = 6 * tb * max(dh, dout) * 4
    try:
        vmem_cap = int(pltpu.get_tpu_info().vmem_capacity_bytes)
    except Exception:
        vmem_cap = 64 * 2 ** 20
    vmem_cap = int(vmem_cap * 0.75)
    vmem_limit = int(min(vmem_cap,
                         param_bytes + act_bytes + live_bytes + (8 << 20)))

    flops = 2 * b_pad * (ng_pad * dh + 6 * dh * dh + dh * dout
                         + ne_pad * dout + dout * dout)
    bytes_accessed = int(param_bytes
                         + b_pad * (ng_pad + ne_pad) * 2
                         + b_pad * dout * jnp.dtype(out_dtype).itemsize)

    out = pl.pallas_call(
        functools.partial(fc_net_v2_kernel, ng=ng_pad, row_splits=row_splits),
        grid=grid,
        in_specs=in_specs,
        out_specs=out_spec,
        out_shape=jax.ShapeDtypeStruct((b_pad, dout), out_dtype),
        compiler_params=pltpu.CompilerParams(
            dimension_semantics=("parallel",),
            vmem_limit_bytes=vmem_limit,
        ),
        cost_estimate=pl.CostEstimate(
            flops=flops, transcendentals=0, bytes_accessed=bytes_accessed),
    )(xin, *flat)

    return out[:B, :OUT_DIM]


# --------------------------------------------------------------------------
# References for correctness checking
# --------------------------------------------------------------------------
def reference_forward(x, params, num_geno):
    """Pure-JAX f32 eval-mode reference matching the PyTorch forward."""
    env = x[:, num_geno:]
    h = x[:, :num_geno]

    def bn(z, p):
        return (z - p['mean']) / jnp.sqrt(p['var'] + BN_EPS) * p['gamma'] + p['beta']

    for i in range(7):
        p = params[i]
        h = jnp.maximum(bn(h @ p['w'] + p['b'], p), 0.0)   # dropout = identity (eval)
    h = jnp.concatenate([h, env], axis=1)
    for i in (7, 8):
        p = params[i]
        h = jnp.maximum(bn(h @ p['w'] + p['b'], p), 0.0)
    return h


def folded_reference(x, flat, num_geno):
    """Plain JAX with the SAME folded/padded bf16 weights as the kernel."""
    (w1, w2, w3, w4, w5, w6, w7, w13x, w13e, w14, bh, bo) = flat
    num_env = x.shape[1] - num_geno
    ng_pad = w1.shape[0]
    ne_pad = w13e.shape[0]

    h = jnp.pad(x[:, :num_geno].astype(jnp.bfloat16),
                ((0, 0), (0, ng_pad - num_geno)))
    env = jnp.pad(x[:, num_geno:].astype(jnp.bfloat16),
                  ((0, 0), (0, ne_pad - num_env)))
    for k, w in enumerate((w1, w2, w3, w4, w5, w6, w7)):
        z = jnp.dot(h, w, preferred_element_type=jnp.float32) + bh[k:k + 1, :]
        h = jnp.maximum(z, 0.0).astype(jnp.bfloat16)
    z = (jnp.dot(h, w13x, preferred_element_type=jnp.float32)
         + jnp.dot(env, w13e, preferred_element_type=jnp.float32) + bo[0:1, :])
    h = jnp.maximum(z, 0.0).astype(jnp.bfloat16)
    z = jnp.dot(h, w14, preferred_element_type=jnp.float32) + bo[1:2, :]
    return jnp.maximum(z, 0.0)[:, :OUT_DIM]


# --------------------------------------------------------------------------
if __name__ == "__main__":
    B, NUM_GENO, NUM_ENV, REDUCE_DIM = 256, 32, 8, 256

    key = jax.random.PRNGKey(0)
    kx, kp = jax.random.split(key)
    x = jax.random.normal(kx, (B, NUM_GENO + NUM_ENV), dtype=jnp.float32)
    params = init_params(kp, NUM_GENO, NUM_ENV, REDUCE_DIM)

    # One-time weight preparation (BN fold, lane padding, bf16 cast, bias
    # packing) — hoisted out of the per-call forward path.
    flat = jax.block_until_ready(prepare_params(params, NUM_GENO, NUM_ENV))

    fwd = jax.jit(functools.partial(fc_net_v2_forward, num_geno=NUM_GENO))
    out = jax.block_until_ready(fwd(x, flat))
    assert out.shape == (B, OUT_DIM)

    # Apples-to-apples: plain JAX with the same folded/packed bf16 weights.
    ref_bf16 = folded_reference(x, flat, NUM_GENO)
    assert jnp.allclose(out, ref_bf16, atol=2e-2, rtol=2e-2), \
        float(jnp.max(jnp.abs(out - ref_bf16)))

    # Loose check vs. the f32 eval-mode semantics of the PyTorch module
    # (difference is only bf16 weight/activation quantization).
    ref_f32 = reference_forward(x, params, NUM_GENO)
    assert jnp.allclose(out, ref_f32, atol=1e-1, rtol=1e-1), \
        float(jnp.max(jnp.abs(out - ref_f32)))

    print("KERNEL_OK")
</pallas_src>

<mosaic_0001>
module attributes {stable_mosaic.version = 11 : i64} {
  func.func @fc_net_v2_kernel(%arg0: i32, %arg1: memref<128x256xbf16, #tpu.memory_space<vmem>>, %arg2: memref<128x256xbf16, #tpu.memory_space<vmem>>, %arg3: memref<256x256xbf16, #tpu.memory_space<vmem>>, %arg4: memref<256x256xbf16, #tpu.memory_space<vmem>>, %arg5: memref<256x256xbf16, #tpu.memory_space<vmem>>, %arg6: memref<256x256xbf16, #tpu.memory_space<vmem>>, %arg7: memref<256x256xbf16, #tpu.memory_space<vmem>>, %arg8: memref<256x256xbf16, #tpu.memory_space<vmem>>, %arg9: memref<256x768xbf16, #tpu.memory_space<vmem>>, %arg10: memref<128x768xbf16, #tpu.memory_space<vmem>>, %arg11: memref<768x768xbf16, #tpu.memory_space<vmem>>, %arg12: memref<8x256xf32, #tpu.memory_space<vmem>>, %arg13: memref<8x768xf32, #tpu.memory_space<vmem>>, %arg14: memref<128x768xf32, #tpu.memory_space<vmem>>) attributes {dimension_semantics = [#tpu.dimension_semantics<parallel>], iteration_bounds = array<i64: 2>, scalar_prefetch = 0 : i64, scratch_operands = 0 : i64, tpu.core_type = #tpu.core_type<tc>, window_params = [{transform_indices = @transform_0, window_bounds = array<i64: 128, 256>}, {pipeline_mode = #tpu.pipeline_mode<synchronous>, transform_indices = @transform_1, window_bounds = array<i64: 128, 256>}, {pipeline_mode = #tpu.pipeline_mode<synchronous>, transform_indices = @transform_2, window_bounds = array<i64: 256, 256>}, {pipeline_mode = #tpu.pipeline_mode<synchronous>, transform_indices = @transform_3, window_bounds = array<i64: 256, 256>}, {pipeline_mode = #tpu.pipeline_mode<synchronous>, transform_indices = @transform_4, window_bounds = array<i64: 256, 256>}, {pipeline_mode = #tpu.pipeline_mode<synchronous>, transform_indices = @transform_5, window_bounds = array<i64: 256, 256>}, {pipeline_mode = #tpu.pipeline_mode<synchronous>, transform_indices = @transform_6, window_bounds = array<i64: 256, 256>}, {pipeline_mode = #tpu.pipeline_mode<synchronous>, transform_indices = @transform_7, window_bounds = array<i64: 256, 256>}, {pipeline_mode = #tpu.pipeline_mode<synchronous>, transform_indices = @transform_8, window_bounds = array<i64: 256, 768>}, {pipeline_mode = #tpu.pipeline_mode<synchronous>, transform_indices = @transform_9, window_bounds = array<i64: 128, 768>}, {pipeline_mode = #tpu.pipeline_mode<synchronous>, transform_indices = @transform_10, window_bounds = array<i64: 768, 768>}, {pipeline_mode = #tpu.pipeline_mode<synchronous>, transform_indices = @transform_11, window_bounds = array<i64: 8, 256>}, {pipeline_mode = #tpu.pipeline_mode<synchronous>, transform_indices = @transform_12, window_bounds = array<i64: 8, 768>}, {transform_indices = @transform_13, window_bounds = array<i64: 128, 768>}]} {
    %c0 = arith.constant 0 : index
    %c0_0 = arith.constant 0 : index
    %0 = vector.load %arg1[%c0, %c0_0] : memref<128x256xbf16, #tpu.memory_space<vmem>>, vector<64x128xbf16>
    %c64 = arith.constant 64 : index
    %c0_1 = arith.constant 0 : index
    %1 = vector.load %arg1[%c64, %c0_1] : memref<128x256xbf16, #tpu.memory_space<vmem>>, vector<64x128xbf16>
    %c0_2 = arith.constant 0 : index
    %c128 = arith.constant 128 : index
    %2 = vector.load %arg1[%c0_2, %c128] : memref<128x256xbf16, #tpu.memory_space<vmem>>, vector<64x128xbf16>
    %c64_3 = arith.constant 64 : index
    %c128_4 = arith.constant 128 : index
    %3 = vector.load %arg1[%c64_3, %c128_4] : memref<128x256xbf16, #tpu.memory_space<vmem>>, vector<64x128xbf16>
    %c0_5 = arith.constant 0 : index
    %c0_6 = arith.constant 0 : index
    %4 = vector.load %arg2[%c0_5, %c0_6] : memref<128x256xbf16, #tpu.memory_space<vmem>>, vector<128x256xbf16>
    %c0_7 = arith.constant 0 : index
    %c0_8 = arith.constant 0 : index
    %5 = vector.load %arg12[%c0_7, %c0_8] : memref<8x256xf32, #tpu.memory_space<vmem>>, vector<1x256xf32>
    %cst = arith.constant dense<0.000000e+00> : vector<64x256xf32>
    %6 = tpu.matmul %0, %4, %cst {dimension_numbers = #tpu.dot_dimension_numbers<[1], [0], [0], [1], [0, 0, 1, 1], [], []>} : vector<64x128xbf16>, vector<128x256xbf16>, vector<64x256xf32> -> vector<64x256xf32>
    %7 = vector.broadcast %5 : vector<1x256xf32> to vector<64x256xf32>
    %8 = arith.addf %6, %7 : vector<64x256xf32>
    %cst_9 = arith.constant dense<0.000000e+00> : vector<64x256xf32>
    %9 = tpu.matmul %1, %4, %cst_9 {dimension_numbers = #tpu.dot_dimension_numbers<[1], [0], [0], [1], [0, 0, 1, 1], [], []>} : vector<64x128xbf16>, vector<128x256xbf16>, vector<64x256xf32> -> vector<64x256xf32>
    %10 = vector.broadcast %5 : vector<1x256xf32> to vector<64x256xf32>
    %11 = arith.addf %9, %10 : vector<64x256xf32>
    %cst_10 = arith.constant 0.000000e+00 : f32
    %12 = vector.broadcast %cst_10 : f32 to vector<64x256xf32>
    %13 = arith.maximumf %8, %12 : vector<64x256xf32>
    %14 = arith.truncf %13 : vector<64x256xf32> to vector<64x256xbf16>
    %cst_11 = arith.constant 0.000000e+00 : f32
    %15 = vector.broadcast %cst_11 : f32 to vector<64x256xf32>
    %16 = arith.maximumf %11, %15 : vector<64x256xf32>
    %17 = arith.truncf %16 : vector<64x256xf32> to vector<64x256xbf16>
    %c0_12 = arith.constant 0 : index
    %c0_13 = arith.constant 0 : index
    %18 = vector.load %arg3[%c0_12, %c0_13] : memref<256x256xbf16, #tpu.memory_space<vmem>>, vector<256x256xbf16>
    %c1 = arith.constant 1 : index
    %c0_14 = arith.constant 0 : index
    %19 = vector.load %arg12[%c1, %c0_14] : memref<8x256xf32, #tpu.memory_space<vmem>>, vector<1x256xf32>
    %cst_15 = arith.constant dense<0.000000e+00> : vector<64x256xf32>
    %20 = tpu.matmul %14, %18, %cst_15 {dimension_numbers = #tpu.dot_dimension_numbers<[1], [0], [0], [1], [0, 0, 1, 1], [], []>} : vector<64x256xbf16>, vector<256x256xbf16>, vector<64x256xf32> -> vector<64x256xf32>
    %21 = vector.broadcast %19 : vector<1x256xf32> to vector<64x256xf32>
    %22 = arith.addf %20, %21 : vector<64x256xf32>
    %cst_16 = arith.constant dense<0.000000e+00> : vector<64x256xf32>
    %23 = tpu.matmul %17, %18, %cst_16 {dimension_numbers = #tpu.dot_dimension_numbers<[1], [0], [0], [1], [0, 0, 1, 1], [], []>} : vector<64x256xbf16>, vector<256x256xbf16>, vector<64x256xf32> -> vector<64x256xf32>
    %24 = vector.broadcast %19 : vector<1x256xf32> to vector<64x256xf32>
    %25 = arith.addf %23, %24 : vector<64x256xf32>
    %cst_17 = arith.constant 0.000000e+00 : f32
    %26 = vector.broadcast %cst_17 : f32 to vector<64x256xf32>
    %27 = arith.maximumf %22, %26 : vector<64x256xf32>
    %28 = arith.truncf %27 : vector<64x256xf32> to vector<64x256xbf16>
    %cst_18 = arith.constant 0.000000e+00 : f32
    %29 = vector.broadcast %cst_18 : f32 to vector<64x256xf32>
    %30 = arith.maximumf %25, %29 : vector<64x256xf32>
    %31 = arith.truncf %30 : vector<64x256xf32> to vector<64x256xbf16>
    %c0_19 = arith.constant 0 : index
    %c0_20 = arith.constant 0 : index
    %32 = vector.load %arg4[%c0_19, %c0_20] : memref<256x256xbf16, #tpu.memory_space<vmem>>, vector<256x256xbf16>
    %c2 = arith.constant 2 : index
    %c0_21 = arith.constant 0 : index
    %33 = vector.load %arg12[%c2, %c0_21] : memref<8x256xf32, #tpu.memory_space<vmem>>, vector<1x256xf32>
    %cst_22 = arith.constant dense<0.000000e+00> : vector<64x256xf32>
    %34 = tpu.matmul %28, %32, %cst_22 {dimension_numbers = #tpu.dot_dimension_numbers<[1], [0], [0], [1], [0, 0, 1, 1], [], []>} : vector<64x256xbf16>, vector<256x256xbf16>, vector<64x256xf32> -> vector<64x256xf32>
    %35 = vector.broadcast %33 : vector<1x256xf32> to vector<64x256xf32>
    %36 = arith.addf %34, %35 : vector<64x256xf32>
    %cst_23 = arith.constant dense<0.000000e+00> : vector<64x256xf32>
    %37 = tpu.matmul %31, %32, %cst_23 {dimension_numbers = #tpu.dot_dimension_numbers<[1], [0], [0], [1], [0, 0, 1, 1], [], []>} : vector<64x256xbf16>, vector<256x256xbf16>, vector<64x256xf32> -> vector<64x256xf32>
    %38 = vector.broadcast %33 : vector<1x256xf32> to vector<64x256xf32>
    %39 = arith.addf %37, %38 : vector<64x256xf32>
    %cst_24 = arith.constant 0.000000e+00 : f32
    %40 = vector.broadcast %cst_24 : f32 to vector<64x256xf32>
    %41 = arith.maximumf %36, %40 : vector<64x256xf32>
    %42 = arith.truncf %41 : vector<64x256xf32> to vector<64x256xbf16>
    %cst_25 = arith.constant 0.000000e+00 : f32
    %43 = vector.broadcast %cst_25 : f32 to vector<64x256xf32>
    %44 = arith.maximumf %39, %43 : vector<64x256xf32>
    %45 = arith.truncf %44 : vector<64x256xf32> to vector<64x256xbf16>
    %c0_26 = arith.constant 0 : index
    %c0_27 = arith.constant 0 : index
    %46 = vector.load %arg5[%c0_26, %c0_27] : memref<256x256xbf16, #tpu.memory_space<vmem>>, vector<256x256xbf16>
    %c3 = arith.constant 3 : index
    %c0_28 = arith.constant 0 : index
    %47 = vector.load %arg12[%c3, %c0_28] : memref<8x256xf32, #tpu.memory_space<vmem>>, vector<1x256xf32>
    %cst_29 = arith.constant dense<0.000000e+00> : vector<64x256xf32>
    %48 = tpu.matmul %42, %46, %cst_29 {dimension_numbers = #tpu.dot_dimension_numbers<[1], [0], [0], [1], [0, 0, 1, 1], [], []>} : vector<64x256xbf16>, vector<256x256xbf16>, vector<64x256xf32> -> vector<64x256xf32>
    %49 = vector.broadcast %47 : vector<1x256xf32> to vector<64x256xf32>
    %50 = arith.addf %48, %49 : vector<64x256xf32>
    %cst_30 = arith.constant dense<0.000000e+00> : vector<64x256xf32>
    %51 = tpu.matmul %45, %46, %cst_30 {dimension_numbers = #tpu.dot_dimension_numbers<[1], [0], [0], [1], [0, 0, 1, 1], [], []>} : vector<64x256xbf16>, vector<256x256xbf16>, vector<64x256xf32> -> vector<64x256xf32>
    %52 = vector.broadcast %47 : vector<1x256xf32> to vector<64x256xf32>
    %53 = arith.addf %51, %52 : vector<64x256xf32>
    %cst_31 = arith.constant 0.000000e+00 : f32
    %54 = vector.broadcast %cst_31 : f32 to vector<64x256xf32>
    %55 = arith.maximumf %50, %54 : vector<64x256xf32>
    %56 = arith.truncf %55 : vector<64x256xf32> to vector<64x256xbf16>
    %cst_32 = arith.constant 0.000000e+00 : f32
    %57 = vector.broadcast %cst_32 : f32 to vector<64x256xf32>
    %58 = arith.maximumf %53, %57 : vector<64x256xf32>
    %59 = arith.truncf %58 : vector<64x256xf32> to vector<64x256xbf16>
    %c0_33 = arith.constant 0 : index
    %c0_34 = arith.constant 0 : index
    %60 = vector.load %arg6[%c0_33, %c0_34] : memref<256x256xbf16, #tpu.memory_space<vmem>>, vector<256x256xbf16>
    %c4 = arith.constant 4 : index
    %c0_35 = arith.constant 0 : index
    %61 = vector.load %arg12[%c4, %c0_35] : memref<8x256xf32, #tpu.memory_space<vmem>>, vector<1x256xf32>
    %cst_36 = arith.constant dense<0.000000e+00> : vector<64x256xf32>
    %62 = tpu.matmul %56, %60, %cst_36 {dimension_numbers = #tpu.dot_dimension_numbers<[1], [0], [0], [1], [0, 0, 1, 1], [], []>} : vector<64x256xbf16>, vector<256x256xbf16>, vector<64x256xf32> -> vector<64x256xf32>
    %63 = vector.broadcast %61 : vector<1x256xf32> to vector<64x256xf32>
    %64 = arith.addf %62, %63 : vector<64x256xf32>
    %cst_37 = arith.constant dense<0.000000e+00> : vector<64x256xf32>
    %65 = tpu.matmul %59, %60, %cst_37 {dimension_numbers = #tpu.dot_dimension_numbers<[1], [0], [0], [1], [0, 0, 1, 1], [], []>} : vector<64x256xbf16>, vector<256x256xbf16>, vector<64x256xf32> -> vector<64x256xf32>
    %66 = vector.broadcast %61 : vector<1x256xf32> to vector<64x256xf32>
    %67 = arith.addf %65, %66 : vector<64x256xf32>
    %cst_38 = arith.constant 0.000000e+00 : f32
    %68 = vector.broadcast %cst_38 : f32 to vector<64x256xf32>
    %69 = arith.maximumf %64, %68 : vector<64x256xf32>
    %70 = arith.truncf %69 : vector<64x256xf32> to vector<64x256xbf16>
    %cst_39 = arith.constant 0.000000e+00 : f32
    %71 = vector.broadcast %cst_39 : f32 to vector<64x256xf32>
    %72 = arith.maximumf %67, %71 : vector<64x256xf32>
    %73 = arith.truncf %72 : vector<64x256xf32> to vector<64x256xbf16>
    %c0_40 = arith.constant 0 : index
    %c0_41 = arith.constant 0 : index
    %74 = vector.load %arg7[%c0_40, %c0_41] : memref<256x256xbf16, #tpu.memory_space<vmem>>, vector<256x256xbf16>
    %c5 = arith.constant 5 : index
    %c0_42 = arith.constant 0 : index
    %75 = vector.load %arg12[%c5, %c0_42] : memref<8x256xf32, #tpu.memory_space<vmem>>, vector<1x256xf32>
    %cst_43 = arith.constant dense<0.000000e+00> : vector<64x256xf32>
    %76 = tpu.matmul %70, %74, %cst_43 {dimension_numbers = #tpu.dot_dimension_numbers<[1], [0], [0], [1], [0, 0, 1, 1], [], []>} : vector<64x256xbf16>, vector<256x256xbf16>, vector<64x256xf32> -> vector<64x256xf32>
    %77 = vector.broadcast %75 : vector<1x256xf32> to vector<64x256xf32>
    %78 = arith.addf %76, %77 : vector<64x256xf32>
    %cst_44 = arith.constant dense<0.000000e+00> : vector<64x256xf32>
    %79 = tpu.matmul %73, %74, %cst_44 {dimension_numbers = #tpu.dot_dimension_numbers<[1], [0], [0], [1], [0, 0, 1, 1], [], []>} : vector<64x256xbf16>, vector<256x256xbf16>, vector<64x256xf32> -> vector<64x256xf32>
    %80 = vector.broadcast %75 : vector<1x256xf32> to vector<64x256xf32>
    %81 = arith.addf %79, %80 : vector<64x256xf32>
    %cst_45 = arith.constant 0.000000e+00 : f32
    %82 = vector.broadcast %cst_45 : f32 to vector<64x256xf32>
    %83 = arith.maximumf %78, %82 : vector<64x256xf32>
    %84 = arith.truncf %83 : vector<64x256xf32> to vector<64x256xbf16>
    %cst_46 = arith.constant 0.000000e+00 : f32
    %85 = vector.broadcast %cst_46 : f32 to vector<64x256xf32>
    %86 = arith.maximumf %81, %85 : vector<64x256xf32>
    %87 = arith.truncf %86 : vector<64x256xf32> to vector<64x256xbf16>
    %c0_47 = arith.constant 0 : index
    %c0_48 = arith.constant 0 : index
    %88 = vector.load %arg8[%c0_47, %c0_48] : memref<256x256xbf16, #tpu.memory_space<vmem>>, vector<256x256xbf16>
    %c6 = arith.constant 6 : index
    %c0_49 = arith.constant 0 : index
    %89 = vector.load %arg12[%c6, %c0_49] : memref<8x256xf32, #tpu.memory_space<vmem>>, vector<1x256xf32>
    %cst_50 = arith.constant dense<0.000000e+00> : vector<64x256xf32>
    %90 = tpu.matmul %84, %88, %cst_50 {dimension_numbers = #tpu.dot_dimension_numbers<[1], [0], [0], [1], [0, 0, 1, 1], [], []>} : vector<64x256xbf16>, vector<256x256xbf16>, vector<64x256xf32> -> vector<64x256xf32>
    %91 = vector.broadcast %89 : vector<1x256xf32> to vector<64x256xf32>
    %92 = arith.addf %90, %91 : vector<64x256xf32>
    %cst_51 = arith.constant dense<0.000000e+00> : vector<64x256xf32>
    %93 = tpu.matmul %87, %88, %cst_51 {dimension_numbers = #tpu.dot_dimension_numbers<[1], [0], [0], [1], [0, 0, 1, 1], [], []>} : vector<64x256xbf16>, vector<256x256xbf16>, vector<64x256xf32> -> vector<64x256xf32>
    %94 = vector.broadcast %89 : vector<1x256xf32> to vector<64x256xf32>
    %95 = arith.addf %93, %94 : vector<64x256xf32>
    %cst_52 = arith.constant 0.000000e+00 : f32
    %96 = vector.broadcast %cst_52 : f32 to vector<64x256xf32>
    %97 = arith.maximumf %92, %96 : vector<64x256xf32>
    %98 = arith.truncf %97 : vector<64x256xf32> to vector<64x256xbf16>
    %cst_53 = arith.constant 0.000000e+00 : f32
    %99 = vector.broadcast %cst_53 : f32 to vector<64x256xf32>
    %100 = arith.maximumf %95, %99 : vector<64x256xf32>
    %101 = arith.truncf %100 : vector<64x256xf32> to vector<64x256xbf16>
    %c0_54 = arith.constant 0 : index
    %c0_55 = arith.constant 0 : index
    %102 = vector.load %arg9[%c0_54, %c0_55] : memref<256x768xbf16, #tpu.memory_space<vmem>>, vector<256x768xbf16>
    %c0_56 = arith.constant 0 : index
    %c0_57 = arith.constant 0 : index
    %103 = vector.load %arg10[%c0_56, %c0_57] : memref<128x768xbf16, #tpu.memory_space<vmem>>, vector<128x768xbf16>
    %c0_58 = arith.constant 0 : index
    %c0_59 = arith.constant 0 : index
    %104 = vector.load %arg13[%c0_58, %c0_59] : memref<8x768xf32, #tpu.memory_space<vmem>>, vector<1x768xf32>
    %cst_60 = arith.constant dense<0.000000e+00> : vector<64x768xf32>
    %105 = tpu.matmul %98, %102, %cst_60 {dimension_numbers = #tpu.dot_dimension_numbers<[1], [0], [0], [1], [0, 0, 1, 1], [], []>} : vector<64x256xbf16>, vector<256x768xbf16>, vector<64x768xf32> -> vector<64x768xf32>
    %cst_61 = arith.constant dense<0.000000e+00> : vector<64x768xf32>
    %106 = tpu.matmul %2, %103, %cst_61 {dimension_numbers = #tpu.dot_dimension_numbers<[1], [0], [0], [1], [0, 0, 1, 1], [], []>} : vector<64x128xbf16>, vector<128x768xbf16>, vector<64x768xf32> -> vector<64x768xf32>
    %107 = arith.addf %105, %106 : vector<64x768xf32>
    %108 = vector.broadcast %104 : vector<1x768xf32> to vector<64x768xf32>
    %109 = arith.addf %107, %108 : vector<64x768xf32>
    %cst_62 = arith.constant dense<0.000000e+00> : vector<64x768xf32>
    %110 = tpu.matmul %101, %102, %cst_62 {dimension_numbers = #tpu.dot_dimension_numbers<[1], [0], [0], [1], [0, 0, 1, 1], [], []>} : vector<64x256xbf16>, vector<256x768xbf16>, vector<64x768xf32> -> vector<64x768xf32>
    %cst_63 = arith.constant dense<0.000000e+00> : vector<64x768xf32>
    %111 = tpu.matmul %3, %103, %cst_63 {dimension_numbers = #tpu.dot_dimension_numbers<[1], [0], [0], [1], [0, 0, 1, 1], [], []>} : vector<64x128xbf16>, vector<128x768xbf16>, vector<64x768xf32> -> vector<64x768xf32>
    %112 = arith.addf %110, %111 : vector<64x768xf32>
    %113 = vector.broadcast %104 : vector<1x768xf32> to vector<64x768xf32>
    %114 = arith.addf %112, %113 : vector<64x768xf32>
    %cst_64 = arith.constant 0.000000e+00 : f32
    %115 = vector.broadcast %cst_64 : f32 to vector<64x768xf32>
    %116 = arith.maximumf %109, %115 : vector<64x768xf32>
    %117 = arith.truncf %116 : vector<64x768xf32> to vector<64x768xbf16>
    %cst_65 = arith.constant 0.000000e+00 : f32
    %118 = vector.broadcast %cst_65 : f32 to vector<64x768xf32>
    %119 = arith.maximumf %114, %118 : vector<64x768xf32>
    %120 = arith.truncf %119 : vector<64x768xf32> to vector<64x768xbf16>
    %c0_66 = arith.constant 0 : index
    %c0_67 = arith.constant 0 : index
    %121 = vector.load %arg11[%c0_66, %c0_67] : memref<768x768xbf16, #tpu.memory_space<vmem>>, vector<768x768xbf16>
    %c1_68 = arith.constant 1 : index
    %c0_69 = arith.constant 0 : index
    %122 = vector.load %arg13[%c1_68, %c0_69] : memref<8x768xf32, #tpu.memory_space<vmem>>, vector<1x768xf32>
    %cst_70 = arith.constant dense<0.000000e+00> : vector<64x768xf32>
    %123 = tpu.matmul %117, %121, %cst_70 {dimension_numbers = #tpu.dot_dimension_numbers<[1], [0], [0], [1], [0, 0, 1, 1], [], []>} : vector<64x768xbf16>, vector<768x768xbf16>, vector<64x768xf32> -> vector<64x768xf32>
    %124 = vector.broadcast %122 : vector<1x768xf32> to vector<64x768xf32>
    %125 = arith.addf %123, %124 : vector<64x768xf32>
    %cst_71 = arith.constant 0.000000e+00 : f32
    %126 = vector.broadcast %cst_71 : f32 to vector<64x768xf32>
    %127 = arith.maximumf %125, %126 : vector<64x768xf32>
    %c0_72 = arith.constant 0 : index
    %c0_73 = arith.constant 0 : index
    %128 = vector.load %arg14[%c0_72, %c0_73] : memref<128x768xf32, #tpu.memory_space<vmem>>, vector<64x768xf32>
    tpu.vector_store %arg14[%c0_72, %c0_73], %127 {strides = array<i32>} : memref<128x768xf32, #tpu.memory_space<vmem>>, vector<64x768xf32>,
    %cst_74 = arith.constant dense<0.000000e+00> : vector<64x768xf32>
    %129 = tpu.matmul %120, %121, %cst_74 {dimension_numbers = #tpu.dot_dimension_numbers<[1], [0], [0], [1], [0, 0, 1, 1], [], []>} : vector<64x768xbf16>, vector<768x768xbf16>, vector<64x768xf32> -> vector<64x768xf32>
    %130 = vector.broadcast %122 : vector<1x768xf32> to vector<64x768xf32>
    %131 = arith.addf %129, %130 : vector<64x768xf32>
    %cst_75 = arith.constant 0.000000e+00 : f32
    %132 = vector.broadcast %cst_75 : f32 to vector<64x768xf32>
    %133 = arith.maximumf %131, %132 : vector<64x768xf32>
    %c64_76 = arith.constant 64 : index
    %c0_77 = arith.constant 0 : index
    %134 = vector.load %arg14[%c64_76, %c0_77] : memref<128x768xf32, #tpu.memory_space<vmem>>, vector<64x768xf32>
    tpu.vector_store %arg14[%c64_76, %c0_77], %133 {strides = array<i32>} : memref<128x768xf32, #tpu.memory_space<vmem>>, vector<64x768xf32>,
    return
  }
  func.func @transform_0(%arg0: i32) -> (i32, i32) {
    %c0_i32 = arith.constant 0 : i32
    %c0_i32_0 = arith.constant 0 : i32
    return %arg0, %c0_i32 : i32, i32
  }
  func.func @transform_1(%arg0: i32) -> (i32, i32) {
    %c0_i32 = arith.constant 0 : i32
    %c0_i32_0 = arith.constant 0 : i32
    %c0_i32_1 = arith.constant 0 : i32
    return %c0_i32, %c0_i32_0 : i32, i32
  }
  func.func @transform_2(%arg0: i32) -> (i32, i32) {
    %c0_i32 = arith.constant 0 : i32
    %c0_i32_0 = arith.constant 0 : i32
    %c0_i32_1 = arith.constant 0 : i32
    return %c0_i32, %c0_i32_0 : i32, i32
  }
  func.func @transform_3(%arg0: i32) -> (i32, i32) {
    %c0_i32 = arith.constant 0 : i32
    %c0_i32_0 = arith.constant 0 : i32
    %c0_i32_1 = arith.constant 0 : i32
    return %c0_i32, %c0_i32_0 : i32, i32
  }
  func.func @transform_4(%arg0: i32) -> (i32, i32) {
    %c0_i32 = arith.constant 0 : i32
    %c0_i32_0 = arith.constant 0 : i32
    %c0_i32_1 = arith.constant 0 : i32
    return %c0_i32, %c0_i32_0 : i32, i32
  }
  func.func @transform_5(%arg0: i32) -> (i32, i32) {
    %c0_i32 = arith.constant 0 : i32
    %c0_i32_0 = arith.constant 0 : i32
    %c0_i32_1 = arith.constant 0 : i32
    return %c0_i32, %c0_i32_0 : i32, i32
  }
  func.func @transform_6(%arg0: i32) -> (i32, i32) {
    %c0_i32 = arith.constant 0 : i32
    %c0_i32_0 = arith.constant 0 : i32
    %c0_i32_1 = arith.constant 0 : i32
    return %c0_i32, %c0_i32_0 : i32, i32
  }
  func.func @transform_7(%arg0: i32) -> (i32, i32) {
    %c0_i32 = arith.constant 0 : i32
    %c0_i32_0 = arith.constant 0 : i32
    %c0_i32_1 = arith.constant 0 : i32
    return %c0_i32, %c0_i32_0 : i32, i32
  }
  func.func @transform_8(%arg0: i32) -> (i32, i32) {
    %c0_i32 = arith.constant 0 : i32
    %c0_i32_0 = arith.constant 0 : i32
    %c0_i32_1 = arith.constant 0 : i32
    return %c0_i32, %c0_i32_0 : i32, i32
  }
  func.func @transform_9(%arg0: i32) -> (i32, i32) {
    %c0_i32 = arith.constant 0 : i32
    %c0_i32_0 = arith.constant 0 : i32
    %c0_i32_1 = arith.constant 0 : i32
    return %c0_i32, %c0_i32_0 : i32, i32
  }
  func.func @transform_10(%arg0: i32) -> (i32, i32) {
    %c0_i32 = arith.constant 0 : i32
    %c0_i32_0 = arith.constant 0 : i32
    %c0_i32_1 = arith.constant 0 : i32
    return %c0_i32, %c0_i32_0 : i32, i32
  }
  func.func @transform_11(%arg0: i32) -> (i32, i32) {
    %c0_i32 = arith.constant 0 : i32
    %c0_i32_0 = arith.constant 0 : i32
    %c0_i32_1 = arith.constant 0 : i32
    return %c0_i32, %c0_i32_0 : i32, i32
  }
  func.func @transform_12(%arg0: i32) -> (i32, i32) {
    %c0_i32 = arith.constant 0 : i32
    %c0_i32_0 = arith.constant 0 : i32
    %c0_i32_1 = arith.constant 0 : i32
    return %c0_i32, %c0_i32_0 : i32, i32
  }
  func.func @transform_13(%arg0: i32) -> (i32, i32) {
    %c0_i32 = arith.constant 0 : i32
    %c0_i32_0 = arith.constant 0 : i32
    return %arg0, %c0_i32 : i32, i32
  }
}

</mosaic_0001>

<llo_original>
// kernel: fc_net_v2_forward.1
$region0: #{fc_net_v2_forward.1}
  #allocation0 [shape = 'u32[]', space=smem, size = 0x4, offset = 0x4, fixed_abs, tag = 'smem constant byte address 0x4 - core index']
  #allocation1 [shape = 'u32[144,128]{1,0:T(1,128)}', space=vmem, size = 0x12000, scoped, tag = 'internal scratch']
  %s0 = inlined_call_operand.vmem [shape: bf16[256,256], index: 0, kind: input, shape index: {}]
  %s1 = inlined_call_operand.hbm [shape: bf16[128,256], index: 1, kind: input, shape index: {}]
  %s2 = inlined_call_operand.hbm [shape: bf16[256,256], index: 2, kind: input, shape index: {}]
  %s3 = inlined_call_operand.hbm [shape: bf16[256,256], index: 3, kind: input, shape index: {}]
  %s4 = inlined_call_operand.hbm [shape: bf16[256,256], index: 4, kind: input, shape index: {}]
  %s5 = inlined_call_operand.hbm [shape: bf16[256,256], index: 5, kind: input, shape index: {}]
  %s6 = inlined_call_operand.hbm [shape: bf16[256,256], index: 6, kind: input, shape index: {}]
  %s7 = inlined_call_operand.hbm [shape: bf16[256,256], index: 7, kind: input, shape index: {}]
  %s8 = inlined_call_operand.hbm [shape: bf16[256,768], index: 8, kind: input, shape index: {}]
  %s9 = inlined_call_operand.hbm [shape: bf16[128,768], index: 9, kind: input, shape index: {}]
  %s10 = inlined_call_operand.hbm [shape: bf16[768,768], index: 10, kind: input, shape index: {}]
  %s11 = inlined_call_operand.hbm [shape: f32[8,256], index: 11, kind: input, shape index: {}]
  %s12 = inlined_call_operand.hbm [shape: f32[8,768], index: 12, kind: input, shape index: {}]
  %s13 = inlined_call_operand.vmem [shape: f32[256,768], index: 13, kind: output, shape index: {}]
  %s14 = sld [smem:[#allocation0]]
  $region133: #{fc_net_v2_forward.1} parent=0
    _
  %s16 = ssub.s32 1, %s14
  %s17 = scalar_select 0, %s16, %s14
  $region1: #{fc_net_v2_forward.1} parent=0
    #allocation2 [shape = 'u8[65536]{0}', space=vmem, size = 0x10000, scoped, tag = 'input window, operand 1, single buffered']
    #allocation3 [shape = 's32[2]{0}', space=sflag, size = 0x8, scoped, tag = 'scoped memory for fc_net_v2_forward.1']
    #allocation4 [shape = 'u8[131072]{0}', space=vmem, size = 0x20000, scoped, tag = 'input window, operand 2, single buffered']
    #allocation5 [shape = 's32[1]{0}', space=sflag, size = 0x4, scoped, tag = 'scoped memory for fc_net_v2_forward.1']
    #allocation6 [shape = 'u8[131072]{0}', space=vmem, size = 0x20000, scoped, tag = 'input window, operand 3, single buffered']
    #allocation7 [shape = 'u8[131072]{0}', space=vmem, size = 0x20000, scoped, tag = 'input window, operand 4, single buffered']
    #allocation8 [shape = 's32[1]{0}', space=sflag, size = 0x4, scoped, tag = 'scoped memory for fc_net_v2_forward.1']
    #allocation9 [shape = 'u8[131072]{0}', space=vmem, size = 0x20000, scoped, tag = 'input window, operand 5, single buffered']
    #allocation10 [shape = 'u8[131072]{0}', space=vmem, size = 0x20000, scoped, tag = 'input window, operand 6, single buffered']
    #allocation11 [shape = 's32[1]{0}', space=sflag, size = 0x4, scoped, tag = 'scoped memory for fc_net_v2_forward.1']
    #allocation12 [shape = 'u8[131072]{0}', space=vmem, size = 0x20000, scoped, tag = 'input window, operand 7, single buffered']
    #allocation13 [shape = 'u8[393216]{0}', space=vmem, size = 0x60000, scoped, tag = 'input window, operand 8, single buffered']
    #allocation14 [shape = 's32[1]{0}', space=sflag, size = 0x4, scoped, tag = 'scoped memory for fc_net_v2_forward.1']
    #allocation15 [shape = 'u8[196608]{0}', space=vmem, size = 0x30000, scoped, tag = 'input window, operand 9, single buffered']
    #allocation16 [shape = 'u8[1179648]{0}', space=vmem, size = 0x120000, scoped, tag = 'input window, operand 10, single buffered']
    #allocation17 [shape = 's32[1]{0}', space=sflag, size = 0x4, scoped, tag = 'scoped memory for fc_net_v2_forward.1']
    #allocation18 [shape = 'u8[8192]{0}', space=vmem, size = 0x2000, scoped, tag = 'input window, operand 11, single buffered']
    #allocation19 [shape = 'u8[24576]{0}', space=vmem, size = 0x6000, scoped, tag = 'input window, operand 12, single buffered']
    #allocation20 [shape = 's32[1]{0}', space=sflag, size = 0x4, scoped, tag = 'scoped memory for fc_net_v2_forward.1']
    %18 = vsyncpa [#allocation3], 0
    %19 = vsyncpa [#allocation5], 0
    %20 = vsyncpa [#allocation8], 0
    %21 = vsyncpa [#allocation11], 0
    %22 = vsyncpa [#allocation14], 0
    %23 = vsyncpa [#allocation17], 0
    %24 = vsyncpa [#allocation20], 0
    loop: start=0, step=1, limit=4
    $region2: #{fc_net_v2_forward.1} parent=1 // loop_pre_header
      _
    $region3: #{fc_net_v2_forward.1} parent=1 // loop_header
      %s26 = sphi 0, %s30
      %p27 = scmp.ge.s32.totalorder %s26, 4
      %s36 = sphi 0, %s38
      %s39 = sphi 0, %s36
      %s40 = sphi 0, %s39
      %s56 = sphi 0, %s40
      %s60 = sphi 0, %s60
      %s62 = sphi 0, %s60
      %s63 = sphi 0, %s62
      %s77 = sphi 0, %s63
      %s81 = sphi 0, %s81
      %s83 = sphi 0, %s81
      %s84 = sphi 0, %s83
      %s98 = sphi 0, %s84
      %s102 = sphi 0, %s102
      %s104 = sphi 0, %s102
      %s105 = sphi 0, %s104
      %s119 = sphi 0, %s105
      %s123 = sphi 0, %s123
      %s125 = sphi 0, %s123
      %s126 = sphi 0, %s125
      %s140 = sphi 0, %s126
      %s144 = sphi 0, %s144
      %s146 = sphi 0, %s144
      %s147 = sphi 0, %s146
      %s161 = sphi 0, %s147
      %s165 = sphi 0, %s165
      %s167 = sphi 0, %s165
      %s168 = sphi 0, %s167
      %s182 = sphi 0, %s168
      %s186 = sphi 0, %s186
      %s188 = sphi 0, %s186
      %s189 = sphi 0, %s188
      %s203 = sphi 0, %s189
      %s207 = sphi 0, %s207
      %s209 = sphi 0, %s207
      %s210 = sphi 0, %s209
      %s224 = sphi 0, %s210
      %s228 = sphi 0, %s228
      %s230 = sphi 0, %s228
      %s231 = sphi 0, %s230
      %s245 = sphi 0, %s231
      %s249 = sphi 0, %s249
      %s251 = sphi 0, %s249
      %s252 = sphi 0, %s251
      %s266 = sphi 0, %s252
      %s270 = sphi 0, %s270
      %s272 = sphi 0, %s270
      %s273 = sphi 0, %s272
      %s287 = sphi 0, %s273
      %s291 = sphi 0, %s291
      %s293 = sphi 0, %s291
      %s294 = sphi 0, %s293
      %s308 = sphi 0, %s294
      %s314 = sphi 0, %s316
      %s317 = sphi 0, %s314
      %s318 = sphi 0, %s317
      %s334 = sphi 0, %s318
    $region4: #{fc_net_v2_forward.1} parent=1 // loop_header_branch
      %29 = sbr.rel (%p27) target = $region8
    $region5: #{fc_net_v2_forward.1} parent=1 // loop_body
      %s31 = ssub.s32 %s26, 1
      %s32 = ssub.s32 %s26, 2
      %s33 = sadd.s32 %s26, 1
      %s34 = ssub.s32 %s26, %s33
      %p35 = scmp.eq.s32.totalorder %s34, 0
      %s37 = sadd.s32 %s36, 1
      %s38 = scalar_select %p35, %s36, %s37
      %p41 = pneg %p35
      %p42 = scmp.eq.s32.totalorder %s26, 1
      %p43 = por %p41, %p42
      %p44 = scmp.ne.s32.totalorder %s36, %s39
      %p45 = scmp.eq.s32.totalorder %s26, 0
      %p46 = por %p44, %p45
      %p47 = scmp.ne.s32.totalorder %s36, %s39
      %p48 = scmp.eq.s32.totalorder %s31, 1
      %p49 = por %p47, %p48
      %p50 = scmp.ne.s32.totalorder %s39, %s40
      %p51 = scmp.eq.s32.totalorder %s31, 0
      %p52 = por %p50, %p51
      %p53 = scmp.ne.s32.totalorder %s39, %s40
      %p54 = scmp.eq.s32.totalorder %s32, 1
      %p55 = por %p53, %p54
      %p57 = scmp.ne.s32.totalorder %s40, %s56
      %p58 = scmp.eq.s32.totalorder %s32, 0
      %p59 = por %p57, %p58
      %s61 = sadd.s32 %s60, 1
      %p64 = scmp.eq.s32.totalorder %s26, 1
      %p65 = scmp.ne.s32.totalorder %s60, %s62
      %p66 = scmp.eq.s32.totalorder %s26, 0
      %p67 = por %p65, %p66
      %p68 = scmp.ne.s32.totalorder %s60, %s62
      %p69 = scmp.eq.s32.totalorder %s31, 1
      %p70 = por %p68, %p69
      %p71 = scmp.ne.s32.totalorder %s62, %s63
      %p72 = scmp.eq.s32.totalorder %s31, 0
      %p73 = por %p71, %p72
      %p74 = scmp.ne.s32.totalorder %s62, %s63
      %p75 = scmp.eq.s32.totalorder %s32, 1
      %p76 = por %p74, %p75
      %p78 = scmp.ne.s32.totalorder %s63, %s77
      %p79 = scmp.eq.s32.totalorder %s32, 0
      %p80 = por %p78, %p79
      %s82 = sadd.s32 %s81, 1
      %p85 = scmp.eq.s32.totalorder %s26, 1
      %p86 = scmp.ne.s32.totalorder %s81, %s83
      %p87 = scmp.eq.s32.totalorder %s26, 0
      %p88 = por %p86, %p87
      %p89 = scmp.ne.s32.totalorder %s81, %s83
      %p90 = scmp.eq.s32.totalorder %s31, 1
      %p91 = por %p89, %p90
      %p92 = scmp.ne.s32.totalorder %s83, %s84
      %p93 = scmp.eq.s32.totalorder %s31, 0
      %p94 = por %p92, %p93
      %p95 = scmp.ne.s32.totalorder %s83, %s84
      %p96 = scmp.eq.s32.totalorder %s32, 1
      %p97 = por %p95, %p96
      %p99 = scmp.ne.s32.totalorder %s84, %s98
      %p100 = scmp.eq.s32.totalorder %s32, 0
      %p101 = por %p99, %p100
      %s103 = sadd.s32 %s102, 1
      %p106 = scmp.eq.s32.totalorder %s26, 1
      %p107 = scmp.ne.s32.totalorder %s102, %s104
      %p108 = scmp.eq.s32.totalorder %s26, 0
      %p109 = por %p107, %p108
      %p110 = scmp.ne.s32.totalorder %s102, %s104
      %p111 = scmp.eq.s32.totalorder %s31, 1
      %p112 = por %p110, %p111
      %p113 = scmp.ne.s32.totalorder %s104, %s105
      %p114 = scmp.eq.s32.totalorder %s31, 0
      %p115 = por %p113, %p114
      %p116 = scmp.ne.s32.totalorder %s104, %s105
      %p117 = scmp.eq.s32.totalorder %s32, 1
      %p118 = por %p116, %p117
      %p120 = scmp.ne.s32.totalorder %s105, %s119
      %p121 = scmp.eq.s32.totalorder %s32, 0
      %p122 = por %p120, %p121
      %s124 = sadd.s32 %s123, 1
      %p127 = scmp.eq.s32.totalorder %s26, 1
      %p128 = scmp.ne.s32.totalorder %s123, %s125
      %p129 = scmp.eq.s32.totalorder %s26, 0
      %p130 = por %p128, %p129
      %p131 = scmp.ne.s32.totalorder %s123, %s125
      %p132 = scmp.eq.s32.totalorder %s31, 1
      %p133 = por %p131, %p132
      %p134 = scmp.ne.s32.totalorder %s125, %s126
      %p135 = scmp.eq.s32.totalorder %s31, 0
      %p136 = por %p134, %p135
      %p137 = scmp.ne.s32.totalorder %s125, %s126
      %p138 = scmp.eq.s32.totalorder %s32, 1
      %p139 = por %p137, %p138
      %p141 = scmp.ne.s32.totalorder %s126, %s140
      %p142 = scmp.eq.s32.totalorder %s32, 0
      %p143 = por %p141, %p142
      %s145 = sadd.s32 %s144, 1
      %p148 = scmp.eq.s32.totalorder %s26, 1
      %p149 = scmp.ne.s32.totalorder %s144, %s146
      %p150 = scmp.eq.s32.totalorder %s26, 0
      %p151 = por %p149, %p150
      %p152 = scmp.ne.s32.totalorder %s144, %s146
      %p153 = scmp.eq.s32.totalorder %s31, 1
      %p154 = por %p152, %p153
      %p155 = scmp.ne.s32.totalorder %s146, %s147
      %p156 = scmp.eq.s32.totalorder %s31, 0
      %p157 = por %p155, %p156
      %p158 = scmp.ne.s32.totalorder %s146, %s147
      %p159 = scmp.eq.s32.totalorder %s32, 1
      %p160 = por %p158, %p159
      %p162 = scmp.ne.s32.totalorder %s147, %s161
      %p163 = scmp.eq.s32.totalorder %s32, 0
      %p164 = por %p162, %p163
      %s166 = sadd.s32 %s165, 1
      %p169 = scmp.eq.s32.totalorder %s26, 1
      %p170 = scmp.ne.s32.totalorder %s165, %s167
      %p171 = scmp.eq.s32.totalorder %s26, 0
      %p172 = por %p170, %p171
      %p173 = scmp.ne.s32.totalorder %s165, %s167
      %p174 = scmp.eq.s32.totalorder %s31, 1
      %p175 = por %p173, %p174
      %p176 = scmp.ne.s32.totalorder %s167, %s168
      %p177 = scmp.eq.s32.totalorder %s31, 0
      %p178 = por %p176, %p177
      %p179 = scmp.ne.s32.totalorder %s167, %s168
      %p180 = scmp.eq.s32.totalorder %s32, 1
      %p181 = por %p179, %p180
      %p183 = scmp.ne.s32.totalorder %s168, %s182
      %p184 = scmp.eq.s32.totalorder %s32, 0
      %p185 = por %p183, %p184
      %s187 = sadd.s32 %s186, 1
      %p190 = scmp.eq.s32.totalorder %s26, 1
      %p191 = scmp.ne.s32.totalorder %s186, %s188
      %p192 = scmp.eq.s32.totalorder %s26, 0
      %p193 = por %p191, %p192
      %p194 = scmp.ne.s32.totalorder %s186, %s188
      %p195 = scmp.eq.s32.totalorder %s31, 1
      %p196 = por %p194, %p195
      %p197 = scmp.ne.s32.totalorder %s188, %s189
      %p198 = scmp.eq.s32.totalorder %s31, 0
      %p199 = por %p197, %p198
      %p200 = scmp.ne.s32.totalorder %s188, %s189
      %p201 = scmp.eq.s32.totalorder %s32, 1
      %p202 = por %p200, %p201
      %p204 = scmp.ne.s32.totalorder %s189, %s203
      %p205 = scmp.eq.s32.totalorder %s32, 0
      %p206 = por %p204, %p205
      %s208 = sadd.s32 %s207, 1
      %p211 = scmp.eq.s32.totalorder %s26, 1
      %p212 = scmp.ne.s32.totalorder %s207, %s209
      %p213 = scmp.eq.s32.totalorder %s26, 0
      %p214 = por %p212, %p213
      %p215 = scmp.ne.s32.totalorder %s207, %s209
      %p216 = scmp.eq.s32.totalorder %s31, 1
      %p217 = por %p215, %p216
      %p218 = scmp.ne.s32.totalorder %s209, %s210
      %p219 = scmp.eq.s32.totalorder %s31, 0
      %p220 = por %p218, %p219
      %p221 = scmp.ne.s32.totalorder %s209, %s210
      %p222 = scmp.eq.s32.totalorder %s32, 1
      %p223 = por %p221, %p222
      %p225 = scmp.ne.s32.totalorder %s210, %s224
      %p226 = scmp.eq.s32.totalorder %s32, 0
      %p227 = por %p225, %p226
      %s229 = sadd.s32 %s228, 1
      %p232 = scmp.eq.s32.totalorder %s26, 1
      %p233 = scmp.ne.s32.totalorder %s228, %s230
      %p234 = scmp.eq.s32.totalorder %s26, 0
      %p235 = por %p233, %p234
      %p236 = scmp.ne.s32.totalorder %s228, %s230
      %p237 = scmp.eq.s32.totalorder %s31, 1
      %p238 = por %p236, %p237
      %p239 = scmp.ne.s32.totalorder %s230, %s231
      %p240 = scmp.eq.s32.totalorder %s31, 0
      %p241 = por %p239, %p240
      %p242 = scmp.ne.s32.totalorder %s230, %s231
      %p243 = scmp.eq.s32.totalorder %s32, 1
      %p244 = por %p242, %p243
      %p246 = scmp.ne.s32.totalorder %s231, %s245
      %p247 = scmp.eq.s32.totalorder %s32, 0
      %p248 = por %p246, %p247
      %s250 = sadd.s32 %s249, 1
      %p253 = scmp.eq.s32.totalorder %s26, 1
      %p254 = scmp.ne.s32.totalorder %s249, %s251
      %p255 = scmp.eq.s32.totalorder %s26, 0
      %p256 = por %p254, %p255
      %p257 = scmp.ne.s32.totalorder %s249, %s251
      %p258 = scmp.eq.s32.totalorder %s31, 1
      %p259 = por %p257, %p258
      %p260 = scmp.ne.s32.totalorder %s251, %s252
      %p261 = scmp.eq.s32.totalorder %s31, 0
      %p262 = por %p260, %p261
      %p263 = scmp.ne.s32.totalorder %s251, %s252
      %p264 = scmp.eq.s32.totalorder %s32, 1
      %p265 = por %p263, %p264
      %p267 = scmp.ne.s32.totalorder %s252, %s266
      %p268 = scmp.eq.s32.totalorder %s32, 0
      %p269 = por %p267, %p268
      %s271 = sadd.s32 %s270, 1
      %p274 = scmp.eq.s32.totalorder %s26, 1
      %p275 = scmp.ne.s32.totalorder %s270, %s272
      %p276 = scmp.eq.s32.totalorder %s26, 0
      %p277 = por %p275, %p276
      %p278 = scmp.ne.s32.totalorder %s270, %s272
      %p279 = scmp.eq.s32.totalorder %s31, 1
      %p280 = por %p278, %p279
      %p281 = scmp.ne.s32.totalorder %s272, %s273
      %p282 = scmp.eq.s32.totalorder %s31, 0
      %p283 = por %p281, %p282
      %p284 = scmp.ne.s32.totalorder %s272, %s273
      %p285 = scmp.eq.s32.totalorder %s32, 1
      %p286 = por %p284, %p285
      %p288 = scmp.ne.s32.totalorder %s273, %s287
      %p289 = scmp.eq.s32.totalorder %s32, 0
      %p290 = por %p288, %p289
      %s292 = sadd.s32 %s291, 1
      %p295 = scmp.eq.s32.totalorder %s26, 1
      %p296 = scmp.ne.s32.totalorder %s291, %s293
      %p297 = scmp.eq.s32.totalorder %s26, 0
      %p298 = por %p296, %p297
      %p299 = scmp.ne.s32.totalorder %s291, %s293
      %p300 = scmp.eq.s32.totalorder %s31, 1
      %p301 = por %p299, %p300
      %p302 = scmp.ne.s32.totalorder %s293, %s294
      %p303 = scmp.eq.s32.totalorder %s31, 0
      %p304 = por %p302, %p303
      %p305 = scmp.ne.s32.totalorder %s293, %s294
      %p306 = scmp.eq.s32.totalorder %s32, 1
      %p307 = por %p305, %p306
      %p309 = scmp.ne.s32.totalorder %s294, %s308
      %p310 = scmp.eq.s32.totalorder %s32, 0
      %p311 = por %p309, %p310
      %s312 = ssub.s32 %s26, %s33
      %p313 = scmp.eq.s32.totalorder %s312, 0
      %s315 = sadd.s32 %s314, 1
      %s316 = scalar_select %p313, %s314, %s315
      %p319 = pneg %p313
      %p320 = scmp.eq.s32.totalorder %s26, 1
      %p321 = por %p319, %p320
      %p322 = scmp.ne.s32.totalorder %s314, %s317
      %p323 = scmp.eq.s32.totalorder %s26, 0
      %p324 = por %p322, %p323
      %p325 = scmp.ne.s32.totalorder %s314, %s317
      %p326 = scmp.eq.s32.totalorder %s31, 1
      %p327 = por %p325, %p326
      %p328 = scmp.ne.s32.totalorder %s317, %s318
      %p329 = scmp.eq.s32.totalorder %s31, 0
      %p330 = por %p328, %p329
      %p331 = scmp.ne.s32.totalorder %s317, %s318
      %p332 = scmp.eq.s32.totalorder %s32, 1
      %p333 = por %p331, %p332
      %p335 = scmp.ne.s32.totalorder %s318, %s334
      %p336 = scmp.eq.s32.totalorder %s32, 0
      %p337 = por %p335, %p336
      %p338 = scmp.le.s32.totalorder 1, %s26
      %p339 = scmp.lt.s32.totalorder %s26, 3
      %p340 = pnand %p338, %p339
      %p341 = pneg %p340
      // Predicated region
      $region9: #{fc_net_v2_forward.1} parent=5 // pred_check
        _
      $region10: #{fc_net_v2_forward.1} parent=5 // pred_check_branch
        %343 = sbr.rel (%p340) target = $region12
      $region11: #{fc_net_v2_forward.1} parent=5 // pred_region
        %s344 = ssub.s32 %s26, 1
        // Predicated region
        $region13: #{fc_net_v2_forward.1} parent=11 // pred_check
          %p345 = pneg %p73
        $region14: #{fc_net_v2_forward.1} parent=11 // pred_check_branch
          %347 = sbr.rel (%p345) target = $region16
        $region15: #{fc_net_v2_forward.1} parent=11 // pred_region
          %s349 = ssub.s32 2048, 2048
          %350 = vsyncadd [#allocation3], %s349
          %s351 = sshll.u32 [#allocation2], 4
          %s352 = int_to_ptr.vmem [resolvable:$true] %s351
          %357 = dma.hbm_to_vmem [thread:$0]  %s1, 2048, %s352, [#allocation3], 128, 128, 8
        $region16: #{fc_net_v2_forward.1} parent=11 // pred_fallthru
          _
        // Predicated region
        $region17: #{fc_net_v2_forward.1} parent=11 // pred_check
          %p358 = pneg %p94
        $region18: #{fc_net_v2_forward.1} parent=11 // pred_check_branch
          %360 = sbr.rel (%p358) target = $region20
        $region19: #{fc_net_v2_forward.1} parent=11 // pred_region
          %s362 = ssub.s32 4096, 4096
          %363 = vsyncadd [#allocation5], %s362
          %s364 = sshll.u32 [#allocation4], 4
          %s365 = int_to_ptr.vmem [resolvable:$true] %s364
          %370 = dma.hbm_to_vmem [thread:$0]  %s2, 4096, %s365, [#allocation5], 128, 128, 8
        $region20: #{fc_net_v2_forward.1} parent=11 // pred_fallthru
          _
        // Predicated region
        $region21: #{fc_net_v2_forward.1} parent=11 // pred_check
          %p371 = pneg %p115
        $region22: #{fc_net_v2_forward.1} parent=11 // pred_check_branch
          %373 = sbr.rel (%p371) target = $region24
        $region23: #{fc_net_v2_forward.1} parent=11 // pred_region
          %s375 = ssub.s32 4096, 4096
          %376 = vsyncadd [#allocation5], %s375
          %s377 = sshll.u32 [#allocation6], 4
          %s378 = int_to_ptr.vmem [resolvable:$true] %s377
          %383 = dma.hbm_to_vmem [thread:$0]  %s3, 4096, %s378, [#allocation5], 128, 128, 8
        $region24: #{fc_net_v2_forward.1} parent=11 // pred_fallthru
          _
        // Predicated region
        $region25: #{fc_net_v2_forward.1} parent=11 // pred_check
          %p384 = pneg %p136
        $region26: #{fc_net_v2_forward.1} parent=11 // pred_check_branch
          %386 = sbr.rel (%p384) target = $region28
        $region27: #{fc_net_v2_forward.1} parent=11 // pred_region
          %s388 = ssub.s32 4096, 4096
          %389 = vsyncadd [#allocation8], %s388
          %s390 = sshll.u32 [#allocation7], 4
          %s391 = int_to_ptr.vmem [resolvable:$true] %s390
          %396 = dma.hbm_to_vmem [thread:$0]  %s4, 4096, %s391, [#allocation8], 128, 128, 8
        $region28: #{fc_net_v2_forward.1} parent=11 // pred_fallthru
          _
        // Predicated region
        $region29: #{fc_net_v2_forward.1} parent=11 // pred_check
          %p397 = pneg %p157
        $region30: #{fc_net_v2_forward.1} parent=11 // pred_check_branch
          %399 = sbr.rel (%p397) target = $region32
        $region31: #{fc_net_v2_forward.1} parent=11 // pred_region
          %s401 = ssub.s32 4096, 4096
          %402 = vsyncadd [#allocation8], %s401
          %s403 = sshll.u32 [#allocation9], 4
          %s404 = int_to_ptr.vmem [resolvable:$true] %s403
          %409 = dma.hbm_to_vmem [thread:$0]  %s5, 4096, %s404, [#allocation8], 128, 128, 8
        $region32: #{fc_net_v2_forward.1} parent=11 // pred_fallthru
          _
        // Predicated region
        $region33: #{fc_net_v2_forward.1} parent=11 // pred_check
          %p410 = pneg %p178
        $region34: #{fc_net_v2_forward.1} parent=11 // pred_check_branch
          %412 = sbr.rel (%p410) target = $region36
        $region35: #{fc_net_v2_forward.1} parent=11 // pred_region
          %s414 = ssub.s32 4096, 4096
          %415 = vsyncadd [#allocation11], %s414
          %s416 = sshll.u32 [#allocation10], 4
          %s417 = int_to_ptr.vmem [resolvable:$true] %s416
          %422 = dma.hbm_to_vmem [thread:$0]  %s6, 4096, %s417, [#allocation11], 128, 128, 8
        $region36: #{fc_net_v2_forward.1} parent=11 // pred_fallthru
          _
        // Predicated region
        $region37: #{fc_net_v2_forward.1} parent=11 // pred_check
          %p423 = pneg %p199
        $region38: #{fc_net_v2_forward.1} parent=11 // pred_check_branch
          %425 = sbr.rel (%p423) target = $region40
        $region39: #{fc_net_v2_forward.1} parent=11 // pred_region
          %s427 = ssub.s32 4096, 4096
          %428 = vsyncadd [#allocation11], %s427
          %s429 = sshll.u32 [#allocation12], 4
          %s430 = int_to_ptr.vmem [resolvable:$true] %s429
          %435 = dma.hbm_to_vmem [thread:$0]  %s7, 4096, %s430, [#allocation11], 128, 128, 8
        $region40: #{fc_net_v2_forward.1} parent=11 // pred_fallthru
          _
        // Predicated region
        $region41: #{fc_net_v2_forward.1} parent=11 // pred_check
          %p436 = pneg %p220
        $region42: #{fc_net_v2_forward.1} parent=11 // pred_check_branch
          %438 = sbr.rel (%p436) target = $region44
        $region43: #{fc_net_v2_forward.1} parent=11 // pred_region
          %s440 = ssub.s32 12288, 12288
          %441 = vsyncadd [#allocation14], %s440
          %s442 = sshll.u32 [#allocation13], 4
          %s443 = int_to_ptr.vmem [resolvable:$true] %s442
          %448 = dma.hbm_to_vmem [thread:$0]  %s8, 12288, %s443, [#allocation14], 384, 384, 24
        $region44: #{fc_net_v2_forward.1} parent=11 // pred_fallthru
          _
        // Predicated region
        $region45: #{fc_net_v2_forward.1} parent=11 // pred_check
          %p449 = pneg %p241
        $region46: #{fc_net_v2_forward.1} parent=11 // pred_check_branch
          %451 = sbr.rel (%p449) target = $region48
        $region47: #{fc_net_v2_forward.1} parent=11 // pred_region
          %s453 = ssub.s32 6144, 6144
          %454 = vsyncadd [#allocation14], %s453
          %s455 = sshll.u32 [#allocation15], 4
          %s456 = int_to_ptr.vmem [resolvable:$true] %s455
          %461 = dma.hbm_to_vmem [thread:$0]  %s9, 6144, %s456, [#allocation14], 384, 384, 24
        $region48: #{fc_net_v2_forward.1} parent=11 // pred_fallthru
          _
        // Predicated region
        $region49: #{fc_net_v2_forward.1} parent=11 // pred_check
          %p462 = pneg %p262
        $region50: #{fc_net_v2_forward.1} parent=11 // pred_check_branch
          %464 = sbr.rel (%p462) target = $region52
        $region51: #{fc_net_v2_forward.1} parent=11 // pred_region
          %s466 = ssub.s32 36864, 36864
          %467 = vsyncadd [#allocation17], %s466
          %s468 = sshll.u32 [#allocation16], 4
          %s469 = int_to_ptr.vmem [resolvable:$true] %s468
          %474 = dma.hbm_to_vmem [thread:$0]  %s10, 36864, %s469, [#allocation17], 384, 384, 24
        $region52: #{fc_net_v2_forward.1} parent=11 // pred_fallthru
          _
        // Predicated region
        $region53: #{fc_net_v2_forward.1} parent=11 // pred_check
          %p475 = pneg %p283
        $region54: #{fc_net_v2_forward.1} parent=11 // pred_check_branch
          %477 = sbr.rel (%p475) target = $region56
        $region55: #{fc_net_v2_forward.1} parent=11 // pred_region
          %s479 = ssub.s32 256, 256
          %480 = vsyncadd [#allocation17], %s479
          %s482 = sshll.u32 [#allocation18], 4
          %s483 = int_to_ptr.vmem [resolvable:$true] %s482
          %485 = dma.hbm_to_vmem [thread:$0]  %s11, 256, %s483, [#allocation17]
        $region56: #{fc_net_v2_forward.1} parent=11 // pred_fallthru
          _
        // Predicated region
        $region57: #{fc_net_v2_forward.1} parent=11 // pred_check
          %p486 = pneg %p304
        $region58: #{fc_net_v2_forward.1} parent=11 // pred_check_branch
          %488 = sbr.rel (%p486) target = $region60
        $region59: #{fc_net_v2_forward.1} parent=11 // pred_region
          %s490 = ssub.s32 768, 768
          %491 = vsyncadd [#allocation20], %s490
          %s493 = sshll.u32 [#allocation19], 4
          %s494 = int_to_ptr.vmem [resolvable:$true] %s493
          %496 = dma.hbm_to_vmem [thread:$0]  %s12, 768, %s494, [#allocation20]
        $region60: #{fc_net_v2_forward.1} parent=11 // pred_fallthru
          _
      $region12: #{fc_net_v2_forward.1} parent=5 // pred_fallthru
        _
      %p497 = scmp.lt.s32.totalorder %s26, 2
      // Predicated region
      $region61: #{fc_net_v2_forward.1} parent=5 // pred_check
        %p498 = pneg %p497
      $region62: #{fc_net_v2_forward.1} parent=5 // pred_check_branch
        %500 = sbr.rel (%p498) target = $region64
      $region63: #{fc_net_v2_forward.1} parent=5 // pred_region
        // Predicated region
        $region65: #{fc_net_v2_forward.1} parent=63 // pred_check
          %p501 = pneg %p46
        $region66: #{fc_net_v2_forward.1} parent=63 // pred_check_branch
          %503 = sbr.rel (%p501) target = $region68
        $region67: #{fc_net_v2_forward.1} parent=63 // pred_region
          %s504 = smul.u32 16, %s26
          %p505 = scmp.lt.s32.totalorder %s504, 31
          %s506 = scalar_select %p505, %s504, 31
          %s507 = smul.addr %s506, 2
          %s508 = smul.addr %s507, 4
          %s509 = scalar_lea.vmem %s0, %s508
          %s510 = smul.u32 16, %s26
        $region68: #{fc_net_v2_forward.1} parent=63 // pred_fallthru
          _
      $region64: #{fc_net_v2_forward.1} parent=5 // pred_fallthru
        _
      %p511 = scmp.le.s32.totalorder 1, %s26
      %p512 = scmp.lt.s32.totalorder %s26, 3
      %p513 = pnand %p511, %p512
      %p514 = pneg %p513
      // Predicated region
      $region69: #{fc_net_v2_forward.1} parent=5 // pred_check
        _
      $region70: #{fc_net_v2_forward.1} parent=5 // pred_check_branch
        %516 = sbr.rel (%p513) target = $region72
      $region71: #{fc_net_v2_forward.1} parent=5 // pred_region
        %s517 = ssub.s32 %s26, 1
        // Predicated region
        $region73: #{fc_net_v2_forward.1} parent=71 // pred_check
          %p518 = pneg %p73
        $region74: #{fc_net_v2_forward.1} parent=71 // pred_check_branch
          %520 = sbr.rel (%p518) target = $region76
        $region75: #{fc_net_v2_forward.1} parent=71 // pred_region
          %521 = dma.done [#allocation3], 2048
        $region76: #{fc_net_v2_forward.1} parent=71 // pred_fallthru
          _
        // Predicated region
        $region77: #{fc_net_v2_forward.1} parent=71 // pred_check
          %p522 = pneg %p94
        $region78: #{fc_net_v2_forward.1} parent=71 // pred_check_branch
          %524 = sbr.rel (%p522) target = $region80
        $region79: #{fc_net_v2_forward.1} parent=71 // pred_region
          %525 = dma.done [#allocation5], 4096
        $region80: #{fc_net_v2_forward.1} parent=71 // pred_fallthru
          _
        // Predicated region
        $region81: #{fc_net_v2_forward.1} parent=71 // pred_check
          %p526 = pneg %p115
        $region82: #{fc_net_v2_forward.1} parent=71 // pred_check_branch
          %528 = sbr.rel (%p526) target = $region84
        $region83: #{fc_net_v2_forward.1} parent=71 // pred_region
          %529 = dma.done [#allocation5], 4096
        $region84: #{fc_net_v2_forward.1} parent=71 // pred_fallthru
          _
        // Predicated region
        $region85: #{fc_net_v2_forward.1} parent=71 // pred_check
          %p530 = pneg %p136
        $region86: #{fc_net_v2_forward.1} parent=71 // pred_check_branch
          %532 = sbr.rel (%p530) target = $region88
        $region87: #{fc_net_v2_forward.1} parent=71 // pred_region
          %533 = dma.done [#allocation8], 4096
        $region88: #{fc_net_v2_forward.1} parent=71 // pred_fallthru
          _
        // Predicated region
        $region89: #{fc_net_v2_forward.1} parent=71 // pred_check
          %p534 = pneg %p157
        $region90: #{fc_net_v2_forward.1} parent=71 // pred_check_branch
          %536 = sbr.rel (%p534) target = $region92
        $region91: #{fc_net_v2_forward.1} parent=71 // pred_region
          %537 = dma.done [#allocation8], 4096
        $region92: #{fc_net_v2_forward.1} parent=71 // pred_fallthru
          _
        // Predicated region
        $region93: #{fc_net_v2_forward.1} parent=71 // pred_check
          %p538 = pneg %p178
        $region94: #{fc_net_v2_forward.1} parent=71 // pred_check_branch
          %540 = sbr.rel (%p538) target = $region96
        $region95: #{fc_net_v2_forward.1} parent=71 // pred_region
          %541 = dma.done [#allocation11], 4096
        $region96: #{fc_net_v2_forward.1} parent=71 // pred_fallthru
          _
        // Predicated region
        $region97: #{fc_net_v2_forward.1} parent=71 // pred_check
          %p542 = pneg %p199
        $region98: #{fc_net_v2_forward.1} parent=71 // pred_check_branch
          %544 = sbr.rel (%p542) target = $region100
        $region99: #{fc_net_v2_forward.1} parent=71 // pred_region
          %545 = dma.done [#allocation11], 4096
        $region100: #{fc_net_v2_forward.1} parent=71 // pred_fallthru
          _
        // Predicated region
        $region101: #{fc_net_v2_forward.1} parent=71 // pred_check
          %p546 = pneg %p220
        $region102: #{fc_net_v2_forward.1} parent=71 // pred_check_branch
          %548 = sbr.rel (%p546) target = $region104
        $region103: #{fc_net_v2_forward.1} parent=71 // pred_region
          %549 = dma.done [#allocation14], 12288
        $region104: #{fc_net_v2_forward.1} parent=71 // pred_fallthru
          _
        // Predicated region
        $region105: #{fc_net_v2_forward.1} parent=71 // pred_check
          %p550 = pneg %p241
        $region106: #{fc_net_v2_forward.1} parent=71 // pred_check_branch
          %552 = sbr.rel (%p550) target = $region108
        $region107: #{fc_net_v2_forward.1} parent=71 // pred_region
          %553 = dma.done [#allocation14], 6144
        $region108: #{fc_net_v2_forward.1} parent=71 // pred_fallthru
          _
        // Predicated region
        $region109: #{fc_net_v2_forward.1} parent=71 // pred_check
          %p554 = pneg %p262
        $region110: #{fc_net_v2_forward.1} parent=71 // pred_check_branch
          %556 = sbr.rel (%p554) target = $region112
        $region111: #{fc_net_v2_forward.1} parent=71 // pred_region
          %557 = dma.done [#allocation17], 36864
        $region112: #{fc_net_v2_forward.1} parent=71 // pred_fallthru
          _
        // Predicated region
        $region113: #{fc_net_v2_forward.1} parent=71 // pred_check
          %p558 = pneg %p283
        $region114: #{fc_net_v2_forward.1} parent=71 // pred_check_branch
          %560 = sbr.rel (%p558) target = $region116
        $region115: #{fc_net_v2_forward.1} parent=71 // pred_region
          %561 = dma.done [#allocation17], 256
        $region116: #{fc_net_v2_forward.1} parent=71 // pred_fallthru
          _
        // Predicated region
        $region117: #{fc_net_v2_forward.1} parent=71 // pred_check
          %p562 = pneg %p304
        $region118: #{fc_net_v2_forward.1} parent=71 // pred_check_branch
          %564 = sbr.rel (%p562) target = $region120
        $region119: #{fc_net_v2_forward.1} parent=71 // pred_region
          %565 = dma.done [#allocation20], 768
        $region120: #{fc_net_v2_forward.1} parent=71 // pred_fallthru
          _
        %s566 = smul.u32 16, %s31
        %p567 = scmp.lt.s32.totalorder %s566, 31
        %s568 = scalar_select %p567, %s566, 31
        %s569 = smul.addr %s568, 2
        %s570 = smul.addr %s569, 4
        %s571 = scalar_lea.vmem %s0, %s570
        %p572 = pneg %p52
        %p573 = pneg %p49
        %p574 = pneg %p73
        %p575 = pneg %p70
        %p576 = pneg %p94
        %p577 = pneg %p91
        %p578 = pneg %p115
        %p579 = pneg %p112
        %p580 = pneg %p136
        %p581 = pneg %p133
        %p582 = pneg %p157
        %p583 = pneg %p154
        %p584 = pneg %p178
        %p585 = pneg %p175
        %p586 = pneg %p199
        %p587 = pneg %p196
        %p588 = pneg %p220
        %p589 = pneg %p217
        %p590 = pneg %p241
        %p591 = pneg %p238
        %p592 = pneg %p262
        %p593 = pneg %p259
        %p594 = pneg %p283
        %p595 = pneg %p280
        %p596 = pneg %p304
        %p597 = pneg %p301
        %p598 = pneg %p330
        %p599 = pneg %p327
        %s600 = smul.u32 16, %s31
        %p601 = scmp.lt.s32.totalorder %s600, 31
        %s602 = scalar_select %p601, %s600, 31
        %s603 = smul.addr %s602, 6
        %s604 = smul.addr %s603, 8
        %s605 = scalar_lea.vmem %s13, %s604
        %s606 = smul.u32 16, %s31
        %p607 = scmp.lt.s32.totalorder %s606, 31
        %s608 = scalar_select %p607, %s606, 31
        %s609 = smul.addr %s608, 2
        %s610 = smul.addr %s609, 4
        %s611 = scalar_lea.vmem %s0, %s610
        %s612 = smul.u32 16, %s31
        %s613 = smul.u32 16, %s31
        %p614 = scmp.lt.s32.totalorder %s613, 31
        %s615 = scalar_select %p614, %s613, 31
        %s616 = smul.addr %s615, 6
        %s617 = smul.addr %s616, 8
        %s618 = scalar_lea.vmem %s13, %s617
        %s619 = smul.u32 16, %s31
        %v621 = vld [vmem:[%s611] sm:$0xf]
        %v622 = vld [vmem:[%s611 + $0x8] sm:$0xf]
        %v623 = vld [vmem:[%s611 + $0x10] sm:$0xf]
        %v624 = vld [vmem:[%s611 + $0x18] sm:$0xf]
        %v625 = vld [vmem:[%s611 + $0x20] sm:$0xf]
        %v626 = vld [vmem:[%s611 + $0x28] sm:$0xf]
        %v627 = vld [vmem:[%s611 + $0x30] sm:$0xf]
        %v628 = vld [vmem:[%s611 + $0x38] sm:$0xf]
        %v629 = vld [vmem:[%s611 + $0x40] sm:$0xf]
        %v630 = vld [vmem:[%s611 + $0x48] sm:$0xf]
        %v631 = vld [vmem:[%s611 + $0x50] sm:$0xf]
        %v632 = vld [vmem:[%s611 + $0x58] sm:$0xf]
        %v633 = vld [vmem:[%s611 + $0x60] sm:$0xf]
        %v634 = vld [vmem:[%s611 + $0x68] sm:$0xf]
        %v635 = vld [vmem:[%s611 + $0x70] sm:$0xf]
        %v636 = vld [vmem:[%s611 + $0x78] sm:$0xf]
        %v637 = vld [vmem:[%s611 + $0x4] sm:$0xf]
        %v638 = vld [vmem:[%s611 + $0xc] sm:$0xf]
        %v639 = vld [vmem:[%s611 + $0x14] sm:$0xf]
        %v640 = vld [vmem:[%s611 + $0x1c] sm:$0xf]
        %v641 = vld [vmem:[%s611 + $0x24] sm:$0xf]
        %v642 = vld [vmem:[%s611 + $0x2c] sm:$0xf]
        %v643 = vld [vmem:[%s611 + $0x34] sm:$0xf]
        %v644 = vld [vmem:[%s611 + $0x3c] sm:$0xf]
        %v645 = vld [vmem:[%s611 + $0x44] sm:$0xf]
        %v646 = vld [vmem:[%s611 + $0x4c] sm:$0xf]
        %v647 = vld [vmem:[%s611 + $0x54] sm:$0xf]
        %v648 = vld [vmem:[%s611 + $0x5c] sm:$0xf]
        %v649 = vld [vmem:[%s611 + $0x64] sm:$0xf]
        %v650 = vld [vmem:[%s611 + $0x6c] sm:$0xf]
        %v651 = vld [vmem:[%s611 + $0x74] sm:$0xf]
        %v652 = vld [vmem:[%s611 + $0x7c] sm:$0xf]
        %v653 = vld [vmem:[#allocation2] sm:$0xff]
        %v654 = vld [vmem:[#allocation2 + $0x8] sm:$0xff]
        %v655 = vld [vmem:[#allocation2 + $0x10] sm:$0xff]
        %v656 = vld [vmem:[#allocation2 + $0x18] sm:$0xff]
        %v657 = vld [vmem:[#allocation2 + $0x20] sm:$0xff]
        %v658 = vld [vmem:[#allocation2 + $0x28] sm:$0xff]
        %v659 = vld [vmem:[#allocation2 + $0x30] sm:$0xff]
        %v660 = vld [vmem:[#allocation2 + $0x38] sm:$0xff]
        %v661 = vld [vmem:[#allocation2 + $0x40] sm:$0xff]
        %v662 = vld [vmem:[#allocation2 + $0x48] sm:$0xff]
        %v663 = vld [vmem:[#allocation2 + $0x50] sm:$0xff]
        %v664 = vld [vmem:[#allocation2 + $0x58] sm:$0xff]
        %v665 = vld [vmem:[#allocation2 + $0x60] sm:$0xff]
        %v666 = vld [vmem:[#allocation2 + $0x68] sm:$0xff]
        %v667 = vld [vmem:[#allocation2 + $0x70] sm:$0xff]
        %v668 = vld [vmem:[#allocation2 + $0x78] sm:$0xff]
        %v669 = vld [vmem:[#allocation18] ss:$8 sm:$0x3]
        %v671 = vlaneseq
        %v672 = vshrl.u32 %v671, 7
        %v673 = vsub.s32 0, %v672
        %v674 = vrot.slane %v669, %v673
        %v675 = vlaneseq
        %v676 = vshrl.u32 %v675, 7
        %v677 = vsub.s32 1, %v676
        %v678 = vrot.slane %v669, %v677
        %v689 = vunpack.c.l.b16 %v621
        %v690 = vunpack.c.l.b16 %v622
        %v691 = vunpack.c.l.b16 %v623
        %v692 = vunpack.c.l.b16 %v624
        %v693 = vunpack.c.l.b16 %v625
        %v694 = vunpack.c.l.b16 %v626
        %v695 = vunpack.c.l.b16 %v627
        %v696 = vunpack.c.l.b16 %v628
        %v697 = vpack.c.b16 %v690, %v689
        %v698 = vpack.c.b16 %v692, %v691
        %v699 = vpack.c.b16 %v694, %v693
        %v700 = vpack.c.b16 %v696, %v695
        %v721 = vunpack.c.l.b16 %v653
        %v722 = vunpack.c.h.b16 %v653
        %v723 = vunpack.c.l.b16 %v654
        %v724 = vunpack.c.h.b16 %v654
        %v725 = vunpack.c.l.b16 %v655
        %v726 = vunpack.c.h.b16 %v655
        %v727 = vunpack.c.l.b16 %v656
        %v728 = vunpack.c.h.b16 %v656
        %v729 = vunpack.c.l.b16 %v657
        %v730 = vunpack.c.h.b16 %v657
        %v731 = vunpack.c.l.b16 %v658
        %v732 = vunpack.c.h.b16 %v658
        %v733 = vunpack.c.l.b16 %v659
        %v734 = vunpack.c.h.b16 %v659
        %v735 = vunpack.c.l.b16 %v660
        %v736 = vunpack.c.h.b16 %v660
        %v737 = vunpack.c.l.b16 %v661
        %v738 = vunpack.c.h.b16 %v661
        %v739 = vunpack.c.l.b16 %v662
        %v740 = vunpack.c.h.b16 %v662
        %v741 = vunpack.c.l.b16 %v663
        %v742 = vunpack.c.h.b16 %v663
        %v743 = vunpack.c.l.b16 %v664
        %v744 = vunpack.c.h.b16 %v664
        %v745 = vunpack.c.l.b16 %v665
        %v746 = vunpack.c.h.b16 %v665
        %v747 = vunpack.c.l.b16 %v666
        %v748 = vunpack.c.h.b16 %v666
        %v749 = vunpack.c.l.b16 %v667
        %v750 = vunpack.c.h.b16 %v667
        %v751 = vunpack.c.l.b16 %v668
        %v752 = vunpack.c.h.b16 %v668
        %v753 = vpack.c.b16 %v723, %v721
        %v754 = vpack.c.b16 %v724, %v722
        %v755 = vpack.c.b16 %v727, %v725
        %v756 = vpack.c.b16 %v728, %v726
        %v757 = vpack.c.b16 %v731, %v729
        %v758 = vpack.c.b16 %v732, %v730
        %v759 = vpack.c.b16 %v735, %v733
        %v760 = vpack.c.b16 %v736, %v734
        %v761 = vpack.c.b16 %v739, %v737
        %v762 = vpack.c.b16 %v740, %v738
        %v763 = vpack.c.b16 %v743, %v741
        %v764 = vpack.c.b16 %v744, %v742
        %v765 = vpack.c.b16 %v747, %v745
        %v766 = vpack.c.b16 %v748, %v746
        %v767 = vpack.c.b16 %v751, %v749
        %v768 = vpack.c.b16 %v752, %v750
        %785 = vmatprep.subr.bf16.mxu0 %v754
        %786 = vmatpush1.bf16.msra.mxu0 %v753
        %787 = vmatprep.subr.bf16.mxu0 %v756
        %788 = vmatpush1.bf16.msra.mxu0 %v755
        %789 = vmatprep.subr.bf16.mxu0 %v758
        %790 = vmatpush1.bf16.msra.mxu0 %v757
        %791 = vmatprep.subr.bf16.mxu0 %v760
        %792 = vmatpush1.bf16.msra.mxu0 %v759
        %793 = vmatprep.subr.bf16.mxu0 %v762
        %794 = vmatpush1.bf16.msra.mxu0 %v761
        %795 = vmatprep.subr.bf16.mxu0 %v764
        %796 = vmatpush1.bf16.msra.mxu0 %v763
        %797 = vmatprep.subr.bf16.mxu0 %v766
        %798 = vmatpush1.bf16.msra.mxu0 %v765
        %799 = vmatprep.subr.bf16.mxu0 %v768
        %800 = vmatpush1.bf16.msra.mxu0 %v767
        %801 = vmatprep.subr.bf16.mxu0 0
        %802 = vmatpush1.bf16.msra.mxu0 0
        %803 = vmatprep.subr.bf16.mxu0 0
        %804 = vmatpush1.bf16.msra.mxu0 0
        %805 = vmatprep.subr.bf16.mxu0 0
        %806 = vmatpush1.bf16.msra.mxu0 0
        %807 = vmatprep.subr.bf16.mxu0 0
        %808 = vmatpush1.bf16.msra.mxu0 0
        %809 = vmatprep.subr.bf16.mxu0 0
        %810 = vmatpush1.bf16.msra.mxu0 0
        %811 = vmatprep.subr.bf16.mxu0 0
        %812 = vmatpush1.bf16.msra.mxu0 0
        %813 = vmatprep.subr.bf16.mxu0 0
        %814 = vmatpush1.bf16.msra.mxu0 0
        %815 = vmatprep.subr.bf16.mxu0 0
        %816 = vmatpush1.bf16.msra.mxu0 0
        %817 = vmatprep.mubr.bf16.mxu0 0
        %818 = vmatmul.mubr.bf16.gmra.mrb[0].mxu0 %v697
        %v819 = vpop.f32.mrb[0].mxu0
        %v820 = vadd.f32 %v674, %v819
        %v821 = vpop.f32.mrb[0].mxu0
        %v822 = vadd.f32 %v678, %v821
        %v823 = vpop.f32.mrb[0].mxu0
        %v824 = vadd.f32 %v674, %v823
        %v825 = vpop.f32.mrb[0].mxu0
        %v826 = vadd.f32 %v678, %v825
        %827 = vmatprep.mubr.bf16.mxu0 0
        %828 = vmatmul.mubr.bf16.gmra.mrb[0].mxu0 %v698
        %v829 = vpop.f32.mrb[0].mxu0
        %v830 = vadd.f32 %v674, %v829
        %v831 = vpop.f32.mrb[0].mxu0
        %v832 = vadd.f32 %v678, %v831
        %v833 = vpop.f32.mrb[0].mxu0
        %v834 = vadd.f32 %v674, %v833
        %v835 = vpop.f32.mrb[0].mxu0
        %v836 = vadd.f32 %v678, %v835
        %837 = vmatprep.mubr.bf16.mxu0 0
        %838 = vmatmul.mubr.bf16.gmra.mrb[0].mxu0 %v699
        %v839 = vpop.f32.mrb[0].mxu0
        %v840 = vadd.f32 %v674, %v839
        %v841 = vpop.f32.mrb[0].mxu0
        %v842 = vadd.f32 %v678, %v841
        %v843 = vpop.f32.mrb[0].mxu0
        %v844 = vadd.f32 %v674, %v843
        %v845 = vpop.f32.mrb[0].mxu0
        %v846 = vadd.f32 %v678, %v845
        %847 = vmatprep.mubr.bf16.mxu0 0
        %848 = vmatmul.mubr.bf16.gmra.mrb[0].mxu0 %v700
        %v849 = vpop.f32.mrb[0].mxu0
        %v850 = vadd.f32 %v674, %v849
        %v851 = vpop.f32.mrb[0].mxu0
        %v852 = vadd.f32 %v678, %v851
        %v853 = vpop.f32.mrb[0].mxu0
        %v854 = vadd.f32 %v674, %v853
        %v855 = vpop.f32.mrb[0].mxu0
        %v856 = vadd.f32 %v678, %v855
        %857 = vdwg.mxu0
        %v866 = vunpack.c.l.b16 %v629
        %v867 = vunpack.c.l.b16 %v630
        %v868 = vunpack.c.l.b16 %v631
        %v869 = vunpack.c.l.b16 %v632
        %v870 = vunpack.c.l.b16 %v633
        %v871 = vunpack.c.l.b16 %v634
        %v872 = vunpack.c.l.b16 %v635
        %v873 = vunpack.c.l.b16 %v636
        %v874 = vpack.c.b16 %v867, %v866
        %v875 = vpack.c.b16 %v869, %v868
        %v876 = vpack.c.b16 %v871, %v870
        %v877 = vpack.c.b16 %v873, %v872
        %882 = vmatprep.subr.bf16.mxu0 %v754
        %883 = vmatpush1.bf16.msra.mxu0 %v753
        %884 = vmatprep.subr.bf16.mxu0 %v756
        %885 = vmatpush1.bf16.msra.mxu0 %v755
        %886 = vmatprep.subr.bf16.mxu0 %v758
        %887 = vmatpush1.bf16.msra.mxu0 %v757
        %888 = vmatprep.subr.bf16.mxu0 %v760
        %889 = vmatpush1.bf16.msra.mxu0 %v759
        %890 = vmatprep.subr.bf16.mxu0 %v762
        %891 = vmatpush1.bf16.msra.mxu0 %v761
        %892 = vmatprep.subr.bf16.mxu0 %v764
        %893 = vmatpush1.bf16.msra.mxu0 %v763
        %894 = vmatprep.subr.bf16.mxu0 %v766
        %895 = vmatpush1.bf16.msra.mxu0 %v765
        %896 = vmatprep.subr.bf16.mxu0 %v768
        %897 = vmatpush1.bf16.msra.mxu0 %v767
        %898 = vmatprep.subr.bf16.mxu0 0
        %899 = vmatpush1.bf16.msra.mxu0 0
        %900 = vmatprep.subr.bf16.mxu0 0
        %901 = vmatpush1.bf16.msra.mxu0 0
        %902 = vmatprep.subr.bf16.mxu0 0
        %903 = vmatpush1.bf16.msra.mxu0 0
        %904 = vmatprep.subr.bf16.mxu0 0
        %905 = vmatpush1.bf16.msra.mxu0 0
        %906 = vmatprep.subr.bf16.mxu0 0
        %907 = vmatpush1.bf16.msra.mxu0 0
        %908 = vmatprep.subr.bf16.mxu0 0
        %909 = vmatpush1.bf16.msra.mxu0 0
        %910 = vmatprep.subr.bf16.mxu0 0
        %911 = vmatpush1.bf16.msra.mxu0 0
        %912 = vmatprep.subr.bf16.mxu0 0
        %913 = vmatpush1.bf16.msra.mxu0 0
        %914 = vmatprep.mubr.bf16.mxu0 0
        %915 = vmatmul.mubr.bf16.gmra.mrb[0].mxu0 %v874
        %v916 = vpop.f32.mrb[0].mxu0
        %v917 = vadd.f32 %v674, %v916
        %v918 = vpop.f32.mrb[0].mxu0
        %v919 = vadd.f32 %v678, %v918
        %v920 = vpop.f32.mrb[0].mxu0
        %v921 = vadd.f32 %v674, %v920
        %v922 = vpop.f32.mrb[0].mxu0
        %v923 = vadd.f32 %v678, %v922
        %924 = vmatprep.mubr.bf16.mxu0 0
        %925 = vmatmul.mubr.bf16.gmra.mrb[0].mxu0 %v875
        %v926 = vpop.f32.mrb[0].mxu0
        %v927 = vadd.f32 %v674, %v926
        %v928 = vpop.f32.mrb[0].mxu0
        %v929 = vadd.f32 %v678, %v928
        %v930 = vpop.f32.mrb[0].mxu0
        %v931 = vadd.f32 %v674, %v930
        %v932 = vpop.f32.mrb[0].mxu0
        %v933 = vadd.f32 %v678, %v932
        %934 = vmatprep.mubr.bf16.mxu0 0
        %935 = vmatmul.mubr.bf16.gmra.mrb[0].mxu0 %v876
        %v936 = vpop.f32.mrb[0].mxu0
        %v937 = vadd.f32 %v674, %v936
        %v938 = vpop.f32.mrb[0].mxu0
        %v939 = vadd.f32 %v678, %v938
        %v940 = vpop.f32.mrb[0].mxu0
        %v941 = vadd.f32 %v674, %v940
        %v942 = vpop.f32.mrb[0].mxu0
        %v943 = vadd.f32 %v678, %v942
        %944 = vmatprep.mubr.bf16.mxu0 0
        %945 = vmatmul.mubr.bf16.gmra.mrb[0].mxu0 %v877
        %v946 = vpop.f32.mrb[0].mxu0
        %v947 = vadd.f32 %v674, %v946
        %v948 = vpop.f32.mrb[0].mxu0
        %v949 = vadd.f32 %v678, %v948
        %v950 = vpop.f32.mrb[0].mxu0
        %v951 = vadd.f32 %v674, %v950
        %v952 = vpop.f32.mrb[0].mxu0
        %v953 = vadd.f32 %v678, %v952
        %954 = vdwg.mxu0
        %v955 = vmax.f32 %v820, 0.0
        %v956 = vmax.f32 %v822, 0.0
        %v957 = vmax.f32 %v824, 0.0
        %v958 = vmax.f32 %v826, 0.0
        %v959 = vmax.f32 %v830, 0.0
        %v960 = vmax.f32 %v832, 0.0
        %v961 = vmax.f32 %v834, 0.0
        %v962 = vmax.f32 %v836, 0.0
        %v963 = vmax.f32 %v840, 0.0
        %v964 = vmax.f32 %v842, 0.0
        %v965 = vmax.f32 %v844, 0.0
        %v966 = vmax.f32 %v846, 0.0
        %v967 = vmax.f32 %v850, 0.0
        %v968 = vmax.f32 %v852, 0.0
        %v969 = vmax.f32 %v854, 0.0
        %v970 = vmax.f32 %v856, 0.0
        %v971 = vpack.c.bf16 %v957, %v955
        %v972 = vpack.c.bf16 %v958, %v956
        %v973 = vpack.c.bf16 %v961, %v959
        %v974 = vpack.c.bf16 %v962, %v960
        %v975 = vpack.c.bf16 %v965, %v963
        %v976 = vpack.c.bf16 %v966, %v964
        %v977 = vpack.c.bf16 %v969, %v967
        %v978 = vpack.c.bf16 %v970, %v968
        %v979 = vmax.f32 %v917, 0.0
        %v980 = vmax.f32 %v919, 0.0
        %v981 = vmax.f32 %v921, 0.0
        %v982 = vmax.f32 %v923, 0.0
        %v983 = vmax.f32 %v927, 0.0
        %v984 = vmax.f32 %v929, 0.0
        %v985 = vmax.f32 %v931, 0.0
        %v986 = vmax.f32 %v933, 0.0
        %v987 = vmax.f32 %v937, 0.0
        %v988 = vmax.f32 %v939, 0.0
        %v989 = vmax.f32 %v941, 0.0
        %v990 = vmax.f32 %v943, 0.0
        %v991 = vmax.f32 %v947, 0.0
        %v992 = vmax.f32 %v949, 0.0
        %v993 = vmax.f32 %v951, 0.0
        %v994 = vmax.f32 %v953, 0.0
        %v995 = vpack.c.bf16 %v981, %v979
        %v996 = vpack.c.bf16 %v982, %v980
        %v997 = vpack.c.bf16 %v985, %v983
        %v998 = vpack.c.bf16 %v986, %v984
        %v999 = vpack.c.bf16 %v989, %v987
        %v1000 = vpack.c.bf16 %v990, %v988
        %v1001 = vpack.c.bf16 %v993, %v991
        %v1002 = vpack.c.bf16 %v994, %v992
        %v1003 = vld [vmem:[#allocation4] sm:$0xff]
        %v1004 = vld [vmem:[#allocation4 + $0x8] sm:$0xff]
        %v1005 = vld [vmem:[#allocation4 + $0x10] sm:$0xff]
        %v1006 = vld [vmem:[#allocation4 + $0x18] sm:$0xff]
        %v1007 = vld [vmem:[#allocation4 + $0x20] sm:$0xff]
        %v1008 = vld [vmem:[#allocation4 + $0x28] sm:$0xff]
        %v1009 = vld [vmem:[#allocation4 + $0x30] sm:$0xff]
        %v1010 = vld [vmem:[#allocation4 + $0x38] sm:$0xff]
        %v1011 = vld [vmem:[#allocation4 + $0x40] sm:$0xff]
        %v1012 = vld [vmem:[#allocation4 + $0x48] sm:$0xff]
        %v1013 = vld [vmem:[#allocation4 + $0x50] sm:$0xff]
        %v1014 = vld [vmem:[#allocation4 + $0x58] sm:$0xff]
        %v1015 = vld [vmem:[#allocation4 + $0x60] sm:$0xff]
        %v1016 = vld [vmem:[#allocation4 + $0x68] sm:$0xff]
        %v1017 = vld [vmem:[#allocation4 + $0x70] sm:$0xff]
        %v1018 = vld [vmem:[#allocation4 + $0x78] sm:$0xff]
        %v1019 = vld [vmem:[#allocation4 + $0x80] sm:$0xff]
        %v1020 = vld [vmem:[#allocation4 + $0x88] sm:$0xff]
        %v1021 = vld [vmem:[#allocation4 + $0x90] sm:$0xff]
        %v1022 = vld [vmem:[#allocation4 + $0x98] sm:$0xff]
        %v1023 = vld [vmem:[#allocation4 + $0xa0] sm:$0xff]
        %v1024 = vld [vmem:[#allocation4 + $0xa8] sm:$0xff]
        %v1025 = vld [vmem:[#allocation4 + $0xb0] sm:$0xff]
        %v1026 = vld [vmem:[#allocation4 + $0xb8] sm:$0xff]
        %v1027 = vld [vmem:[#allocation4 + $0xc0] sm:$0xff]
        %v1028 = vld [vmem:[#allocation4 + $0xc8] sm:$0xff]
        %v1029 = vld [vmem:[#allocation4 + $0xd0] sm:$0xff]
        %v1030 = vld [vmem:[#allocation4 + $0xd8] sm:$0xff]
        %v1031 = vld [vmem:[#allocation4 + $0xe0] sm:$0xff]
        %v1032 = vld [vmem:[#allocation4 + $0xe8] sm:$0xff]
        %v1033 = vld [vmem:[#allocation4 + $0xf0] sm:$0xff]
        %v1034 = vld [vmem:[#allocation4 + $0xf8] sm:$0xff]
        %s1035 = scalar_lea.vmem [#allocation18], 1
        %v1036 = vld [vmem:[%s1035] ss:$8 sm:$0x3]
        %v1038 = vlaneseq
        %v1039 = vshrl.u32 %v1038, 7
        %v1040 = vsub.s32 0, %v1039
        %v1041 = vrot.slane %v1036, %v1040
        %v1042 = vlaneseq
        %v1043 = vshrl.u32 %v1042, 7
        %v1044 = vsub.s32 1, %v1043
        %v1045 = vrot.slane %v1036, %v1044
        %v1080 = vunpack.c.l.b16 %v1003
        %v1081 = vunpack.c.h.b16 %v1003
        %v1082 = vunpack.c.l.b16 %v1004
        %v1083 = vunpack.c.h.b16 %v1004
        %v1084 = vunpack.c.l.b16 %v1005
        %v1085 = vunpack.c.h.b16 %v1005
        %v1086 = vunpack.c.l.b16 %v1006
        %v1087 = vunpack.c.h.b16 %v1006
        %v1088 = vunpack.c.l.b16 %v1007
        %v1089 = vunpack.c.h.b16 %v1007
        %v1090 = vunpack.c.l.b16 %v1008
        %v1091 = vunpack.c.h.b16 %v1008
        %v1092 = vunpack.c.l.b16 %v1009
        %v1093 = vunpack.c.h.b16 %v1009
        %v1094 = vunpack.c.l.b16 %v1010
        %v1095 = vunpack.c.h.b16 %v1010
        %v1096 = vunpack.c.l.b16 %v1011
        %v1097 = vunpack.c.h.b16 %v1011
        %v1098 = vunpack.c.l.b16 %v1012
        %v1099 = vunpack.c.h.b16 %v1012
        %v1100 = vunpack.c.l.b16 %v1013
        %v1101 = vunpack.c.h.b16 %v1013
        %v1102 = vunpack.c.l.b16 %v1014
        %v1103 = vunpack.c.h.b16 %v1014
        %v1104 = vunpack.c.l.b16 %v1015
        %v1105 = vunpack.c.h.b16 %v1015
        %v1106 = vunpack.c.l.b16 %v1016
        %v1107 = vunpack.c.h.b16 %v1016
        %v1108 = vunpack.c.l.b16 %v1017
        %v1109 = vunpack.c.h.b16 %v1017
        %v1110 = vunpack.c.l.b16 %v1018
        %v1111 = vunpack.c.h.b16 %v1018
        %v1112 = vunpack.c.l.b16 %v1019
        %v1113 = vunpack.c.h.b16 %v1019
        %v1114 = vunpack.c.l.b16 %v1020
        %v1115 = vunpack.c.h.b16 %v1020
        %v1116 = vunpack.c.l.b16 %v1021
        %v1117 = vunpack.c.h.b16 %v1021
        %v1118 = vunpack.c.l.b16 %v1022
        %v1119 = vunpack.c.h.b16 %v1022
        %v1120 = vunpack.c.l.b16 %v1023
        %v1121 = vunpack.c.h.b16 %v1023
        %v1122 = vunpack.c.l.b16 %v1024
        %v1123 = vunpack.c.h.b16 %v1024
        %v1124 = vunpack.c.l.b16 %v1025
        %v1125 = vunpack.c.h.b16 %v1025
        %v1126 = vunpack.c.l.b16 %v1026
        %v1127 = vunpack.c.h.b16 %v1026
        %v1128 = vunpack.c.l.b16 %v1027
        %v1129 = vunpack.c.h.b16 %v1027
        %v1130 = vunpack.c.l.b16 %v1028
        %v1131 = vunpack.c.h.b16 %v1028
        %v1132 = vunpack.c.l.b16 %v1029
        %v1133 = vunpack.c.h.b16 %v1029
        %v1134 = vunpack.c.l.b16 %v1030
        %v1135 = vunpack.c.h.b16 %v1030
        %v1136 = vunpack.c.l.b16 %v1031
        %v1137 = vunpack.c.h.b16 %v1031
        %v1138 = vunpack.c.l.b16 %v1032
        %v1139 = vunpack.c.h.b16 %v1032
        %v1140 = vunpack.c.l.b16 %v1033
        %v1141 = vunpack.c.h.b16 %v1033
        %v1142 = vunpack.c.l.b16 %v1034
        %v1143 = vunpack.c.h.b16 %v1034
        %v1144 = vpack.c.b16 %v1082, %v1080
        %v1145 = vpack.c.b16 %v1083, %v1081
        %v1146 = vpack.c.b16 %v1086, %v1084
        %v1147 = vpack.c.b16 %v1087, %v1085
        %v1148 = vpack.c.b16 %v1090, %v1088
        %v1149 = vpack.c.b16 %v1091, %v1089
        %v1150 = vpack.c.b16 %v1094, %v1092
        %v1151 = vpack.c.b16 %v1095, %v1093
        %v1152 = vpack.c.b16 %v1098, %v1096
        %v1153 = vpack.c.b16 %v1099, %v1097
        %v1154 = vpack.c.b16 %v1102, %v1100
        %v1155 = vpack.c.b16 %v1103, %v1101
        %v1156 = vpack.c.b16 %v1106, %v1104
        %v1157 = vpack.c.b16 %v1107, %v1105
        %v1158 = vpack.c.b16 %v1110, %v1108
        %v1159 = vpack.c.b16 %v1111, %v1109
        %v1160 = vpack.c.b16 %v1114, %v1112
        %v1161 = vpack.c.b16 %v1115, %v1113
        %v1162 = vpack.c.b16 %v1118, %v1116
        %v1163 = vpack.c.b16 %v1119, %v1117
        %v1164 = vpack.c.b16 %v1122, %v1120
        %v1165 = vpack.c.b16 %v1123, %v1121
        %v1166 = vpack.c.b16 %v1126, %v1124
        %v1167 = vpack.c.b16 %v1127, %v1125
        %v1168 = vpack.c.b16 %v1130, %v1128
        %v1169 = vpack.c.b16 %v1131, %v1129
        %v1170 = vpack.c.b16 %v1134, %v1132
        %v1171 = vpack.c.b16 %v1135, %v1133
        %v1172 = vpack.c.b16 %v1138, %v1136
        %v1173 = vpack.c.b16 %v1139, %v1137
        %v1174 = vpack.c.b16 %v1142, %v1140
        %v1175 = vpack.c.b16 %v1143, %v1141
        %1208 = vmatprep.subr.bf16.mxu0 %v1145
        %1209 = vmatpush1.bf16.msra.mxu0 %v1144
        %1210 = vmatprep.subr.bf16.mxu0 %v1147
        %1211 = vmatpush1.bf16.msra.mxu0 %v1146
        %1212 = vmatprep.subr.bf16.mxu0 %v1149
        %1213 = vmatpush1.bf16.msra.mxu0 %v1148
        %1214 = vmatprep.subr.bf16.mxu0 %v1151
        %1215 = vmatpush1.bf16.msra.mxu0 %v1150
        %1216 = vmatprep.subr.bf16.mxu0 %v1153
        %1217 = vmatpush1.bf16.msra.mxu0 %v1152
        %1218 = vmatprep.subr.bf16.mxu0 %v1155
        %1219 = vmatpush1.bf16.msra.mxu0 %v1154
        %1220 = vmatprep.subr.bf16.mxu0 %v1157
        %1221 = vmatpush1.bf16.msra.mxu0 %v1156
        %1222 = vmatprep.subr.bf16.mxu0 %v1159
        %1223 = vmatpush1.bf16.msra.mxu0 %v1158
        %1224 = vmatprep.subr.bf16.mxu0 %v1161
        %1225 = vmatpush1.bf16.msra.mxu0 %v1160
        %1226 = vmatprep.subr.bf16.mxu0 %v1163
        %1227 = vmatpush1.bf16.msra.mxu0 %v1162
        %1228 = vmatprep.subr.bf16.mxu0 %v1165
        %1229 = vmatpush1.bf16.msra.mxu0 %v1164
        %1230 = vmatprep.subr.bf16.mxu0 %v1167
        %1231 = vmatpush1.bf16.msra.mxu0 %v1166
        %1232 = vmatprep.subr.bf16.mxu0 %v1169
        %1233 = vmatpush1.bf16.msra.mxu0 %v1168
        %1234 = vmatprep.subr.bf16.mxu0 %v1171
        %1235 = vmatpush1.bf16.msra.mxu0 %v1170
        %1236 = vmatprep.subr.bf16.mxu0 %v1173
        %1237 = vmatpush1.bf16.msra.mxu0 %v1172
        %1238 = vmatprep.subr.bf16.mxu0 %v1175
        %1239 = vmatpush1.bf16.msra.mxu0 %v1174
        %1240 = vmatprep.mubr.bf16.mxu0 %v972
        %1241 = vmatmul.mubr.bf16.gmra.mrb[0].mxu0 %v971
        %v1242 = vpop.f32.mrb[0].mxu0
        %v1243 = vadd.f32 %v1041, %v1242
        %v1244 = vpop.f32.mrb[0].mxu0
        %v1245 = vadd.f32 %v1045, %v1244
        %v1246 = vpop.f32.mrb[0].mxu0
        %v1247 = vadd.f32 %v1041, %v1246
        %v1248 = vpop.f32.mrb[0].mxu0
        %v1249 = vadd.f32 %v1045, %v1248
        %1250 = vmatprep.mubr.bf16.mxu0 %v974
        %1251 = vmatmul.mubr.bf16.gmra.mrb[0].mxu0 %v973
        %v1252 = vpop.f32.mrb[0].mxu0
        %v1253 = vadd.f32 %v1041, %v1252
        %v1254 = vpop.f32.mrb[0].mxu0
        %v1255 = vadd.f32 %v1045, %v1254
        %v1256 = vpop.f32.mrb[0].mxu0
        %v1257 = vadd.f32 %v1041, %v1256
        %v1258 = vpop.f32.mrb[0].mxu0
        %v1259 = vadd.f32 %v1045, %v1258
        %1260 = vmatprep.mubr.bf16.mxu0 %v976
        %1261 = vmatmul.mubr.bf16.gmra.mrb[0].mxu0 %v975
        %v1262 = vpop.f32.mrb[0].mxu0
        %v1263 = vadd.f32 %v1041, %v1262
        %v1264 = vpop.f32.mrb[0].mxu0
        %v1265 = vadd.f32 %v1045, %v1264
        %v1266 = vpop.f32.mrb[0].mxu0
        %v1267 = vadd.f32 %v1041, %v1266
        %v1268 = vpop.f32.mrb[0].mxu0
        %v1269 = vadd.f32 %v1045, %v1268
        %1270 = vmatprep.mubr.bf16.mxu0 %v978
        %1271 = vmatmul.mubr.bf16.gmra.mrb[0].mxu0 %v977
        %v1272 = vpop.f32.mrb[0].mxu0
        %v1273 = vadd.f32 %v1041, %v1272
        %v1274 = vpop.f32.mrb[0].mxu0
        %v1275 = vadd.f32 %v1045, %v1274
        %v1276 = vpop.f32.mrb[0].mxu0
        %v1277 = vadd.f32 %v1041, %v1276
        %v1278 = vpop.f32.mrb[0].mxu0
        %v1279 = vadd.f32 %v1045, %v1278
        %1280 = vdwg.mxu0
        %1281 = vmatprep.subr.bf16.mxu0 %v1145
        %1282 = vmatpush1.bf16.msra.mxu0 %v1144
        %1283 = vmatprep.subr.bf16.mxu0 %v1147
        %1284 = vmatpush1.bf16.msra.mxu0 %v1146
        %1285 = vmatprep.subr.bf16.mxu0 %v1149
        %1286 = vmatpush1.bf16.msra.mxu0 %v1148
        %1287 = vmatprep.subr.bf16.mxu0 %v1151
        %1288 = vmatpush1.bf16.msra.mxu0 %v1150
        %1289 = vmatprep.subr.bf16.mxu0 %v1153
        %1290 = vmatpush1.bf16.msra.mxu0 %v1152
        %1291 = vmatprep.subr.bf16.mxu0 %v1155
        %1292 = vmatpush1.bf16.msra.mxu0 %v1154
        %1293 = vmatprep.subr.bf16.mxu0 %v1157
        %1294 = vmatpush1.bf16.msra.mxu0 %v1156
        %1295 = vmatprep.subr.bf16.mxu0 %v1159
        %1296 = vmatpush1.bf16.msra.mxu0 %v1158
        %1297 = vmatprep.subr.bf16.mxu0 %v1161
        %1298 = vmatpush1.bf16.msra.mxu0 %v1160
        %1299 = vmatprep.subr.bf16.mxu0 %v1163
        %1300 = vmatpush1.bf16.msra.mxu0 %v1162
        %1301 = vmatprep.subr.bf16.mxu0 %v1165
        %1302 = vmatpush1.bf16.msra.mxu0 %v1164
        %1303 = vmatprep.subr.bf16.mxu0 %v1167
        %1304 = vmatpush1.bf16.msra.mxu0 %v1166
        %1305 = vmatprep.subr.bf16.mxu0 %v1169
        %1306 = vmatpush1.bf16.msra.mxu0 %v1168
        %1307 = vmatprep.subr.bf16.mxu0 %v1171
        %1308 = vmatpush1.bf16.msra.mxu0 %v1170
        %1309 = vmatprep.subr.bf16.mxu0 %v1173
        %1310 = vmatpush1.bf16.msra.mxu0 %v1172
        %1311 = vmatprep.subr.bf16.mxu0 %v1175
        %1312 = vmatpush1.bf16.msra.mxu0 %v1174
        %1313 = vmatprep.mubr.bf16.mxu0 %v996
        %1314 = vmatmul.mubr.bf16.gmra.mrb[0].mxu0 %v995
        %v1315 = vpop.f32.mrb[0].mxu0
        %v1316 = vadd.f32 %v1041, %v1315
        %v1317 = vpop.f32.mrb[0].mxu0
        %v1318 = vadd.f32 %v1045, %v1317
        %v1319 = vpop.f32.mrb[0].mxu0
        %v1320 = vadd.f32 %v1041, %v1319
        %v1321 = vpop.f32.mrb[0].mxu0
        %v1322 = vadd.f32 %v1045, %v1321
        %1323 = vmatprep.mubr.bf16.mxu0 %v998
        %1324 = vmatmul.mubr.bf16.gmra.mrb[0].mxu0 %v997
        %v1325 = vpop.f32.mrb[0].mxu0
        %v1326 = vadd.f32 %v1041, %v1325
        %v1327 = vpop.f32.mrb[0].mxu0
        %v1328 = vadd.f32 %v1045, %v1327
        %v1329 = vpop.f32.mrb[0].mxu0
        %v1330 = vadd.f32 %v1041, %v1329
        %v1331 = vpop.f32.mrb[0].mxu0
        %v1332 = vadd.f32 %v1045, %v1331
        %1333 = vmatprep.mubr.bf16.mxu0 %v1000
        %1334 = vmatmul.mubr.bf16.gmra.mrb[0].mxu0 %v999
        %v1335 = vpop.f32.mrb[0].mxu0
        %v1336 = vadd.f32 %v1041, %v1335
        %v1337 = vpop.f32.mrb[0].mxu0
        %v1338 = vadd.f32 %v1045, %v1337
        %v1339 = vpop.f32.mrb[0].mxu0
        %v1340 = vadd.f32 %v1041, %v1339
        %v1341 = vpop.f32.mrb[0].mxu0
        %v1342 = vadd.f32 %v1045, %v1341
        %1343 = vmatprep.mubr.bf16.mxu0 %v1002
        %1344 = vmatmul.mubr.bf16.gmra.mrb[0].mxu0 %v1001
        %v1345 = vpop.f32.mrb[0].mxu0
        %v1346 = vadd.f32 %v1041, %v1345
        %v1347 = vpop.f32.mrb[0].mxu0
        %v1348 = vadd.f32 %v1045, %v1347
        %v1349 = vpop.f32.mrb[0].mxu0
        %v1350 = vadd.f32 %v1041, %v1349
        %v1351 = vpop.f32.mrb[0].mxu0
        %v1352 = vadd.f32 %v1045, %v1351
        %1353 = vdwg.mxu0
        %v1354 = vmax.f32 %v1243, 0.0
        %v1355 = vmax.f32 %v1245, 0.0
        %v1356 = vmax.f32 %v1247, 0.0
        %v1357 = vmax.f32 %v1249, 0.0
        %v1358 = vmax.f32 %v1253, 0.0
        %v1359 = vmax.f32 %v1255, 0.0
        %v1360 = vmax.f32 %v1257, 0.0
        %v1361 = vmax.f32 %v1259, 0.0
        %v1362 = vmax.f32 %v1263, 0.0
        %v1363 = vmax.f32 %v1265, 0.0
        %v1364 = vmax.f32 %v1267, 0.0
        %v1365 = vmax.f32 %v1269, 0.0
        %v1366 = vmax.f32 %v1273, 0.0
        %v1367 = vmax.f32 %v1275, 0.0
        %v1368 = vmax.f32 %v1277, 0.0
        %v1369 = vmax.f32 %v1279, 0.0
        %v1370 = vpack.c.bf16 %v1356, %v1354
        %v1371 = vpack.c.bf16 %v1357, %v1355
        %v1372 = vpack.c.bf16 %v1360, %v1358
        %v1373 = vpack.c.bf16 %v1361, %v1359
        %v1374 = vpack.c.bf16 %v1364, %v1362
        %v1375 = vpack.c.bf16 %v1365, %v1363
        %v1376 = vpack.c.bf16 %v1368, %v1366
        %v1377 = vpack.c.bf16 %v1369, %v1367
        %v1378 = vmax.f32 %v1316, 0.0
        %v1379 = vmax.f32 %v1318, 0.0
        %v1380 = vmax.f32 %v1320, 0.0
        %v1381 = vmax.f32 %v1322, 0.0
        %v1382 = vmax.f32 %v1326, 0.0
        %v1383 = vmax.f32 %v1328, 0.0
        %v1384 = vmax.f32 %v1330, 0.0
        %v1385 = vmax.f32 %v1332, 0.0
        %v1386 = vmax.f32 %v1336, 0.0
        %v1387 = vmax.f32 %v1338, 0.0
        %v1388 = vmax.f32 %v1340, 0.0
        %v1389 = vmax.f32 %v1342, 0.0
        %v1390 = vmax.f32 %v1346, 0.0
        %v1391 = vmax.f32 %v1348, 0.0
        %v1392 = vmax.f32 %v1350, 0.0
        %v1393 = vmax.f32 %v1352, 0.0
        %v1394 = vpack.c.bf16 %v1380, %v1378
        %v1395 = vpack.c.bf16 %v1381, %v1379
        %v1396 = vpack.c.bf16 %v1384, %v1382
        %v1397 = vpack.c.bf16 %v1385, %v1383
        %v1398 = vpack.c.bf16 %v1388, %v1386
        %v1399 = vpack.c.bf16 %v1389, %v1387
        %v1400 = vpack.c.bf16 %v1392, %v1390
        %v1401 = vpack.c.bf16 %v1393, %v1391
        %v1402 = vld [vmem:[#allocation6] sm:$0xff]
        %v1403 = vld [vmem:[#allocation6 + $0x8] sm:$0xff]
        %v1404 = vld [vmem:[#allocation6 + $0x10] sm:$0xff]
        %v1405 = vld [vmem:[#allocation6 + $0x18] sm:$0xff]
        %v1406 = vld [vmem:[#allocation6 + $0x20] sm:$0xff]
        %v1407 = vld [vmem:[#allocation6 + $0x28] sm:$0xff]
        %v1408 = vld [vmem:[#allocation6 + $0x30] sm:$0xff]
        %v1409 = vld [vmem:[#allocation6 + $0x38] sm:$0xff]
        %v1410 = vld [vmem:[#allocation6 + $0x40] sm:$0xff]
        %v1411 = vld [vmem:[#allocation6 + $0x48] sm:$0xff]
        %v1412 = vld [vmem:[#allocation6 + $0x50] sm:$0xff]
        %v1413 = vld [vmem:[#allocation6 + $0x58] sm:$0xff]
        %v1414 = vld [vmem:[#allocation6 + $0x60] sm:$0xff]
        %v1415 = vld [vmem:[#allocation6 + $0x68] sm:$0xff]
        %v1416 = vld [vmem:[#allocation6 + $0x70] sm:$0xff]
        %v1417 = vld [vmem:[#allocation6 + $0x78] sm:$0xff]
        %v1418 = vld [vmem:[#allocation6 + $0x80] sm:$0xff]
        %v1419 = vld [vmem:[#allocation6 + $0x88] sm:$0xff]
        %v1420 = vld [vmem:[#allocation6 + $0x90] sm:$0xff]
        %v1421 = vld [vmem:[#allocation6 + $0x98] sm:$0xff]
        %v1422 = vld [vmem:[#allocation6 + $0xa0] sm:$0xff]
        %v1423 = vld [vmem:[#allocation6 + $0xa8] sm:$0xff]
        %v1424 = vld [vmem:[#allocation6 + $0xb0] sm:$0xff]
        %v1425 = vld [vmem:[#allocation6 + $0xb8] sm:$0xff]
        %v1426 = vld [vmem:[#allocation6 + $0xc0] sm:$0xff]
        %v1427 = vld [vmem:[#allocation6 + $0xc8] sm:$0xff]
        %v1428 = vld [vmem:[#allocation6 + $0xd0] sm:$0xff]
        %v1429 = vld [vmem:[#allocation6 + $0xd8] sm:$0xff]
        %v1430 = vld [vmem:[#allocation6 + $0xe0] sm:$0xff]
        %v1431 = vld [vmem:[#allocation6 + $0xe8] sm:$0xff]
        %v1432 = vld [vmem:[#allocation6 + $0xf0] sm:$0xff]
        %v1433 = vld [vmem:[#allocation6 + $0xf8] sm:$0xff]
        %s1434 = scalar_lea.vmem [#allocation18], 2
        %v1435 = vld [vmem:[%s1434] ss:$8 sm:$0x3]
        %v1437 = vlaneseq
        %v1438 = vshrl.u32 %v1437, 7
        %v1439 = vsub.s32 0, %v1438
        %v1440 = vrot.slane %v1435, %v1439
        %v1441 = vlaneseq
        %v1442 = vshrl.u32 %v1441, 7
        %v1443 = vsub.s32 1, %v1442
        %v1444 = vrot.slane %v1435, %v1443
        %v1479 = vunpack.c.l.b16 %v1402
        %v1480 = vunpack.c.h.b16 %v1402
        %v1481 = vunpack.c.l.b16 %v1403
        %v1482 = vunpack.c.h.b16 %v1403
        %v1483 = vunpack.c.l.b16 %v1404
        %v1484 = vunpack.c.h.b16 %v1404
        %v1485 = vunpack.c.l.b16 %v1405
        %v1486 = vunpack.c.h.b16 %v1405
        %v1487 = vunpack.c.l.b16 %v1406
        %v1488 = vunpack.c.h.b16 %v1406
        %v1489 = vunpack.c.l.b16 %v1407
        %v1490 = vunpack.c.h.b16 %v1407
        %v1491 = vunpack.c.l.b16 %v1408
        %v1492 = vunpack.c.h.b16 %v1408
        %v1493 = vunpack.c.l.b16 %v1409
        %v1494 = vunpack.c.h.b16 %v1409
        %v1495 = vunpack.c.l.b16 %v1410
        %v1496 = vunpack.c.h.b16 %v1410
        %v1497 = vunpack.c.l.b16 %v1411
        %v1498 = vunpack.c.h.b16 %v1411
        %v1499 = vunpack.c.l.b16 %v1412
        %v1500 = vunpack.c.h.b16 %v1412
        %v1501 = vunpack.c.l.b16 %v1413
        %v1502 = vunpack.c.h.b16 %v1413
        %v1503 = vunpack.c.l.b16 %v1414
        %v1504 = vunpack.c.h.b16 %v1414
        %v1505 = vunpack.c.l.b16 %v1415
        %v1506 = vunpack.c.h.b16 %v1415
        %v1507 = vunpack.c.l.b16 %v1416
        %v1508 = vunpack.c.h.b16 %v1416
        %v1509 = vunpack.c.l.b16 %v1417
        %v1510 = vunpack.c.h.b16 %v1417
        %v1511 = vunpack.c.l.b16 %v1418
        %v1512 = vunpack.c.h.b16 %v1418
        %v1513 = vunpack.c.l.b16 %v1419
        %v1514 = vunpack.c.h.b16 %v1419
        %v1515 = vunpack.c.l.b16 %v1420
        %v1516 = vunpack.c.h.b16 %v1420
        %v1517 = vunpack.c.l.b16 %v1421
        %v1518 = vunpack.c.h.b16 %v1421
        %v1519 = vunpack.c.l.b16 %v1422
        %v1520 = vunpack.c.h.b16 %v1422
        %v1521 = vunpack.c.l.b16 %v1423
        %v1522 = vunpack.c.h.b16 %v1423
        %v1523 = vunpack.c.l.b16 %v1424
        %v1524 = vunpack.c.h.b16 %v1424
        %v1525 = vunpack.c.l.b16 %v1425
        %v1526 = vunpack.c.h.b16 %v1425
        %v1527 = vunpack.c.l.b16 %v1426
        %v1528 = vunpack.c.h.b16 %v1426
        %v1529 = vunpack.c.l.b16 %v1427
        %v1530 = vunpack.c.h.b16 %v1427
        %v1531 = vunpack.c.l.b16 %v1428
        %v1532 = vunpack.c.h.b16 %v1428
        %v1533 = vunpack.c.l.b16 %v1429
        %v1534 = vunpack.c.h.b16 %v1429
        %v1535 = vunpack.c.l.b16 %v1430
        %v1536 = vunpack.c.h.b16 %v1430
        %v1537 = vunpack.c.l.b16 %v1431
        %v1538 = vunpack.c.h.b16 %v1431
        %v1539 = vunpack.c.l.b16 %v1432
        %v1540 = vunpack.c.h.b16 %v1432
        %v1541 = vunpack.c.l.b16 %v1433
        %v1542 = vunpack.c.h.b16 %v1433
        %v1543 = vpack.c.b16 %v1481, %v1479
        %v1544 = vpack.c.b16 %v1482, %v1480
        %v1545 = vpack.c.b16 %v1485, %v1483
        %v1546 = vpack.c.b16 %v1486, %v1484
        %v1547 = vpack.c.b16 %v1489, %v1487
        %v1548 = vpack.c.b16 %v1490, %v1488
        %v1549 = vpack.c.b16 %v1493, %v1491
        %v1550 = vpack.c.b16 %v1494, %v1492
        %v1551 = vpack.c.b16 %v1497, %v1495
        %v1552 = vpack.c.b16 %v1498, %v1496
        %v1553 = vpack.c.b16 %v1501, %v1499
        %v1554 = vpack.c.b16 %v1502, %v1500
        %v1555 = vpack.c.b16 %v1505, %v1503
        %v1556 = vpack.c.b16 %v1506, %v1504
        %v1557 = vpack.c.b16 %v1509, %v1507
        %v1558 = vpack.c.b16 %v1510, %v1508
        %v1559 = vpack.c.b16 %v1513, %v1511
        %v1560 = vpack.c.b16 %v1514, %v1512
        %v1561 = vpack.c.b16 %v1517, %v1515
        %v1562 = vpack.c.b16 %v1518, %v1516
        %v1563 = vpack.c.b16 %v1521, %v1519
        %v1564 = vpack.c.b16 %v1522, %v1520
        %v1565 = vpack.c.b16 %v1525, %v1523
        %v1566 = vpack.c.b16 %v1526, %v1524
        %v1567 = vpack.c.b16 %v1529, %v1527
        %v1568 = vpack.c.b16 %v1530, %v1528
        %v1569 = vpack.c.b16 %v1533, %v1531
        %v1570 = vpack.c.b16 %v1534, %v1532
        %v1571 = vpack.c.b16 %v1537, %v1535
        %v1572 = vpack.c.b16 %v1538, %v1536
        %v1573 = vpack.c.b16 %v1541, %v1539
        %v1574 = vpack.c.b16 %v1542, %v1540
        %1607 = vmatprep.subr.bf16.mxu0 %v1544
        %1608 = vmatpush1.bf16.msra.mxu0 %v1543
        %1609 = vmatprep.subr.bf16.mxu0 %v1546
        %1610 = vmatpush1.bf16.msra.mxu0 %v1545
        %1611 = vmatprep.subr.bf16.mxu0 %v1548
        %1612 = vmatpush1.bf16.msra.mxu0 %v1547
        %1613 = vmatprep.subr.bf16.mxu0 %v1550
        %1614 = vmatpush1.bf16.msra.mxu0 %v1549
        %1615 = vmatprep.subr.bf16.mxu0 %v1552
        %1616 = vmatpush1.bf16.msra.mxu0 %v1551
        %1617 = vmatprep.subr.bf16.mxu0 %v1554
        %1618 = vmatpush1.bf16.msra.mxu0 %v1553
        %1619 = vmatprep.subr.bf16.mxu0 %v1556
        %1620 = vmatpush1.bf16.msra.mxu0 %v1555
        %1621 = vmatprep.subr.bf16.mxu0 %v1558
        %1622 = vmatpush1.bf16.msra.mxu0 %v1557
        %1623 = vmatprep.subr.bf16.mxu0 %v1560
        %1624 = vmatpush1.bf16.msra.mxu0 %v1559
        %1625 = vmatprep.subr.bf16.mxu0 %v1562
        %1626 = vmatpush1.bf16.msra.mxu0 %v1561
        %1627 = vmatprep.subr.bf16.mxu0 %v1564
        %1628 = vmatpush1.bf16.msra.mxu0 %v1563
        %1629 = vmatprep.subr.bf16.mxu0 %v1566
        %1630 = vmatpush1.bf16.msra.mxu0 %v1565
        %1631 = vmatprep.subr.bf16.mxu0 %v1568
        %1632 = vmatpush1.bf16.msra.mxu0 %v1567
        %1633 = vmatprep.subr.bf16.mxu0 %v1570
        %1634 = vmatpush1.bf16.msra.mxu0 %v1569
        %1635 = vmatprep.subr.bf16.mxu0 %v1572
        %1636 = vmatpush1.bf16.msra.mxu0 %v1571
        %1637 = vmatprep.subr.bf16.mxu0 %v1574
        %1638 = vmatpush1.bf16.msra.mxu0 %v1573
        %1639 = vmatprep.mubr.bf16.mxu0 %v1371
        %1640 = vmatmul.mubr.bf16.gmra.mrb[0].mxu0 %v1370
        %v1641 = vpop.f32.mrb[0].mxu0
        %v1642 = vadd.f32 %v1440, %v1641
        %v1643 = vpop.f32.mrb[0].mxu0
        %v1644 = vadd.f32 %v1444, %v1643
        %v1645 = vpop.f32.mrb[0].mxu0
        %v1646 = vadd.f32 %v1440, %v1645
        %v1647 = vpop.f32.mrb[0].mxu0
        %v1648 = vadd.f32 %v1444, %v1647
        %1649 = vmatprep.mubr.bf16.mxu0 %v1373
        %1650 = vmatmul.mubr.bf16.gmra.mrb[0].mxu0 %v1372
        %v1651 = vpop.f32.mrb[0].mxu0
        %v1652 = vadd.f32 %v1440, %v1651
        %v1653 = vpop.f32.mrb[0].mxu0
        %v1654 = vadd.f32 %v1444, %v1653
        %v1655 = vpop.f32.mrb[0].mxu0
        %v1656 = vadd.f32 %v1440, %v1655
        %v1657 = vpop.f32.mrb[0].mxu0
        %v1658 = vadd.f32 %v1444, %v1657
        %1659 = vmatprep.mubr.bf16.mxu0 %v1375
        %1660 = vmatmul.mubr.bf16.gmra.mrb[0].mxu0 %v1374
        %v1661 = vpop.f32.mrb[0].mxu0
        %v1662 = vadd.f32 %v1440, %v1661
        %v1663 = vpop.f32.mrb[0].mxu0
        %v1664 = vadd.f32 %v1444, %v1663
        %v1665 = vpop.f32.mrb[0].mxu0
        %v1666 = vadd.f32 %v1440, %v1665
        %v1667 = vpop.f32.mrb[0].mxu0
        %v1668 = vadd.f32 %v1444, %v1667
        %1669 = vmatprep.mubr.bf16.mxu0 %v1377
        %1670 = vmatmul.mubr.bf16.gmra.mrb[0].mxu0 %v1376
        %v1671 = vpop.f32.mrb[0].mxu0
        %v1672 = vadd.f32 %v1440, %v1671
        %v1673 = vpop.f32.mrb[0].mxu0
        %v1674 = vadd.f32 %v1444, %v1673
        %v1675 = vpop.f32.mrb[0].mxu0
        %v1676 = vadd.f32 %v1440, %v1675
        %v1677 = vpop.f32.mrb[0].mxu0
        %v1678 = vadd.f32 %v1444, %v1677
        %1679 = vdwg.mxu0
        %1680 = vmatprep.subr.bf16.mxu0 %v1544
        %1681 = vmatpush1.bf16.msra.mxu0 %v1543
        %1682 = vmatprep.subr.bf16.mxu0 %v1546
        %1683 = vmatpush1.bf16.msra.mxu0 %v1545
        %1684 = vmatprep.subr.bf16.mxu0 %v1548
        %1685 = vmatpush1.bf16.msra.mxu0 %v1547
        %1686 = vmatprep.subr.bf16.mxu0 %v1550
        %1687 = vmatpush1.bf16.msra.mxu0 %v1549
        %1688 = vmatprep.subr.bf16.mxu0 %v1552
        %1689 = vmatpush1.bf16.msra.mxu0 %v1551
        %1690 = vmatprep.subr.bf16.mxu0 %v1554
        %1691 = vmatpush1.bf16.msra.mxu0 %v1553
        %1692 = vmatprep.subr.bf16.mxu0 %v1556
        %1693 = vmatpush1.bf16.msra.mxu0 %v1555
        %1694 = vmatprep.subr.bf16.mxu0 %v1558
        %1695 = vmatpush1.bf16.msra.mxu0 %v1557
        %1696 = vmatprep.subr.bf16.mxu0 %v1560
        %1697 = vmatpush1.bf16.msra.mxu0 %v1559
        %1698 = vmatprep.subr.bf16.mxu0 %v1562
        %1699 = vmatpush1.bf16.msra.mxu0 %v1561
        %1700 = vmatprep.subr.bf16.mxu0 %v1564
        %1701 = vmatpush1.bf16.msra.mxu0 %v1563
        %1702 = vmatprep.subr.bf16.mxu0 %v1566
        %1703 = vmatpush1.bf16.msra.mxu0 %v1565
        %1704 = vmatprep.subr.bf16.mxu0 %v1568
        %1705 = vmatpush1.bf16.msra.mxu0 %v1567
        %1706 = vmatprep.subr.bf16.mxu0 %v1570
        %1707 = vmatpush1.bf16.msra.mxu0 %v1569
        %1708 = vmatprep.subr.bf16.mxu0 %v1572
        %1709 = vmatpush1.bf16.msra.mxu0 %v1571
        %1710 = vmatprep.subr.bf16.mxu0 %v1574
        %1711 = vmatpush1.bf16.msra.mxu0 %v1573
        %1712 = vmatprep.mubr.bf16.mxu0 %v1395
        %1713 = vmatmul.mubr.bf16.gmra.mrb[0].mxu0 %v1394
        %v1714 = vpop.f32.mrb[0].mxu0
        %v1715 = vadd.f32 %v1440, %v1714
        %v1716 = vpop.f32.mrb[0].mxu0
        %v1717 = vadd.f32 %v1444, %v1716
        %v1718 = vpop.f32.mrb[0].mxu0
        %v1719 = vadd.f32 %v1440, %v1718
        %v1720 = vpop.f32.mrb[0].mxu0
        %v1721 = vadd.f32 %v1444, %v1720
        %1722 = vmatprep.mubr.bf16.mxu0 %v1397
        %1723 = vmatmul.mubr.bf16.gmra.mrb[0].mxu0 %v1396
        %v1724 = vpop.f32.mrb[0].mxu0
        %v1725 = vadd.f32 %v1440, %v1724
        %v1726 = vpop.f32.mrb[0].mxu0
        %v1727 = vadd.f32 %v1444, %v1726
        %v1728 = vpop.f32.mrb[0].mxu0
        %v1729 = vadd.f32 %v1440, %v1728
        %v1730 = vpop.f32.mrb[0].mxu0
        %v1731 = vadd.f32 %v1444, %v1730
        %1732 = vmatprep.mubr.bf16.mxu0 %v1399
        %1733 = vmatmul.mubr.bf16.gmra.mrb[0].mxu0 %v1398
        %v1734 = vpop.f32.mrb[0].mxu0
        %v1735 = vadd.f32 %v1440, %v1734
        %v1736 = vpop.f32.mrb[0].mxu0
        %v1737 = vadd.f32 %v1444, %v1736
        %v1738 = vpop.f32.mrb[0].mxu0
        %v1739 = vadd.f32 %v1440, %v1738
        %v1740 = vpop.f32.mrb[0].mxu0
        %v1741 = vadd.f32 %v1444, %v1740
        %1742 = vmatprep.mubr.bf16.mxu0 %v1401
        %1743 = vmatmul.mubr.bf16.gmra.mrb[0].mxu0 %v1400
        %v1744 = vpop.f32.mrb[0].mxu0
        %v1745 = vadd.f32 %v1440, %v1744
        %v1746 = vpop.f32.mrb[0].mxu0
        %v1747 = vadd.f32 %v1444, %v1746
        %v1748 = vpop.f32.mrb[0].mxu0
        %v1749 = vadd.f32 %v1440, %v1748
        %v1750 = vpop.f32.mrb[0].mxu0
        %v1751 = vadd.f32 %v1444, %v1750
        %1752 = vdwg.mxu0
        %v1753 = vmax.f32 %v1642, 0.0
        %v1754 = vmax.f32 %v1644, 0.0
        %v1755 = vmax.f32 %v1646, 0.0
        %v1756 = vmax.f32 %v1648, 0.0
        %v1757 = vmax.f32 %v1652, 0.0
        %v1758 = vmax.f32 %v1654, 0.0
        %v1759 = vmax.f32 %v1656, 0.0
        %v1760 = vmax.f32 %v1658, 0.0
        %v1761 = vmax.f32 %v1662, 0.0
        %v1762 = vmax.f32 %v1664, 0.0
        %v1763 = vmax.f32 %v1666, 0.0
        %v1764 = vmax.f32 %v1668, 0.0
        %v1765 = vmax.f32 %v1672, 0.0
        %v1766 = vmax.f32 %v1674, 0.0
        %v1767 = vmax.f32 %v1676, 0.0
        %v1768 = vmax.f32 %v1678, 0.0
        %v1769 = vpack.c.bf16 %v1755, %v1753
        %v1770 = vpack.c.bf16 %v1756, %v1754
        %v1771 = vpack.c.bf16 %v1759, %v1757
        %v1772 = vpack.c.bf16 %v1760, %v1758
        %v1773 = vpack.c.bf16 %v1763, %v1761
        %v1774 = vpack.c.bf16 %v1764, %v1762
        %v1775 = vpack.c.bf16 %v1767, %v1765
        %v1776 = vpack.c.bf16 %v1768, %v1766
        %v1777 = vmax.f32 %v1715, 0.0
        %v1778 = vmax.f32 %v1717, 0.0
        %v1779 = vmax.f32 %v1719, 0.0
        %v1780 = vmax.f32 %v1721, 0.0
        %v1781 = vmax.f32 %v1725, 0.0
        %v1782 = vmax.f32 %v1727, 0.0
        %v1783 = vmax.f32 %v1729, 0.0
        %v1784 = vmax.f32 %v1731, 0.0
        %v1785 = vmax.f32 %v1735, 0.0
        %v1786 = vmax.f32 %v1737, 0.0
        %v1787 = vmax.f32 %v1739, 0.0
        %v1788 = vmax.f32 %v1741, 0.0
        %v1789 = vmax.f32 %v1745, 0.0
        %v1790 = vmax.f32 %v1747, 0.0
        %v1791 = vmax.f32 %v1749, 0.0
        %v1792 = vmax.f32 %v1751, 0.0
        %v1793 = vpack.c.bf16 %v1779, %v1777
        %v1794 = vpack.c.bf16 %v1780, %v1778
        %v1795 = vpack.c.bf16 %v1783, %v1781
        %v1796 = vpack.c.bf16 %v1784, %v1782
        %v1797 = vpack.c.bf16 %v1787, %v1785
        %v1798 = vpack.c.bf16 %v1788, %v1786
        %v1799 = vpack.c.bf16 %v1791, %v1789
        %v1800 = vpack.c.bf16 %v1792, %v1790
        %v1801 = vld [vmem:[#allocation7] sm:$0xff]
        %v1802 = vld [vmem:[#allocation7 + $0x8] sm:$0xff]
        %v1803 = vld [vmem:[#allocation7 + $0x10] sm:$0xff]
        %v1804 = vld [vmem:[#allocation7 + $0x18] sm:$0xff]
        %v1805 = vld [vmem:[#allocation7 + $0x20] sm:$0xff]
        %v1806 = vld [vmem:[#allocation7 + $0x28] sm:$0xff]
        %v1807 = vld [vmem:[#allocation7 + $0x30] sm:$0xff]
        %v1808 = vld [vmem:[#allocation7 + $0x38] sm:$0xff]
        %v1809 = vld [vmem:[#allocation7 + $0x40] sm:$0xff]
        %v1810 = vld [vmem:[#allocation7 + $0x48] sm:$0xff]
        %v1811 = vld [vmem:[#allocation7 + $0x50] sm:$0xff]
        %v1812 = vld [vmem:[#allocation7 + $0x58] sm:$0xff]
        %v1813 = vld [vmem:[#allocation7 + $0x60] sm:$0xff]
        %v1814 = vld [vmem:[#allocation7 + $0x68] sm:$0xff]
        %v1815 = vld [vmem:[#allocation7 + $0x70] sm:$0xff]
        %v1816 = vld [vmem:[#allocation7 + $0x78] sm:$0xff]
        %v1817 = vld [vmem:[#allocation7 + $0x80] sm:$0xff]
        %v1818 = vld [vmem:[#allocation7 + $0x88] sm:$0xff]
        %v1819 = vld [vmem:[#allocation7 + $0x90] sm:$0xff]
        %v1820 = vld [vmem:[#allocation7 + $0x98] sm:$0xff]
        %v1821 = vld [vmem:[#allocation7 + $0xa0] sm:$0xff]
        %v1822 = vld [vmem:[#allocation7 + $0xa8] sm:$0xff]
        %v1823 = vld [vmem:[#allocation7 + $0xb0] sm:$0xff]
        %v1824 = vld [vmem:[#allocation7 + $0xb8] sm:$0xff]
        %v1825 = vld [vmem:[#allocation7 + $0xc0] sm:$0xff]
        %v1826 = vld [vmem:[#allocation7 + $0xc8] sm:$0xff]
        %v1827 = vld [vmem:[#allocation7 + $0xd0] sm:$0xff]
        %v1828 = vld [vmem:[#allocation7 + $0xd8] sm:$0xff]
        %v1829 = vld [vmem:[#allocation7 + $0xe0] sm:$0xff]
        %v1830 = vld [vmem:[#allocation7 + $0xe8] sm:$0xff]
        %v1831 = vld [vmem:[#allocation7 + $0xf0] sm:$0xff]
        %v1832 = vld [vmem:[#allocation7 + $0xf8] sm:$0xff]
        %s1833 = scalar_lea.vmem [#allocation18], 3
        %v1834 = vld [vmem:[%s1833] ss:$8 sm:$0x3]
        %v1836 = vlaneseq
        %v1837 = vshrl.u32 %v1836, 7
        %v1838 = vsub.s32 0, %v1837
        %v1839 = vrot.slane %v1834, %v1838
        %v1840 = vlaneseq
        %v1841 = vshrl.u32 %v1840, 7
        %v1842 = vsub.s32 1, %v1841
        %v1843 = vrot.slane %v1834, %v1842
        %v1878 = vunpack.c.l.b16 %v1801
        %v1879 = vunpack.c.h.b16 %v1801
        %v1880 = vunpack.c.l.b16 %v1802
        %v1881 = vunpack.c.h.b16 %v1802
        %v1882 = vunpack.c.l.b16 %v1803
        %v1883 = vunpack.c.h.b16 %v1803
        %v1884 = vunpack.c.l.b16 %v1804
        %v1885 = vunpack.c.h.b16 %v1804
        %v1886 = vunpack.c.l.b16 %v1805
        %v1887 = vunpack.c.h.b16 %v1805
        %v1888 = vunpack.c.l.b16 %v1806
        %v1889 = vunpack.c.h.b16 %v1806
        %v1890 = vunpack.c.l.b16 %v1807
        %v1891 = vunpack.c.h.b16 %v1807
        %v1892 = vunpack.c.l.b16 %v1808
        %v1893 = vunpack.c.h.b16 %v1808
        %v1894 = vunpack.c.l.b16 %v1809
        %v1895 = vunpack.c.h.b16 %v1809
        %v1896 = vunpack.c.l.b16 %v1810
        %v1897 = vunpack.c.h.b16 %v1810
        %v1898 = vunpack.c.l.b16 %v1811
        %v1899 = vunpack.c.h.b16 %v1811
        %v1900 = vunpack.c.l.b16 %v1812
        %v1901 = vunpack.c.h.b16 %v1812
        %v1902 = vunpack.c.l.b16 %v1813
        %v1903 = vunpack.c.h.b16 %v1813
        %v1904 = vunpack.c.l.b16 %v1814
        %v1905 = vunpack.c.h.b16 %v1814
        %v1906 = vunpack.c.l.b16 %v1815
        %v1907 = vunpack.c.h.b16 %v1815
        %v1908 = vunpack.c.l.b16 %v1816
        %v1909 = vunpack.c.h.b16 %v1816
        %v1910 = vunpack.c.l.b16 %v1817
        %v1911 = vunpack.c.h.b16 %v1817
        %v1912 = vunpack.c.l.b16 %v1818
        %v1913 = vunpack.c.h.b16 %v1818
        %v1914 = vunpack.c.l.b16 %v1819
        %v1915 = vunpack.c.h.b16 %v1819
        %v1916 = vunpack.c.l.b16 %v1820
        %v1917 = vunpack.c.h.b16 %v1820
        %v1918 = vunpack.c.l.b16 %v1821
        %v1919 = vunpack.c.h.b16 %v1821
        %v1920 = vunpack.c.l.b16 %v1822
        %v1921 = vunpack.c.h.b16 %v1822
        %v1922 = vunpack.c.l.b16 %v1823
        %v1923 = vunpack.c.h.b16 %v1823
        %v1924 = vunpack.c.l.b16 %v1824
        %v1925 = vunpack.c.h.b16 %v1824
        %v1926 = vunpack.c.l.b16 %v1825
        %v1927 = vunpack.c.h.b16 %v1825
        %v1928 = vunpack.c.l.b16 %v1826
        %v1929 = vunpack.c.h.b16 %v1826
        %v1930 = vunpack.c.l.b16 %v1827
        %v1931 = vunpack.c.h.b16 %v1827
        %v1932 = vunpack.c.l.b16 %v1828
        %v1933 = vunpack.c.h.b16 %v1828
        %v1934 = vunpack.c.l.b16 %v1829
        %v1935 = vunpack.c.h.b16 %v1829
        %v1936 = vunpack.c.l.b16 %v1830
        %v1937 = vunpack.c.h.b16 %v1830
        %v1938 = vunpack.c.l.b16 %v1831
        %v1939 = vunpack.c.h.b16 %v1831
        %v1940 = vunpack.c.l.b16 %v1832
        %v1941 = vunpack.c.h.b16 %v1832
        %v1942 = vpack.c.b16 %v1880, %v1878
        %v1943 = vpack.c.b16 %v1881, %v1879
        %v1944 = vpack.c.b16 %v1884, %v1882
        %v1945 = vpack.c.b16 %v1885, %v1883
        %v1946 = vpack.c.b16 %v1888, %v1886
        %v1947 = vpack.c.b16 %v1889, %v1887
        %v1948 = vpack.c.b16 %v1892, %v1890
        %v1949 = vpack.c.b16 %v1893, %v1891
        %v1950 = vpack.c.b16 %v1896, %v1894
        %v1951 = vpack.c.b16 %v1897, %v1895
        %v1952 = vpack.c.b16 %v1900, %v1898
        %v1953 = vpack.c.b16 %v1901, %v1899
        %v1954 = vpack.c.b16 %v1904, %v1902
        %v1955 = vpack.c.b16 %v1905, %v1903
        %v1956 = vpack.c.b16 %v1908, %v1906
        %v1957 = vpack.c.b16 %v1909, %v1907
        %v1958 = vpack.c.b16 %v1912, %v1910
        %v1959 = vpack.c.b16 %v1913, %v1911
        %v1960 = vpack.c.b16 %v1916, %v1914
        %v1961 = vpack.c.b16 %v1917, %v1915
        %v1962 = vpack.c.b16 %v1920, %v1918
        %v1963 = vpack.c.b16 %v1921, %v1919
        %v1964 = vpack.c.b16 %v1924, %v1922
        %v1965 = vpack.c.b16 %v1925, %v1923
        %v1966 = vpack.c.b16 %v1928, %v1926
        %v1967 = vpack.c.b16 %v1929, %v1927
        %v1968 = vpack.c.b16 %v1932, %v1930
        %v1969 = vpack.c.b16 %v1933, %v1931
        %v1970 = vpack.c.b16 %v1936, %v1934
        %v1971 = vpack.c.b16 %v1937, %v1935
        %v1972 = vpack.c.b16 %v1940, %v1938
        %v1973 = vpack.c.b16 %v1941, %v1939
        %2006 = vmatprep.subr.bf16.mxu0 %v1943
        %2007 = vmatpush1.bf16.msra.mxu0 %v1942
        %2008 = vmatprep.subr.bf16.mxu0 %v1945
        %2009 = vmatpush1.bf16.msra.mxu0 %v1944
        %2010 = vmatprep.subr.bf16.mxu0 %v1947
        %2011 = vmatpush1.bf16.msra.mxu0 %v1946
        %2012 = vmatprep.subr.bf16.mxu0 %v1949
        %2013 = vmatpush1.bf16.msra.mxu0 %v1948
        %2014 = vmatprep.subr.bf16.mxu0 %v1951
        %2015 = vmatpush1.bf16.msra.mxu0 %v1950
        %2016 = vmatprep.subr.bf16.mxu0 %v1953
        %2017 = vmatpush1.bf16.msra.mxu0 %v1952
        %2018 = vmatprep.subr.bf16.mxu0 %v1955
        %2019 = vmatpush1.bf16.msra.mxu0 %v1954
        %2020 = vmatprep.subr.bf16.mxu0 %v1957
        %2021 = vmatpush1.bf16.msra.mxu0 %v1956
        %2022 = vmatprep.subr.bf16.mxu0 %v1959
        %2023 = vmatpush1.bf16.msra.mxu0 %v1958
        %2024 = vmatprep.subr.bf16.mxu0 %v1961
        %2025 = vmatpush1.bf16.msra.mxu0 %v1960
        %2026 = vmatprep.subr.bf16.mxu0 %v1963
        %2027 = vmatpush1.bf16.msra.mxu0 %v1962
        %2028 = vmatprep.subr.bf16.mxu0 %v1965
        %2029 = vmatpush1.bf16.msra.mxu0 %v1964
        %2030 = vmatprep.subr.bf16.mxu0 %v1967
        %2031 = vmatpush1.bf16.msra.mxu0 %v1966
        %2032 = vmatprep.subr.bf16.mxu0 %v1969
        %2033 = vmatpush1.bf16.msra.mxu0 %v1968
        %2034 = vmatprep.subr.bf16.mxu0 %v1971
        %2035 = vmatpush1.bf16.msra.mxu0 %v1970
        %2036 = vmatprep.subr.bf16.mxu0 %v1973
        %2037 = vmatpush1.bf16.msra.mxu0 %v1972
        %2038 = vmatprep.mubr.bf16.mxu0 %v1770
        %2039 = vmatmul.mubr.bf16.gmra.mrb[0].mxu0 %v1769
        %v2040 = vpop.f32.mrb[0].mxu0
        %v2041 = vadd.f32 %v1839, %v2040
        %v2042 = vpop.f32.mrb[0].mxu0
        %v2043 = vadd.f32 %v1843, %v2042
        %v2044 = vpop.f32.mrb[0].mxu0
        %v2045 = vadd.f32 %v1839, %v2044
        %v2046 = vpop.f32.mrb[0].mxu0
        %v2047 = vadd.f32 %v1843, %v2046
        %2048 = vmatprep.mubr.bf16.mxu0 %v1772
        %2049 = vmatmul.mubr.bf16.gmra.mrb[0].mxu0 %v1771
        %v2050 = vpop.f32.mrb[0].mxu0
        %v2051 = vadd.f32 %v1839, %v2050
        %v2052 = vpop.f32.mrb[0].mxu0
        %v2053 = vadd.f32 %v1843, %v2052
        %v2054 = vpop.f32.mrb[0].mxu0
        %v2055 = vadd.f32 %v1839, %v2054
        %v2056 = vpop.f32.mrb[0].mxu0
        %v2057 = vadd.f32 %v1843, %v2056
        %2058 = vmatprep.mubr.bf16.mxu0 %v1774
        %2059 = vmatmul.mubr.bf16.gmra.mrb[0].mxu0 %v1773
        %v2060 = vpop.f32.mrb[0].mxu0
        %v2061 = vadd.f32 %v1839, %v2060
        %v2062 = vpop.f32.mrb[0].mxu0
        %v2063 = vadd.f32 %v1843, %v2062
        %v2064 = vpop.f32.mrb[0].mxu0
        %v2065 = vadd.f32 %v1839, %v2064
        %v2066 = vpop.f32.mrb[0].mxu0
        %v2067 = vadd.f32 %v1843, %v2066
        %2068 = vmatprep.mubr.bf16.mxu0 %v1776
        %2069 = vmatmul.mubr.bf16.gmra.mrb[0].mxu0 %v1775
        %v2070 = vpop.f32.mrb[0].mxu0
        %v2071 = vadd.f32 %v1839, %v2070
        %v2072 = vpop.f32.mrb[0].mxu0
        %v2073 = vadd.f32 %v1843, %v2072
        %v2074 = vpop.f32.mrb[0].mxu0
        %v2075 = vadd.f32 %v1839, %v2074
        %v2076 = vpop.f32.mrb[0].mxu0
        %v2077 = vadd.f32 %v1843, %v2076
        %2078 = vdwg.mxu0
        %2079 = vmatprep.subr.bf16.mxu0 %v1943
        %2080 = vmatpush1.bf16.msra.mxu0 %v1942
        %2081 = vmatprep.subr.bf16.mxu0 %v1945
        %2082 = vmatpush1.bf16.msra.mxu0 %v1944
        %2083 = vmatprep.subr.bf16.mxu0 %v1947
        %2084 = vmatpush1.bf16.msra.mxu0 %v1946
        %2085 = vmatprep.subr.bf16.mxu0 %v1949
        %2086 = vmatpush1.bf16.msra.mxu0 %v1948
        %2087 = vmatprep.subr.bf16.mxu0 %v1951
        %2088 = vmatpush1.bf16.msra.mxu0 %v1950
        %2089 = vmatprep.subr.bf16.mxu0 %v1953
        %2090 = vmatpush1.bf16.msra.mxu0 %v1952
        %2091 = vmatprep.subr.bf16.mxu0 %v1955
        %2092 = vmatpush1.bf16.msra.mxu0 %v1954
        %2093 = vmatprep.subr.bf16.mxu0 %v1957
        %2094 = vmatpush1.bf16.msra.mxu0 %v1956
        %2095 = vmatprep.subr.bf16.mxu0 %v1959
        %2096 = vmatpush1.bf16.msra.mxu0 %v1958
        %2097 = vmatprep.subr.bf16.mxu0 %v1961
        %2098 = vmatpush1.bf16.msra.mxu0 %v1960
        %2099 = vmatprep.subr.bf16.mxu0 %v1963
        %2100 = vmatpush1.bf16.msra.mxu0 %v1962
        %2101 = vmatprep.subr.bf16.mxu0 %v1965
        %2102 = vmatpush1.bf16.msra.mxu0 %v1964
        %2103 = vmatprep.subr.bf16.mxu0 %v1967
        %2104 = vmatpush1.bf16.msra.mxu0 %v1966
        %2105 = vmatprep.subr.bf16.mxu0 %v1969
        %2106 = vmatpush1.bf16.msra.mxu0 %v1968
        %2107 = vmatprep.subr.bf16.mxu0 %v1971
        %2108 = vmatpush1.bf16.msra.mxu0 %v1970
        %2109 = vmatprep.subr.bf16.mxu0 %v1973
        %2110 = vmatpush1.bf16.msra.mxu0 %v1972
        %2111 = vmatprep.mubr.bf16.mxu0 %v1794
        %2112 = vmatmul.mubr.bf16.gmra.mrb[0].mxu0 %v1793
        %v2113 = vpop.f32.mrb[0].mxu0
        %v2114 = vadd.f32 %v1839, %v2113
        %v2115 = vpop.f32.mrb[0].mxu0
        %v2116 = vadd.f32 %v1843, %v2115
        %v2117 = vpop.f32.mrb[0].mxu0
        %v2118 = vadd.f32 %v1839, %v2117
        %v2119 = vpop.f32.mrb[0].mxu0
        %v2120 = vadd.f32 %v1843, %v2119
        %2121 = vmatprep.mubr.bf16.mxu0 %v1796
        %2122 = vmatmul.mubr.bf16.gmra.mrb[0].mxu0 %v1795
        %v2123 = vpop.f32.mrb[0].mxu0
        %v2124 = vadd.f32 %v1839, %v2123
        %v2125 = vpop.f32.mrb[0].mxu0
        %v2126 = vadd.f32 %v1843, %v2125
        %v2127 = vpop.f32.mrb[0].mxu0
        %v2128 = vadd.f32 %v1839, %v2127
        %v2129 = vpop.f32.mrb[0].mxu0
        %v2130 = vadd.f32 %v1843, %v2129
        %2131 = vmatprep.mubr.bf16.mxu0 %v1798
        %2132 = vmatmul.mubr.bf16.gmra.mrb[0].mxu0 %v1797
        %v2133 = vpop.f32.mrb[0].mxu0
        %v2134 = vadd.f32 %v1839, %v2133
        %v2135 = vpop.f32.mrb[0].mxu0
        %v2136 = vadd.f32 %v1843, %v2135
        %v2137 = vpop.f32.mrb[0].mxu0
        %v2138 = vadd.f32 %v1839, %v2137
        %v2139 = vpop.f32.mrb[0].mxu0
        %v2140 = vadd.f32 %v1843, %v2139
        %2141 = vmatprep.mubr.bf16.mxu0 %v1800
        %2142 = vmatmul.mubr.bf16.gmra.mrb[0].mxu0 %v1799
        %v2143 = vpop.f32.mrb[0].mxu0
        %v2144 = vadd.f32 %v1839, %v2143
        %v2145 = vpop.f32.mrb[0].mxu0
        %v2146 = vadd.f32 %v1843, %v2145
        %v2147 = vpop.f32.mrb[0].mxu0
        %v2148 = vadd.f32 %v1839, %v2147
        %v2149 = vpop.f32.mrb[0].mxu0
        %v2150 = vadd.f32 %v1843, %v2149
        %2151 = vdwg.mxu0
        %v2152 = vmax.f32 %v2041, 0.0
        %v2153 = vmax.f32 %v2043, 0.0
        %v2154 = vmax.f32 %v2045, 0.0
        %v2155 = vmax.f32 %v2047, 0.0
        %v2156 = vmax.f32 %v2051, 0.0
        %v2157 = vmax.f32 %v2053, 0.0
        %v2158 = vmax.f32 %v2055, 0.0
        %v2159 = vmax.f32 %v2057, 0.0
        %v2160 = vmax.f32 %v2061, 0.0
        %v2161 = vmax.f32 %v2063, 0.0
        %v2162 = vmax.f32 %v2065, 0.0
        %v2163 = vmax.f32 %v2067, 0.0
        %v2164 = vmax.f32 %v2071, 0.0
        %v2165 = vmax.f32 %v2073, 0.0
        %v2166 = vmax.f32 %v2075, 0.0
        %v2167 = vmax.f32 %v2077, 0.0
        %v2168 = vpack.c.bf16 %v2154, %v2152
        %v2169 = vpack.c.bf16 %v2155, %v2153
        %v2170 = vpack.c.bf16 %v2158, %v2156
        %v2171 = vpack.c.bf16 %v2159, %v2157
        %v2172 = vpack.c.bf16 %v2162, %v2160
        %v2173 = vpack.c.bf16 %v2163, %v2161
        %v2174 = vpack.c.bf16 %v2166, %v2164
        %v2175 = vpack.c.bf16 %v2167, %v2165
        %v2176 = vmax.f32 %v2114, 0.0
        %v2177 = vmax.f32 %v2116, 0.0
        %v2178 = vmax.f32 %v2118, 0.0
        %v2179 = vmax.f32 %v2120, 0.0
        %v2180 = vmax.f32 %v2124, 0.0
        %v2181 = vmax.f32 %v2126, 0.0
        %v2182 = vmax.f32 %v2128, 0.0
        %v2183 = vmax.f32 %v2130, 0.0
        %v2184 = vmax.f32 %v2134, 0.0
        %v2185 = vmax.f32 %v2136, 0.0
        %v2186 = vmax.f32 %v2138, 0.0
        %v2187 = vmax.f32 %v2140, 0.0
        %v2188 = vmax.f32 %v2144, 0.0
        %v2189 = vmax.f32 %v2146, 0.0
        %v2190 = vmax.f32 %v2148, 0.0
        %v2191 = vmax.f32 %v2150, 0.0
        %v2192 = vpack.c.bf16 %v2178, %v2176
        %v2193 = vpack.c.bf16 %v2179, %v2177
        %v2194 = vpack.c.bf16 %v2182, %v2180
        %v2195 = vpack.c.bf16 %v2183, %v2181
        %v2196 = vpack.c.bf16 %v2186, %v2184
        %v2197 = vpack.c.bf16 %v2187, %v2185
        %v2198 = vpack.c.bf16 %v2190, %v2188
        %v2199 = vpack.c.bf16 %v2191, %v2189
        %v2200 = vld [vmem:[#allocation9] sm:$0xff]
        %v2201 = vld [vmem:[#allocation9 + $0x8] sm:$0xff]
        %v2202 = vld [vmem:[#allocation9 + $0x10] sm:$0xff]
        %v2203 = vld [vmem:[#allocation9 + $0x18] sm:$0xff]
        %v2204 = vld [vmem:[#allocation9 + $0x20] sm:$0xff]
        %v2205 = vld [vmem:[#allocation9 + $0x28] sm:$0xff]
        %v2206 = vld [vmem:[#allocation9 + $0x30] sm:$0xff]
        %v2207 = vld [vmem:[#allocation9 + $0x38] sm:$0xff]
        %v2208 = vld [vmem:[#allocation9 + $0x40] sm:$0xff]
        %v2209 = vld [vmem:[#allocation9 + $0x48] sm:$0xff]
        %v2210 = vld [vmem:[#allocation9 + $0x50] sm:$0xff]
        %v2211 = vld [vmem:[#allocation9 + $0x58] sm:$0xff]
        %v2212 = vld [vmem:[#allocation9 + $0x60] sm:$0xff]
        %v2213 = vld [vmem:[#allocation9 + $0x68] sm:$0xff]
        %v2214 = vld [vmem:[#allocation9 + $0x70] sm:$0xff]
        %v2215 = vld [vmem:[#allocation9 + $0x78] sm:$0xff]
        %v2216 = vld [vmem:[#allocation9 + $0x80] sm:$0xff]
        %v2217 = vld [vmem:[#allocation9 + $0x88] sm:$0xff]
        %v2218 = vld [vmem:[#allocation9 + $0x90] sm:$0xff]
        %v2219 = vld [vmem:[#allocation9 + $0x98] sm:$0xff]
        %v2220 = vld [vmem:[#allocation9 + $0xa0] sm:$0xff]
        %v2221 = vld [vmem:[#allocation9 + $0xa8] sm:$0xff]
        %v2222 = vld [vmem:[#allocation9 + $0xb0] sm:$0xff]
        %v2223 = vld [vmem:[#allocation9 + $0xb8] sm:$0xff]
        %v2224 = vld [vmem:[#allocation9 + $0xc0] sm:$0xff]
        %v2225 = vld [vmem:[#allocation9 + $0xc8] sm:$0xff]
        %v2226 = vld [vmem:[#allocation9 + $0xd0] sm:$0xff]
        %v2227 = vld [vmem:[#allocation9 + $0xd8] sm:$0xff]
        %v2228 = vld [vmem:[#allocation9 + $0xe0] sm:$0xff]
        %v2229 = vld [vmem:[#allocation9 + $0xe8] sm:$0xff]
        %v2230 = vld [vmem:[#allocation9 + $0xf0] sm:$0xff]
        %v2231 = vld [vmem:[#allocation9 + $0xf8] sm:$0xff]
        %s2232 = scalar_lea.vmem [#allocation18], 4
        %v2233 = vld [vmem:[%s2232] ss:$8 sm:$0x3]
        %v2235 = vlaneseq
        %v2236 = vshrl.u32 %v2235, 7
        %v2237 = vsub.s32 0, %v2236
        %v2238 = vrot.slane %v2233, %v2237
        %v2239 = vlaneseq
        %v2240 = vshrl.u32 %v2239, 7
        %v2241 = vsub.s32 1, %v2240
        %v2242 = vrot.slane %v2233, %v2241
        %v2277 = vunpack.c.l.b16 %v2200
        %v2278 = vunpack.c.h.b16 %v2200
        %v2279 = vunpack.c.l.b16 %v2201
        %v2280 = vunpack.c.h.b16 %v2201
        %v2281 = vunpack.c.l.b16 %v2202
        %v2282 = vunpack.c.h.b16 %v2202
        %v2283 = vunpack.c.l.b16 %v2203
        %v2284 = vunpack.c.h.b16 %v2203
        %v2285 = vunpack.c.l.b16 %v2204
        %v2286 = vunpack.c.h.b16 %v2204
        %v2287 = vunpack.c.l.b16 %v2205
        %v2288 = vunpack.c.h.b16 %v2205
        %v2289 = vunpack.c.l.b16 %v2206
        %v2290 = vunpack.c.h.b16 %v2206
        %v2291 = vunpack.c.l.b16 %v2207
        %v2292 = vunpack.c.h.b16 %v2207
        %v2293 = vunpack.c.l.b16 %v2208
        %v2294 = vunpack.c.h.b16 %v2208
        %v2295 = vunpack.c.l.b16 %v2209
        %v2296 = vunpack.c.h.b16 %v2209
        %v2297 = vunpack.c.l.b16 %v2210
        %v2298 = vunpack.c.h.b16 %v2210
        %v2299 = vunpack.c.l.b16 %v2211
        %v2300 = vunpack.c.h.b16 %v2211
        %v2301 = vunpack.c.l.b16 %v2212
        %v2302 = vunpack.c.h.b16 %v2212
        %v2303 = vunpack.c.l.b16 %v2213
        %v2304 = vunpack.c.h.b16 %v2213
        %v2305 = vunpack.c.l.b16 %v2214
        %v2306 = vunpack.c.h.b16 %v2214
        %v2307 = vunpack.c.l.b16 %v2215
        %v2308 = vunpack.c.h.b16 %v2215
        %v2309 = vunpack.c.l.b16 %v2216
        %v2310 = vunpack.c.h.b16 %v2216
        %v2311 = vunpack.c.l.b16 %v2217
        %v2312 = vunpack.c.h.b16 %v2217
        %v2313 = vunpack.c.l.b16 %v2218
        %v2314 = vunpack.c.h.b16 %v2218
        %v2315 = vunpack.c.l.b16 %v2219
        %v2316 = vunpack.c.h.b16 %v2219
        %v2317 = vunpack.c.l.b16 %v2220
        %v2318 = vunpack.c.h.b16 %v2220
        %v2319 = vunpack.c.l.b16 %v2221
        %v2320 = vunpack.c.h.b16 %v2221
        %v2321 = vunpack.c.l.b16 %v2222
        %v2322 = vunpack.c.h.b16 %v2222
        %v2323 = vunpack.c.l.b16 %v2223
        %v2324 = vunpack.c.h.b16 %v2223
        %v2325 = vunpack.c.l.b16 %v2224
        %v2326 = vunpack.c.h.b16 %v2224
        %v2327 = vunpack.c.l.b16 %v2225
        %v2328 = vunpack.c.h.b16 %v2225
        %v2329 = vunpack.c.l.b16 %v2226
        %v2330 = vunpack.c.h.b16 %v2226
        %v2331 = vunpack.c.l.b16 %v2227
        %v2332 = vunpack.c.h.b16 %v2227
        %v2333 = vunpack.c.l.b16 %v2228
        %v2334 = vunpack.c.h.b16 %v2228
        %v2335 = vunpack.c.l.b16 %v2229
        %v2336 = vunpack.c.h.b16 %v2229
        %v2337 = vunpack.c.l.b16 %v2230
        %v2338 = vunpack.c.h.b16 %v2230
        %v2339 = vunpack.c.l.b16 %v2231
        %v2340 = vunpack.c.h.b16 %v2231
        %v2341 = vpack.c.b16 %v2279, %v2277
        %v2342 = vpack.c.b16 %v2280, %v2278
        %v2343 = vpack.c.b16 %v2283, %v2281
        %v2344 = vpack.c.b16 %v2284, %v2282
        %v2345 = vpack.c.b16 %v2287, %v2285
        %v2346 = vpack.c.b16 %v2288, %v2286
        %v2347 = vpack.c.b16 %v2291, %v2289
        %v2348 = vpack.c.b16 %v2292, %v2290
        %v2349 = vpack.c.b16 %v2295, %v2293
        %v2350 = vpack.c.b16 %v2296, %v2294
        %v2351 = vpack.c.b16 %v2299, %v2297
        %v2352 = vpack.c.b16 %v2300, %v2298
        %v2353 = vpack.c.b16 %v2303, %v2301
        %v2354 = vpack.c.b16 %v2304, %v2302
        %v2355 = vpack.c.b16 %v2307, %v2305
        %v2356 = vpack.c.b16 %v2308, %v2306
        %v2357 = vpack.c.b16 %v2311, %v2309
        %v2358 = vpack.c.b16 %v2312, %v2310
        %v2359 = vpack.c.b16 %v2315, %v2313
        %v2360 = vpack.c.b16 %v2316, %v2314
        %v2361 = vpack.c.b16 %v2319, %v2317
        %v2362 = vpack.c.b16 %v2320, %v2318
        %v2363 = vpack.c.b16 %v2323, %v2321
        %v2364 = vpack.c.b16 %v2324, %v2322
        %v2365 = vpack.c.b16 %v2327, %v2325
        %v2366 = vpack.c.b16 %v2328, %v2326
        %v2367 = vpack.c.b16 %v2331, %v2329
        %v2368 = vpack.c.b16 %v2332, %v2330
        %v2369 = vpack.c.b16 %v2335, %v2333
        %v2370 = vpack.c.b16 %v2336, %v2334
        %v2371 = vpack.c.b16 %v2339, %v2337
        %v2372 = vpack.c.b16 %v2340, %v2338
        %2405 = vmatprep.subr.bf16.mxu0 %v2342
        %2406 = vmatpush1.bf16.msra.mxu0 %v2341
        %2407 = vmatprep.subr.bf16.mxu0 %v2344
        %2408 = vmatpush1.bf16.msra.mxu0 %v2343
        %2409 = vmatprep.subr.bf16.mxu0 %v2346
        %2410 = vmatpush1.bf16.msra.mxu0 %v2345
        %2411 = vmatprep.subr.bf16.mxu0 %v2348
        %2412 = vmatpush1.bf16.msra.mxu0 %v2347
        %2413 = vmatprep.subr.bf16.mxu0 %v2350
        %2414 = vmatpush1.bf16.msra.mxu0 %v2349
        %2415 = vmatprep.subr.bf16.mxu0 %v2352
        %2416 = vmatpush1.bf16.msra.mxu0 %v2351
        %2417 = vmatprep.subr.bf16.mxu0 %v2354
        %2418 = vmatpush1.bf16.msra.mxu0 %v2353
        %2419 = vmatprep.subr.bf16.mxu0 %v2356
        %2420 = vmatpush1.bf16.msra.mxu0 %v2355
        %2421 = vmatprep.subr.bf16.mxu0 %v2358
        %2422 = vmatpush1.bf16.msra.mxu0 %v2357
        %2423 = vmatprep.subr.bf16.mxu0 %v2360
        %2424 = vmatpush1.bf16.msra.mxu0 %v2359
        %2425 = vmatprep.subr.bf16.mxu0 %v2362
        %2426 = vmatpush1.bf16.msra.mxu0 %v2361
        %2427 = vmatprep.subr.bf16.mxu0 %v2364
        %2428 = vmatpush1.bf16.msra.mxu0 %v2363
        %2429 = vmatprep.subr.bf16.mxu0 %v2366
        %2430 = vmatpush1.bf16.msra.mxu0 %v2365
        %2431 = vmatprep.subr.bf16.mxu0 %v2368
        %2432 = vmatpush1.bf16.msra.mxu0 %v2367
        %2433 = vmatprep.subr.bf16.mxu0 %v2370
        %2434 = vmatpush1.bf16.msra.mxu0 %v2369
        %2435 = vmatprep.subr.bf16.mxu0 %v2372
        %2436 = vmatpush1.bf16.msra.mxu0 %v2371
        %2437 = vmatprep.mubr.bf16.mxu0 %v2169
        %2438 = vmatmul.mubr.bf16.gmra.mrb[0].mxu0 %v2168
        %v2439 = vpop.f32.mrb[0].mxu0
        %v2440 = vadd.f32 %v2238, %v2439
        %v2441 = vpop.f32.mrb[0].mxu0
        %v2442 = vadd.f32 %v2242, %v2441
        %v2443 = vpop.f32.mrb[0].mxu0
        %v2444 = vadd.f32 %v2238, %v2443
        %v2445 = vpop.f32.mrb[0].mxu0
        %v2446 = vadd.f32 %v2242, %v2445
        %2447 = vmatprep.mubr.bf16.mxu0 %v2171
        %2448 = vmatmul.mubr.bf16.gmra.mrb[0].mxu0 %v2170
        %v2449 = vpop.f32.mrb[0].mxu0
        %v2450 = vadd.f32 %v2238, %v2449
        %v2451 = vpop.f32.mrb[0].mxu0
        %v2452 = vadd.f32 %v2242, %v2451
        %v2453 = vpop.f32.mrb[0].mxu0
        %v2454 = vadd.f32 %v2238, %v2453
        %v2455 = vpop.f32.mrb[0].mxu0
        %v2456 = vadd.f32 %v2242, %v2455
        %2457 = vmatprep.mubr.bf16.mxu0 %v2173
        %2458 = vmatmul.mubr.bf16.gmra.mrb[0].mxu0 %v2172
        %v2459 = vpop.f32.mrb[0].mxu0
        %v2460 = vadd.f32 %v2238, %v2459
        %v2461 = vpop.f32.mrb[0].mxu0
        %v2462 = vadd.f32 %v2242, %v2461
        %v2463 = vpop.f32.mrb[0].mxu0
        %v2464 = vadd.f32 %v2238, %v2463
        %v2465 = vpop.f32.mrb[0].mxu0
        %v2466 = vadd.f32 %v2242, %v2465
        %2467 = vmatprep.mubr.bf16.mxu0 %v2175
        %2468 = vmatmul.mubr.bf16.gmra.mrb[0].mxu0 %v2174
        %v2469 = vpop.f32.mrb[0].mxu0
        %v2470 = vadd.f32 %v2238, %v2469
        %v2471 = vpop.f32.mrb[0].mxu0
        %v2472 = vadd.f32 %v2242, %v2471
        %v2473 = vpop.f32.mrb[0].mxu0
        %v2474 = vadd.f32 %v2238, %v2473
        %v2475 = vpop.f32.mrb[0].mxu0
        %v2476 = vadd.f32 %v2242, %v2475
        %2477 = vdwg.mxu0
        %2478 = vmatprep.subr.bf16.mxu0 %v2342
        %2479 = vmatpush1.bf16.msra.mxu0 %v2341
        %2480 = vmatprep.subr.bf16.mxu0 %v2344
        %2481 = vmatpush1.bf16.msra.mxu0 %v2343
        %2482 = vmatprep.subr.bf16.mxu0 %v2346
        %2483 = vmatpush1.bf16.msra.mxu0 %v2345
        %2484 = vmatprep.subr.bf16.mxu0 %v2348
        %2485 = vmatpush1.bf16.msra.mxu0 %v2347
        %2486 = vmatprep.subr.bf16.mxu0 %v2350
        %2487 = vmatpush1.bf16.msra.mxu0 %v2349
        %2488 = vmatprep.subr.bf16.mxu0 %v2352
        %2489 = vmatpush1.bf16.msra.mxu0 %v2351
        %2490 = vmatprep.subr.bf16.mxu0 %v2354
        %2491 = vmatpush1.bf16.msra.mxu0 %v2353
        %2492 = vmatprep.subr.bf16.mxu0 %v2356
        %2493 = vmatpush1.bf16.msra.mxu0 %v2355
        %2494 = vmatprep.subr.bf16.mxu0 %v2358
        %2495 = vmatpush1.bf16.msra.mxu0 %v2357
        %2496 = vmatprep.subr.bf16.mxu0 %v2360
        %2497 = vmatpush1.bf16.msra.mxu0 %v2359
        %2498 = vmatprep.subr.bf16.mxu0 %v2362
        %2499 = vmatpush1.bf16.msra.mxu0 %v2361
        %2500 = vmatprep.subr.bf16.mxu0 %v2364
        %2501 = vmatpush1.bf16.msra.mxu0 %v2363
        %2502 = vmatprep.subr.bf16.mxu0 %v2366
        %2503 = vmatpush1.bf16.msra.mxu0 %v2365
        %2504 = vmatprep.subr.bf16.mxu0 %v2368
        %2505 = vmatpush1.bf16.msra.mxu0 %v2367
        %2506 = vmatprep.subr.bf16.mxu0 %v2370
        %2507 = vmatpush1.bf16.msra.mxu0 %v2369
        %2508 = vmatprep.subr.bf16.mxu0 %v2372
        %2509 = vmatpush1.bf16.msra.mxu0 %v2371
        %2510 = vmatprep.mubr.bf16.mxu0 %v2193
        %2511 = vmatmul.mubr.bf16.gmra.mrb[0].mxu0 %v2192
        %v2512 = vpop.f32.mrb[0].mxu0
        %v2513 = vadd.f32 %v2238, %v2512
        %v2514 = vpop.f32.mrb[0].mxu0
        %v2515 = vadd.f32 %v2242, %v2514
        %v2516 = vpop.f32.mrb[0].mxu0
        %v2517 = vadd.f32 %v2238, %v2516
        %v2518 = vpop.f32.mrb[0].mxu0
        %v2519 = vadd.f32 %v2242, %v2518
        %2520 = vmatprep.mubr.bf16.mxu0 %v2195
        %2521 = vmatmul.mubr.bf16.gmra.mrb[0].mxu0 %v2194
        %v2522 = vpop.f32.mrb[0].mxu0
        %v2523 = vadd.f32 %v2238, %v2522
        %v2524 = vpop.f32.mrb[0].mxu0
        %v2525 = vadd.f32 %v2242, %v2524
        %v2526 = vpop.f32.mrb[0].mxu0
        %v2527 = vadd.f32 %v2238, %v2526
        %v2528 = vpop.f32.mrb[0].mxu0
        %v2529 = vadd.f32 %v2242, %v2528
        %2530 = vmatprep.mubr.bf16.mxu0 %v2197
        %2531 = vmatmul.mubr.bf16.gmra.mrb[0].mxu0 %v2196
        %v2532 = vpop.f32.mrb[0].mxu0
        %v2533 = vadd.f32 %v2238, %v2532
        %v2534 = vpop.f32.mrb[0].mxu0
        %v2535 = vadd.f32 %v2242, %v2534
        %v2536 = vpop.f32.mrb[0].mxu0
        %v2537 = vadd.f32 %v2238, %v2536
        %v2538 = vpop.f32.mrb[0].mxu0
        %v2539 = vadd.f32 %v2242, %v2538
        %2540 = vmatprep.mubr.bf16.mxu0 %v2199
        %2541 = vmatmul.mubr.bf16.gmra.mrb[0].mxu0 %v2198
        %v2542 = vpop.f32.mrb[0].mxu0
        %v2543 = vadd.f32 %v2238, %v2542
        %v2544 = vpop.f32.mrb[0].mxu0
        %v2545 = vadd.f32 %v2242, %v2544
        %v2546 = vpop.f32.mrb[0].mxu0
        %v2547 = vadd.f32 %v2238, %v2546
        %v2548 = vpop.f32.mrb[0].mxu0
        %v2549 = vadd.f32 %v2242, %v2548
        %2550 = vdwg.mxu0
        %v2551 = vmax.f32 %v2440, 0.0
        %v2552 = vmax.f32 %v2442, 0.0
        %v2553 = vmax.f32 %v2444, 0.0
        %v2554 = vmax.f32 %v2446, 0.0
        %v2555 = vmax.f32 %v2450, 0.0
        %v2556 = vmax.f32 %v2452, 0.0
        %v2557 = vmax.f32 %v2454, 0.0
        %v2558 = vmax.f32 %v2456, 0.0
        %v2559 = vmax.f32 %v2460, 0.0
        %v2560 = vmax.f32 %v2462, 0.0
        %v2561 = vmax.f32 %v2464, 0.0
        %v2562 = vmax.f32 %v2466, 0.0
        %v2563 = vmax.f32 %v2470, 0.0
        %v2564 = vmax.f32 %v2472, 0.0
        %v2565 = vmax.f32 %v2474, 0.0
        %v2566 = vmax.f32 %v2476, 0.0
        %v2567 = vpack.c.bf16 %v2553, %v2551
        %v2568 = vpack.c.bf16 %v2554, %v2552
        %v2569 = vpack.c.bf16 %v2557, %v2555
        %v2570 = vpack.c.bf16 %v2558, %v2556
        %v2571 = vpack.c.bf16 %v2561, %v2559
        %v2572 = vpack.c.bf16 %v2562, %v2560
        %v2573 = vpack.c.bf16 %v2565, %v2563
        %v2574 = vpack.c.bf16 %v2566, %v2564
        %v2575 = vmax.f32 %v2513, 0.0
        %v2576 = vmax.f32 %v2515, 0.0
        %v2577 = vmax.f32 %v2517, 0.0
        %v2578 = vmax.f32 %v2519, 0.0
        %v2579 = vmax.f32 %v2523, 0.0
        %v2580 = vmax.f32 %v2525, 0.0
        %v2581 = vmax.f32 %v2527, 0.0
        %v2582 = vmax.f32 %v2529, 0.0
        %v2583 = vmax.f32 %v2533, 0.0
        %v2584 = vmax.f32 %v2535, 0.0
        %v2585 = vmax.f32 %v2537, 0.0
        %v2586 = vmax.f32 %v2539, 0.0
        %v2587 = vmax.f32 %v2543, 0.0
        %v2588 = vmax.f32 %v2545, 0.0
        %v2589 = vmax.f32 %v2547, 0.0
        %v2590 = vmax.f32 %v2549, 0.0
        %v2591 = vpack.c.bf16 %v2577, %v2575
        %v2592 = vpack.c.bf16 %v2578, %v2576
        %v2593 = vpack.c.bf16 %v2581, %v2579
        %v2594 = vpack.c.bf16 %v2582, %v2580
        %v2595 = vpack.c.bf16 %v2585, %v2583
        %v2596 = vpack.c.bf16 %v2586, %v2584
        %v2597 = vpack.c.bf16 %v2589, %v2587
        %v2598 = vpack.c.bf16 %v2590, %v2588
        %v2599 = vld [vmem:[#allocation10] sm:$0xff]
        %v2600 = vld [vmem:[#allocation10 + $0x8] sm:$0xff]
        %v2601 = vld [vmem:[#allocation10 + $0x10] sm:$0xff]
        %v2602 = vld [vmem:[#allocation10 + $0x18] sm:$0xff]
        %v2603 = vld [vmem:[#allocation10 + $0x20] sm:$0xff]
        %v2604 = vld [vmem:[#allocation10 + $0x28] sm:$0xff]
        %v2605 = vld [vmem:[#allocation10 + $0x30] sm:$0xff]
        %v2606 = vld [vmem:[#allocation10 + $0x38] sm:$0xff]
        %v2607 = vld [vmem:[#allocation10 + $0x40] sm:$0xff]
        %v2608 = vld [vmem:[#allocation10 + $0x48] sm:$0xff]
        %v2609 = vld [vmem:[#allocation10 + $0x50] sm:$0xff]
        %v2610 = vld [vmem:[#allocation10 + $0x58] sm:$0xff]
        %v2611 = vld [vmem:[#allocation10 + $0x60] sm:$0xff]
        %v2612 = vld [vmem:[#allocation10 + $0x68] sm:$0xff]
        %v2613 = vld [vmem:[#allocation10 + $0x70] sm:$0xff]
        %v2614 = vld [vmem:[#allocation10 + $0x78] sm:$0xff]
        %v2615 = vld [vmem:[#allocation10 + $0x80] sm:$0xff]
        %v2616 = vld [vmem:[#allocation10 + $0x88] sm:$0xff]
        %v2617 = vld [vmem:[#allocation10 + $0x90] sm:$0xff]
        %v2618 = vld [vmem:[#allocation10 + $0x98] sm:$0xff]
        %v2619 = vld [vmem:[#allocation10 + $0xa0] sm:$0xff]
        %v2620 = vld [vmem:[#allocation10 + $0xa8] sm:$0xff]
        %v2621 = vld [vmem:[#allocation10 + $0xb0] sm:$0xff]
        %v2622 = vld [vmem:[#allocation10 + $0xb8] sm:$0xff]
        %v2623 = vld [vmem:[#allocation10 + $0xc0] sm:$0xff]
        %v2624 = vld [vmem:[#allocation10 + $0xc8] sm:$0xff]
        %v2625 = vld [vmem:[#allocation10 + $0xd0] sm:$0xff]
        %v2626 = vld [vmem:[#allocation10 + $0xd8] sm:$0xff]
        %v2627 = vld [vmem:[#allocation10 + $0xe0] sm:$0xff]
        %v2628 = vld [vmem:[#allocation10 + $0xe8] sm:$0xff]
        %v2629 = vld [vmem:[#allocation10 + $0xf0] sm:$0xff]
        %v2630 = vld [vmem:[#allocation10 + $0xf8] sm:$0xff]
        %s2631 = scalar_lea.vmem [#allocation18], 5
        %v2632 = vld [vmem:[%s2631] ss:$8 sm:$0x3]
        %v2634 = vlaneseq
        %v2635 = vshrl.u32 %v2634, 7
        %v2636 = vsub.s32 0, %v2635
        %v2637 = vrot.slane %v2632, %v2636
        %v2638 = vlaneseq
        %v2639 = vshrl.u32 %v2638, 7
        %v2640 = vsub.s32 1, %v2639
        %v2641 = vrot.slane %v2632, %v2640
        %v2676 = vunpack.c.l.b16 %v2599
        %v2677 = vunpack.c.h.b16 %v2599
        %v2678 = vunpack.c.l.b16 %v2600
        %v2679 = vunpack.c.h.b16 %v2600
        %v2680 = vunpack.c.l.b16 %v2601
        %v2681 = vunpack.c.h.b16 %v2601
        %v2682 = vunpack.c.l.b16 %v2602
        %v2683 = vunpack.c.h.b16 %v2602
        %v2684 = vunpack.c.l.b16 %v2603
        %v2685 = vunpack.c.h.b16 %v2603
        %v2686 = vunpack.c.l.b16 %v2604
        %v2687 = vunpack.c.h.b16 %v2604
        %v2688 = vunpack.c.l.b16 %v2605
        %v2689 = vunpack.c.h.b16 %v2605
        %v2690 = vunpack.c.l.b16 %v2606
        %v2691 = vunpack.c.h.b16 %v2606
        %v2692 = vunpack.c.l.b16 %v2607
        %v2693 = vunpack.c.h.b16 %v2607
        %v2694 = vunpack.c.l.b16 %v2608
        %v2695 = vunpack.c.h.b16 %v2608
        %v2696 = vunpack.c.l.b16 %v2609
        %v2697 = vunpack.c.h.b16 %v2609
        %v2698 = vunpack.c.l.b16 %v2610
        %v2699 = vunpack.c.h.b16 %v2610
        %v2700 = vunpack.c.l.b16 %v2611
        %v2701 = vunpack.c.h.b16 %v2611
        %v2702 = vunpack.c.l.b16 %v2612
        %v2703 = vunpack.c.h.b16 %v2612
        %v2704 = vunpack.c.l.b16 %v2613
        %v2705 = vunpack.c.h.b16 %v2613
        %v2706 = vunpack.c.l.b16 %v2614
        %v2707 = vunpack.c.h.b16 %v2614
        %v2708 = vunpack.c.l.b16 %v2615
        %v2709 = vunpack.c.h.b16 %v2615
        %v2710 = vunpack.c.l.b16 %v2616
        %v2711 = vunpack.c.h.b16 %v2616
        %v2712 = vunpack.c.l.b16 %v2617
        %v2713 = vunpack.c.h.b16 %v2617
        %v2714 = vunpack.c.l.b16 %v2618
        %v2715 = vunpack.c.h.b16 %v2618
        %v2716 = vunpack.c.l.b16 %v2619
        %v2717 = vunpack.c.h.b16 %v2619
        %v2718 = vunpack.c.l.b16 %v2620
        %v2719 = vunpack.c.h.b16 %v2620
        %v2720 = vunpack.c.l.b16 %v2621
        %v2721 = vunpack.c.h.b16 %v2621
        %v2722 = vunpack.c.l.b16 %v2622
        %v2723 = vunpack.c.h.b16 %v2622
        %v2724 = vunpack.c.l.b16 %v2623
        %v2725 = vunpack.c.h.b16 %v2623
        %v2726 = vunpack.c.l.b16 %v2624
        %v2727 = vunpack.c.h.b16 %v2624
        %v2728 = vunpack.c.l.b16 %v2625
        %v2729 = vunpack.c.h.b16 %v2625
        %v2730 = vunpack.c.l.b16 %v2626
        %v2731 = vunpack.c.h.b16 %v2626
        %v2732 = vunpack.c.l.b16 %v2627
        %v2733 = vunpack.c.h.b16 %v2627
        %v2734 = vunpack.c.l.b16 %v2628
        %v2735 = vunpack.c.h.b16 %v2628
        %v2736 = vunpack.c.l.b16 %v2629
        %v2737 = vunpack.c.h.b16 %v2629
        %v2738 = vunpack.c.l.b16 %v2630
        %v2739 = vunpack.c.h.b16 %v2630
        %v2740 = vpack.c.b16 %v2678, %v2676
        %v2741 = vpack.c.b16 %v2679, %v2677
        %v2742 = vpack.c.b16 %v2682, %v2680
        %v2743 = vpack.c.b16 %v2683, %v2681
        %v2744 = vpack.c.b16 %v2686, %v2684
        %v2745 = vpack.c.b16 %v2687, %v2685
        %v2746 = vpack.c.b16 %v2690, %v2688
        %v2747 = vpack.c.b16 %v2691, %v2689
        %v2748 = vpack.c.b16 %v2694, %v2692
        %v2749 = vpack.c.b16 %v2695, %v2693
        %v2750 = vpack.c.b16 %v2698, %v2696
        %v2751 = vpack.c.b16 %v2699, %v2697
        %v2752 = vpack.c.b16 %v2702, %v2700
        %v2753 = vpack.c.b16 %v2703, %v2701
        %v2754 = vpack.c.b16 %v2706, %v2704
        %v2755 = vpack.c.b16 %v2707, %v2705
        %v2756 = vpack.c.b16 %v2710, %v2708
        %v2757 = vpack.c.b16 %v2711, %v2709
        %v2758 = vpack.c.b16 %v2714, %v2712
        %v2759 = vpack.c.b16 %v2715, %v2713
        %v2760 = vpack.c.b16 %v2718, %v2716
        %v2761 = vpack.c.b16 %v2719, %v2717
        %v2762 = vpack.c.b16 %v2722, %v2720
        %v2763 = vpack.c.b16 %v2723, %v2721
        %v2764 = vpack.c.b16 %v2726, %v2724
        %v2765 = vpack.c.b16 %v2727, %v2725
        %v2766 = vpack.c.b16 %v2730, %v2728
        %v2767 = vpack.c.b16 %v2731, %v2729
        %v2768 = vpack.c.b16 %v2734, %v2732
        %v2769 = vpack.c.b16 %v2735, %v2733
        %v2770 = vpack.c.b16 %v2738, %v2736
        %v2771 = vpack.c.b16 %v2739, %v2737
        %2804 = vmatprep.subr.bf16.mxu0 %v2741
        %2805 = vmatpush1.bf16.msra.mxu0 %v2740
        %2806 = vmatprep.subr.bf16.mxu0 %v2743
        %2807 = vmatpush1.bf16.msra.mxu0 %v2742
        %2808 = vmatprep.subr.bf16.mxu0 %v2745
        %2809 = vmatpush1.bf16.msra.mxu0 %v2744
        %2810 = vmatprep.subr.bf16.mxu0 %v2747
        %2811 = vmatpush1.bf16.msra.mxu0 %v2746
        %2812 = vmatprep.subr.bf16.mxu0 %v2749
        %2813 = vmatpush1.bf16.msra.mxu0 %v2748
        %2814 = vmatprep.subr.bf16.mxu0 %v2751
        %2815 = vmatpush1.bf16.msra.mxu0 %v2750
        %2816 = vmatprep.subr.bf16.mxu0 %v2753
        %2817 = vmatpush1.bf16.msra.mxu0 %v2752
        %2818 = vmatprep.subr.bf16.mxu0 %v2755
        %2819 = vmatpush1.bf16.msra.mxu0 %v2754
        %2820 = vmatprep.subr.bf16.mxu0 %v2757
        %2821 = vmatpush1.bf16.msra.mxu0 %v2756
        %2822 = vmatprep.subr.bf16.mxu0 %v2759
        %2823 = vmatpush1.bf16.msra.mxu0 %v2758
        %2824 = vmatprep.subr.bf16.mxu0 %v2761
        %2825 = vmatpush1.bf16.msra.mxu0 %v2760
        %2826 = vmatprep.subr.bf16.mxu0 %v2763
        %2827 = vmatpush1.bf16.msra.mxu0 %v2762
        %2828 = vmatprep.subr.bf16.mxu0 %v2765
        %2829 = vmatpush1.bf16.msra.mxu0 %v2764
        %2830 = vmatprep.subr.bf16.mxu0 %v2767
        %2831 = vmatpush1.bf16.msra.mxu0 %v2766
        %2832 = vmatprep.subr.bf16.mxu0 %v2769
        %2833 = vmatpush1.bf16.msra.mxu0 %v2768
        %2834 = vmatprep.subr.bf16.mxu0 %v2771
        %2835 = vmatpush1.bf16.msra.mxu0 %v2770
        %2836 = vmatprep.mubr.bf16.mxu0 %v2568
        %2837 = vmatmul.mubr.bf16.gmra.mrb[0].mxu0 %v2567
        %v2838 = vpop.f32.mrb[0].mxu0
        %v2839 = vadd.f32 %v2637, %v2838
        %v2840 = vpop.f32.mrb[0].mxu0
        %v2841 = vadd.f32 %v2641, %v2840
        %v2842 = vpop.f32.mrb[0].mxu0
        %v2843 = vadd.f32 %v2637, %v2842
        %v2844 = vpop.f32.mrb[0].mxu0
        %v2845 = vadd.f32 %v2641, %v2844
        %2846 = vmatprep.mubr.bf16.mxu0 %v2570
        %2847 = vmatmul.mubr.bf16.gmra.mrb[0].mxu0 %v2569
        %v2848 = vpop.f32.mrb[0].mxu0
        %v2849 = vadd.f32 %v2637, %v2848
        %v2850 = vpop.f32.mrb[0].mxu0
        %v2851 = vadd.f32 %v2641, %v2850
        %v2852 = vpop.f32.mrb[0].mxu0
        %v2853 = vadd.f32 %v2637, %v2852
        %v2854 = vpop.f32.mrb[0].mxu0
        %v2855 = vadd.f32 %v2641, %v2854
        %2856 = vmatprep.mubr.bf16.mxu0 %v2572
        %2857 = vmatmul.mubr.bf16.gmra.mrb[0].mxu0 %v2571
        %v2858 = vpop.f32.mrb[0].mxu0
        %v2859 = vadd.f32 %v2637, %v2858
        %v2860 = vpop.f32.mrb[0].mxu0
        %v2861 = vadd.f32 %v2641, %v2860
        %v2862 = vpop.f32.mrb[0].mxu0
        %v2863 = vadd.f32 %v2637, %v2862
        %v2864 = vpop.f32.mrb[0].mxu0
        %v2865 = vadd.f32 %v2641, %v2864
        %2866 = vmatprep.mubr.bf16.mxu0 %v2574
        %2867 = vmatmul.mubr.bf16.gmra.mrb[0].mxu0 %v2573
        %v2868 = vpop.f32.mrb[0].mxu0
        %v2869 = vadd.f32 %v2637, %v2868
        %v2870 = vpop.f32.mrb[0].mxu0
        %v2871 = vadd.f32 %v2641, %v2870
        %v2872 = vpop.f32.mrb[0].mxu0
        %v2873 = vadd.f32 %v2637, %v2872
        %v2874 = vpop.f32.mrb[0].mxu0
        %v2875 = vadd.f32 %v2641, %v2874
        %2876 = vdwg.mxu0
        %2877 = vmatprep.subr.bf16.mxu0 %v2741
        %2878 = vmatpush1.bf16.msra.mxu0 %v2740
        %2879 = vmatprep.subr.bf16.mxu0 %v2743
        %2880 = vmatpush1.bf16.msra.mxu0 %v2742
        %2881 = vmatprep.subr.bf16.mxu0 %v2745
        %2882 = vmatpush1.bf16.msra.mxu0 %v2744
        %2883 = vmatprep.subr.bf16.mxu0 %v2747
        %2884 = vmatpush1.bf16.msra.mxu0 %v2746
        %2885 = vmatprep.subr.bf16.mxu0 %v2749
        %2886 = vmatpush1.bf16.msra.mxu0 %v2748
        %2887 = vmatprep.subr.bf16.mxu0 %v2751
        %2888 = vmatpush1.bf16.msra.mxu0 %v2750
        %2889 = vmatprep.subr.bf16.mxu0 %v2753
        %2890 = vmatpush1.bf16.msra.mxu0 %v2752
        %2891 = vmatprep.subr.bf16.mxu0 %v2755
        %2892 = vmatpush1.bf16.msra.mxu0 %v2754
        %2893 = vmatprep.subr.bf16.mxu0 %v2757
        %2894 = vmatpush1.bf16.msra.mxu0 %v2756
        %2895 = vmatprep.subr.bf16.mxu0 %v2759
        %2896 = vmatpush1.bf16.msra.mxu0 %v2758
        %2897 = vmatprep.subr.bf16.mxu0 %v2761
        %2898 = vmatpush1.bf16.msra.mxu0 %v2760
        %2899 = vmatprep.subr.bf16.mxu0 %v2763
        %2900 = vmatpush1.bf16.msra.mxu0 %v2762
        %2901 = vmatprep.subr.bf16.mxu0 %v2765
        %2902 = vmatpush1.bf16.msra.mxu0 %v2764
        %2903 = vmatprep.subr.bf16.mxu0 %v2767
        %2904 = vmatpush1.bf16.msra.mxu0 %v2766
        %2905 = vmatprep.subr.bf16.mxu0 %v2769
        %2906 = vmatpush1.bf16.msra.mxu0 %v2768
        %2907 = vmatprep.subr.bf16.mxu0 %v2771
        %2908 = vmatpush1.bf16.msra.mxu0 %v2770
        %2909 = vmatprep.mubr.bf16.mxu0 %v2592
        %2910 = vmatmul.mubr.bf16.gmra.mrb[0].mxu0 %v2591
        %v2911 = vpop.f32.mrb[0].mxu0
        %v2912 = vadd.f32 %v2637, %v2911
        %v2913 = vpop.f32.mrb[0].mxu0
        %v2914 = vadd.f32 %v2641, %v2913
        %v2915 = vpop.f32.mrb[0].mxu0
        %v2916 = vadd.f32 %v2637, %v2915
        %v2917 = vpop.f32.mrb[0].mxu0
        %v2918 = vadd.f32 %v2641, %v2917
        %2919 = vmatprep.mubr.bf16.mxu0 %v2594
        %2920 = vmatmul.mubr.bf16.gmra.mrb[0].mxu0 %v2593
        %v2921 = vpop.f32.mrb[0].mxu0
        %v2922 = vadd.f32 %v2637, %v2921
        %v2923 = vpop.f32.mrb[0].mxu0
        %v2924 = vadd.f32 %v2641, %v2923
        %v2925 = vpop.f32.mrb[0].mxu0
        %v2926 = vadd.f32 %v2637, %v2925
        %v2927 = vpop.f32.mrb[0].mxu0
        %v2928 = vadd.f32 %v2641, %v2927
        %2929 = vmatprep.mubr.bf16.mxu0 %v2596
        %2930 = vmatmul.mubr.bf16.gmra.mrb[0].mxu0 %v2595
        %v2931 = vpop.f32.mrb[0].mxu0
        %v2932 = vadd.f32 %v2637, %v2931
        %v2933 = vpop.f32.mrb[0].mxu0
        %v2934 = vadd.f32 %v2641, %v2933
        %v2935 = vpop.f32.mrb[0].mxu0
        %v2936 = vadd.f32 %v2637, %v2935
        %v2937 = vpop.f32.mrb[0].mxu0
        %v2938 = vadd.f32 %v2641, %v2937
        %2939 = vmatprep.mubr.bf16.mxu0 %v2598
        %2940 = vmatmul.mubr.bf16.gmra.mrb[0].mxu0 %v2597
        %v2941 = vpop.f32.mrb[0].mxu0
        %v2942 = vadd.f32 %v2637, %v2941
        %v2943 = vpop.f32.mrb[0].mxu0
        %v2944 = vadd.f32 %v2641, %v2943
        %v2945 = vpop.f32.mrb[0].mxu0
        %v2946 = vadd.f32 %v2637, %v2945
        %v2947 = vpop.f32.mrb[0].mxu0
        %v2948 = vadd.f32 %v2641, %v2947
        %2949 = vdwg.mxu0
        %v2950 = vmax.f32 %v2839, 0.0
        %v2951 = vmax.f32 %v2841, 0.0
        %v2952 = vmax.f32 %v2843, 0.0
        %v2953 = vmax.f32 %v2845, 0.0
        %v2954 = vmax.f32 %v2849, 0.0
        %v2955 = vmax.f32 %v2851, 0.0
        %v2956 = vmax.f32 %v2853, 0.0
        %v2957 = vmax.f32 %v2855, 0.0
        %v2958 = vmax.f32 %v2859, 0.0
        %v2959 = vmax.f32 %v2861, 0.0
        %v2960 = vmax.f32 %v2863, 0.0
        %v2961 = vmax.f32 %v2865, 0.0
        %v2962 = vmax.f32 %v2869, 0.0
        %v2963 = vmax.f32 %v2871, 0.0
        %v2964 = vmax.f32 %v2873, 0.0
        %v2965 = vmax.f32 %v2875, 0.0
        %v2966 = vpack.c.bf16 %v2952, %v2950
        %v2967 = vpack.c.bf16 %v2953, %v2951
        %v2968 = vpack.c.bf16 %v2956, %v2954
        %v2969 = vpack.c.bf16 %v2957, %v2955
        %v2970 = vpack.c.bf16 %v2960, %v2958
        %v2971 = vpack.c.bf16 %v2961, %v2959
        %v2972 = vpack.c.bf16 %v2964, %v2962
        %v2973 = vpack.c.bf16 %v2965, %v2963
        %v2974 = vmax.f32 %v2912, 0.0
        %v2975 = vmax.f32 %v2914, 0.0
        %v2976 = vmax.f32 %v2916, 0.0
        %v2977 = vmax.f32 %v2918, 0.0
        %v2978 = vmax.f32 %v2922, 0.0
        %v2979 = vmax.f32 %v2924, 0.0
        %v2980 = vmax.f32 %v2926, 0.0
        %v2981 = vmax.f32 %v2928, 0.0
        %v2982 = vmax.f32 %v2932, 0.0
        %v2983 = vmax.f32 %v2934, 0.0
        %v2984 = vmax.f32 %v2936, 0.0
        %v2985 = vmax.f32 %v2938, 0.0
        %v2986 = vmax.f32 %v2942, 0.0
        %v2987 = vmax.f32 %v2944, 0.0
        %v2988 = vmax.f32 %v2946, 0.0
        %v2989 = vmax.f32 %v2948, 0.0
        %v2990 = vpack.c.bf16 %v2976, %v2974
        %v2991 = vpack.c.bf16 %v2977, %v2975
        %v2992 = vpack.c.bf16 %v2980, %v2978
        %v2993 = vpack.c.bf16 %v2981, %v2979
        %v2994 = vpack.c.bf16 %v2984, %v2982
        %v2995 = vpack.c.bf16 %v2985, %v2983
        %v2996 = vpack.c.bf16 %v2988, %v2986
        %v2997 = vpack.c.bf16 %v2989, %v2987
        %v2998 = vld [vmem:[#allocation12] sm:$0xff]
        %v2999 = vld [vmem:[#allocation12 + $0x8] sm:$0xff]
        %v3000 = vld [vmem:[#allocation12 + $0x10] sm:$0xff]
        %v3001 = vld [vmem:[#allocation12 + $0x18] sm:$0xff]
        %v3002 = vld [vmem:[#allocation12 + $0x20] sm:$0xff]
        %v3003 = vld [vmem:[#allocation12 + $0x28] sm:$0xff]
        %v3004 = vld [vmem:[#allocation12 + $0x30] sm:$0xff]
        %v3005 = vld [vmem:[#allocation12 + $0x38] sm:$0xff]
        %v3006 = vld [vmem:[#allocation12 + $0x40] sm:$0xff]
        %v3007 = vld [vmem:[#allocation12 + $0x48] sm:$0xff]
        %v3008 = vld [vmem:[#allocation12 + $0x50] sm:$0xff]
        %v3009 = vld [vmem:[#allocation12 + $0x58] sm:$0xff]
        %v3010 = vld [vmem:[#allocation12 + $0x60] sm:$0xff]
        %v3011 = vld [vmem:[#allocation12 + $0x68] sm:$0xff]
        %v3012 = vld [vmem:[#allocation12 + $0x70] sm:$0xff]
        %v3013 = vld [vmem:[#allocation12 + $0x78] sm:$0xff]
        %v3014 = vld [vmem:[#allocation12 + $0x80] sm:$0xff]
        %v3015 = vld [vmem:[#allocation12 + $0x88] sm:$0xff]
        %v3016 = vld [vmem:[#allocation12 + $0x90] sm:$0xff]
        %v3017 = vld [vmem:[#allocation12 + $0x98] sm:$0xff]
        %v3018 = vld [vmem:[#allocation12 + $0xa0] sm:$0xff]
        %v3019 = vld [vmem:[#allocation12 + $0xa8] sm:$0xff]
        %v3020 = vld [vmem:[#allocation12 + $0xb0] sm:$0xff]
        %v3021 = vld [vmem:[#allocation12 + $0xb8] sm:$0xff]
        %v3022 = vld [vmem:[#allocation12 + $0xc0] sm:$0xff]
        %v3023 = vld [vmem:[#allocation12 + $0xc8] sm:$0xff]
        %v3024 = vld [vmem:[#allocation12 + $0xd0] sm:$0xff]
        %v3025 = vld [vmem:[#allocation12 + $0xd8] sm:$0xff]
        %v3026 = vld [vmem:[#allocation12 + $0xe0] sm:$0xff]
        %v3027 = vld [vmem:[#allocation12 + $0xe8] sm:$0xff]
        %v3028 = vld [vmem:[#allocation12 + $0xf0] sm:$0xff]
        %v3029 = vld [vmem:[#allocation12 + $0xf8] sm:$0xff]
        %s3030 = scalar_lea.vmem [#allocation18], 6
        %v3031 = vld [vmem:[%s3030] ss:$8 sm:$0x3]
        %v3033 = vlaneseq
        %v3034 = vshrl.u32 %v3033, 7
        %v3035 = vsub.s32 0, %v3034
        %v3036 = vrot.slane %v3031, %v3035
        %v3037 = vlaneseq
        %v3038 = vshrl.u32 %v3037, 7
        %v3039 = vsub.s32 1, %v3038
        %v3040 = vrot.slane %v3031, %v3039
        %v3075 = vunpack.c.l.b16 %v2998
        %v3076 = vunpack.c.h.b16 %v2998
        %v3077 = vunpack.c.l.b16 %v2999
        %v3078 = vunpack.c.h.b16 %v2999
        %v3079 = vunpack.c.l.b16 %v3000
        %v3080 = vunpack.c.h.b16 %v3000
        %v3081 = vunpack.c.l.b16 %v3001
        %v3082 = vunpack.c.h.b16 %v3001
        %v3083 = vunpack.c.l.b16 %v3002
        %v3084 = vunpack.c.h.b16 %v3002
        %v3085 = vunpack.c.l.b16 %v3003
        %v3086 = vunpack.c.h.b16 %v3003
        %v3087 = vunpack.c.l.b16 %v3004
        %v3088 = vunpack.c.h.b16 %v3004
        %v3089 = vunpack.c.l.b16 %v3005
        %v3090 = vunpack.c.h.b16 %v3005
        %v3091 = vunpack.c.l.b16 %v3006
        %v3092 = vunpack.c.h.b16 %v3006
        %v3093 = vunpack.c.l.b16 %v3007
        %v3094 = vunpack.c.h.b16 %v3007
        %v3095 = vunpack.c.l.b16 %v3008
        %v3096 = vunpack.c.h.b16 %v3008
        %v3097 = vunpack.c.l.b16 %v3009
        %v3098 = vunpack.c.h.b16 %v3009
        %v3099 = vunpack.c.l.b16 %v3010
        %v3100 = vunpack.c.h.b16 %v3010
        %v3101 = vunpack.c.l.b16 %v3011
        %v3102 = vunpack.c.h.b16 %v3011
        %v3103 = vunpack.c.l.b16 %v3012
        %v3104 = vunpack.c.h.b16 %v3012
        %v3105 = vunpack.c.l.b16 %v3013
        %v3106 = vunpack.c.h.b16 %v3013
        %v3107 = vunpack.c.l.b16 %v3014
        %v3108 = vunpack.c.h.b16 %v3014
        %v3109 = vunpack.c.l.b16 %v3015
        %v3110 = vunpack.c.h.b16 %v3015
        %v3111 = vunpack.c.l.b16 %v3016
        %v3112 = vunpack.c.h.b16 %v3016
        %v3113 = vunpack.c.l.b16 %v3017
        %v3114 = vunpack.c.h.b16 %v3017
        %v3115 = vunpack.c.l.b16 %v3018
        %v3116 = vunpack.c.h.b16 %v3018
        %v3117 = vunpack.c.l.b16 %v3019
        %v3118 = vunpack.c.h.b16 %v3019
        %v3119 = vunpack.c.l.b16 %v3020
        %v3120 = vunpack.c.h.b16 %v3020
        %v3121 = vunpack.c.l.b16 %v3021
        %v3122 = vunpack.c.h.b16 %v3021
        %v3123 = vunpack.c.l.b16 %v3022
        %v3124 = vunpack.c.h.b16 %v3022
        %v3125 = vunpack.c.l.b16 %v3023
        %v3126 = vunpack.c.h.b16 %v3023
        %v3127 = vunpack.c.l.b16 %v3024
        %v3128 = vunpack.c.h.b16 %v3024
        %v3129 = vunpack.c.l.b16 %v3025
        %v3130 = vunpack.c.h.b16 %v3025
        %v3131 = vunpack.c.l.b16 %v3026
        %v3132 = vunpack.c.h.b16 %v3026
        %v3133 = vunpack.c.l.b16 %v3027
        %v3134 = vunpack.c.h.b16 %v3027
        %v3135 = vunpack.c.l.b16 %v3028
        %v3136 = vunpack.c.h.b16 %v3028
        %v3137 = vunpack.c.l.b16 %v3029
        %v3138 = vunpack.c.h.b16 %v3029
        %v3139 = vpack.c.b16 %v3077, %v3075
        %v3140 = vpack.c.b16 %v3078, %v3076
        %v3141 = vpack.c.b16 %v3081, %v3079
        %v3142 = vpack.c.b16 %v3082, %v3080
        %v3143 = vpack.c.b16 %v3085, %v3083
        %v3144 = vpack.c.b16 %v3086, %v3084
        %v3145 = vpack.c.b16 %v3089, %v3087
        %v3146 = vpack.c.b16 %v3090, %v3088
        %v3147 = vpack.c.b16 %v3093, %v3091
        %v3148 = vpack.c.b16 %v3094, %v3092
        %v3149 = vpack.c.b16 %v3097, %v3095
        %v3150 = vpack.c.b16 %v3098, %v3096
        %v3151 = vpack.c.b16 %v3101, %v3099
        %v3152 = vpack.c.b16 %v3102, %v3100
        %v3153 = vpack.c.b16 %v3105, %v3103
        %v3154 = vpack.c.b16 %v3106, %v3104
        %v3155 = vpack.c.b16 %v3109, %v3107
        %v3156 = vpack.c.b16 %v3110, %v3108
        %v3157 = vpack.c.b16 %v3113, %v3111
        %v3158 = vpack.c.b16 %v3114, %v3112
        %v3159 = vpack.c.b16 %v3117, %v3115
        %v3160 = vpack.c.b16 %v3118, %v3116
        %v3161 = vpack.c.b16 %v3121, %v3119
        %v3162 = vpack.c.b16 %v3122, %v3120
        %v3163 = vpack.c.b16 %v3125, %v3123
        %v3164 = vpack.c.b16 %v3126, %v3124
        %v3165 = vpack.c.b16 %v3129, %v3127
        %v3166 = vpack.c.b16 %v3130, %v3128
        %v3167 = vpack.c.b16 %v3133, %v3131
        %v3168 = vpack.c.b16 %v3134, %v3132
        %v3169 = vpack.c.b16 %v3137, %v3135
        %v3170 = vpack.c.b16 %v3138, %v3136
        %3203 = vmatprep.subr.bf16.mxu0 %v3140
        %3204 = vmatpush1.bf16.msra.mxu0 %v3139
        %3205 = vmatprep.subr.bf16.mxu0 %v3142
        %3206 = vmatpush1.bf16.msra.mxu0 %v3141
        %3207 = vmatprep.subr.bf16.mxu0 %v3144
        %3208 = vmatpush1.bf16.msra.mxu0 %v3143
        %3209 = vmatprep.subr.bf16.mxu0 %v3146
        %3210 = vmatpush1.bf16.msra.mxu0 %v3145
        %3211 = vmatprep.subr.bf16.mxu0 %v3148
        %3212 = vmatpush1.bf16.msra.mxu0 %v3147
        %3213 = vmatprep.subr.bf16.mxu0 %v3150
        %3214 = vmatpush1.bf16.msra.mxu0 %v3149
        %3215 = vmatprep.subr.bf16.mxu0 %v3152
        %3216 = vmatpush1.bf16.msra.mxu0 %v3151
        %3217 = vmatprep.subr.bf16.mxu0 %v3154
        %3218 = vmatpush1.bf16.msra.mxu0 %v3153
        %3219 = vmatprep.subr.bf16.mxu0 %v3156
        %3220 = vmatpush1.bf16.msra.mxu0 %v3155
        %3221 = vmatprep.subr.bf16.mxu0 %v3158
        %3222 = vmatpush1.bf16.msra.mxu0 %v3157
        %3223 = vmatprep.subr.bf16.mxu0 %v3160
        %3224 = vmatpush1.bf16.msra.mxu0 %v3159
        %3225 = vmatprep.subr.bf16.mxu0 %v3162
        %3226 = vmatpush1.bf16.msra.mxu0 %v3161
        %3227 = vmatprep.subr.bf16.mxu0 %v3164
        %3228 = vmatpush1.bf16.msra.mxu0 %v3163
        %3229 = vmatprep.subr.bf16.mxu0 %v3166
        %3230 = vmatpush1.bf16.msra.mxu0 %v3165
        %3231 = vmatprep.subr.bf16.mxu0 %v3168
        %3232 = vmatpush1.bf16.msra.mxu0 %v3167
        %3233 = vmatprep.subr.bf16.mxu0 %v3170
        %3234 = vmatpush1.bf16.msra.mxu0 %v3169
        %3235 = vmatprep.mubr.bf16.mxu0 %v2967
        %3236 = vmatmul.mubr.bf16.gmra.mrb[0].mxu0 %v2966
        %v3237 = vpop.f32.mrb[0].mxu0
        %v3238 = vadd.f32 %v3036, %v3237
        %v3239 = vpop.f32.mrb[0].mxu0
        %v3240 = vadd.f32 %v3040, %v3239
        %v3241 = vpop.f32.mrb[0].mxu0
        %v3242 = vadd.f32 %v3036, %v3241
        %v3243 = vpop.f32.mrb[0].mxu0
        %v3244 = vadd.f32 %v3040, %v3243
        %3245 = vmatprep.mubr.bf16.mxu0 %v2969
        %3246 = vmatmul.mubr.bf16.gmra.mrb[0].mxu0 %v2968
        %v3247 = vpop.f32.mrb[0].mxu0
        %v3248 = vadd.f32 %v3036, %v3247
        %v3249 = vpop.f32.mrb[0].mxu0
        %v3250 = vadd.f32 %v3040, %v3249
        %v3251 = vpop.f32.mrb[0].mxu0
        %v3252 = vadd.f32 %v3036, %v3251
        %v3253 = vpop.f32.mrb[0].mxu0
        %v3254 = vadd.f32 %v3040, %v3253
        %3255 = vmatprep.mubr.bf16.mxu0 %v2971
        %3256 = vmatmul.mubr.bf16.gmra.mrb[0].mxu0 %v2970
        %v3257 = vpop.f32.mrb[0].mxu0
        %v3258 = vadd.f32 %v3036, %v3257
        %v3259 = vpop.f32.mrb[0].mxu0
        %v3260 = vadd.f32 %v3040, %v3259
        %v3261 = vpop.f32.mrb[0].mxu0
        %v3262 = vadd.f32 %v3036, %v3261
        %v3263 = vpop.f32.mrb[0].mxu0
        %v3264 = vadd.f32 %v3040, %v3263
        %3265 = vmatprep.mubr.bf16.mxu0 %v2973
        %3266 = vmatmul.mubr.bf16.gmra.mrb[0].mxu0 %v2972
        %v3267 = vpop.f32.mrb[0].mxu0
        %v3268 = vadd.f32 %v3036, %v3267
        %v3269 = vpop.f32.mrb[0].mxu0
        %v3270 = vadd.f32 %v3040, %v3269
        %v3271 = vpop.f32.mrb[0].mxu0
        %v3272 = vadd.f32 %v3036, %v3271
        %v3273 = vpop.f32.mrb[0].mxu0
        %v3274 = vadd.f32 %v3040, %v3273
        %3275 = vdwg.mxu0
        %3276 = vmatprep.subr.bf16.mxu0 %v3140
        %3277 = vmatpush1.bf16.msra.mxu0 %v3139
        %3278 = vmatprep.subr.bf16.mxu0 %v3142
        %3279 = vmatpush1.bf16.msra.mxu0 %v3141
        %3280 = vmatprep.subr.bf16.mxu0 %v3144
        %3281 = vmatpush1.bf16.msra.mxu0 %v3143
        %3282 = vmatprep.subr.bf16.mxu0 %v3146
        %3283 = vmatpush1.bf16.msra.mxu0 %v3145
        %3284 = vmatprep.subr.bf16.mxu0 %v3148
        %3285 = vmatpush1.bf16.msra.mxu0 %v3147
        %3286 = vmatprep.subr.bf16.mxu0 %v3150
        %3287 = vmatpush1.bf16.msra.mxu0 %v3149
        %3288 = vmatprep.subr.bf16.mxu0 %v3152
        %3289 = vmatpush1.bf16.msra.mxu0 %v3151
        %3290 = vmatprep.subr.bf16.mxu0 %v3154
        %3291 = vmatpush1.bf16.msra.mxu0 %v3153
        %3292 = vmatprep.subr.bf16.mxu0 %v3156
        %3293 = vmatpush1.bf16.msra.mxu0 %v3155
        %3294 = vmatprep.subr.bf16.mxu0 %v3158
        %3295 = vmatpush1.bf16.msra.mxu0 %v3157
        %3296 = vmatprep.subr.bf16.mxu0 %v3160
        %3297 = vmatpush1.bf16.msra.mxu0 %v3159
        %3298 = vmatprep.subr.bf16.mxu0 %v3162
        %3299 = vmatpush1.bf16.msra.mxu0 %v3161
        %3300 = vmatprep.subr.bf16.mxu0 %v3164
        %3301 = vmatpush1.bf16.msra.mxu0 %v3163
        %3302 = vmatprep.subr.bf16.mxu0 %v3166
        %3303 = vmatpush1.bf16.msra.mxu0 %v3165
        %3304 = vmatprep.subr.bf16.mxu0 %v3168
        %3305 = vmatpush1.bf16.msra.mxu0 %v3167
        %3306 = vmatprep.subr.bf16.mxu0 %v3170
        %3307 = vmatpush1.bf16.msra.mxu0 %v3169
        %3308 = vmatprep.mubr.bf16.mxu0 %v2991
        %3309 = vmatmul.mubr.bf16.gmra.mrb[0].mxu0 %v2990
        %v3310 = vpop.f32.mrb[0].mxu0
        %v3311 = vadd.f32 %v3036, %v3310
        %v3312 = vpop.f32.mrb[0].mxu0
        %v3313 = vadd.f32 %v3040, %v3312
        %v3314 = vpop.f32.mrb[0].mxu0
        %v3315 = vadd.f32 %v3036, %v3314
        %v3316 = vpop.f32.mrb[0].mxu0
        %v3317 = vadd.f32 %v3040, %v3316
        %3318 = vmatprep.mubr.bf16.mxu0 %v2993
        %3319 = vmatmul.mubr.bf16.gmra.mrb[0].mxu0 %v2992
        %v3320 = vpop.f32.mrb[0].mxu0
        %v3321 = vadd.f32 %v3036, %v3320
        %v3322 = vpop.f32.mrb[0].mxu0
        %v3323 = vadd.f32 %v3040, %v3322
        %v3324 = vpop.f32.mrb[0].mxu0
        %v3325 = vadd.f32 %v3036, %v3324
        %v3326 = vpop.f32.mrb[0].mxu0
        %v3327 = vadd.f32 %v3040, %v3326
        %3328 = vmatprep.mubr.bf16.mxu0 %v2995
        %3329 = vmatmul.mubr.bf16.gmra.mrb[0].mxu0 %v2994
        %v3330 = vpop.f32.mrb[0].mxu0
        %v3331 = vadd.f32 %v3036, %v3330
        %v3332 = vpop.f32.mrb[0].mxu0
        %v3333 = vadd.f32 %v3040, %v3332
        %v3334 = vpop.f32.mrb[0].mxu0
        %v3335 = vadd.f32 %v3036, %v3334
        %v3336 = vpop.f32.mrb[0].mxu0
        %v3337 = vadd.f32 %v3040, %v3336
        %3338 = vmatprep.mubr.bf16.mxu0 %v2997
        %3339 = vmatmul.mubr.bf16.gmra.mrb[0].mxu0 %v2996
        %v3340 = vpop.f32.mrb[0].mxu0
        %v3341 = vadd.f32 %v3036, %v3340
        %v3342 = vpop.f32.mrb[0].mxu0
        %v3343 = vadd.f32 %v3040, %v3342
        %v3344 = vpop.f32.mrb[0].mxu0
        %v3345 = vadd.f32 %v3036, %v3344
        %v3346 = vpop.f32.mrb[0].mxu0
        %v3347 = vadd.f32 %v3040, %v3346
        %3348 = vdwg.mxu0
        %v3349 = vmax.f32 %v3238, 0.0
        %v3350 = vmax.f32 %v3240, 0.0
        %v3351 = vmax.f32 %v3242, 0.0
        %v3352 = vmax.f32 %v3244, 0.0
        %v3353 = vmax.f32 %v3248, 0.0
        %v3354 = vmax.f32 %v3250, 0.0
        %v3355 = vmax.f32 %v3252, 0.0
        %v3356 = vmax.f32 %v3254, 0.0
        %v3357 = vmax.f32 %v3258, 0.0
        %v3358 = vmax.f32 %v3260, 0.0
        %v3359 = vmax.f32 %v3262, 0.0
        %v3360 = vmax.f32 %v3264, 0.0
        %v3361 = vmax.f32 %v3268, 0.0
        %v3362 = vmax.f32 %v3270, 0.0
        %v3363 = vmax.f32 %v3272, 0.0
        %v3364 = vmax.f32 %v3274, 0.0
        %v3365 = vpack.c.bf16 %v3351, %v3349
        %v3366 = vpack.c.bf16 %v3352, %v3350
        %v3367 = vpack.c.bf16 %v3355, %v3353
        %v3368 = vpack.c.bf16 %v3356, %v3354
        %v3369 = vpack.c.bf16 %v3359, %v3357
        %v3370 = vpack.c.bf16 %v3360, %v3358
        %v3371 = vpack.c.bf16 %v3363, %v3361
        %v3372 = vpack.c.bf16 %v3364, %v3362
        %v3373 = vmax.f32 %v3311, 0.0
        %v3374 = vmax.f32 %v3313, 0.0
        %v3375 = vmax.f32 %v3315, 0.0
        %v3376 = vmax.f32 %v3317, 0.0
        %v3377 = vmax.f32 %v3321, 0.0
        %v3378 = vmax.f32 %v3323, 0.0
        %v3379 = vmax.f32 %v3325, 0.0
        %v3380 = vmax.f32 %v3327, 0.0
        %v3381 = vmax.f32 %v3331, 0.0
        %v3382 = vmax.f32 %v3333, 0.0
        %v3383 = vmax.f32 %v3335, 0.0
        %v3384 = vmax.f32 %v3337, 0.0
        %v3385 = vmax.f32 %v3341, 0.0
        %v3386 = vmax.f32 %v3343, 0.0
        %v3387 = vmax.f32 %v3345, 0.0
        %v3388 = vmax.f32 %v3347, 0.0
        %v3389 = vpack.c.bf16 %v3375, %v3373
        %v3390 = vpack.c.bf16 %v3376, %v3374
        %v3391 = vpack.c.bf16 %v3379, %v3377
        %v3392 = vpack.c.bf16 %v3380, %v3378
        %v3393 = vpack.c.bf16 %v3383, %v3381
        %v3394 = vpack.c.bf16 %v3384, %v3382
        %v3395 = vpack.c.bf16 %v3387, %v3385
        %v3396 = vpack.c.bf16 %v3388, %v3386
        %v3397 = vld [vmem:[#allocation13] sm:$0xff]
        %v3398 = vld [vmem:[#allocation13 + $0x8] sm:$0xff]
        %v3399 = vld [vmem:[#allocation13 + $0x10] sm:$0xff]
        %v3400 = vld [vmem:[#allocation13 + $0x18] sm:$0xff]
        %v3401 = vld [vmem:[#allocation13 + $0x20] sm:$0xff]
        %v3402 = vld [vmem:[#allocation13 + $0x28] sm:$0xff]
        %v3403 = vld [vmem:[#allocation13 + $0x30] sm:$0xff]
        %v3404 = vld [vmem:[#allocation13 + $0x38] sm:$0xff]
        %v3405 = vld [vmem:[#allocation13 + $0x40] sm:$0xff]
        %v3406 = vld [vmem:[#allocation13 + $0x48] sm:$0xff]
        %v3407 = vld [vmem:[#allocation13 + $0x50] sm:$0xff]
        %v3408 = vld [vmem:[#allocation13 + $0x58] sm:$0xff]
        %v3409 = vld [vmem:[#allocation13 + $0x60] sm:$0xff]
        %v3410 = vld [vmem:[#allocation13 + $0x68] sm:$0xff]
        %v3411 = vld [vmem:[#allocation13 + $0x70] sm:$0xff]
        %v3412 = vld [vmem:[#allocation13 + $0x78] sm:$0xff]
        %v3413 = vld [vmem:[#allocation13 + $0x80] sm:$0xff]
        %v3414 = vld [vmem:[#allocation13 + $0x88] sm:$0xff]
        %v3415 = vld [vmem:[#allocation13 + $0x90] sm:$0xff]
        %v3416 = vld [vmem:[#allocation13 + $0x98] sm:$0xff]
        %v3417 = vld [vmem:[#allocation13 + $0xa0] sm:$0xff]
        %v3418 = vld [vmem:[#allocation13 + $0xa8] sm:$0xff]
        %v3419 = vld [vmem:[#allocation13 + $0xb0] sm:$0xff]
        %v3420 = vld [vmem:[#allocation13 + $0xb8] sm:$0xff]
        %v3421 = vld [vmem:[#allocation13 + $0xc0] sm:$0xff]
        %v3422 = vld [vmem:[#allocation13 + $0xc8] sm:$0xff]
        %v3423 = vld [vmem:[#allocation13 + $0xd0] sm:$0xff]
        %v3424 = vld [vmem:[#allocation13 + $0xd8] sm:$0xff]
        %v3425 = vld [vmem:[#allocation13 + $0xe0] sm:$0xff]
        %v3426 = vld [vmem:[#allocation13 + $0xe8] sm:$0xff]
        %v3427 = vld [vmem:[#allocation13 + $0xf0] sm:$0xff]
        %v3428 = vld [vmem:[#allocation13 + $0xf8] sm:$0xff]
        %v3429 = vld [vmem:[#allocation13 + $0x100] sm:$0xff]
        %v3430 = vld [vmem:[#allocation13 + $0x108] sm:$0xff]
        %v3431 = vld [vmem:[#allocation13 + $0x110] sm:$0xff]
        %v3432 = vld [vmem:[#allocation13 + $0x118] sm:$0xff]
        %v3433 = vld [vmem:[#allocation13 + $0x120] sm:$0xff]
        %v3434 = vld [vmem:[#allocation13 + $0x128] sm:$0xff]
        %v3435 = vld [vmem:[#allocation13 + $0x130] sm:$0xff]
        %v3436 = vld [vmem:[#allocation13 + $0x138] sm:$0xff]
        %v3437 = vld [vmem:[#allocation13 + $0x140] sm:$0xff]
        %v3438 = vld [vmem:[#allocation13 + $0x148] sm:$0xff]
        %v3439 = vld [vmem:[#allocation13 + $0x150] sm:$0xff]
        %v3440 = vld [vmem:[#allocation13 + $0x158] sm:$0xff]
        %v3441 = vld [vmem:[#allocation13 + $0x160] sm:$0xff]
        %v3442 = vld [vmem:[#allocation13 + $0x168] sm:$0xff]
        %v3443 = vld [vmem:[#allocation13 + $0x170] sm:$0xff]
        %v3444 = vld [vmem:[#allocation13 + $0x178] sm:$0xff]
        %v3445 = vld [vmem:[#allocation13 + $0x180] sm:$0xff]
        %v3446 = vld [vmem:[#allocation13 + $0x188] sm:$0xff]
        %v3447 = vld [vmem:[#allocation13 + $0x190] sm:$0xff]
        %v3448 = vld [vmem:[#allocation13 + $0x198] sm:$0xff]
        %v3449 = vld [vmem:[#allocation13 + $0x1a0] sm:$0xff]
        %v3450 = vld [vmem:[#allocation13 + $0x1a8] sm:$0xff]
        %v3451 = vld [vmem:[#allocation13 + $0x1b0] sm:$0xff]
        %v3452 = vld [vmem:[#allocation13 + $0x1b8] sm:$0xff]
        %v3453 = vld [vmem:[#allocation13 + $0x1c0] sm:$0xff]
        %v3454 = vld [vmem:[#allocation13 + $0x1c8] sm:$0xff]
        %v3455 = vld [vmem:[#allocation13 + $0x1d0] sm:$0xff]
        %v3456 = vld [vmem:[#allocation13 + $0x1d8] sm:$0xff]
        %v3457 = vld [vmem:[#allocation13 + $0x1e0] sm:$0xff]
        %v3458 = vld [vmem:[#allocation13 + $0x1e8] sm:$0xff]
        %v3459 = vld [vmem:[#allocation13 + $0x1f0] sm:$0xff]
        %v3460 = vld [vmem:[#allocation13 + $0x1f8] sm:$0xff]
        %v3461 = vld [vmem:[#allocation13 + $0x200] sm:$0xff]
        %v3462 = vld [vmem:[#allocation13 + $0x208] sm:$0xff]
        %v3463 = vld [vmem:[#allocation13 + $0x210] sm:$0xff]
        %v3464 = vld [vmem:[#allocation13 + $0x218] sm:$0xff]
        %v3465 = vld [vmem:[#allocation13 + $0x220] sm:$0xff]
        %v3466 = vld [vmem:[#allocation13 + $0x228] sm:$0xff]
        %v3467 = vld [vmem:[#allocation13 + $0x230] sm:$0xff]
        %v3468 = vld [vmem:[#allocation13 + $0x238] sm:$0xff]
        %v3469 = vld [vmem:[#allocation13 + $0x240] sm:$0xff]
        %v3470 = vld [vmem:[#allocation13 + $0x248] sm:$0xff]
        %v3471 = vld [vmem:[#allocation13 + $0x250] sm:$0xff]
        %v3472 = vld [vmem:[#allocation13 + $0x258] sm:$0xff]
        %v3473 = vld [vmem:[#allocation13 + $0x260] sm:$0xff]
        %v3474 = vld [vmem:[#allocation13 + $0x268] sm:$0xff]
        %v3475 = vld [vmem:[#allocation13 + $0x270] sm:$0xff]
        %v3476 = vld [vmem:[#allocation13 + $0x278] sm:$0xff]
        %v3477 = vld [vmem:[#allocation13 + $0x280] sm:$0xff]
        %v3478 = vld [vmem:[#allocation13 + $0x288] sm:$0xff]
        %v3479 = vld [vmem:[#allocation13 + $0x290] sm:$0xff]
        %v3480 = vld [vmem:[#allocation13 + $0x298] sm:$0xff]
        %v3481 = vld [vmem:[#allocation13 + $0x2a0] sm:$0xff]
        %v3482 = vld [vmem:[#allocation13 + $0x2a8] sm:$0xff]
        %v3483 = vld [vmem:[#allocation13 + $0x2b0] sm:$0xff]
        %v3484 = vld [vmem:[#allocation13 + $0x2b8] sm:$0xff]
        %v3485 = vld [vmem:[#allocation13 + $0x2c0] sm:$0xff]
        %v3486 = vld [vmem:[#allocation13 + $0x2c8] sm:$0xff]
        %v3487 = vld [vmem:[#allocation13 + $0x2d0] sm:$0xff]
        %v3488 = vld [vmem:[#allocation13 + $0x2d8] sm:$0xff]
        %v3489 = vld [vmem:[#allocation13 + $0x2e0] sm:$0xff]
        %v3490 = vld [vmem:[#allocation13 + $0x2e8] sm:$0xff]
        %v3491 = vld [vmem:[#allocation13 + $0x2f0] sm:$0xff]
        %v3492 = vld [vmem:[#allocation13 + $0x2f8] sm:$0xff]
        %v3493 = vld [vmem:[#allocation15] sm:$0xff]
        %v3494 = vld [vmem:[#allocation15 + $0x8] sm:$0xff]
        %v3495 = vld [vmem:[#allocation15 + $0x10] sm:$0xff]
        %v3496 = vld [vmem:[#allocation15 + $0x18] sm:$0xff]
        %v3497 = vld [vmem:[#allocation15 + $0x20] sm:$0xff]
        %v3498 = vld [vmem:[#allocation15 + $0x28] sm:$0xff]
        %v3499 = vld [vmem:[#allocation15 + $0x30] sm:$0xff]
        %v3500 = vld [vmem:[#allocation15 + $0x38] sm:$0xff]
        %v3501 = vld [vmem:[#allocation15 + $0x40] sm:$0xff]
        %v3502 = vld [vmem:[#allocation15 + $0x48] sm:$0xff]
        %v3503 = vld [vmem:[#allocation15 + $0x50] sm:$0xff]
        %v3504 = vld [vmem:[#allocation15 + $0x58] sm:$0xff]
        %v3505 = vld [vmem:[#allocation15 + $0x60] sm:$0xff]
        %v3506 = vld [vmem:[#allocation15 + $0x68] sm:$0xff]
        %v3507 = vld [vmem:[#allocation15 + $0x70] sm:$0xff]
        %v3508 = vld [vmem:[#allocation15 + $0x78] sm:$0xff]
        %v3509 = vld [vmem:[#allocation15 + $0x80] sm:$0xff]
        %v3510 = vld [vmem:[#allocation15 + $0x88] sm:$0xff]
        %v3511 = vld [vmem:[#allocation15 + $0x90] sm:$0xff]
        %v3512 = vld [vmem:[#allocation15 + $0x98] sm:$0xff]
        %v3513 = vld [vmem:[#allocation15 + $0xa0] sm:$0xff]
        %v3514 = vld [vmem:[#allocation15 + $0xa8] sm:$0xff]
        %v3515 = vld [vmem:[#allocation15 + $0xb0] sm:$0xff]
        %v3516 = vld [vmem:[#allocation15 + $0xb8] sm:$0xff]
        %v3517 = vld [vmem:[#allocation15 + $0xc0] sm:$0xff]
        %v3518 = vld [vmem:[#allocation15 + $0xc8] sm:$0xff]
        %v3519 = vld [vmem:[#allocation15 + $0xd0] sm:$0xff]
        %v3520 = vld [vmem:[#allocation15 + $0xd8] sm:$0xff]
        %v3521 = vld [vmem:[#allocation15 + $0xe0] sm:$0xff]
        %v3522 = vld [vmem:[#allocation15 + $0xe8] sm:$0xff]
        %v3523 = vld [vmem:[#allocation15 + $0xf0] sm:$0xff]
        %v3524 = vld [vmem:[#allocation15 + $0xf8] sm:$0xff]
        %v3525 = vld [vmem:[#allocation15 + $0x100] sm:$0xff]
        %v3526 = vld [vmem:[#allocation15 + $0x108] sm:$0xff]
        %v3527 = vld [vmem:[#allocation15 + $0x110] sm:$0xff]
        %v3528 = vld [vmem:[#allocation15 + $0x118] sm:$0xff]
        %v3529 = vld [vmem:[#allocation15 + $0x120] sm:$0xff]
        %v3530 = vld [vmem:[#allocation15 + $0x128] sm:$0xff]
        %v3531 = vld [vmem:[#allocation15 + $0x130] sm:$0xff]
        %v3532 = vld [vmem:[#allocation15 + $0x138] sm:$0xff]
        %v3533 = vld [vmem:[#allocation15 + $0x140] sm:$0xff]
        %v3534 = vld [vmem:[#allocation15 + $0x148] sm:$0xff]
        %v3535 = vld [vmem:[#allocation15 + $0x150] sm:$0xff]
        %v3536 = vld [vmem:[#allocation15 + $0x158] sm:$0xff]
        %v3537 = vld [vmem:[#allocation15 + $0x160] sm:$0xff]
        %v3538 = vld [vmem:[#allocation15 + $0x168] sm:$0xff]
        %v3539 = vld [vmem:[#allocation15 + $0x170] sm:$0xff]
        %v3540 = vld [vmem:[#allocation15 + $0x178] sm:$0xff]
        %v3541 = vld [vmem:[#allocation19] ss:$8 sm:$0xf]
        %v3542 = vld [vmem:[#allocation19] ss:$8 sm:$0x30]
        %v3543 = vor.u32 %v3541, %v3542
        %v3552 = vunpack.c.l.b16 %v637
        %v3553 = vunpack.c.l.b16 %v638
        %v3554 = vunpack.c.l.b16 %v639
        %v3555 = vunpack.c.l.b16 %v640
        %v3556 = vunpack.c.l.b16 %v641
        %v3557 = vunpack.c.l.b16 %v642
        %v3558 = vunpack.c.l.b16 %v643
        %v3559 = vunpack.c.l.b16 %v644
        %v3560 = vpack.c.b16 %v3553, %v3552
        %v3561 = vpack.c.b16 %v3555, %v3554
        %v3562 = vpack.c.b16 %v3557, %v3556
        %v3563 = vpack.c.b16 %v3559, %v3558
        %v3616 = vunpack.c.l.b16 %v3493
        %v3617 = vunpack.c.h.b16 %v3493
        %v3618 = vunpack.c.l.b16 %v3494
        %v3619 = vunpack.c.h.b16 %v3494
        %v3620 = vunpack.c.l.b16 %v3495
        %v3621 = vunpack.c.h.b16 %v3495
        %v3622 = vunpack.c.l.b16 %v3496
        %v3623 = vunpack.c.h.b16 %v3496
        %v3624 = vunpack.c.l.b16 %v3497
        %v3625 = vunpack.c.h.b16 %v3497
        %v3626 = vunpack.c.l.b16 %v3498
        %v3627 = vunpack.c.h.b16 %v3498
        %v3628 = vunpack.c.l.b16 %v3499
        %v3629 = vunpack.c.h.b16 %v3499
        %v3630 = vunpack.c.l.b16 %v3500
        %v3631 = vunpack.c.h.b16 %v3500
        %v3632 = vunpack.c.l.b16 %v3501
        %v3633 = vunpack.c.h.b16 %v3501
        %v3634 = vunpack.c.l.b16 %v3502
        %v3635 = vunpack.c.h.b16 %v3502
        %v3636 = vunpack.c.l.b16 %v3503
        %v3637 = vunpack.c.h.b16 %v3503
        %v3638 = vunpack.c.l.b16 %v3504
        %v3639 = vunpack.c.h.b16 %v3504
        %v3640 = vunpack.c.l.b16 %v3505
        %v3641 = vunpack.c.h.b16 %v3505
        %v3642 = vunpack.c.l.b16 %v3506
        %v3643 = vunpack.c.h.b16 %v3506
        %v3644 = vunpack.c.l.b16 %v3507
        %v3645 = vunpack.c.h.b16 %v3507
        %v3646 = vunpack.c.l.b16 %v3508
        %v3647 = vunpack.c.h.b16 %v3508
        %v3648 = vunpack.c.l.b16 %v3509
        %v3649 = vunpack.c.h.b16 %v3509
        %v3650 = vunpack.c.l.b16 %v3510
        %v3651 = vunpack.c.h.b16 %v3510
        %v3652 = vunpack.c.l.b16 %v3511
        %v3653 = vunpack.c.h.b16 %v3511
        %v3654 = vunpack.c.l.b16 %v3512
        %v3655 = vunpack.c.h.b16 %v3512
        %v3656 = vunpack.c.l.b16 %v3513
        %v3657 = vunpack.c.h.b16 %v3513
        %v3658 = vunpack.c.l.b16 %v3514
        %v3659 = vunpack.c.h.b16 %v3514
        %v3660 = vunpack.c.l.b16 %v3515
        %v3661 = vunpack.c.h.b16 %v3515
        %v3662 = vunpack.c.l.b16 %v3516
        %v3663 = vunpack.c.h.b16 %v3516
        %v3664 = vunpack.c.l.b16 %v3517
        %v3665 = vunpack.c.h.b16 %v3517
        %v3666 = vunpack.c.l.b16 %v3518
        %v3667 = vunpack.c.h.b16 %v3518
        %v3668 = vunpack.c.l.b16 %v3519
        %v3669 = vunpack.c.h.b16 %v3519
        %v3670 = vunpack.c.l.b16 %v3520
        %v3671 = vunpack.c.h.b16 %v3520
        %v3672 = vunpack.c.l.b16 %v3521
        %v3673 = vunpack.c.h.b16 %v3521
        %v3674 = vunpack.c.l.b16 %v3522
        %v3675 = vunpack.c.h.b16 %v3522
        %v3676 = vunpack.c.l.b16 %v3523
        %v3677 = vunpack.c.h.b16 %v3523
        %v3678 = vunpack.c.l.b16 %v3524
        %v3679 = vunpack.c.h.b16 %v3524
        %v3680 = vunpack.c.l.b16 %v3525
        %v3681 = vunpack.c.h.b16 %v3525
        %v3682 = vunpack.c.l.b16 %v3526
        %v3683 = vunpack.c.h.b16 %v3526
        %v3684 = vunpack.c.l.b16 %v3527
        %v3685 = vunpack.c.h.b16 %v3527
        %v3686 = vunpack.c.l.b16 %v3528
        %v3687 = vunpack.c.h.b16 %v3528
        %v3688 = vunpack.c.l.b16 %v3529
        %v3689 = vunpack.c.h.b16 %v3529
        %v3690 = vunpack.c.l.b16 %v3530
        %v3691 = vunpack.c.h.b16 %v3530
        %v3692 = vunpack.c.l.b16 %v3531
        %v3693 = vunpack.c.h.b16 %v3531
        %v3694 = vunpack.c.l.b16 %v3532
        %v3695 = vunpack.c.h.b16 %v3532
        %v3696 = vunpack.c.l.b16 %v3533
        %v3697 = vunpack.c.h.b16 %v3533
        %v3698 = vunpack.c.l.b16 %v3534
        %v3699 = vunpack.c.h.b16 %v3534
        %v3700 = vunpack.c.l.b16 %v3535
        %v3701 = vunpack.c.h.b16 %v3535
        %v3702 = vunpack.c.l.b16 %v3536
        %v3703 = vunpack.c.h.b16 %v3536
        %v3704 = vunpack.c.l.b16 %v3537
        %v3705 = vunpack.c.h.b16 %v3537
        %v3706 = vunpack.c.l.b16 %v3538
        %v3707 = vunpack.c.h.b16 %v3538
        %v3708 = vunpack.c.l.b16 %v3539
        %v3709 = vunpack.c.h.b16 %v3539
        %v3710 = vunpack.c.l.b16 %v3540
        %v3711 = vunpack.c.h.b16 %v3540
        %v3712 = vpack.c.b16 %v3622, %v3616
        %v3713 = vpack.c.b16 %v3623, %v3617
        %v3714 = vpack.c.b16 %v3624, %v3618
        %v3715 = vpack.c.b16 %v3625, %v3619
        %v3716 = vpack.c.b16 %v3626, %v3620
        %v3717 = vpack.c.b16 %v3627, %v3621
        %v3718 = vpack.c.b16 %v3634, %v3628
        %v3719 = vpack.c.b16 %v3635, %v3629
        %v3720 = vpack.c.b16 %v3636, %v3630
        %v3721 = vpack.c.b16 %v3637, %v3631
        %v3722 = vpack.c.b16 %v3638, %v3632
        %v3723 = vpack.c.b16 %v3639, %v3633
        %v3724 = vpack.c.b16 %v3646, %v3640
        %v3725 = vpack.c.b16 %v3647, %v3641
        %v3726 = vpack.c.b16 %v3648, %v3642
        %v3727 = vpack.c.b16 %v3649, %v3643
        %v3728 = vpack.c.b16 %v3650, %v3644
        %v3729 = vpack.c.b16 %v3651, %v3645
        %v3730 = vpack.c.b16 %v3658, %v3652
        %v3731 = vpack.c.b16 %v3659, %v3653
        %v3732 = vpack.c.b16 %v3660, %v3654
        %v3733 = vpack.c.b16 %v3661, %v3655
        %v3734 = vpack.c.b16 %v3662, %v3656
        %v3735 = vpack.c.b16 %v3663, %v3657
        %v3736 = vpack.c.b16 %v3670, %v3664
        %v3737 = vpack.c.b16 %v3671, %v3665
        %v3738 = vpack.c.b16 %v3672, %v3666
        %v3739 = vpack.c.b16 %v3673, %v3667
        %v3740 = vpack.c.b16 %v3674, %v3668
        %v3741 = vpack.c.b16 %v3675, %v3669
        %v3742 = vpack.c.b16 %v3682, %v3676
        %v3743 = vpack.c.b16 %v3683, %v3677
        %v3744 = vpack.c.b16 %v3684, %v3678
        %v3745 = vpack.c.b16 %v3685, %v3679
        %v3746 = vpack.c.b16 %v3686, %v3680
        %v3747 = vpack.c.b16 %v3687, %v3681
        %v3748 = vpack.c.b16 %v3694, %v3688
        %v3749 = vpack.c.b16 %v3695, %v3689
        %v3750 = vpack.c.b16 %v3696, %v3690
        %v3751 = vpack.c.b16 %v3697, %v3691
        %v3752 = vpack.c.b16 %v3698, %v3692
        %v3753 = vpack.c.b16 %v3699, %v3693
        %v3754 = vpack.c.b16 %v3706, %v3700
        %v3755 = vpack.c.b16 %v3707, %v3701
        %v3756 = vpack.c.b16 %v3708, %v3702
        %v3757 = vpack.c.b16 %v3709, %v3703
        %v3758 = vpack.c.b16 %v3710, %v3704
        %v3759 = vpack.c.b16 %v3711, %v3705
        %3808 = vmatprep.subr.bf16.mxu0 %v3713
        %3809 = vmatpush1.bf16.msra.mxu0 %v3712
        %3810 = vmatprep.subr.bf16.mxu0 %v3719
        %3811 = vmatpush1.bf16.msra.mxu0 %v3718
        %3812 = vmatprep.subr.bf16.mxu0 %v3725
        %3813 = vmatpush1.bf16.msra.mxu0 %v3724
        %3814 = vmatprep.subr.bf16.mxu0 %v3731
        %3815 = vmatpush1.bf16.msra.mxu0 %v3730
        %3816 = vmatprep.subr.bf16.mxu0 %v3737
        %3817 = vmatpush1.bf16.msra.mxu0 %v3736
        %3818 = vmatprep.subr.bf16.mxu0 %v3743
        %3819 = vmatpush1.bf16.msra.mxu0 %v3742
        %3820 = vmatprep.subr.bf16.mxu0 %v3749
        %3821 = vmatpush1.bf16.msra.mxu0 %v3748
        %3822 = vmatprep.subr.bf16.mxu0 %v3755
        %3823 = vmatpush1.bf16.msra.mxu0 %v3754
        %3824 = vmatprep.subr.bf16.mxu0 0
        %3825 = vmatpush1.bf16.msra.mxu0 0
        %3826 = vmatprep.subr.bf16.mxu0 0
        %3827 = vmatpush1.bf16.msra.mxu0 0
        %3828 = vmatprep.subr.bf16.mxu0 0
        %3829 = vmatpush1.bf16.msra.mxu0 0
        %3830 = vmatprep.subr.bf16.mxu0 0
        %3831 = vmatpush1.bf16.msra.mxu0 0
        %3832 = vmatprep.subr.bf16.mxu0 0
        %3833 = vmatpush1.bf16.msra.mxu0 0
        %3834 = vmatprep.subr.bf16.mxu0 0
        %3835 = vmatpush1.bf16.msra.mxu0 0
        %3836 = vmatprep.subr.bf16.mxu0 0
        %3837 = vmatpush1.bf16.msra.mxu0 0
        %3838 = vmatprep.subr.bf16.mxu0 0
        %3839 = vmatpush1.bf16.msra.mxu0 0
        %3840 = vmatprep.mubr.bf16.mxu0 0
        %3841 = vmatmul.mubr.bf16.gmra.mrb[0].mxu0 %v3560
        %v3842 = vpop.f32.mrb[0].mxu0
        %v3843 = vadd.f32 0.0, %v3842
        %v3844 = vpop.f32.mrb[0].mxu0
        %v3845 = vadd.f32 0.0, %v3844
        %v3846 = vpop.f32.mrb[0].mxu0
        %v3847 = vadd.f32 0.0, %v3846
        %v3848 = vpop.f32.mrb[0].mxu0
        %v3849 = vadd.f32 0.0, %v3848
        %3850 = vmatprep.mubr.bf16.mxu0 0
        %3851 = vmatmul.mubr.bf16.gmra.mrb[0].mxu0 %v3561
        %v3852 = vpop.f32.mrb[0].mxu0
        %v3853 = vadd.f32 0.0, %v3852
        %v3854 = vpop.f32.mrb[0].mxu0
        %v3855 = vadd.f32 0.0, %v3854
        %v3856 = vpop.f32.mrb[0].mxu0
        %v3857 = vadd.f32 0.0, %v3856
        %v3858 = vpop.f32.mrb[0].mxu0
        %v3859 = vadd.f32 0.0, %v3858
        %3860 = vmatprep.mubr.bf16.mxu0 0
        %3861 = vmatmul.mubr.bf16.gmra.mrb[0].mxu0 %v3562
        %v3862 = vpop.f32.mrb[0].mxu0
        %v3863 = vadd.f32 0.0, %v3862
        %v3864 = vpop.f32.mrb[0].mxu0
        %v3865 = vadd.f32 0.0, %v3864
        %v3866 = vpop.f32.mrb[0].mxu0
        %v3867 = vadd.f32 0.0, %v3866
        %v3868 = vpop.f32.mrb[0].mxu0
        %v3869 = vadd.f32 0.0, %v3868
        %3870 = vmatprep.mubr.bf16.mxu0 0
        %3871 = vmatmul.mubr.bf16.gmra.mrb[0].mxu0 %v3563
        %v3872 = vpop.f32.mrb[0].mxu0
        %v3873 = vadd.f32 0.0, %v3872
        %v3874 = vpop.f32.mrb[0].mxu0
        %v3875 = vadd.f32 0.0, %v3874
        %v3876 = vpop.f32.mrb[0].mxu0
        %v3877 = vadd.f32 0.0, %v3876
        %v3878 = vpop.f32.mrb[0].mxu0
        %v3879 = vadd.f32 0.0, %v3878
        %3880 = vdwg.mxu0
        %3881 = vmatprep.subr.bf16.mxu0 %v3715
        %3882 = vmatpush1.bf16.msra.mxu0 %v3714
        %3883 = vmatprep.subr.bf16.mxu0 %v3721
        %3884 = vmatpush1.bf16.msra.mxu0 %v3720
        %3885 = vmatprep.subr.bf16.mxu0 %v3727
        %3886 = vmatpush1.bf16.msra.mxu0 %v3726
        %3887 = vmatprep.subr.bf16.mxu0 %v3733
        %3888 = vmatpush1.bf16.msra.mxu0 %v3732
        %3889 = vmatprep.subr.bf16.mxu0 %v3739
        %3890 = vmatpush1.bf16.msra.mxu0 %v3738
        %3891 = vmatprep.subr.bf16.mxu0 %v3745
        %3892 = vmatpush1.bf16.msra.mxu0 %v3744
        %3893 = vmatprep.subr.bf16.mxu0 %v3751
        %3894 = vmatpush1.bf16.msra.mxu0 %v3750
        %3895 = vmatprep.subr.bf16.mxu0 %v3757
        %3896 = vmatpush1.bf16.msra.mxu0 %v3756
        %3897 = vmatprep.subr.bf16.mxu0 0
        %3898 = vmatpush1.bf16.msra.mxu0 0
        %3899 = vmatprep.subr.bf16.mxu0 0
        %3900 = vmatpush1.bf16.msra.mxu0 0
        %3901 = vmatprep.subr.bf16.mxu0 0
        %3902 = vmatpush1.bf16.msra.mxu0 0
        %3903 = vmatprep.subr.bf16.mxu0 0
        %3904 = vmatpush1.bf16.msra.mxu0 0
        %3905 = vmatprep.subr.bf16.mxu0 0
        %3906 = vmatpush1.bf16.msra.mxu0 0
        %3907 = vmatprep.subr.bf16.mxu0 0
        %3908 = vmatpush1.bf16.msra.mxu0 0
        %3909 = vmatprep.subr.bf16.mxu0 0
        %3910 = vmatpush1.bf16.msra.mxu0 0
        %3911 = vmatprep.subr.bf16.mxu0 0
        %3912 = vmatpush1.bf16.msra.mxu0 0
        %3913 = vmatprep.mubr.bf16.mxu0 0
        %3914 = vmatmul.mubr.bf16.gmra.mrb[0].mxu0 %v3560
        %v3915 = vpop.f32.mrb[0].mxu0
        %v3916 = vadd.f32 0.0, %v3915
        %v3917 = vpop.f32.mrb[0].mxu0
        %v3918 = vadd.f32 0.0, %v3917
        %v3919 = vpop.f32.mrb[0].mxu0
        %v3920 = vadd.f32 0.0, %v3919
        %v3921 = vpop.f32.mrb[0].mxu0
        %v3922 = vadd.f32 0.0, %v3921
        %3923 = vmatprep.mubr.bf16.mxu0 0
        %3924 = vmatmul.mubr.bf16.gmra.mrb[0].mxu0 %v3561
        %v3925 = vpop.f32.mrb[0].mxu0
        %v3926 = vadd.f32 0.0, %v3925
        %v3927 = vpop.f32.mrb[0].mxu0
        %v3928 = vadd.f32 0.0, %v3927
        %v3929 = vpop.f32.mrb[0].mxu0
        %v3930 = vadd.f32 0.0, %v3929
        %v3931 = vpop.f32.mrb[0].mxu0
        %v3932 = vadd.f32 0.0, %v3931
        %3933 = vmatprep.mubr.bf16.mxu0 0
        %3934 = vmatmul.mubr.bf16.gmra.mrb[0].mxu0 %v3562
        %v3935 = vpop.f32.mrb[0].mxu0
        %v3936 = vadd.f32 0.0, %v3935
        %v3937 = vpop.f32.mrb[0].mxu0
        %v3938 = vadd.f32 0.0, %v3937
        %v3939 = vpop.f32.mrb[0].mxu0
        %v3940 = vadd.f32 0.0, %v3939
        %v3941 = vpop.f32.mrb[0].mxu0
        %v3942 = vadd.f32 0.0, %v3941
        %3943 = vmatprep.mubr.bf16.mxu0 0
        %3944 = vmatmul.mubr.bf16.gmra.mrb[0].mxu0 %v3563
        %v3945 = vpop.f32.mrb[0].mxu0
        %v3946 = vadd.f32 0.0, %v3945
        %v3947 = vpop.f32.mrb[0].mxu0
        %v3948 = vadd.f32 0.0, %v3947
        %v3949 = vpop.f32.mrb[0].mxu0
        %v3950 = vadd.f32 0.0, %v3949
        %v3951 = vpop.f32.mrb[0].mxu0
        %v3952 = vadd.f32 0.0, %v3951
        %3953 = vdwg.mxu0
        %3954 = vmatprep.subr.bf16.mxu0 %v3717
        %3955 = vmatpush1.bf16.msra.mxu0 %v3716
        %3956 = vmatprep.subr.bf16.mxu0 %v3723
        %3957 = vmatpush1.bf16.msra.mxu0 %v3722
        %3958 = vmatprep.subr.bf16.mxu0 %v3729
        %3959 = vmatpush1.bf16.msra.mxu0 %v3728
        %3960 = vmatprep.subr.bf16.mxu0 %v3735
        %3961 = vmatpush1.bf16.msra.mxu0 %v3734
        %3962 = vmatprep.subr.bf16.mxu0 %v3741
        %3963 = vmatpush1.bf16.msra.mxu0 %v3740
        %3964 = vmatprep.subr.bf16.mxu0 %v3747
        %3965 = vmatpush1.bf16.msra.mxu0 %v3746
        %3966 = vmatprep.subr.bf16.mxu0 %v3753
        %3967 = vmatpush1.bf16.msra.mxu0 %v3752
        %3968 = vmatprep.subr.bf16.mxu0 %v3759
        %3969 = vmatpush1.bf16.msra.mxu0 %v3758
        %3970 = vmatprep.subr.bf16.mxu0 0
        %3971 = vmatpush1.bf16.msra.mxu0 0
        %3972 = vmatprep.subr.bf16.mxu0 0
        %3973 = vmatpush1.bf16.msra.mxu0 0
        %3974 = vmatprep.subr.bf16.mxu0 0
        %3975 = vmatpush1.bf16.msra.mxu0 0
        %3976 = vmatprep.subr.bf16.mxu0 0
        %3977 = vmatpush1.bf16.msra.mxu0 0
        %3978 = vmatprep.subr.bf16.mxu0 0
        %3979 = vmatpush1.bf16.msra.mxu0 0
        %3980 = vmatprep.subr.bf16.mxu0 0
        %3981 = vmatpush1.bf16.msra.mxu0 0
        %3982 = vmatprep.subr.bf16.mxu0 0
        %3983 = vmatpush1.bf16.msra.mxu0 0
        %3984 = vmatprep.subr.bf16.mxu0 0
        %3985 = vmatpush1.bf16.msra.mxu0 0
        %3986 = vmatprep.mubr.bf16.mxu0 0
        %3987 = vmatmul.mubr.bf16.gmra.mrb[0].mxu0 %v3560
        %v3988 = vpop.f32.mrb[0].mxu0
        %v3989 = vadd.f32 0.0, %v3988
        %v3990 = vpop.f32.mrb[0].mxu0
        %v3991 = vadd.f32 0.0, %v3990
        %v3992 = vpop.f32.mrb[0].mxu0
        %v3993 = vadd.f32 0.0, %v3992
        %v3994 = vpop.f32.mrb[0].mxu0
        %v3995 = vadd.f32 0.0, %v3994
        %3996 = vmatprep.mubr.bf16.mxu0 0
        %3997 = vmatmul.mubr.bf16.gmra.mrb[0].mxu0 %v3561
        %v3998 = vpop.f32.mrb[0].mxu0
        %v3999 = vadd.f32 0.0, %v3998
        %v4000 = vpop.f32.mrb[0].mxu0
        %v4001 = vadd.f32 0.0, %v4000
        %v4002 = vpop.f32.mrb[0].mxu0
        %v4003 = vadd.f32 0.0, %v4002
        %v4004 = vpop.f32.mrb[0].mxu0
        %v4005 = vadd.f32 0.0, %v4004
        %4006 = vmatprep.mubr.bf16.mxu0 0
        %4007 = vmatmul.mubr.bf16.gmra.mrb[0].mxu0 %v3562
        %v4008 = vpop.f32.mrb[0].mxu0
        %v4009 = vadd.f32 0.0, %v4008
        %v4010 = vpop.f32.mrb[0].mxu0
        %v4011 = vadd.f32 0.0, %v4010
        %v4012 = vpop.f32.mrb[0].mxu0
        %v4013 = vadd.f32 0.0, %v4012
        %v4014 = vpop.f32.mrb[0].mxu0
        %v4015 = vadd.f32 0.0, %v4014
        %4016 = vmatprep.mubr.bf16.mxu0 0
        %4017 = vmatmul.mubr.bf16.gmra.mrb[0].mxu0 %v3563
        %v4018 = vpop.f32.mrb[0].mxu0
        %v4019 = vadd.f32 0.0, %v4018
        %v4020 = vpop.f32.mrb[0].mxu0
        %v4021 = vadd.f32 0.0, %v4020
        %v4022 = vpop.f32.mrb[0].mxu0
        %v4023 = vadd.f32 0.0, %v4022
        %v4024 = vpop.f32.mrb[0].mxu0
        %v4025 = vadd.f32 0.0, %v4024
        %4026 = vdwg.mxu0
        %v4123 = vunpack.c.l.b16 %v3397
        %v4124 = vunpack.c.h.b16 %v3397
        %v4125 = vunpack.c.l.b16 %v3398
        %v4126 = vunpack.c.h.b16 %v3398
        %v4127 = vunpack.c.l.b16 %v3399
        %v4128 = vunpack.c.h.b16 %v3399
        %v4129 = vunpack.c.l.b16 %v3400
        %v4130 = vunpack.c.h.b16 %v3400
        %v4131 = vunpack.c.l.b16 %v3401
        %v4132 = vunpack.c.h.b16 %v3401
        %v4133 = vunpack.c.l.b16 %v3402
        %v4134 = vunpack.c.h.b16 %v3402
        %v4135 = vunpack.c.l.b16 %v3403
        %v4136 = vunpack.c.h.b16 %v3403
        %v4137 = vunpack.c.l.b16 %v3404
        %v4138 = vunpack.c.h.b16 %v3404
        %v4139 = vunpack.c.l.b16 %v3405
        %v4140 = vunpack.c.h.b16 %v3405
        %v4141 = vunpack.c.l.b16 %v3406
        %v4142 = vunpack.c.h.b16 %v3406
        %v4143 = vunpack.c.l.b16 %v3407
        %v4144 = vunpack.c.h.b16 %v3407
        %v4145 = vunpack.c.l.b16 %v3408
        %v4146 = vunpack.c.h.b16 %v3408
        %v4147 = vunpack.c.l.b16 %v3409
        %v4148 = vunpack.c.h.b16 %v3409
        %v4149 = vunpack.c.l.b16 %v3410
        %v4150 = vunpack.c.h.b16 %v3410
        %v4151 = vunpack.c.l.b16 %v3411
        %v4152 = vunpack.c.h.b16 %v3411
        %v4153 = vunpack.c.l.b16 %v3412
        %v4154 = vunpack.c.h.b16 %v3412
        %v4155 = vunpack.c.l.b16 %v3413
        %v4156 = vunpack.c.h.b16 %v3413
        %v4157 = vunpack.c.l.b16 %v3414
        %v4158 = vunpack.c.h.b16 %v3414
        %v4159 = vunpack.c.l.b16 %v3415
        %v4160 = vunpack.c.h.b16 %v3415
        %v4161 = vunpack.c.l.b16 %v3416
        %v4162 = vunpack.c.h.b16 %v3416
        %v4163 = vunpack.c.l.b16 %v3417
        %v4164 = vunpack.c.h.b16 %v3417
        %v4165 = vunpack.c.l.b16 %v3418
        %v4166 = vunpack.c.h.b16 %v3418
        %v4167 = vunpack.c.l.b16 %v3419
        %v4168 = vunpack.c.h.b16 %v3419
        %v4169 = vunpack.c.l.b16 %v3420
        %v4170 = vunpack.c.h.b16 %v3420
        %v4171 = vunpack.c.l.b16 %v3421
        %v4172 = vunpack.c.h.b16 %v3421
        %v4173 = vunpack.c.l.b16 %v3422
        %v4174 = vunpack.c.h.b16 %v3422
        %v4175 = vunpack.c.l.b16 %v3423
        %v4176 = vunpack.c.h.b16 %v3423
        %v4177 = vunpack.c.l.b16 %v3424
        %v4178 = vunpack.c.h.b16 %v3424
        %v4179 = vunpack.c.l.b16 %v3425
        %v4180 = vunpack.c.h.b16 %v3425
        %v4181 = vunpack.c.l.b16 %v3426
        %v4182 = vunpack.c.h.b16 %v3426
        %v4183 = vunpack.c.l.b16 %v3427
        %v4184 = vunpack.c.h.b16 %v3427
        %v4185 = vunpack.c.l.b16 %v3428
        %v4186 = vunpack.c.h.b16 %v3428
        %v4187 = vunpack.c.l.b16 %v3429
        %v4188 = vunpack.c.h.b16 %v3429
        %v4189 = vunpack.c.l.b16 %v3430
        %v4190 = vunpack.c.h.b16 %v3430
        %v4191 = vunpack.c.l.b16 %v3431
        %v4192 = vunpack.c.h.b16 %v3431
        %v4193 = vunpack.c.l.b16 %v3432
        %v4194 = vunpack.c.h.b16 %v3432
        %v4195 = vunpack.c.l.b16 %v3433
        %v4196 = vunpack.c.h.b16 %v3433
        %v4197 = vunpack.c.l.b16 %v3434
        %v4198 = vunpack.c.h.b16 %v3434
        %v4199 = vunpack.c.l.b16 %v3435
        %v4200 = vunpack.c.h.b16 %v3435
        %v4201 = vunpack.c.l.b16 %v3436
        %v4202 = vunpack.c.h.b16 %v3436
        %v4203 = vunpack.c.l.b16 %v3437
        %v4204 = vunpack.c.h.b16 %v3437
        %v4205 = vunpack.c.l.b16 %v3438
        %v4206 = vunpack.c.h.b16 %v3438
        %v4207 = vunpack.c.l.b16 %v3439
        %v4208 = vunpack.c.h.b16 %v3439
        %v4209 = vunpack.c.l.b16 %v3440
        %v4210 = vunpack.c.h.b16 %v3440
        %v4211 = vunpack.c.l.b16 %v3441
        %v4212 = vunpack.c.h.b16 %v3441
        %v4213 = vunpack.c.l.b16 %v3442
        %v4214 = vunpack.c.h.b16 %v3442
        %v4215 = vunpack.c.l.b16 %v3443
        %v4216 = vunpack.c.h.b16 %v3443
        %v4217 = vunpack.c.l.b16 %v3444
        %v4218 = vunpack.c.h.b16 %v3444
        %v4219 = vunpack.c.l.b16 %v3445
        %v4220 = vunpack.c.h.b16 %v3445
        %v4221 = vunpack.c.l.b16 %v3446
        %v4222 = vunpack.c.h.b16 %v3446
        %v4223 = vunpack.c.l.b16 %v3447
        %v4224 = vunpack.c.h.b16 %v3447
        %v4225 = vunpack.c.l.b16 %v3448
        %v4226 = vunpack.c.h.b16 %v3448
        %v4227 = vunpack.c.l.b16 %v3449
        %v4228 = vunpack.c.h.b16 %v3449
        %v4229 = vunpack.c.l.b16 %v3450
        %v4230 = vunpack.c.h.b16 %v3450
        %v4231 = vunpack.c.l.b16 %v3451
        %v4232 = vunpack.c.h.b16 %v3451
        %v4233 = vunpack.c.l.b16 %v3452
        %v4234 = vunpack.c.h.b16 %v3452
        %v4235 = vunpack.c.l.b16 %v3453
        %v4236 = vunpack.c.h.b16 %v3453
        %v4237 = vunpack.c.l.b16 %v3454
        %v4238 = vunpack.c.h.b16 %v3454
        %v4239 = vunpack.c.l.b16 %v3455
        %v4240 = vunpack.c.h.b16 %v3455
        %v4241 = vunpack.c.l.b16 %v3456
        %v4242 = vunpack.c.h.b16 %v3456
        %v4243 = vunpack.c.l.b16 %v3457
        %v4244 = vunpack.c.h.b16 %v3457
        %v4245 = vunpack.c.l.b16 %v3458
        %v4246 = vunpack.c.h.b16 %v3458
        %v4247 = vunpack.c.l.b16 %v3459
        %v4248 = vunpack.c.h.b16 %v3459
        %v4249 = vunpack.c.l.b16 %v3460
        %v4250 = vunpack.c.h.b16 %v3460
        %v4251 = vunpack.c.l.b16 %v3461
        %v4252 = vunpack.c.h.b16 %v3461
        %v4253 = vunpack.c.l.b16 %v3462
        %v4254 = vunpack.c.h.b16 %v3462
        %v4255 = vunpack.c.l.b16 %v3463
        %v4256 = vunpack.c.h.b16 %v3463
        %v4257 = vunpack.c.l.b16 %v3464
        %v4258 = vunpack.c.h.b16 %v3464
        %v4259 = vunpack.c.l.b16 %v3465
        %v4260 = vunpack.c.h.b16 %v3465
        %v4261 = vunpack.c.l.b16 %v3466
        %v4262 = vunpack.c.h.b16 %v3466
        %v4263 = vunpack.c.l.b16 %v3467
        %v4264 = vunpack.c.h.b16 %v3467
        %v4265 = vunpack.c.l.b16 %v3468
        %v4266 = vunpack.c.h.b16 %v3468
        %v4267 = vunpack.c.l.b16 %v3469
        %v4268 = vunpack.c.h.b16 %v3469
        %v4269 = vunpack.c.l.b16 %v3470
        %v4270 = vunpack.c.h.b16 %v3470
        %v4271 = vunpack.c.l.b16 %v3471
        %v4272 = vunpack.c.h.b16 %v3471
        %v4273 = vunpack.c.l.b16 %v3472
        %v4274 = vunpack.c.h.b16 %v3472
        %v4275 = vunpack.c.l.b16 %v3473
        %v4276 = vunpack.c.h.b16 %v3473
        %v4277 = vunpack.c.l.b16 %v3474
        %v4278 = vunpack.c.h.b16 %v3474
        %v4279 = vunpack.c.l.b16 %v3475
        %v4280 = vunpack.c.h.b16 %v3475
        %v4281 = vunpack.c.l.b16 %v3476
        %v4282 = vunpack.c.h.b16 %v3476
        %v4283 = vunpack.c.l.b16 %v3477
        %v4284 = vunpack.c.h.b16 %v3477
        %v4285 = vunpack.c.l.b16 %v3478
        %v4286 = vunpack.c.h.b16 %v3478
        %v4287 = vunpack.c.l.b16 %v3479
        %v4288 = vunpack.c.h.b16 %v3479
        %v4289 = vunpack.c.l.b16 %v3480
        %v4290 = vunpack.c.h.b16 %v3480
        %v4291 = vunpack.c.l.b16 %v3481
        %v4292 = vunpack.c.h.b16 %v3481
        %v4293 = vunpack.c.l.b16 %v3482
        %v4294 = vunpack.c.h.b16 %v3482
        %v4295 = vunpack.c.l.b16 %v3483
        %v4296 = vunpack.c.h.b16 %v3483
        %v4297 = vunpack.c.l.b16 %v3484
        %v4298 = vunpack.c.h.b16 %v3484
        %v4299 = vunpack.c.l.b16 %v3485
        %v4300 = vunpack.c.h.b16 %v3485
        %v4301 = vunpack.c.l.b16 %v3486
        %v4302 = vunpack.c.h.b16 %v3486
        %v4303 = vunpack.c.l.b16 %v3487
        %v4304 = vunpack.c.h.b16 %v3487
        %v4305 = vunpack.c.l.b16 %v3488
        %v4306 = vunpack.c.h.b16 %v3488
        %v4307 = vunpack.c.l.b16 %v3489
        %v4308 = vunpack.c.h.b16 %v3489
        %v4309 = vunpack.c.l.b16 %v3490
        %v4310 = vunpack.c.h.b16 %v3490
        %v4311 = vunpack.c.l.b16 %v3491
        %v4312 = vunpack.c.h.b16 %v3491
        %v4313 = vunpack.c.l.b16 %v3492
        %v4314 = vunpack.c.h.b16 %v3492
        %v4315 = vpack.c.b16 %v4129, %v4123
        %v4316 = vpack.c.b16 %v4130, %v4124
        %v4317 = vpack.c.b16 %v4131, %v4125
        %v4318 = vpack.c.b16 %v4132, %v4126
        %v4319 = vpack.c.b16 %v4133, %v4127
        %v4320 = vpack.c.b16 %v4134, %v4128
        %v4321 = vpack.c.b16 %v4141, %v4135
        %v4322 = vpack.c.b16 %v4142, %v4136
        %v4323 = vpack.c.b16 %v4143, %v4137
        %v4324 = vpack.c.b16 %v4144, %v4138
        %v4325 = vpack.c.b16 %v4145, %v4139
        %v4326 = vpack.c.b16 %v4146, %v4140
        %v4327 = vpack.c.b16 %v4153, %v4147
        %v4328 = vpack.c.b16 %v4154, %v4148
        %v4329 = vpack.c.b16 %v4155, %v4149
        %v4330 = vpack.c.b16 %v4156, %v4150
        %v4331 = vpack.c.b16 %v4157, %v4151
        %v4332 = vpack.c.b16 %v4158, %v4152
        %v4333 = vpack.c.b16 %v4165, %v4159
        %v4334 = vpack.c.b16 %v4166, %v4160
        %v4335 = vpack.c.b16 %v4167, %v4161
        %v4336 = vpack.c.b16 %v4168, %v4162
        %v4337 = vpack.c.b16 %v4169, %v4163
        %v4338 = vpack.c.b16 %v4170, %v4164
        %v4339 = vpack.c.b16 %v4177, %v4171
        %v4340 = vpack.c.b16 %v4178, %v4172
        %v4341 = vpack.c.b16 %v4179, %v4173
        %v4342 = vpack.c.b16 %v4180, %v4174
        %v4343 = vpack.c.b16 %v4181, %v4175
        %v4344 = vpack.c.b16 %v4182, %v4176
        %v4345 = vpack.c.b16 %v4189, %v4183
        %v4346 = vpack.c.b16 %v4190, %v4184
        %v4347 = vpack.c.b16 %v4191, %v4185
        %v4348 = vpack.c.b16 %v4192, %v4186
        %v4349 = vpack.c.b16 %v4193, %v4187
        %v4350 = vpack.c.b16 %v4194, %v4188
        %v4351 = vpack.c.b16 %v4201, %v4195
        %v4352 = vpack.c.b16 %v4202, %v4196
        %v4353 = vpack.c.b16 %v4203, %v4197
        %v4354 = vpack.c.b16 %v4204, %v4198
        %v4355 = vpack.c.b16 %v4205, %v4199
        %v4356 = vpack.c.b16 %v4206, %v4200
        %v4357 = vpack.c.b16 %v4213, %v4207
        %v4358 = vpack.c.b16 %v4214, %v4208
        %v4359 = vpack.c.b16 %v4215, %v4209
        %v4360 = vpack.c.b16 %v4216, %v4210
        %v4361 = vpack.c.b16 %v4217, %v4211
        %v4362 = vpack.c.b16 %v4218, %v4212
        %v4363 = vpack.c.b16 %v4225, %v4219
        %v4364 = vpack.c.b16 %v4226, %v4220
        %v4365 = vpack.c.b16 %v4227, %v4221
        %v4366 = vpack.c.b16 %v4228, %v4222
        %v4367 = vpack.c.b16 %v4229, %v4223
        %v4368 = vpack.c.b16 %v4230, %v4224
        %v4369 = vpack.c.b16 %v4237, %v4231
        %v4370 = vpack.c.b16 %v4238, %v4232
        %v4371 = vpack.c.b16 %v4239, %v4233
        %v4372 = vpack.c.b16 %v4240, %v4234
        %v4373 = vpack.c.b16 %v4241, %v4235
        %v4374 = vpack.c.b16 %v4242, %v4236
        %v4375 = vpack.c.b16 %v4249, %v4243
        %v4376 = vpack.c.b16 %v4250, %v4244
        %v4377 = vpack.c.b16 %v4251, %v4245
        %v4378 = vpack.c.b16 %v4252, %v4246
        %v4379 = vpack.c.b16 %v4253, %v4247
        %v4380 = vpack.c.b16 %v4254, %v4248
        %v4381 = vpack.c.b16 %v4261, %v4255
        %v4382 = vpack.c.b16 %v4262, %v4256
        %v4383 = vpack.c.b16 %v4263, %v4257
        %v4384 = vpack.c.b16 %v4264, %v4258
        %v4385 = vpack.c.b16 %v4265, %v4259
        %v4386 = vpack.c.b16 %v4266, %v4260
        %v4387 = vpack.c.b16 %v4273, %v4267
        %v4388 = vpack.c.b16 %v4274, %v4268
        %v4389 = vpack.c.b16 %v4275, %v4269
        %v4390 = vpack.c.b16 %v4276, %v4270
        %v4391 = vpack.c.b16 %v4277, %v4271
        %v4392 = vpack.c.b16 %v4278, %v4272
        %v4393 = vpack.c.b16 %v4285, %v4279
        %v4394 = vpack.c.b16 %v4286, %v4280
        %v4395 = vpack.c.b16 %v4287, %v4281
        %v4396 = vpack.c.b16 %v4288, %v4282
        %v4397 = vpack.c.b16 %v4289, %v4283
        %v4398 = vpack.c.b16 %v4290, %v4284
        %v4399 = vpack.c.b16 %v4297, %v4291
        %v4400 = vpack.c.b16 %v4298, %v4292
        %v4401 = vpack.c.b16 %v4299, %v4293
        %v4402 = vpack.c.b16 %v4300, %v4294
        %v4403 = vpack.c.b16 %v4301, %v4295
        %v4404 = vpack.c.b16 %v4302, %v4296
        %v4405 = vpack.c.b16 %v4309, %v4303
        %v4406 = vpack.c.b16 %v4310, %v4304
        %v4407 = vpack.c.b16 %v4311, %v4305
        %v4408 = vpack.c.b16 %v4312, %v4306
        %v4409 = vpack.c.b16 %v4313, %v4307
        %v4410 = vpack.c.b16 %v4314, %v4308
        %4507 = vmatprep.subr.bf16.mxu0 %v4316
        %4508 = vmatpush1.bf16.msra.mxu0 %v4315
        %4509 = vmatprep.subr.bf16.mxu0 %v4322
        %4510 = vmatpush1.bf16.msra.mxu0 %v4321
        %4511 = vmatprep.subr.bf16.mxu0 %v4328
        %4512 = vmatpush1.bf16.msra.mxu0 %v4327
        %4513 = vmatprep.subr.bf16.mxu0 %v4334
        %4514 = vmatpush1.bf16.msra.mxu0 %v4333
        %4515 = vmatprep.subr.bf16.mxu0 %v4340
        %4516 = vmatpush1.bf16.msra.mxu0 %v4339
        %4517 = vmatprep.subr.bf16.mxu0 %v4346
        %4518 = vmatpush1.bf16.msra.mxu0 %v4345
        %4519 = vmatprep.subr.bf16.mxu0 %v4352
        %4520 = vmatpush1.bf16.msra.mxu0 %v4351
        %4521 = vmatprep.subr.bf16.mxu0 %v4358
        %4522 = vmatpush1.bf16.msra.mxu0 %v4357
        %4523 = vmatprep.subr.bf16.mxu0 %v4364
        %4524 = vmatpush1.bf16.msra.mxu0 %v4363
        %4525 = vmatprep.subr.bf16.mxu0 %v4370
        %4526 = vmatpush1.bf16.msra.mxu0 %v4369
        %4527 = vmatprep.subr.bf16.mxu0 %v4376
        %4528 = vmatpush1.bf16.msra.mxu0 %v4375
        %4529 = vmatprep.subr.bf16.mxu0 %v4382
        %4530 = vmatpush1.bf16.msra.mxu0 %v4381
        %4531 = vmatprep.subr.bf16.mxu0 %v4388
        %4532 = vmatpush1.bf16.msra.mxu0 %v4387
        %4533 = vmatprep.subr.bf16.mxu0 %v4394
        %4534 = vmatpush1.bf16.msra.mxu0 %v4393
        %4535 = vmatprep.subr.bf16.mxu0 %v4400
        %4536 = vmatpush1.bf16.msra.mxu0 %v4399
        %4537 = vmatprep.subr.bf16.mxu0 %v4406
        %4538 = vmatpush1.bf16.msra.mxu0 %v4405
        %4539 = vmatprep.mubr.bf16.mxu0 %v3366
        %4540 = vmatmul.mubr.bf16.gmra.mrb[0].mxu0 %v3365
        %v4541 = vpop.f32.mrb[0].mxu0
        %v4542 = vadd.f32 %v3843, %v4541
        %v4543 = vpop.f32.mrb[0].mxu0
        %v4544 = vadd.f32 %v3845, %v4543
        %v4545 = vpop.f32.mrb[0].mxu0
        %v4546 = vadd.f32 %v3847, %v4545
        %v4547 = vpop.f32.mrb[0].mxu0
        %v4548 = vadd.f32 %v3849, %v4547
        %4549 = vmatprep.mubr.bf16.mxu0 %v3368
        %4550 = vmatmul.mubr.bf16.gmra.mrb[0].mxu0 %v3367
        %v4551 = vpop.f32.mrb[0].mxu0
        %v4552 = vadd.f32 %v3853, %v4551
        %v4553 = vpop.f32.mrb[0].mxu0
        %v4554 = vadd.f32 %v3855, %v4553
        %v4555 = vpop.f32.mrb[0].mxu0
        %v4556 = vadd.f32 %v3857, %v4555
        %v4557 = vpop.f32.mrb[0].mxu0
        %v4558 = vadd.f32 %v3859, %v4557
        %4559 = vmatprep.mubr.bf16.mxu0 %v3370
        %4560 = vmatmul.mubr.bf16.gmra.mrb[0].mxu0 %v3369
        %v4561 = vpop.f32.mrb[0].mxu0
        %v4562 = vadd.f32 %v3863, %v4561
        %v4563 = vpop.f32.mrb[0].mxu0
        %v4564 = vadd.f32 %v3865, %v4563
        %v4565 = vpop.f32.mrb[0].mxu0
        %v4566 = vadd.f32 %v3867, %v4565
        %v4567 = vpop.f32.mrb[0].mxu0
        %v4568 = vadd.f32 %v3869, %v4567
        %4569 = vmatprep.mubr.bf16.mxu0 %v3372
        %4570 = vmatmul.mubr.bf16.gmra.mrb[0].mxu0 %v3371
        %v4571 = vpop.f32.mrb[0].mxu0
        %v4572 = vadd.f32 %v3873, %v4571
        %v4573 = vpop.f32.mrb[0].mxu0
        %v4574 = vadd.f32 %v3875, %v4573
        %v4575 = vpop.f32.mrb[0].mxu0
        %v4576 = vadd.f32 %v3877, %v4575
        %v4577 = vpop.f32.mrb[0].mxu0
        %v4578 = vadd.f32 %v3879, %v4577
        %4579 = vdwg.mxu0
        %4580 = vmatprep.subr.bf16.mxu0 %v4318
        %4581 = vmatpush1.bf16.msra.mxu0 %v4317
        %4582 = vmatprep.subr.bf16.mxu0 %v4324
        %4583 = vmatpush1.bf16.msra.mxu0 %v4323
        %4584 = vmatprep.subr.bf16.mxu0 %v4330
        %4585 = vmatpush1.bf16.msra.mxu0 %v4329
        %4586 = vmatprep.subr.bf16.mxu0 %v4336
        %4587 = vmatpush1.bf16.msra.mxu0 %v4335
        %4588 = vmatprep.subr.bf16.mxu0 %v4342
        %4589 = vmatpush1.bf16.msra.mxu0 %v4341
        %4590 = vmatprep.subr.bf16.mxu0 %v4348
        %4591 = vmatpush1.bf16.msra.mxu0 %v4347
        %4592 = vmatprep.subr.bf16.mxu0 %v4354
        %4593 = vmatpush1.bf16.msra.mxu0 %v4353
        %4594 = vmatprep.subr.bf16.mxu0 %v4360
        %4595 = vmatpush1.bf16.msra.mxu0 %v4359
        %4596 = vmatprep.subr.bf16.mxu0 %v4366
        %4597 = vmatpush1.bf16.msra.mxu0 %v4365
        %4598 = vmatprep.subr.bf16.mxu0 %v4372
        %4599 = vmatpush1.bf16.msra.mxu0 %v4371
        %4600 = vmatprep.subr.bf16.mxu0 %v4378
        %4601 = vmatpush1.bf16.msra.mxu0 %v4377
        %4602 = vmatprep.subr.bf16.mxu0 %v4384
        %4603 = vmatpush1.bf16.msra.mxu0 %v4383
        %4604 = vmatprep.subr.bf16.mxu0 %v4390
        %4605 = vmatpush1.bf16.msra.mxu0 %v4389
        %4606 = vmatprep.subr.bf16.mxu0 %v4396
        %4607 = vmatpush1.bf16.msra.mxu0 %v4395
        %4608 = vmatprep.subr.bf16.mxu0 %v4402
        %4609 = vmatpush1.bf16.msra.mxu0 %v4401
        %4610 = vmatprep.subr.bf16.mxu0 %v4408
        %4611 = vmatpush1.bf16.msra.mxu0 %v4407
        %4612 = vmatprep.mubr.bf16.mxu0 %v3366
        %4613 = vmatmul.mubr.bf16.gmra.mrb[0].mxu0 %v3365
        %v4614 = vpop.f32.mrb[0].mxu0
        %v4615 = vadd.f32 %v3916, %v4614
        %v4616 = vpop.f32.mrb[0].mxu0
        %v4617 = vadd.f32 %v3918, %v4616
        %v4618 = vpop.f32.mrb[0].mxu0
        %v4619 = vadd.f32 %v3920, %v4618
        %v4620 = vpop.f32.mrb[0].mxu0
        %v4621 = vadd.f32 %v3922, %v4620
        %4622 = vmatprep.mubr.bf16.mxu0 %v3368
        %4623 = vmatmul.mubr.bf16.gmra.mrb[0].mxu0 %v3367
        %v4624 = vpop.f32.mrb[0].mxu0
        %v4625 = vadd.f32 %v3926, %v4624
        %v4626 = vpop.f32.mrb[0].mxu0
        %v4627 = vadd.f32 %v3928, %v4626
        %v4628 = vpop.f32.mrb[0].mxu0
        %v4629 = vadd.f32 %v3930, %v4628
        %v4630 = vpop.f32.mrb[0].mxu0
        %v4631 = vadd.f32 %v3932, %v4630
        %4632 = vmatprep.mubr.bf16.mxu0 %v3370
        %4633 = vmatmul.mubr.bf16.gmra.mrb[0].mxu0 %v3369
        %v4634 = vpop.f32.mrb[0].mxu0
        %v4635 = vadd.f32 %v3936, %v4634
        %v4636 = vpop.f32.mrb[0].mxu0
        %v4637 = vadd.f32 %v3938, %v4636
        %v4638 = vpop.f32.mrb[0].mxu0
        %v4639 = vadd.f32 %v3940, %v4638
        %v4640 = vpop.f32.mrb[0].mxu0
        %v4641 = vadd.f32 %v3942, %v4640
        %4642 = vmatprep.mubr.bf16.mxu0 %v3372
        %4643 = vmatmul.mubr.bf16.gmra.mrb[0].mxu0 %v3371
        %v4644 = vpop.f32.mrb[0].mxu0
        %v4645 = vadd.f32 %v3946, %v4644
        %v4646 = vpop.f32.mrb[0].mxu0
        %v4647 = vadd.f32 %v3948, %v4646
        %v4648 = vpop.f32.mrb[0].mxu0
        %v4649 = vadd.f32 %v3950, %v4648
        %v4650 = vpop.f32.mrb[0].mxu0
        %v4651 = vadd.f32 %v3952, %v4650
        %4652 = vdwg.mxu0
        %4653 = vmatprep.subr.bf16.mxu0 %v4320
        %4654 = vmatpush1.bf16.msra.mxu0 %v4319
        %4655 = vmatprep.subr.bf16.mxu0 %v4326
        %4656 = vmatpush1.bf16.msra.mxu0 %v4325
        %4657 = vmatprep.subr.bf16.mxu0 %v4332
        %4658 = vmatpush1.bf16.msra.mxu0 %v4331
        %4659 = vmatprep.subr.bf16.mxu0 %v4338
        %4660 = vmatpush1.bf16.msra.mxu0 %v4337
        %4661 = vmatprep.subr.bf16.mxu0 %v4344
        %4662 = vmatpush1.bf16.msra.mxu0 %v4343
        %4663 = vmatprep.subr.bf16.mxu0 %v4350
        %4664 = vmatpush1.bf16.msra.mxu0 %v4349
        %4665 = vmatprep.subr.bf16.mxu0 %v4356
        %4666 = vmatpush1.bf16.msra.mxu0 %v4355
        %4667 = vmatprep.subr.bf16.mxu0 %v4362
        %4668 = vmatpush1.bf16.msra.mxu0 %v4361
        %4669 = vmatprep.subr.bf16.mxu0 %v4368
        %4670 = vmatpush1.bf16.msra.mxu0 %v4367
        %4671 = vmatprep.subr.bf16.mxu0 %v4374
        %4672 = vmatpush1.bf16.msra.mxu0 %v4373
        %4673 = vmatprep.subr.bf16.mxu0 %v4380
        %4674 = vmatpush1.bf16.msra.mxu0 %v4379
        %4675 = vmatprep.subr.bf16.mxu0 %v4386
        %4676 = vmatpush1.bf16.msra.mxu0 %v4385
        %4677 = vmatprep.subr.bf16.mxu0 %v4392
        %4678 = vmatpush1.bf16.msra.mxu0 %v4391
        %4679 = vmatprep.subr.bf16.mxu0 %v4398
        %4680 = vmatpush1.bf16.msra.mxu0 %v4397
        %4681 = vmatprep.subr.bf16.mxu0 %v4404
        %4682 = vmatpush1.bf16.msra.mxu0 %v4403
        %4683 = vmatprep.subr.bf16.mxu0 %v4410
        %4684 = vmatpush1.bf16.msra.mxu0 %v4409
        %4685 = vmatprep.mubr.bf16.mxu0 %v3366
        %4686 = vmatmul.mubr.bf16.gmra.mrb[0].mxu0 %v3365
        %v4687 = vpop.f32.mrb[0].mxu0
        %v4688 = vadd.f32 %v3989, %v4687
        %v4689 = vpop.f32.mrb[0].mxu0
        %v4690 = vadd.f32 %v3991, %v4689
        %v4691 = vpop.f32.mrb[0].mxu0
        %v4692 = vadd.f32 %v3993, %v4691
        %v4693 = vpop.f32.mrb[0].mxu0
        %v4694 = vadd.f32 %v3995, %v4693
        %4695 = vmatprep.mubr.bf16.mxu0 %v3368
        %4696 = vmatmul.mubr.bf16.gmra.mrb[0].mxu0 %v3367
        %v4697 = vpop.f32.mrb[0].mxu0
        %v4698 = vadd.f32 %v3999, %v4697
        %v4699 = vpop.f32.mrb[0].mxu0
        %v4700 = vadd.f32 %v4001, %v4699
        %v4701 = vpop.f32.mrb[0].mxu0
        %v4702 = vadd.f32 %v4003, %v4701
        %v4703 = vpop.f32.mrb[0].mxu0
        %v4704 = vadd.f32 %v4005, %v4703
        %4705 = vmatprep.mubr.bf16.mxu0 %v3370
        %4706 = vmatmul.mubr.bf16.gmra.mrb[0].mxu0 %v3369
        %v4707 = vpop.f32.mrb[0].mxu0
        %v4708 = vadd.f32 %v4009, %v4707
        %v4709 = vpop.f32.mrb[0].mxu0
        %v4710 = vadd.f32 %v4011, %v4709
        %v4711 = vpop.f32.mrb[0].mxu0
        %v4712 = vadd.f32 %v4013, %v4711
        %v4713 = vpop.f32.mrb[0].mxu0
        %v4714 = vadd.f32 %v4015, %v4713
        %4715 = vmatprep.mubr.bf16.mxu0 %v3372
        %4716 = vmatmul.mubr.bf16.gmra.mrb[0].mxu0 %v3371
        %v4717 = vpop.f32.mrb[0].mxu0
        %v4718 = vadd.f32 %v4019, %v4717
        %v4719 = vpop.f32.mrb[0].mxu0
        %v4720 = vadd.f32 %v4021, %v4719
        %v4721 = vpop.f32.mrb[0].mxu0
        %v4722 = vadd.f32 %v4023, %v4721
        %v4723 = vpop.f32.mrb[0].mxu0
        %v4724 = vadd.f32 %v4025, %v4723
        %4725 = vdwg.mxu0
        %v4727 = vlaneseq
        %v4728 = vshrl.u32 %v4727, 7
        %v4729 = vsub.s32 0, %v4728
        %v4730 = vrot.slane %v3543, %v4729
        %v4731 = vlaneseq
        %v4732 = vshrl.u32 %v4731, 7
        %v4733 = vsub.s32 1, %v4732
        %v4734 = vrot.slane %v3543, %v4733
        %v4735 = vlaneseq
        %v4736 = vshrl.u32 %v4735, 7
        %v4737 = vsub.s32 2, %v4736
        %v4738 = vrot.slane %v3543, %v4737
        %v4739 = vlaneseq
        %v4740 = vshrl.u32 %v4739, 7
        %v4741 = vsub.s32 3, %v4740
        %v4742 = vrot.slane %v3543, %v4741
        %v4743 = vlaneseq
        %v4744 = vshrl.u32 %v4743, 7
        %v4745 = vsub.s32 4, %v4744
        %v4746 = vrot.slane %v3543, %v4745
        %v4747 = vlaneseq
        %v4748 = vshrl.u32 %v4747, 7
        %v4749 = vsub.s32 5, %v4748
        %v4750 = vrot.slane %v3543, %v4749
        %v4757 = vadd.f32 %v4542, %v4730
        %v4758 = vadd.f32 %v4544, %v4734
        %v4759 = vadd.f32 %v4615, %v4738
        %v4760 = vadd.f32 %v4617, %v4742
        %v4761 = vadd.f32 %v4688, %v4746
        %v4762 = vadd.f32 %v4690, %v4750
        %v4763 = vadd.f32 %v4546, %v4730
        %v4764 = vadd.f32 %v4548, %v4734
        %v4765 = vadd.f32 %v4619, %v4738
        %v4766 = vadd.f32 %v4621, %v4742
        %v4767 = vadd.f32 %v4692, %v4746
        %v4768 = vadd.f32 %v4694, %v4750
        %v4769 = vadd.f32 %v4552, %v4730
        %v4770 = vadd.f32 %v4554, %v4734
        %v4771 = vadd.f32 %v4625, %v4738
        %v4772 = vadd.f32 %v4627, %v4742
        %v4773 = vadd.f32 %v4698, %v4746
        %v4774 = vadd.f32 %v4700, %v4750
        %v4775 = vadd.f32 %v4556, %v4730
        %v4776 = vadd.f32 %v4558, %v4734
        %v4777 = vadd.f32 %v4629, %v4738
        %v4778 = vadd.f32 %v4631, %v4742
        %v4779 = vadd.f32 %v4702, %v4746
        %v4780 = vadd.f32 %v4704, %v4750
        %v4781 = vadd.f32 %v4562, %v4730
        %v4782 = vadd.f32 %v4564, %v4734
        %v4783 = vadd.f32 %v4635, %v4738
        %v4784 = vadd.f32 %v4637, %v4742
        %v4785 = vadd.f32 %v4708, %v4746
        %v4786 = vadd.f32 %v4710, %v4750
        %v4787 = vadd.f32 %v4566, %v4730
        %v4788 = vadd.f32 %v4568, %v4734
        %v4789 = vadd.f32 %v4639, %v4738
        %v4790 = vadd.f32 %v4641, %v4742
        %v4791 = vadd.f32 %v4712, %v4746
        %v4792 = vadd.f32 %v4714, %v4750
        %v4793 = vadd.f32 %v4572, %v4730
        %v4794 = vadd.f32 %v4574, %v4734
        %v4795 = vadd.f32 %v4645, %v4738
        %v4796 = vadd.f32 %v4647, %v4742
        %v4797 = vadd.f32 %v4718, %v4746
        %v4798 = vadd.f32 %v4720, %v4750
        %v4799 = vadd.f32 %v4576, %v4730
        %v4800 = vadd.f32 %v4578, %v4734
        %v4801 = vadd.f32 %v4649, %v4738
        %v4802 = vadd.f32 %v4651, %v4742
        %v4803 = vadd.f32 %v4722, %v4746
        %v4804 = vadd.f32 %v4724, %v4750
        %v4813 = vunpack.c.l.b16 %v645
        %v4814 = vunpack.c.l.b16 %v646
        %v4815 = vunpack.c.l.b16 %v647
        %v4816 = vunpack.c.l.b16 %v648
        %v4817 = vunpack.c.l.b16 %v649
        %v4818 = vunpack.c.l.b16 %v650
        %v4819 = vunpack.c.l.b16 %v651
        %v4820 = vunpack.c.l.b16 %v652
        %v4821 = vpack.c.b16 %v4814, %v4813
        %v4822 = vpack.c.b16 %v4816, %v4815
        %v4823 = vpack.c.b16 %v4818, %v4817
        %v4824 = vpack.c.b16 %v4820, %v4819
        %4829 = vmatprep.subr.bf16.mxu0 %v3713
        %4830 = vmatpush1.bf16.msra.mxu0 %v3712
        %4831 = vmatprep.subr.bf16.mxu0 %v3719
        %4832 = vmatpush1.bf16.msra.mxu0 %v3718
        %4833 = vmatprep.subr.bf16.mxu0 %v3725
        %4834 = vmatpush1.bf16.msra.mxu0 %v3724
        %4835 = vmatprep.subr.bf16.mxu0 %v3731
        %4836 = vmatpush1.bf16.msra.mxu0 %v3730
        %4837 = vmatprep.subr.bf16.mxu0 %v3737
        %4838 = vmatpush1.bf16.msra.mxu0 %v3736
        %4839 = vmatprep.subr.bf16.mxu0 %v3743
        %4840 = vmatpush1.bf16.msra.mxu0 %v3742
        %4841 = vmatprep.subr.bf16.mxu0 %v3749
        %4842 = vmatpush1.bf16.msra.mxu0 %v3748
        %4843 = vmatprep.subr.bf16.mxu0 %v3755
        %4844 = vmatpush1.bf16.msra.mxu0 %v3754
        %4845 = vmatprep.subr.bf16.mxu0 0
        %4846 = vmatpush1.bf16.msra.mxu0 0
        %4847 = vmatprep.subr.bf16.mxu0 0
        %4848 = vmatpush1.bf16.msra.mxu0 0
        %4849 = vmatprep.subr.bf16.mxu0 0
        %4850 = vmatpush1.bf16.msra.mxu0 0
        %4851 = vmatprep.subr.bf16.mxu0 0
        %4852 = vmatpush1.bf16.msra.mxu0 0
        %4853 = vmatprep.subr.bf16.mxu0 0
        %4854 = vmatpush1.bf16.msra.mxu0 0
        %4855 = vmatprep.subr.bf16.mxu0 0
        %4856 = vmatpush1.bf16.msra.mxu0 0
        %4857 = vmatprep.subr.bf16.mxu0 0
        %4858 = vmatpush1.bf16.msra.mxu0 0
        %4859 = vmatprep.subr.bf16.mxu0 0
        %4860 = vmatpush1.bf16.msra.mxu0 0
        %4861 = vmatprep.mubr.bf16.mxu0 0
        %4862 = vmatmul.mubr.bf16.gmra.mrb[0].mxu0 %v4821
        %v4863 = vpop.f32.mrb[0].mxu0
        %v4864 = vadd.f32 0.0, %v4863
        %v4865 = vpop.f32.mrb[0].mxu0
        %v4866 = vadd.f32 0.0, %v4865
        %v4867 = vpop.f32.mrb[0].mxu0
        %v4868 = vadd.f32 0.0, %v4867
        %v4869 = vpop.f32.mrb[0].mxu0
        %v4870 = vadd.f32 0.0, %v4869
        %4871 = vmatprep.mubr.bf16.mxu0 0
        %4872 = vmatmul.mubr.bf16.gmra.mrb[0].mxu0 %v4822
        %v4873 = vpop.f32.mrb[0].mxu0
        %v4874 = vadd.f32 0.0, %v4873
        %v4875 = vpop.f32.mrb[0].mxu0
        %v4876 = vadd.f32 0.0, %v4875
        %v4877 = vpop.f32.mrb[0].mxu0
        %v4878 = vadd.f32 0.0, %v4877
        %v4879 = vpop.f32.mrb[0].mxu0
        %v4880 = vadd.f32 0.0, %v4879
        %4881 = vmatprep.mubr.bf16.mxu0 0
        %4882 = vmatmul.mubr.bf16.gmra.mrb[0].mxu0 %v4823
        %v4883 = vpop.f32.mrb[0].mxu0
        %v4884 = vadd.f32 0.0, %v4883
        %v4885 = vpop.f32.mrb[0].mxu0
        %v4886 = vadd.f32 0.0, %v4885
        %v4887 = vpop.f32.mrb[0].mxu0
        %v4888 = vadd.f32 0.0, %v4887
        %v4889 = vpop.f32.mrb[0].mxu0
        %v4890 = vadd.f32 0.0, %v4889
        %4891 = vmatprep.mubr.bf16.mxu0 0
        %4892 = vmatmul.mubr.bf16.gmra.mrb[0].mxu0 %v4824
        %v4893 = vpop.f32.mrb[0].mxu0
        %v4894 = vadd.f32 0.0, %v4893
        %v4895 = vpop.f32.mrb[0].mxu0
        %v4896 = vadd.f32 0.0, %v4895
        %v4897 = vpop.f32.mrb[0].mxu0
        %v4898 = vadd.f32 0.0, %v4897
        %v4899 = vpop.f32.mrb[0].mxu0
        %v4900 = vadd.f32 0.0, %v4899
        %4901 = vdwg.mxu0
        %4902 = vmatprep.subr.bf16.mxu0 %v3715
        %4903 = vmatpush1.bf16.msra.mxu0 %v3714
        %4904 = vmatprep.subr.bf16.mxu0 %v3721
        %4905 = vmatpush1.bf16.msra.mxu0 %v3720
        %4906 = vmatprep.subr.bf16.mxu0 %v3727
        %4907 = vmatpush1.bf16.msra.mxu0 %v3726
        %4908 = vmatprep.subr.bf16.mxu0 %v3733
        %4909 = vmatpush1.bf16.msra.mxu0 %v3732
        %4910 = vmatprep.subr.bf16.mxu0 %v3739
        %4911 = vmatpush1.bf16.msra.mxu0 %v3738
        %4912 = vmatprep.subr.bf16.mxu0 %v3745
        %4913 = vmatpush1.bf16.msra.mxu0 %v3744
        %4914 = vmatprep.subr.bf16.mxu0 %v3751
        %4915 = vmatpush1.bf16.msra.mxu0 %v3750
        %4916 = vmatprep.subr.bf16.mxu0 %v3757
        %4917 = vmatpush1.bf16.msra.mxu0 %v3756
        %4918 = vmatprep.subr.bf16.mxu0 0
        %4919 = vmatpush1.bf16.msra.mxu0 0
        %4920 = vmatprep.subr.bf16.mxu0 0
        %4921 = vmatpush1.bf16.msra.mxu0 0
        %4922 = vmatprep.subr.bf16.mxu0 0
        %4923 = vmatpush1.bf16.msra.mxu0 0
        %4924 = vmatprep.subr.bf16.mxu0 0
        %4925 = vmatpush1.bf16.msra.mxu0 0
        %4926 = vmatprep.subr.bf16.mxu0 0
        %4927 = vmatpush1.bf16.msra.mxu0 0
        %4928 = vmatprep.subr.bf16.mxu0 0
        %4929 = vmatpush1.bf16.msra.mxu0 0
        %4930 = vmatprep.subr.bf16.mxu0 0
        %4931 = vmatpush1.bf16.msra.mxu0 0
        %4932 = vmatprep.subr.bf16.mxu0 0
        %4933 = vmatpush1.bf16.msra.mxu0 0
        %4934 = vmatprep.mubr.bf16.mxu0 0
        %4935 = vmatmul.mubr.bf16.gmra.mrb[0].mxu0 %v4821
        %v4936 = vpop.f32.mrb[0].mxu0
        %v4937 = vadd.f32 0.0, %v4936
        %v4938 = vpop.f32.mrb[0].mxu0
        %v4939 = vadd.f32 0.0, %v4938
        %v4940 = vpop.f32.mrb[0].mxu0
        %v4941 = vadd.f32 0.0, %v4940
        %v4942 = vpop.f32.mrb[0].mxu0
        %v4943 = vadd.f32 0.0, %v4942
        %4944 = vmatprep.mubr.bf16.mxu0 0
        %4945 = vmatmul.mubr.bf16.gmra.mrb[0].mxu0 %v4822
        %v4946 = vpop.f32.mrb[0].mxu0
        %v4947 = vadd.f32 0.0, %v4946
        %v4948 = vpop.f32.mrb[0].mxu0
        %v4949 = vadd.f32 0.0, %v4948
        %v4950 = vpop.f32.mrb[0].mxu0
        %v4951 = vadd.f32 0.0, %v4950
        %v4952 = vpop.f32.mrb[0].mxu0
        %v4953 = vadd.f32 0.0, %v4952
        %4954 = vmatprep.mubr.bf16.mxu0 0
        %4955 = vmatmul.mubr.bf16.gmra.mrb[0].mxu0 %v4823
        %v4956 = vpop.f32.mrb[0].mxu0
        %v4957 = vadd.f32 0.0, %v4956
        %v4958 = vpop.f32.mrb[0].mxu0
        %v4959 = vadd.f32 0.0, %v4958
        %v4960 = vpop.f32.mrb[0].mxu0
        %v4961 = vadd.f32 0.0, %v4960
        %v4962 = vpop.f32.mrb[0].mxu0
        %v4963 = vadd.f32 0.0, %v4962
        %4964 = vmatprep.mubr.bf16.mxu0 0
        %4965 = vmatmul.mubr.bf16.gmra.mrb[0].mxu0 %v4824
        %v4966 = vpop.f32.mrb[0].mxu0
        %v4967 = vadd.f32 0.0, %v4966
        %v4968 = vpop.f32.mrb[0].mxu0
        %v4969 = vadd.f32 0.0, %v4968
        %v4970 = vpop.f32.mrb[0].mxu0
        %v4971 = vadd.f32 0.0, %v4970
        %v4972 = vpop.f32.mrb[0].mxu0
        %v4973 = vadd.f32 0.0, %v4972
        %4974 = vdwg.mxu0
        %4975 = vmatprep.subr.bf16.mxu0 %v3717
        %4976 = vmatpush1.bf16.msra.mxu0 %v3716
        %4977 = vmatprep.subr.bf16.mxu0 %v3723
        %4978 = vmatpush1.bf16.msra.mxu0 %v3722
        %4979 = vmatprep.subr.bf16.mxu0 %v3729
        %4980 = vmatpush1.bf16.msra.mxu0 %v3728
        %4981 = vmatprep.subr.bf16.mxu0 %v3735
        %4982 = vmatpush1.bf16.msra.mxu0 %v3734
        %4983 = vmatprep.subr.bf16.mxu0 %v3741
        %4984 = vmatpush1.bf16.msra.mxu0 %v3740
        %4985 = vmatprep.subr.bf16.mxu0 %v3747
        %4986 = vmatpush1.bf16.msra.mxu0 %v3746
        %4987 = vmatprep.subr.bf16.mxu0 %v3753
        %4988 = vmatpush1.bf16.msra.mxu0 %v3752
        %4989 = vmatprep.subr.bf16.mxu0 %v3759
        %4990 = vmatpush1.bf16.msra.mxu0 %v3758
        %4991 = vmatprep.subr.bf16.mxu0 0
        %4992 = vmatpush1.bf16.msra.mxu0 0
        %4993 = vmatprep.subr.bf16.mxu0 0
        %4994 = vmatpush1.bf16.msra.mxu0 0
        %4995 = vmatprep.subr.bf16.mxu0 0
        %4996 = vmatpush1.bf16.msra.mxu0 0
        %4997 = vmatprep.subr.bf16.mxu0 0
        %4998 = vmatpush1.bf16.msra.mxu0 0
        %4999 = vmatprep.subr.bf16.mxu0 0
        %5000 = vmatpush1.bf16.msra.mxu0 0
        %5001 = vmatprep.subr.bf16.mxu0 0
        %5002 = vmatpush1.bf16.msra.mxu0 0
        %5003 = vmatprep.subr.bf16.mxu0 0
        %5004 = vmatpush1.bf16.msra.mxu0 0
        %5005 = vmatprep.subr.bf16.mxu0 0
        %5006 = vmatpush1.bf16.msra.mxu0 0
        %5007 = vmatprep.mubr.bf16.mxu0 0
        %5008 = vmatmul.mubr.bf16.gmra.mrb[0].mxu0 %v4821
        %v5009 = vpop.f32.mrb[0].mxu0
        %v5010 = vadd.f32 0.0, %v5009
        %v5011 = vpop.f32.mrb[0].mxu0
        %v5012 = vadd.f32 0.0, %v5011
        %v5013 = vpop.f32.mrb[0].mxu0
        %v5014 = vadd.f32 0.0, %v5013
        %v5015 = vpop.f32.mrb[0].mxu0
        %v5016 = vadd.f32 0.0, %v5015
        %5017 = vmatprep.mubr.bf16.mxu0 0
        %5018 = vmatmul.mubr.bf16.gmra.mrb[0].mxu0 %v4822
        %v5019 = vpop.f32.mrb[0].mxu0
        %v5020 = vadd.f32 0.0, %v5019
        %v5021 = vpop.f32.mrb[0].mxu0
        %v5022 = vadd.f32 0.0, %v5021
        %v5023 = vpop.f32.mrb[0].mxu0
        %v5024 = vadd.f32 0.0, %v5023
        %v5025 = vpop.f32.mrb[0].mxu0
        %v5026 = vadd.f32 0.0, %v5025
        %5027 = vmatprep.mubr.bf16.mxu0 0
        %5028 = vmatmul.mubr.bf16.gmra.mrb[0].mxu0 %v4823
        %v5029 = vpop.f32.mrb[0].mxu0
        %v5030 = vadd.f32 0.0, %v5029
        %v5031 = vpop.f32.mrb[0].mxu0
        %v5032 = vadd.f32 0.0, %v5031
        %v5033 = vpop.f32.mrb[0].mxu0
        %v5034 = vadd.f32 0.0, %v5033
        %v5035 = vpop.f32.mrb[0].mxu0
        %v5036 = vadd.f32 0.0, %v5035
        %5037 = vmatprep.mubr.bf16.mxu0 0
        %5038 = vmatmul.mubr.bf16.gmra.mrb[0].mxu0 %v4824
        %v5039 = vpop.f32.mrb[0].mxu0
        %v5040 = vadd.f32 0.0, %v5039
        %v5041 = vpop.f32.mrb[0].mxu0
        %v5042 = vadd.f32 0.0, %v5041
        %v5043 = vpop.f32.mrb[0].mxu0
        %v5044 = vadd.f32 0.0, %v5043
        %v5045 = vpop.f32.mrb[0].mxu0
        %v5046 = vadd.f32 0.0, %v5045
        %5047 = vdwg.mxu0
        %5048 = vmatprep.subr.bf16.mxu0 %v4316
        %5049 = vmatpush1.bf16.msra.mxu0 %v4315
        %5050 = vmatprep.subr.bf16.mxu0 %v4322
        %5051 = vmatpush1.bf16.msra.mxu0 %v4321
        %5052 = vmatprep.subr.bf16.mxu0 %v4328
        %5053 = vmatpush1.bf16.msra.mxu0 %v4327
        %5054 = vmatprep.subr.bf16.mxu0 %v4334
        %5055 = vmatpush1.bf16.msra.mxu0 %v4333
        %5056 = vmatprep.subr.bf16.mxu0 %v4340
        %5057 = vmatpush1.bf16.msra.mxu0 %v4339
        %5058 = vmatprep.subr.bf16.mxu0 %v4346
        %5059 = vmatpush1.bf16.msra.mxu0 %v4345
        %5060 = vmatprep.subr.bf16.mxu0 %v4352
        %5061 = vmatpush1.bf16.msra.mxu0 %v4351
        %5062 = vmatprep.subr.bf16.mxu0 %v4358
        %5063 = vmatpush1.bf16.msra.mxu0 %v4357
        %5064 = vmatprep.subr.bf16.mxu0 %v4364
        %5065 = vmatpush1.bf16.msra.mxu0 %v4363
        %5066 = vmatprep.subr.bf16.mxu0 %v4370
        %5067 = vmatpush1.bf16.msra.mxu0 %v4369
        %5068 = vmatprep.subr.bf16.mxu0 %v4376
        %5069 = vmatpush1.bf16.msra.mxu0 %v4375
        %5070 = vmatprep.subr.bf16.mxu0 %v4382
        %5071 = vmatpush1.bf16.msra.mxu0 %v4381
        %5072 = vmatprep.subr.bf16.mxu0 %v4388
        %5073 = vmatpush1.bf16.msra.mxu0 %v4387
        %5074 = vmatprep.subr.bf16.mxu0 %v4394
        %5075 = vmatpush1.bf16.msra.mxu0 %v4393
        %5076 = vmatprep.subr.bf16.mxu0 %v4400
        %5077 = vmatpush1.bf16.msra.mxu0 %v4399
        %5078 = vmatprep.subr.bf16.mxu0 %v4406
        %5079 = vmatpush1.bf16.msra.mxu0 %v4405
        %5080 = vmatprep.mubr.bf16.mxu0 %v3390
        %5081 = vmatmul.mubr.bf16.gmra.mrb[0].mxu0 %v3389
        %v5082 = vpop.f32.mrb[0].mxu0
        %v5083 = vadd.f32 %v4864, %v5082
        %v5084 = vpop.f32.mrb[0].mxu0
        %v5085 = vadd.f32 %v4866, %v5084
        %v5086 = vpop.f32.mrb[0].mxu0
        %v5087 = vadd.f32 %v4868, %v5086
        %v5088 = vpop.f32.mrb[0].mxu0
        %v5089 = vadd.f32 %v4870, %v5088
        %5090 = vmatprep.mubr.bf16.mxu0 %v3392
        %5091 = vmatmul.mubr.bf16.gmra.mrb[0].mxu0 %v3391
        %v5092 = vpop.f32.mrb[0].mxu0
        %v5093 = vadd.f32 %v4874, %v5092
        %v5094 = vpop.f32.mrb[0].mxu0
        %v5095 = vadd.f32 %v4876, %v5094
        %v5096 = vpop.f32.mrb[0].mxu0
        %v5097 = vadd.f32 %v4878, %v5096
        %v5098 = vpop.f32.mrb[0].mxu0
        %v5099 = vadd.f32 %v4880, %v5098
        %5100 = vmatprep.mubr.bf16.mxu0 %v3394
        %5101 = vmatmul.mubr.bf16.gmra.mrb[0].mxu0 %v3393
        %v5102 = vpop.f32.mrb[0].mxu0
        %v5103 = vadd.f32 %v4884, %v5102
        %v5104 = vpop.f32.mrb[0].mxu0
        %v5105 = vadd.f32 %v4886, %v5104
        %v5106 = vpop.f32.mrb[0].mxu0
        %v5107 = vadd.f32 %v4888, %v5106
        %v5108 = vpop.f32.mrb[0].mxu0
        %v5109 = vadd.f32 %v4890, %v5108
        %5110 = vmatprep.mubr.bf16.mxu0 %v3396
        %5111 = vmatmul.mubr.bf16.gmra.mrb[0].mxu0 %v3395
        %v5112 = vpop.f32.mrb[0].mxu0
        %v5113 = vadd.f32 %v4894, %v5112
        %v5114 = vpop.f32.mrb[0].mxu0
        %v5115 = vadd.f32 %v4896, %v5114
        %v5116 = vpop.f32.mrb[0].mxu0
        %v5117 = vadd.f32 %v4898, %v5116
        %v5118 = vpop.f32.mrb[0].mxu0
        %v5119 = vadd.f32 %v4900, %v5118
        %5120 = vdwg.mxu0
        %5121 = vmatprep.subr.bf16.mxu0 %v4318
        %5122 = vmatpush1.bf16.msra.mxu0 %v4317
        %5123 = vmatprep.subr.bf16.mxu0 %v4324
        %5124 = vmatpush1.bf16.msra.mxu0 %v4323
        %5125 = vmatprep.subr.bf16.mxu0 %v4330
        %5126 = vmatpush1.bf16.msra.mxu0 %v4329
        %5127 = vmatprep.subr.bf16.mxu0 %v4336
        %5128 = vmatpush1.bf16.msra.mxu0 %v4335
        %5129 = vmatprep.subr.bf16.mxu0 %v4342
        %5130 = vmatpush1.bf16.msra.mxu0 %v4341
        %5131 = vmatprep.subr.bf16.mxu0 %v4348
        %5132 = vmatpush1.bf16.msra.mxu0 %v4347
        %5133 = vmatprep.subr.bf16.mxu0 %v4354
        %5134 = vmatpush1.bf16.msra.mxu0 %v4353
        %5135 = vmatprep.subr.bf16.mxu0 %v4360
        %5136 = vmatpush1.bf16.msra.mxu0 %v4359
        %5137 = vmatprep.subr.bf16.mxu0 %v4366
        %5138 = vmatpush1.bf16.msra.mxu0 %v4365
        %5139 = vmatprep.subr.bf16.mxu0 %v4372
        %5140 = vmatpush1.bf16.msra.mxu0 %v4371
        %5141 = vmatprep.subr.bf16.mxu0 %v4378
        %5142 = vmatpush1.bf16.msra.mxu0 %v4377
        %5143 = vmatprep.subr.bf16.mxu0 %v4384
        %5144 = vmatpush1.bf16.msra.mxu0 %v4383
        %5145 = vmatprep.subr.bf16.mxu0 %v4390
        %5146 = vmatpush1.bf16.msra.mxu0 %v4389
        %5147 = vmatprep.subr.bf16.mxu0 %v4396
        %5148 = vmatpush1.bf16.msra.mxu0 %v4395
        %5149 = vmatprep.subr.bf16.mxu0 %v4402
        %5150 = vmatpush1.bf16.msra.mxu0 %v4401
        %5151 = vmatprep.subr.bf16.mxu0 %v4408
        %5152 = vmatpush1.bf16.msra.mxu0 %v4407
        %5153 = vmatprep.mubr.bf16.mxu0 %v3390
        %5154 = vmatmul.mubr.bf16.gmra.mrb[0].mxu0 %v3389
        %v5155 = vpop.f32.mrb[0].mxu0
        %v5156 = vadd.f32 %v4937, %v5155
        %v5157 = vpop.f32.mrb[0].mxu0
        %v5158 = vadd.f32 %v4939, %v5157
        %v5159 = vpop.f32.mrb[0].mxu0
        %v5160 = vadd.f32 %v4941, %v5159
        %v5161 = vpop.f32.mrb[0].mxu0
        %v5162 = vadd.f32 %v4943, %v5161
        %5163 = vmatprep.mubr.bf16.mxu0 %v3392
        %5164 = vmatmul.mubr.bf16.gmra.mrb[0].mxu0 %v3391
        %v5165 = vpop.f32.mrb[0].mxu0
        %v5166 = vadd.f32 %v4947, %v5165
        %v5167 = vpop.f32.mrb[0].mxu0
        %v5168 = vadd.f32 %v4949, %v5167
        %v5169 = vpop.f32.mrb[0].mxu0
        %v5170 = vadd.f32 %v4951, %v5169
        %v5171 = vpop.f32.mrb[0].mxu0
        %v5172 = vadd.f32 %v4953, %v5171
        %5173 = vmatprep.mubr.bf16.mxu0 %v3394
        %5174 = vmatmul.mubr.bf16.gmra.mrb[0].mxu0 %v3393
        %v5175 = vpop.f32.mrb[0].mxu0
        %v5176 = vadd.f32 %v4957, %v5175
        %v5177 = vpop.f32.mrb[0].mxu0
        %v5178 = vadd.f32 %v4959, %v5177
        %v5179 = vpop.f32.mrb[0].mxu0
        %v5180 = vadd.f32 %v4961, %v5179
        %v5181 = vpop.f32.mrb[0].mxu0
        %v5182 = vadd.f32 %v4963, %v5181
        %5183 = vmatprep.mubr.bf16.mxu0 %v3396
        %5184 = vmatmul.mubr.bf16.gmra.mrb[0].mxu0 %v3395
        %v5185 = vpop.f32.mrb[0].mxu0
        %v5186 = vadd.f32 %v4967, %v5185
        %v5187 = vpop.f32.mrb[0].mxu0
        %v5188 = vadd.f32 %v4969, %v5187
        %v5189 = vpop.f32.mrb[0].mxu0
        %v5190 = vadd.f32 %v4971, %v5189
        %v5191 = vpop.f32.mrb[0].mxu0
        %v5192 = vadd.f32 %v4973, %v5191
        %5193 = vdwg.mxu0
        %5194 = vmatprep.subr.bf16.mxu0 %v4320
        %5195 = vmatpush1.bf16.msra.mxu0 %v4319
        %5196 = vmatprep.subr.bf16.mxu0 %v4326
        %5197 = vmatpush1.bf16.msra.mxu0 %v4325
        %5198 = vmatprep.subr.bf16.mxu0 %v4332
        %5199 = vmatpush1.bf16.msra.mxu0 %v4331
        %5200 = vmatprep.subr.bf16.mxu0 %v4338
        %5201 = vmatpush1.bf16.msra.mxu0 %v4337
        %5202 = vmatprep.subr.bf16.mxu0 %v4344
        %5203 = vmatpush1.bf16.msra.mxu0 %v4343
        %5204 = vmatprep.subr.bf16.mxu0 %v4350
        %5205 = vmatpush1.bf16.msra.mxu0 %v4349
        %5206 = vmatprep.subr.bf16.mxu0 %v4356
        %5207 = vmatpush1.bf16.msra.mxu0 %v4355
        %5208 = vmatprep.subr.bf16.mxu0 %v4362
        %5209 = vmatpush1.bf16.msra.mxu0 %v4361
        %5210 = vmatprep.subr.bf16.mxu0 %v4368
        %5211 = vmatpush1.bf16.msra.mxu0 %v4367
        %5212 = vmatprep.subr.bf16.mxu0 %v4374
        %5213 = vmatpush1.bf16.msra.mxu0 %v4373
        %5214 = vmatprep.subr.bf16.mxu0 %v4380
        %5215 = vmatpush1.bf16.msra.mxu0 %v4379
        %5216 = vmatprep.subr.bf16.mxu0 %v4386
        %5217 = vmatpush1.bf16.msra.mxu0 %v4385
        %5218 = vmatprep.subr.bf16.mxu0 %v4392
        %5219 = vmatpush1.bf16.msra.mxu0 %v4391
        %5220 = vmatprep.subr.bf16.mxu0 %v4398
        %5221 = vmatpush1.bf16.msra.mxu0 %v4397
        %5222 = vmatprep.subr.bf16.mxu0 %v4404
        %5223 = vmatpush1.bf16.msra.mxu0 %v4403
        %5224 = vmatprep.subr.bf16.mxu0 %v4410
        %5225 = vmatpush1.bf16.msra.mxu0 %v4409
        %5226 = vmatprep.mubr.bf16.mxu0 %v3390
        %5227 = vmatmul.mubr.bf16.gmra.mrb[0].mxu0 %v3389
        %v5228 = vpop.f32.mrb[0].mxu0
        %v5229 = vadd.f32 %v5010, %v5228
        %v5230 = vpop.f32.mrb[0].mxu0
        %v5231 = vadd.f32 %v5012, %v5230
        %v5232 = vpop.f32.mrb[0].mxu0
        %v5233 = vadd.f32 %v5014, %v5232
        %v5234 = vpop.f32.mrb[0].mxu0
        %v5235 = vadd.f32 %v5016, %v5234
        %5236 = vmatprep.mubr.bf16.mxu0 %v3392
        %5237 = vmatmul.mubr.bf16.gmra.mrb[0].mxu0 %v3391
        %v5238 = vpop.f32.mrb[0].mxu0
        %v5239 = vadd.f32 %v5020, %v5238
        %v5240 = vpop.f32.mrb[0].mxu0
        %v5241 = vadd.f32 %v5022, %v5240
        %v5242 = vpop.f32.mrb[0].mxu0
        %v5243 = vadd.f32 %v5024, %v5242
        %v5244 = vpop.f32.mrb[0].mxu0
        %v5245 = vadd.f32 %v5026, %v5244
        %5246 = vmatprep.mubr.bf16.mxu0 %v3394
        %5247 = vmatmul.mubr.bf16.gmra.mrb[0].mxu0 %v3393
        %v5248 = vpop.f32.mrb[0].mxu0
        %v5249 = vadd.f32 %v5030, %v5248
        %v5250 = vpop.f32.mrb[0].mxu0
        %v5251 = vadd.f32 %v5032, %v5250
        %v5252 = vpop.f32.mrb[0].mxu0
        %v5253 = vadd.f32 %v5034, %v5252
        %v5254 = vpop.f32.mrb[0].mxu0
        %v5255 = vadd.f32 %v5036, %v5254
        %5256 = vmatprep.mubr.bf16.mxu0 %v3396
        %5257 = vmatmul.mubr.bf16.gmra.mrb[0].mxu0 %v3395
        %v5258 = vpop.f32.mrb[0].mxu0
        %v5259 = vadd.f32 %v5040, %v5258
        %v5260 = vpop.f32.mrb[0].mxu0
        %v5261 = vadd.f32 %v5042, %v5260
        %v5262 = vpop.f32.mrb[0].mxu0
        %v5263 = vadd.f32 %v5044, %v5262
        %v5264 = vpop.f32.mrb[0].mxu0
        %v5265 = vadd.f32 %v5046, %v5264
        %5266 = vdwg.mxu0
        %v5267 = vadd.f32 %v5083, %v4730
        %v5268 = vadd.f32 %v5085, %v4734
        %v5269 = vadd.f32 %v5156, %v4738
        %v5270 = vadd.f32 %v5158, %v4742
        %v5271 = vadd.f32 %v5229, %v4746
        %v5272 = vadd.f32 %v5231, %v4750
        %v5273 = vadd.f32 %v5087, %v4730
        %v5274 = vadd.f32 %v5089, %v4734
        %v5275 = vadd.f32 %v5160, %v4738
        %v5276 = vadd.f32 %v5162, %v4742
        %v5277 = vadd.f32 %v5233, %v4746
        %v5278 = vadd.f32 %v5235, %v4750
        %v5279 = vadd.f32 %v5093, %v4730
        %v5280 = vadd.f32 %v5095, %v4734
        %v5281 = vadd.f32 %v5166, %v4738
        %v5282 = vadd.f32 %v5168, %v4742
        %v5283 = vadd.f32 %v5239, %v4746
        %v5284 = vadd.f32 %v5241, %v4750
        %v5285 = vadd.f32 %v5097, %v4730
        %v5286 = vadd.f32 %v5099, %v4734
        %v5287 = vadd.f32 %v5170, %v4738
        %v5288 = vadd.f32 %v5172, %v4742
        %v5289 = vadd.f32 %v5243, %v4746
        %v5290 = vadd.f32 %v5245, %v4750
        %v5291 = vadd.f32 %v5103, %v4730
        %v5292 = vadd.f32 %v5105, %v4734
        %v5293 = vadd.f32 %v5176, %v4738
        %v5294 = vadd.f32 %v5178, %v4742
        %v5295 = vadd.f32 %v5249, %v4746
        %v5296 = vadd.f32 %v5251, %v4750
        %v5297 = vadd.f32 %v5107, %v4730
        %v5298 = vadd.f32 %v5109, %v4734
        %v5299 = vadd.f32 %v5180, %v4738
        %v5300 = vadd.f32 %v5182, %v4742
        %v5301 = vadd.f32 %v5253, %v4746
        %v5302 = vadd.f32 %v5255, %v4750
        %v5303 = vadd.f32 %v5113, %v4730
        %v5304 = vadd.f32 %v5115, %v4734
        %v5305 = vadd.f32 %v5186, %v4738
        %v5306 = vadd.f32 %v5188, %v4742
        %v5307 = vadd.f32 %v5259, %v4746
        %v5308 = vadd.f32 %v5261, %v4750
        %v5309 = vadd.f32 %v5117, %v4730
        %v5310 = vadd.f32 %v5119, %v4734
        %v5311 = vadd.f32 %v5190, %v4738
        %v5312 = vadd.f32 %v5192, %v4742
        %v5313 = vadd.f32 %v5263, %v4746
        %v5314 = vadd.f32 %v5265, %v4750
        %v5315 = vmax.f32 %v4757, 0.0
        %v5316 = vmax.f32 %v4758, 0.0
        %v5317 = vmax.f32 %v4759, 0.0
        %v5318 = vmax.f32 %v4760, 0.0
        %v5319 = vmax.f32 %v4761, 0.0
        %v5320 = vmax.f32 %v4762, 0.0
        %v5321 = vmax.f32 %v4763, 0.0
        %v5322 = vmax.f32 %v4764, 0.0
        %v5323 = vmax.f32 %v4765, 0.0
        %v5324 = vmax.f32 %v4766, 0.0
        %v5325 = vmax.f32 %v4767, 0.0
        %v5326 = vmax.f32 %v4768, 0.0
        %v5327 = vmax.f32 %v4769, 0.0
        %v5328 = vmax.f32 %v4770, 0.0
        %v5329 = vmax.f32 %v4771, 0.0
        %v5330 = vmax.f32 %v4772, 0.0
        %v5331 = vmax.f32 %v4773, 0.0
        %v5332 = vmax.f32 %v4774, 0.0
        %v5333 = vmax.f32 %v4775, 0.0
        %v5334 = vmax.f32 %v4776, 0.0
        %v5335 = vmax.f32 %v4777, 0.0
        %v5336 = vmax.f32 %v4778, 0.0
        %v5337 = vmax.f32 %v4779, 0.0
        %v5338 = vmax.f32 %v4780, 0.0
        %v5339 = vmax.f32 %v4781, 0.0
        %v5340 = vmax.f32 %v4782, 0.0
        %v5341 = vmax.f32 %v4783, 0.0
        %v5342 = vmax.f32 %v4784, 0.0
        %v5343 = vmax.f32 %v4785, 0.0
        %v5344 = vmax.f32 %v4786, 0.0
        %v5345 = vmax.f32 %v4787, 0.0
        %v5346 = vmax.f32 %v4788, 0.0
        %v5347 = vmax.f32 %v4789, 0.0
        %v5348 = vmax.f32 %v4790, 0.0
        %v5349 = vmax.f32 %v4791, 0.0
        %v5350 = vmax.f32 %v4792, 0.0
        %v5351 = vmax.f32 %v4793, 0.0
        %v5352 = vmax.f32 %v4794, 0.0
        %v5353 = vmax.f32 %v4795, 0.0
        %v5354 = vmax.f32 %v4796, 0.0
        %v5355 = vmax.f32 %v4797, 0.0
        %v5356 = vmax.f32 %v4798, 0.0
        %v5357 = vmax.f32 %v4799, 0.0
        %v5358 = vmax.f32 %v4800, 0.0
        %v5359 = vmax.f32 %v4801, 0.0
        %v5360 = vmax.f32 %v4802, 0.0
        %v5361 = vmax.f32 %v4803, 0.0
        %v5362 = vmax.f32 %v4804, 0.0
        %v5363 = vpack.c.bf16 %v5321, %v5315
        %v5364 = vpack.c.bf16 %v5322, %v5316
        %v5365 = vpack.c.bf16 %v5323, %v5317
        %v5366 = vpack.c.bf16 %v5324, %v5318
        %v5367 = vpack.c.bf16 %v5325, %v5319
        %v5368 = vpack.c.bf16 %v5326, %v5320
        %v5369 = vpack.c.bf16 %v5333, %v5327
        %v5370 = vpack.c.bf16 %v5334, %v5328
        %v5371 = vpack.c.bf16 %v5335, %v5329
        %v5372 = vpack.c.bf16 %v5336, %v5330
        %v5373 = vpack.c.bf16 %v5337, %v5331
        %v5374 = vpack.c.bf16 %v5338, %v5332
        %v5375 = vpack.c.bf16 %v5345, %v5339
        %v5376 = vpack.c.bf16 %v5346, %v5340
        %v5377 = vpack.c.bf16 %v5347, %v5341
        %v5378 = vpack.c.bf16 %v5348, %v5342
        %v5379 = vpack.c.bf16 %v5349, %v5343
        %v5380 = vpack.c.bf16 %v5350, %v5344
        %v5381 = vpack.c.bf16 %v5357, %v5351
        %v5382 = vpack.c.bf16 %v5358, %v5352
        %v5383 = vpack.c.bf16 %v5359, %v5353
        %v5384 = vpack.c.bf16 %v5360, %v5354
        %v5385 = vpack.c.bf16 %v5361, %v5355
        %v5386 = vpack.c.bf16 %v5362, %v5356
        %v5387 = vmax.f32 %v5267, 0.0
        %v5388 = vmax.f32 %v5268, 0.0
        %v5389 = vmax.f32 %v5269, 0.0
        %v5390 = vmax.f32 %v5270, 0.0
        %v5391 = vmax.f32 %v5271, 0.0
        %v5392 = vmax.f32 %v5272, 0.0
        %v5393 = vmax.f32 %v5273, 0.0
        %v5394 = vmax.f32 %v5274, 0.0
        %v5395 = vmax.f32 %v5275, 0.0
        %v5396 = vmax.f32 %v5276, 0.0
        %v5397 = vmax.f32 %v5277, 0.0
        %v5398 = vmax.f32 %v5278, 0.0
        %v5399 = vmax.f32 %v5279, 0.0
        %v5400 = vmax.f32 %v5280, 0.0
        %v5401 = vmax.f32 %v5281, 0.0
        %v5402 = vmax.f32 %v5282, 0.0
        %v5403 = vmax.f32 %v5283, 0.0
        %v5404 = vmax.f32 %v5284, 0.0
        %v5405 = vmax.f32 %v5285, 0.0
        %v5406 = vmax.f32 %v5286, 0.0
        %v5407 = vmax.f32 %v5287, 0.0
        %v5408 = vmax.f32 %v5288, 0.0
        %v5409 = vmax.f32 %v5289, 0.0
        %v5410 = vmax.f32 %v5290, 0.0
        %v5411 = vmax.f32 %v5291, 0.0
        %v5412 = vmax.f32 %v5292, 0.0
        %v5413 = vmax.f32 %v5293, 0.0
        %v5414 = vmax.f32 %v5294, 0.0
        %v5415 = vmax.f32 %v5295, 0.0
        %v5416 = vmax.f32 %v5296, 0.0
        %v5417 = vmax.f32 %v5297, 0.0
        %v5418 = vmax.f32 %v5298, 0.0
        %v5419 = vmax.f32 %v5299, 0.0
        %v5420 = vmax.f32 %v5300, 0.0
        %v5421 = vmax.f32 %v5301, 0.0
        %v5422 = vmax.f32 %v5302, 0.0
        %v5423 = vmax.f32 %v5303, 0.0
        %v5424 = vmax.f32 %v5304, 0.0
        %v5425 = vmax.f32 %v5305, 0.0
        %v5426 = vmax.f32 %v5306, 0.0
        %v5427 = vmax.f32 %v5307, 0.0
        %v5428 = vmax.f32 %v5308, 0.0
        %v5429 = vmax.f32 %v5309, 0.0
        %v5430 = vmax.f32 %v5310, 0.0
        %v5431 = vmax.f32 %v5311, 0.0
        %v5432 = vmax.f32 %v5312, 0.0
        %v5433 = vmax.f32 %v5313, 0.0
        %v5434 = vmax.f32 %v5314, 0.0
        %v5435 = vpack.c.bf16 %v5393, %v5387
        %v5436 = vpack.c.bf16 %v5394, %v5388
        %v5437 = vpack.c.bf16 %v5395, %v5389
        %v5438 = vpack.c.bf16 %v5396, %v5390
        %v5439 = vpack.c.bf16 %v5397, %v5391
        %v5440 = vpack.c.bf16 %v5398, %v5392
        %v5441 = vpack.c.bf16 %v5405, %v5399
        %v5442 = vpack.c.bf16 %v5406, %v5400
        %v5443 = vpack.c.bf16 %v5407, %v5401
        %v5444 = vpack.c.bf16 %v5408, %v5402
        %v5445 = vpack.c.bf16 %v5409, %v5403
        %v5446 = vpack.c.bf16 %v5410, %v5404
        %v5447 = vpack.c.bf16 %v5417, %v5411
        %v5448 = vpack.c.bf16 %v5418, %v5412
        %v5449 = vpack.c.bf16 %v5419, %v5413
        %v5450 = vpack.c.bf16 %v5420, %v5414
        %v5451 = vpack.c.bf16 %v5421, %v5415
        %v5452 = vpack.c.bf16 %v5422, %v5416
        %v5453 = vpack.c.bf16 %v5429, %v5423
        %v5454 = vpack.c.bf16 %v5430, %v5424
        %v5455 = vpack.c.bf16 %v5431, %v5425
        %v5456 = vpack.c.bf16 %v5432, %v5426
        %v5457 = vpack.c.bf16 %v5433, %v5427
        %v5458 = vpack.c.bf16 %v5434, %v5428
        %v5459 = vld [vmem:[#allocation16] sm:$0xff]
        %v5460 = vld [vmem:[#allocation16 + $0x8] sm:$0xff]
        %v5461 = vld [vmem:[#allocation16 + $0x10] sm:$0xff]
        %v5462 = vld [vmem:[#allocation16 + $0x18] sm:$0xff]
        %v5463 = vld [vmem:[#allocation16 + $0x20] sm:$0xff]
        %v5464 = vld [vmem:[#allocation16 + $0x28] sm:$0xff]
        %v5465 = vld [vmem:[#allocation16 + $0x30] sm:$0xff]
        %v5466 = vld [vmem:[#allocation16 + $0x38] sm:$0xff]
        %v5467 = vld [vmem:[#allocation16 + $0x40] sm:$0xff]
        %v5468 = vld [vmem:[#allocation16 + $0x48] sm:$0xff]
        %v5469 = vld [vmem:[#allocation16 + $0x50] sm:$0xff]
        %v5470 = vld [vmem:[#allocation16 + $0x58] sm:$0xff]
        %v5471 = vld [vmem:[#allocation16 + $0x60] sm:$0xff]
        %v5472 = vld [vmem:[#allocation16 + $0x68] sm:$0xff]
        %v5473 = vld [vmem:[#allocation16 + $0x70] sm:$0xff]
        %v5474 = vld [vmem:[#allocation16 + $0x78] sm:$0xff]
        %v5475 = vld [vmem:[#allocation16 + $0x80] sm:$0xff]
        %v5476 = vld [vmem:[#allocation16 + $0x88] sm:$0xff]
        %v5477 = vld [vmem:[#allocation16 + $0x90] sm:$0xff]
        %v5478 = vld [vmem:[#allocation16 + $0x98] sm:$0xff]
        %v5479 = vld [vmem:[#allocation16 + $0xa0] sm:$0xff]
        %v5480 = vld [vmem:[#allocation16 + $0xa8] sm:$0xff]
        %v5481 = vld [vmem:[#allocation16 + $0xb0] sm:$0xff]
        %v5482 = vld [vmem:[#allocation16 + $0xb8] sm:$0xff]
        %v5483 = vld [vmem:[#allocation16 + $0xc0] sm:$0xff]
        %v5484 = vld [vmem:[#allocation16 + $0xc8] sm:$0xff]
        %v5485 = vld [vmem:[#allocation16 + $0xd0] sm:$0xff]
        %v5486 = vld [vmem:[#allocation16 + $0xd8] sm:$0xff]
        %v5487 = vld [vmem:[#allocation16 + $0xe0] sm:$0xff]
        %v5488 = vld [vmem:[#allocation16 + $0xe8] sm:$0xff]
        %v5489 = vld [vmem:[#allocation16 + $0xf0] sm:$0xff]
        %v5490 = vld [vmem:[#allocation16 + $0xf8] sm:$0xff]
        %v5491 = vld [vmem:[#allocation16 + $0x100] sm:$0xff]
        %v5492 = vld [vmem:[#allocation16 + $0x108] sm:$0xff]
        %v5493 = vld [vmem:[#allocation16 + $0x110] sm:$0xff]
        %v5494 = vld [vmem:[#allocation16 + $0x118] sm:$0xff]
        %v5495 = vld [vmem:[#allocation16 + $0x120] sm:$0xff]
        %v5496 = vld [vmem:[#allocation16 + $0x128] sm:$0xff]
        %v5497 = vld [vmem:[#allocation16 + $0x130] sm:$0xff]
        %v5498 = vld [vmem:[#allocation16 + $0x138] sm:$0xff]
        %v5499 = vld [vmem:[#allocation16 + $0x140] sm:$0xff]
        %v5500 = vld [vmem:[#allocation16 + $0x148] sm:$0xff]
        %v5501 = vld [vmem:[#allocation16 + $0x150] sm:$0xff]
        %v5502 = vld [vmem:[#allocation16 + $0x158] sm:$0xff]
        %v5503 = vld [vmem:[#allocation16 + $0x160] sm:$0xff]
        %v5504 = vld [vmem:[#allocation16 + $0x168] sm:$0xff]
        %v5505 = vld [vmem:[#allocation16 + $0x170] sm:$0xff]
        %v5506 = vld [vmem:[#allocation16 + $0x178] sm:$0xff]
        %v5507 = vld [vmem:[#allocation16 + $0x180] sm:$0xff]
        %v5508 = vld [vmem:[#allocation16 + $0x188] sm:$0xff]
        %v5509 = vld [vmem:[#allocation16 + $0x190] sm:$0xff]
        %v5510 = vld [vmem:[#allocation16 + $0x198] sm:$0xff]
        %v5511 = vld [vmem:[#allocation16 + $0x1a0] sm:$0xff]
        %v5512 = vld [vmem:[#allocation16 + $0x1a8] sm:$0xff]
        %v5513 = vld [vmem:[#allocation16 + $0x1b0] sm:$0xff]
        %v5514 = vld [vmem:[#allocation16 + $0x1b8] sm:$0xff]
        %v5515 = vld [vmem:[#allocation16 + $0x1c0] sm:$0xff]
        %v5516 = vld [vmem:[#allocation16 + $0x1c8] sm:$0xff]
        %v5517 = vld [vmem:[#allocation16 + $0x1d0] sm:$0xff]
        %v5518 = vld [vmem:[#allocation16 + $0x1d8] sm:$0xff]
        %v5519 = vld [vmem:[#allocation16 + $0x1e0] sm:$0xff]
        %v5520 = vld [vmem:[#allocation16 + $0x1e8] sm:$0xff]
        %v5521 = vld [vmem:[#allocation16 + $0x1f0] sm:$0xff]
        %v5522 = vld [vmem:[#allocation16 + $0x1f8] sm:$0xff]
        %v5523 = vld [vmem:[#allocation16 + $0x200] sm:$0xff]
        %v5524 = vld [vmem:[#allocation16 + $0x208] sm:$0xff]
        %v5525 = vld [vmem:[#allocation16 + $0x210] sm:$0xff]
        %v5526 = vld [vmem:[#allocation16 + $0x218] sm:$0xff]
        %v5527 = vld [vmem:[#allocation16 + $0x220] sm:$0xff]
        %v5528 = vld [vmem:[#allocation16 + $0x228] sm:$0xff]
        %v5529 = vld [vmem:[#allocation16 + $0x230] sm:$0xff]
        %v5530 = vld [vmem:[#allocation16 + $0x238] sm:$0xff]
        %v5531 = vld [vmem:[#allocation16 + $0x240] sm:$0xff]
        %v5532 = vld [vmem:[#allocation16 + $0x248] sm:$0xff]
        %v5533 = vld [vmem:[#allocation16 + $0x250] sm:$0xff]
        %v5534 = vld [vmem:[#allocation16 + $0x258] sm:$0xff]
        %v5535 = vld [vmem:[#allocation16 + $0x260] sm:$0xff]
        %v5536 = vld [vmem:[#allocation16 + $0x268] sm:$0xff]
        %v5537 = vld [vmem:[#allocation16 + $0x270] sm:$0xff]
        %v5538 = vld [vmem:[#allocation16 + $0x278] sm:$0xff]
        %v5539 = vld [vmem:[#allocation16 + $0x280] sm:$0xff]
        %v5540 = vld [vmem:[#allocation16 + $0x288] sm:$0xff]
        %v5541 = vld [vmem:[#allocation16 + $0x290] sm:$0xff]
        %v5542 = vld [vmem:[#allocation16 + $0x298] sm:$0xff]
        %v5543 = vld [vmem:[#allocation16 + $0x2a0] sm:$0xff]
        %v5544 = vld [vmem:[#allocation16 + $0x2a8] sm:$0xff]
        %v5545 = vld [vmem:[#allocation16 + $0x2b0] sm:$0xff]
        %v5546 = vld [vmem:[#allocation16 + $0x2b8] sm:$0xff]
        %v5547 = vld [vmem:[#allocation16 + $0x2c0] sm:$0xff]
        %v5548 = vld [vmem:[#allocation16 + $0x2c8] sm:$0xff]
        %v5549 = vld [vmem:[#allocation16 + $0x2d0] sm:$0xff]
        %v5550 = vld [vmem:[#allocation16 + $0x2d8] sm:$0xff]
        %v5551 = vld [vmem:[#allocation16 + $0x2e0] sm:$0xff]
        %v5552 = vld [vmem:[#allocation16 + $0x2e8] sm:$0xff]
        %v5553 = vld [vmem:[#allocation16 + $0x2f0] sm:$0xff]
        %v5554 = vld [vmem:[#allocation16 + $0x2f8] sm:$0xff]
        %v5555 = vld [vmem:[#allocation16 + $0x300] sm:$0xff]
        %v5556 = vld [vmem:[#allocation16 + $0x308] sm:$0xff]
        %v5557 = vld [vmem:[#allocation16 + $0x310] sm:$0xff]
        %v5558 = vld [vmem:[#allocation16 + $0x318] sm:$0xff]
        %v5559 = vld [vmem:[#allocation16 + $0x320] sm:$0xff]
        %v5560 = vld [vmem:[#allocation16 + $0x328] sm:$0xff]
        %v5561 = vld [vmem:[#allocation16 + $0x330] sm:$0xff]
        %v5562 = vld [vmem:[#allocation16 + $0x338] sm:$0xff]
        %v5563 = vld [vmem:[#allocation16 + $0x340] sm:$0xff]
        %v5564 = vld [vmem:[#allocation16 + $0x348] sm:$0xff]
        %v5565 = vld [vmem:[#allocation16 + $0x350] sm:$0xff]
        %v5566 = vld [vmem:[#allocation16 + $0x358] sm:$0xff]
        %v5567 = vld [vmem:[#allocation16 + $0x360] sm:$0xff]
        %v5568 = vld [vmem:[#allocation16 + $0x368] sm:$0xff]
        %v5569 = vld [vmem:[#allocation16 + $0x370] sm:$0xff]
        %v5570 = vld [vmem:[#allocation16 + $0x378] sm:$0xff]
        %v5571 = vld [vmem:[#allocation16 + $0x380] sm:$0xff]
        %v5572 = vld [vmem:[#allocation16 + $0x388] sm:$0xff]
        %v5573 = vld [vmem:[#allocation16 + $0x390] sm:$0xff]
        %v5574 = vld [vmem:[#allocation16 + $0x398] sm:$0xff]
        %v5575 = vld [vmem:[#allocation16 + $0x3a0] sm:$0xff]
        %v5576 = vld [vmem:[#allocation16 + $0x3a8] sm:$0xff]
        %v5577 = vld [vmem:[#allocation16 + $0x3b0] sm:$0xff]
        %v5578 = vld [vmem:[#allocation16 + $0x3b8] sm:$0xff]
        %v5579 = vld [vmem:[#allocation16 + $0x3c0] sm:$0xff]
        %v5580 = vld [vmem:[#allocation16 + $0x3c8] sm:$0xff]
        %v5581 = vld [vmem:[#allocation16 + $0x3d0] sm:$0xff]
        %v5582 = vld [vmem:[#allocation16 + $0x3d8] sm:$0xff]
        %v5583 = vld [vmem:[#allocation16 + $0x3e0] sm:$0xff]
        %v5584 = vld [vmem:[#allocation16 + $0x3e8] sm:$0xff]
        %v5585 = vld [vmem:[#allocation16 + $0x3f0] sm:$0xff]
        %v5586 = vld [vmem:[#allocation16 + $0x3f8] sm:$0xff]
        %v5587 = vld [vmem:[#allocation16 + $0x400] sm:$0xff]
        %v5588 = vld [vmem:[#allocation16 + $0x408] sm:$0xff]
        %v5589 = vld [vmem:[#allocation16 + $0x410] sm:$0xff]
        %v5590 = vld [vmem:[#allocation16 + $0x418] sm:$0xff]
        %v5591 = vld [vmem:[#allocation16 + $0x420] sm:$0xff]
        %v5592 = vld [vmem:[#allocation16 + $0x428] sm:$0xff]
        %v5593 = vld [vmem:[#allocation16 + $0x430] sm:$0xff]
        %v5594 = vld [vmem:[#allocation16 + $0x438] sm:$0xff]
        %v5595 = vld [vmem:[#allocation16 + $0x440] sm:$0xff]
        %v5596 = vld [vmem:[#allocation16 + $0x448] sm:$0xff]
        %v5597 = vld [vmem:[#allocation16 + $0x450] sm:$0xff]
        %v5598 = vld [vmem:[#allocation16 + $0x458] sm:$0xff]
        %v5599 = vld [vmem:[#allocation16 + $0x460] sm:$0xff]
        %v5600 = vld [vmem:[#allocation16 + $0x468] sm:$0xff]
        %v5601 = vld [vmem:[#allocation16 + $0x470] sm:$0xff]
        %v5602 = vld [vmem:[#allocation16 + $0x478] sm:$0xff]
        %v5603 = vld [vmem:[#allocation16 + $0x480] sm:$0xff]
        %v5604 = vld [vmem:[#allocation16 + $0x488] sm:$0xff]
        %v5605 = vld [vmem:[#allocation16 + $0x490] sm:$0xff]
        %v5606 = vld [vmem:[#allocation16 + $0x498] sm:$0xff]
        %v5607 = vld [vmem:[#allocation16 + $0x4a0] sm:$0xff]
        %v5608 = vld [vmem:[#allocation16 + $0x4a8] sm:$0xff]
        %v5609 = vld [vmem:[#allocation16 + $0x4b0] sm:$0xff]
        %v5610 = vld [vmem:[#allocation16 + $0x4b8] sm:$0xff]
        %v5611 = vld [vmem:[#allocation16 + $0x4c0] sm:$0xff]
        %v5612 = vld [vmem:[#allocation16 + $0x4c8] sm:$0xff]
        %v5613 = vld [vmem:[#allocation16 + $0x4d0] sm:$0xff]
        %v5614 = vld [vmem:[#allocation16 + $0x4d8] sm:$0xff]
        %v5615 = vld [vmem:[#allocation16 + $0x4e0] sm:$0xff]
        %v5616 = vld [vmem:[#allocation16 + $0x4e8] sm:$0xff]
        %v5617 = vld [vmem:[#allocation16 + $0x4f0] sm:$0xff]
        %v5618 = vld [vmem:[#allocation16 + $0x4f8] sm:$0xff]
        %v5619 = vld [vmem:[#allocation16 + $0x500] sm:$0xff]
        %v5620 = vld [vmem:[#allocation16 + $0x508] sm:$0xff]
        %v5621 = vld [vmem:[#allocation16 + $0x510] sm:$0xff]
        %v5622 = vld [vmem:[#allocation16 + $0x518] sm:$0xff]
        %v5623 = vld [vmem:[#allocation16 + $0x520] sm:$0xff]
        %v5624 = vld [vmem:[#allocation16 + $0x528] sm:$0xff]
        %v5625 = vld [vmem:[#allocation16 + $0x530] sm:$0xff]
        %v5626 = vld [vmem:[#allocation16 + $0x538] sm:$0xff]
        %v5627 = vld [vmem:[#allocation16 + $0x540] sm:$0xff]
        %v5628 = vld [vmem:[#allocation16 + $0x548] sm:$0xff]
        %v5629 = vld [vmem:[#allocation16 + $0x550] sm:$0xff]
        %v5630 = vld [vmem:[#allocation16 + $0x558] sm:$0xff]
        %v5631 = vld [vmem:[#allocation16 + $0x560] sm:$0xff]
        %v5632 = vld [vmem:[#allocation16 + $0x568] sm:$0xff]
        %v5633 = vld [vmem:[#allocation16 + $0x570] sm:$0xff]
        %v5634 = vld [vmem:[#allocation16 + $0x578] sm:$0xff]
        %v5635 = vld [vmem:[#allocation16 + $0x580] sm:$0xff]
        %v5636 = vld [vmem:[#allocation16 + $0x588] sm:$0xff]
        %v5637 = vld [vmem:[#allocation16 + $0x590] sm:$0xff]
        %v5638 = vld [vmem:[#allocation16 + $0x598] sm:$0xff]
        %v5639 = vld [vmem:[#allocation16 + $0x5a0] sm:$0xff]
        %v5640 = vld [vmem:[#allocation16 + $0x5a8] sm:$0xff]
        %v5641 = vld [vmem:[#allocation16 + $0x5b0] sm:$0xff]
        %v5642 = vld [vmem:[#allocation16 + $0x5b8] sm:$0xff]
        %v5643 = vld [vmem:[#allocation16 + $0x5c0] sm:$0xff]
        %v5644 = vld [vmem:[#allocation16 + $0x5c8] sm:$0xff]
        %v5645 = vld [vmem:[#allocation16 + $0x5d0] sm:$0xff]
        %v5646 = vld [vmem:[#allocation16 + $0x5d8] sm:$0xff]
        %v5647 = vld [vmem:[#allocation16 + $0x5e0] sm:$0xff]
        %v5648 = vld [vmem:[#allocation16 + $0x5e8] sm:$0xff]
        %v5649 = vld [vmem:[#allocation16 + $0x5f0] sm:$0xff]
        %v5650 = vld [vmem:[#allocation16 + $0x5f8] sm:$0xff]
        %v5651 = vld [vmem:[#allocation16 + $0x600] sm:$0xff]
        %v5652 = vld [vmem:[#allocation16 + $0x608] sm:$0xff]
        %v5653 = vld [vmem:[#allocation16 + $0x610] sm:$0xff]
        %v5654 = vld [vmem:[#allocation16 + $0x618] sm:$0xff]
        %v5655 = vld [vmem:[#allocation16 + $0x620] sm:$0xff]
        %v5656 = vld [vmem:[#allocation16 + $0x628] sm:$0xff]
        %v5657 = vld [vmem:[#allocation16 + $0x630] sm:$0xff]
        %v5658 = vld [vmem:[#allocation16 + $0x638] sm:$0xff]
        %v5659 = vld [vmem:[#allocation16 + $0x640] sm:$0xff]
        %v5660 = vld [vmem:[#allocation16 + $0x648] sm:$0xff]
        %v5661 = vld [vmem:[#allocation16 + $0x650] sm:$0xff]
        %v5662 = vld [vmem:[#allocation16 + $0x658] sm:$0xff]
        %v5663 = vld [vmem:[#allocation16 + $0x660] sm:$0xff]
        %v5664 = vld [vmem:[#allocation16 + $0x668] sm:$0xff]
        %v5665 = vld [vmem:[#allocation16 + $0x670] sm:$0xff]
        %v5666 = vld [vmem:[#allocation16 + $0x678] sm:$0xff]
        %v5667 = vld [vmem:[#allocation16 + $0x680] sm:$0xff]
        %v5668 = vld [vmem:[#allocation16 + $0x688] sm:$0xff]
        %v5669 = vld [vmem:[#allocation16 + $0x690] sm:$0xff]
        %v5670 = vld [vmem:[#allocation16 + $0x698] sm:$0xff]
        %v5671 = vld [vmem:[#allocation16 + $0x6a0] sm:$0xff]
        %v5672 = vld [vmem:[#allocation16 + $0x6a8] sm:$0xff]
        %v5673 = vld [vmem:[#allocation16 + $0x6b0] sm:$0xff]
        %v5674 = vld [vmem:[#allocation16 + $0x6b8] sm:$0xff]
        %v5675 = vld [vmem:[#allocation16 + $0x6c0] sm:$0xff]
        %v5676 = vld [vmem:[#allocation16 + $0x6c8] sm:$0xff]
        %v5677 = vld [vmem:[#allocation16 + $0x6d0] sm:$0xff]
        %v5678 = vld [vmem:[#allocation16 + $0x6d8] sm:$0xff]
        %v5679 = vld [vmem:[#allocation16 + $0x6e0] sm:$0xff]
        %v5680 = vld [vmem:[#allocation16 + $0x6e8] sm:$0xff]
        %v5681 = vld [vmem:[#allocation16 + $0x6f0] sm:$0xff]
        %v5682 = vld [vmem:[#allocation16 + $0x6f8] sm:$0xff]
        %v5683 = vld [vmem:[#allocation16 + $0x700] sm:$0xff]
        %v5684 = vld [vmem:[#allocation16 + $0x708] sm:$0xff]
        %v5685 = vld [vmem:[#allocation16 + $0x710] sm:$0xff]
        %v5686 = vld [vmem:[#allocation16 + $0x718] sm:$0xff]
        %v5687 = vld [vmem:[#allocation16 + $0x720] sm:$0xff]
        %v5688 = vld [vmem:[#allocation16 + $0x728] sm:$0xff]
        %v5689 = vld [vmem:[#allocation16 + $0x730] sm:$0xff]
        %v5690 = vld [vmem:[#allocation16 + $0x738] sm:$0xff]
        %v5691 = vld [vmem:[#allocation16 + $0x740] sm:$0xff]
        %v5692 = vld [vmem:[#allocation16 + $0x748] sm:$0xff]
        %v5693 = vld [vmem:[#allocation16 + $0x750] sm:$0xff]
        %v5694 = vld [vmem:[#allocation16 + $0x758] sm:$0xff]
        %v5695 = vld [vmem:[#allocation16 + $0x760] sm:$0xff]
        %v5696 = vld [vmem:[#allocation16 + $0x768] sm:$0xff]
        %v5697 = vld [vmem:[#allocation16 + $0x770] sm:$0xff]
        %v5698 = vld [vmem:[#allocation16 + $0x778] sm:$0xff]
        %v5699 = vld [vmem:[#allocation16 + $0x780] sm:$0xff]
        %v5700 = vld [vmem:[#allocation16 + $0x788] sm:$0xff]
        %v5701 = vld [vmem:[#allocation16 + $0x790] sm:$0xff]
        %v5702 = vld [vmem:[#allocation16 + $0x798] sm:$0xff]
        %v5703 = vld [vmem:[#allocation16 + $0x7a0] sm:$0xff]
        %v5704 = vld [vmem:[#allocation16 + $0x7a8] sm:$0xff]
        %v5705 = vld [vmem:[#allocation16 + $0x7b0] sm:$0xff]
        %v5706 = vld [vmem:[#allocation16 + $0x7b8] sm:$0xff]
        %v5707 = vld [vmem:[#allocation16 + $0x7c0] sm:$0xff]
        %v5708 = vld [vmem:[#allocation16 + $0x7c8] sm:$0xff]
        %v5709 = vld [vmem:[#allocation16 + $0x7d0] sm:$0xff]
        %v5710 = vld [vmem:[#allocation16 + $0x7d8] sm:$0xff]
        %v5711 = vld [vmem:[#allocation16 + $0x7e0] sm:$0xff]
        %v5712 = vld [vmem:[#allocation16 + $0x7e8] sm:$0xff]
        %v5713 = vld [vmem:[#allocation16 + $0x7f0] sm:$0xff]
        %v5714 = vld [vmem:[#allocation16 + $0x7f8] sm:$0xff]
        %v5715 = vld [vmem:[#allocation16 + $0x800] sm:$0xff]
        %v5716 = vld [vmem:[#allocation16 + $0x808] sm:$0xff]
        %v5717 = vld [vmem:[#allocation16 + $0x810] sm:$0xff]
        %v5718 = vld [vmem:[#allocation16 + $0x818] sm:$0xff]
        %v5719 = vld [vmem:[#allocation16 + $0x820] sm:$0xff]
        %v5720 = vld [vmem:[#allocation16 + $0x828] sm:$0xff]
        %v5721 = vld [vmem:[#allocation16 + $0x830] sm:$0xff]
        %v5722 = vld [vmem:[#allocation16 + $0x838] sm:$0xff]
        %v5723 = vld [vmem:[#allocation16 + $0x840] sm:$0xff]
        %v5724 = vld [vmem:[#allocation16 + $0x848] sm:$0xff]
        %v5725 = vld [vmem:[#allocation16 + $0x850] sm:$0xff]
        %v5726 = vld [vmem:[#allocation16 + $0x858] sm:$0xff]
        %v5727 = vld [vmem:[#allocation16 + $0x860] sm:$0xff]
        %v5728 = vld [vmem:[#allocation16 + $0x868] sm:$0xff]
        %v5729 = vld [vmem:[#allocation16 + $0x870] sm:$0xff]
        %v5730 = vld [vmem:[#allocation16 + $0x878] sm:$0xff]
        %v5731 = vld [vmem:[#allocation16 + $0x880] sm:$0xff]
        %v5732 = vld [vmem:[#allocation16 + $0x888] sm:$0xff]
        %v5733 = vld [vmem:[#allocation16 + $0x890] sm:$0xff]
        %v5734 = vld [vmem:[#allocation16 + $0x898] sm:$0xff]
        %v5735 = vld [vmem:[#allocation16 + $0x8a0] sm:$0xff]
        %v5736 = vld [vmem:[#allocation16 + $0x8a8] sm:$0xff]
        %v5737 = vld [vmem:[#allocation16 + $0x8b0] sm:$0xff]
        %v5738 = vld [vmem:[#allocation16 + $0x8b8] sm:$0xff]
        %v5739 = vld [vmem:[#allocation16 + $0x8c0] sm:$0xff]
        %v5740 = vld [vmem:[#allocation16 + $0x8c8] sm:$0xff]
        %v5741 = vld [vmem:[#allocation16 + $0x8d0] sm:$0xff]
        %v5742 = vld [vmem:[#allocation16 + $0x8d8] sm:$0xff]
        %v5743 = vld [vmem:[#allocation16 + $0x8e0] sm:$0xff]
        %v5744 = vld [vmem:[#allocation16 + $0x8e8] sm:$0xff]
        %v5745 = vld [vmem:[#allocation16 + $0x8f0] sm:$0xff]
        %v5746 = vld [vmem:[#allocation16 + $0x8f8] sm:$0xff]
        %s5747 = scalar_lea.vmem [#allocation19], 1
        %v5748 = vld [vmem:[%s5747] ss:$8 sm:$0xf]
        %v5749 = vld [vmem:[%s5747] ss:$8 sm:$0x30]
        %v5750 = vor.u32 %v5748, %v5749
        %v5752 = vlaneseq
        %v5753 = vshrl.u32 %v5752, 7
        %v5754 = vsub.s32 0, %v5753
        %v5755 = vrot.slane %v5750, %v5754
        %v5756 = vlaneseq
        %v5757 = vshrl.u32 %v5756, 7
        %v5758 = vsub.s32 1, %v5757
        %v5759 = vrot.slane %v5750, %v5758
        %v5760 = vlaneseq
        %v5761 = vshrl.u32 %v5760, 7
        %v5762 = vsub.s32 2, %v5761
        %v5763 = vrot.slane %v5750, %v5762
        %v5764 = vlaneseq
        %v5765 = vshrl.u32 %v5764, 7
        %v5766 = vsub.s32 3, %v5765
        %v5767 = vrot.slane %v5750, %v5766
        %v5768 = vlaneseq
        %v5769 = vshrl.u32 %v5768, 7
        %v5770 = vsub.s32 4, %v5769
        %v5771 = vrot.slane %v5750, %v5770
        %v5772 = vlaneseq
        %v5773 = vshrl.u32 %v5772, 7
        %v5774 = vsub.s32 5, %v5773
        %v5775 = vrot.slane %v5750, %v5774
        %v6070 = vunpack.c.l.b16 %v5459
        %v6071 = vunpack.c.h.b16 %v5459
        %v6072 = vunpack.c.l.b16 %v5460
        %v6073 = vunpack.c.h.b16 %v5460
        %v6074 = vunpack.c.l.b16 %v5461
        %v6075 = vunpack.c.h.b16 %v5461
        %v6076 = vunpack.c.l.b16 %v5462
        %v6077 = vunpack.c.h.b16 %v5462
        %v6078 = vunpack.c.l.b16 %v5463
        %v6079 = vunpack.c.h.b16 %v5463
        %v6080 = vunpack.c.l.b16 %v5464
        %v6081 = vunpack.c.h.b16 %v5464
        %v6082 = vunpack.c.l.b16 %v5465
        %v6083 = vunpack.c.h.b16 %v5465
        %v6084 = vunpack.c.l.b16 %v5466
        %v6085 = vunpack.c.h.b16 %v5466
        %v6086 = vunpack.c.l.b16 %v5467
        %v6087 = vunpack.c.h.b16 %v5467
        %v6088 = vunpack.c.l.b16 %v5468
        %v6089 = vunpack.c.h.b16 %v5468
        %v6090 = vunpack.c.l.b16 %v5469
        %v6091 = vunpack.c.h.b16 %v5469
        %v6092 = vunpack.c.l.b16 %v5470
        %v6093 = vunpack.c.h.b16 %v5470
        %v6094 = vunpack.c.l.b16 %v5471
        %v6095 = vunpack.c.h.b16 %v5471
        %v6096 = vunpack.c.l.b16 %v5472
        %v6097 = vunpack.c.h.b16 %v5472
        %v6098 = vunpack.c.l.b16 %v5473
        %v6099 = vunpack.c.h.b16 %v5473
        %v6100 = vunpack.c.l.b16 %v5474
        %v6101 = vunpack.c.h.b16 %v5474
        %v6102 = vunpack.c.l.b16 %v5475
        %v6103 = vunpack.c.h.b16 %v5475
        %v6104 = vunpack.c.l.b16 %v5476
        %v6105 = vunpack.c.h.b16 %v5476
        %v6106 = vunpack.c.l.b16 %v5477
        %v6107 = vunpack.c.h.b16 %v5477
        %v6108 = vunpack.c.l.b16 %v5478
        %v6109 = vunpack.c.h.b16 %v5478
        %v6110 = vunpack.c.l.b16 %v5479
        %v6111 = vunpack.c.h.b16 %v5479
        %v6112 = vunpack.c.l.b16 %v5480
        %v6113 = vunpack.c.h.b16 %v5480
        %v6114 = vunpack.c.l.b16 %v5481
        %v6115 = vunpack.c.h.b16 %v5481
        %v6116 = vunpack.c.l.b16 %v5482
        %v6117 = vunpack.c.h.b16 %v5482
        %v6118 = vunpack.c.l.b16 %v5483
        %v6119 = vunpack.c.h.b16 %v5483
        %v6120 = vunpack.c.l.b16 %v5484
        %v6121 = vunpack.c.h.b16 %v5484
        %v6122 = vunpack.c.l.b16 %v5485
        %v6123 = vunpack.c.h.b16 %v5485
        %v6124 = vunpack.c.l.b16 %v5486
        %v6125 = vunpack.c.h.b16 %v5486
        %v6126 = vunpack.c.l.b16 %v5487
        %v6127 = vunpack.c.h.b16 %v5487
        %v6128 = vunpack.c.l.b16 %v5488
        %v6129 = vunpack.c.h.b16 %v5488
        %v6130 = vunpack.c.l.b16 %v5489
        %v6131 = vunpack.c.h.b16 %v5489
        %v6132 = vunpack.c.l.b16 %v5490
        %v6133 = vunpack.c.h.b16 %v5490
        %v6134 = vunpack.c.l.b16 %v5491
        %v6135 = vunpack.c.h.b16 %v5491
        %v6136 = vunpack.c.l.b16 %v5492
        %v6137 = vunpack.c.h.b16 %v5492
        %v6138 = vunpack.c.l.b16 %v5493
        %v6139 = vunpack.c.h.b16 %v5493
        %v6140 = vunpack.c.l.b16 %v5494
        %v6141 = vunpack.c.h.b16 %v5494
        %v6142 = vunpack.c.l.b16 %v5495
        %v6143 = vunpack.c.h.b16 %v5495
        %v6144 = vunpack.c.l.b16 %v5496
        %v6145 = vunpack.c.h.b16 %v5496
        %v6146 = vunpack.c.l.b16 %v5497
        %v6147 = vunpack.c.h.b16 %v5497
        %v6148 = vunpack.c.l.b16 %v5498
        %v6149 = vunpack.c.h.b16 %v5498
        %v6150 = vunpack.c.l.b16 %v5499
        %v6151 = vunpack.c.h.b16 %v5499
        %v6152 = vunpack.c.l.b16 %v5500
        %v6153 = vunpack.c.h.b16 %v5500
        %v6154 = vunpack.c.l.b16 %v5501
        %v6155 = vunpack.c.h.b16 %v5501
        %v6156 = vunpack.c.l.b16 %v5502
        %v6157 = vunpack.c.h.b16 %v5502
        %v6158 = vunpack.c.l.b16 %v5503
        %v6159 = vunpack.c.h.b16 %v5503
        %v6160 = vunpack.c.l.b16 %v5504
        %v6161 = vunpack.c.h.b16 %v5504
        %v6162 = vunpack.c.l.b16 %v5505
        %v6163 = vunpack.c.h.b16 %v5505
        %v6164 = vunpack.c.l.b16 %v5506
        %v6165 = vunpack.c.h.b16 %v5506
        %v6166 = vunpack.c.l.b16 %v5507
        %v6167 = vunpack.c.h.b16 %v5507
        %v6168 = vunpack.c.l.b16 %v5508
        %v6169 = vunpack.c.h.b16 %v5508
        %v6170 = vunpack.c.l.b16 %v5509
        %v6171 = vunpack.c.h.b16 %v5509
        %v6172 = vunpack.c.l.b16 %v5510
        %v6173 = vunpack.c.h.b16 %v5510
        %v6174 = vunpack.c.l.b16 %v5511
        %v6175 = vunpack.c.h.b16 %v5511
        %v6176 = vunpack.c.l.b16 %v5512
        %v6177 = vunpack.c.h.b16 %v5512
        %v6178 = vunpack.c.l.b16 %v5513
        %v6179 = vunpack.c.h.b16 %v5513
        %v6180 = vunpack.c.l.b16 %v5514
        %v6181 = vunpack.c.h.b16 %v5514
        %v6182 = vunpack.c.l.b16 %v5515
        %v6183 = vunpack.c.h.b16 %v5515
        %v6184 = vunpack.c.l.b16 %v5516
        %v6185 = vunpack.c.h.b16 %v5516
        %v6186 = vunpack.c.l.b16 %v5517
        %v6187 = vunpack.c.h.b16 %v5517
        %v6188 = vunpack.c.l.b16 %v5518
        %v6189 = vunpack.c.h.b16 %v5518
        %v6190 = vunpack.c.l.b16 %v5519
        %v6191 = vunpack.c.h.b16 %v5519
        %v6192 = vunpack.c.l.b16 %v5520
        %v6193 = vunpack.c.h.b16 %v5520
        %v6194 = vunpack.c.l.b16 %v5521
        %v6195 = vunpack.c.h.b16 %v5521
        %v6196 = vunpack.c.l.b16 %v5522
        %v6197 = vunpack.c.h.b16 %v5522
        %v6198 = vunpack.c.l.b16 %v5523
        %v6199 = vunpack.c.h.b16 %v5523
        %v6200 = vunpack.c.l.b16 %v5524
        %v6201 = vunpack.c.h.b16 %v5524
        %v6202 = vunpack.c.l.b16 %v5525
        %v6203 = vunpack.c.h.b16 %v5525
        %v6204 = vunpack.c.l.b16 %v5526
        %v6205 = vunpack.c.h.b16 %v5526
        %v6206 = vunpack.c.l.b16 %v5527
        %v6207 = vunpack.c.h.b16 %v5527
        %v6208 = vunpack.c.l.b16 %v5528
        %v6209 = vunpack.c.h.b16 %v5528
        %v6210 = vunpack.c.l.b16 %v5529
        %v6211 = vunpack.c.h.b16 %v5529
        %v6212 = vunpack.c.l.b16 %v5530
        %v6213 = vunpack.c.h.b16 %v5530
        %v6214 = vunpack.c.l.b16 %v5531
        %v6215 = vunpack.c.h.b16 %v5531
        %v6216 = vunpack.c.l.b16 %v5532
        %v6217 = vunpack.c.h.b16 %v5532
        %v6218 = vunpack.c.l.b16 %v5533
        %v6219 = vunpack.c.h.b16 %v5533
        %v6220 = vunpack.c.l.b16 %v5534
        %v6221 = vunpack.c.h.b16 %v5534
        %v6222 = vunpack.c.l.b16 %v5535
        %v6223 = vunpack.c.h.b16 %v5535
        %v6224 = vunpack.c.l.b16 %v5536
        %v6225 = vunpack.c.h.b16 %v5536
        %v6226 = vunpack.c.l.b16 %v5537
        %v6227 = vunpack.c.h.b16 %v5537
        %v6228 = vunpack.c.l.b16 %v5538
        %v6229 = vunpack.c.h.b16 %v5538
        %v6230 = vunpack.c.l.b16 %v5539
        %v6231 = vunpack.c.h.b16 %v5539
        %v6232 = vunpack.c.l.b16 %v5540
        %v6233 = vunpack.c.h.b16 %v5540
        %v6234 = vunpack.c.l.b16 %v5541
        %v6235 = vunpack.c.h.b16 %v5541
        %v6236 = vunpack.c.l.b16 %v5542
        %v6237 = vunpack.c.h.b16 %v5542
        %v6238 = vunpack.c.l.b16 %v5543
        %v6239 = vunpack.c.h.b16 %v5543
        %v6240 = vunpack.c.l.b16 %v5544
        %v6241 = vunpack.c.h.b16 %v5544
        %v6242 = vunpack.c.l.b16 %v5545
        %v6243 = vunpack.c.h.b16 %v5545
        %v6244 = vunpack.c.l.b16 %v5546
        %v6245 = vunpack.c.h.b16 %v5546
        %v6246 = vunpack.c.l.b16 %v5547
        %v6247 = vunpack.c.h.b16 %v5547
        %v6248 = vunpack.c.l.b16 %v5548
        %v6249 = vunpack.c.h.b16 %v5548
        %v6250 = vunpack.c.l.b16 %v5549
        %v6251 = vunpack.c.h.b16 %v5549
        %v6252 = vunpack.c.l.b16 %v5550
        %v6253 = vunpack.c.h.b16 %v5550
        %v6254 = vunpack.c.l.b16 %v5551
        %v6255 = vunpack.c.h.b16 %v5551
        %v6256 = vunpack.c.l.b16 %v5552
        %v6257 = vunpack.c.h.b16 %v5552
        %v6258 = vunpack.c.l.b16 %v5553
        %v6259 = vunpack.c.h.b16 %v5553
        %v6260 = vunpack.c.l.b16 %v5554
        %v6261 = vunpack.c.h.b16 %v5554
        %v6262 = vunpack.c.l.b16 %v5555
        %v6263 = vunpack.c.h.b16 %v5555
        %v6264 = vunpack.c.l.b16 %v5556
        %v6265 = vunpack.c.h.b16 %v5556
        %v6266 = vunpack.c.l.b16 %v5557
        %v6267 = vunpack.c.h.b16 %v5557
        %v6268 = vunpack.c.l.b16 %v5558
        %v6269 = vunpack.c.h.b16 %v5558
        %v6270 = vunpack.c.l.b16 %v5559
        %v6271 = vunpack.c.h.b16 %v5559
        %v6272 = vunpack.c.l.b16 %v5560
        %v6273 = vunpack.c.h.b16 %v5560
        %v6274 = vunpack.c.l.b16 %v5561
        %v6275 = vunpack.c.h.b16 %v5561
        %v6276 = vunpack.c.l.b16 %v5562
        %v6277 = vunpack.c.h.b16 %v5562
        %v6278 = vunpack.c.l.b16 %v5563
        %v6279 = vunpack.c.h.b16 %v5563
        %v6280 = vunpack.c.l.b16 %v5564
        %v6281 = vunpack.c.h.b16 %v5564
        %v6282 = vunpack.c.l.b16 %v5565
        %v6283 = vunpack.c.h.b16 %v5565
        %v6284 = vunpack.c.l.b16 %v5566
        %v6285 = vunpack.c.h.b16 %v5566
        %v6286 = vunpack.c.l.b16 %v5567
        %v6287 = vunpack.c.h.b16 %v5567
        %v6288 = vunpack.c.l.b16 %v5568
        %v6289 = vunpack.c.h.b16 %v5568
        %v6290 = vunpack.c.l.b16 %v5569
        %v6291 = vunpack.c.h.b16 %v5569
        %v6292 = vunpack.c.l.b16 %v5570
        %v6293 = vunpack.c.h.b16 %v5570
        %v6294 = vunpack.c.l.b16 %v5571
        %v6295 = vunpack.c.h.b16 %v5571
        %v6296 = vunpack.c.l.b16 %v5572
        %v6297 = vunpack.c.h.b16 %v5572
        %v6298 = vunpack.c.l.b16 %v5573
        %v6299 = vunpack.c.h.b16 %v5573
        %v6300 = vunpack.c.l.b16 %v5574
        %v6301 = vunpack.c.h.b16 %v5574
        %v6302 = vunpack.c.l.b16 %v5575
        %v6303 = vunpack.c.h.b16 %v5575
        %v6304 = vunpack.c.l.b16 %v5576
        %v6305 = vunpack.c.h.b16 %v5576
        %v6306 = vunpack.c.l.b16 %v5577
        %v6307 = vunpack.c.h.b16 %v5577
        %v6308 = vunpack.c.l.b16 %v5578
        %v6309 = vunpack.c.h.b16 %v5578
        %v6310 = vunpack.c.l.b16 %v5579
        %v6311 = vunpack.c.h.b16 %v5579
        %v6312 = vunpack.c.l.b16 %v5580
        %v6313 = vunpack.c.h.b16 %v5580
        %v6314 = vunpack.c.l.b16 %v5581
        %v6315 = vunpack.c.h.b16 %v5581
        %v6316 = vunpack.c.l.b16 %v5582
        %v6317 = vunpack.c.h.b16 %v5582
        %v6318 = vunpack.c.l.b16 %v5583
        %v6319 = vunpack.c.h.b16 %v5583
        %v6320 = vunpack.c.l.b16 %v5584
        %v6321 = vunpack.c.h.b16 %v5584
        %v6322 = vunpack.c.l.b16 %v5585
        %v6323 = vunpack.c.h.b16 %v5585
        %v6324 = vunpack.c.l.b16 %v5586
        %v6325 = vunpack.c.h.b16 %v5586
        %v6326 = vunpack.c.l.b16 %v5587
        %v6327 = vunpack.c.h.b16 %v5587
        %v6328 = vunpack.c.l.b16 %v5588
        %v6329 = vunpack.c.h.b16 %v5588
        %v6330 = vunpack.c.l.b16 %v5589
        %v6331 = vunpack.c.h.b16 %v5589
        %v6332 = vunpack.c.l.b16 %v5590
        %v6333 = vunpack.c.h.b16 %v5590
        %v6334 = vunpack.c.l.b16 %v5591
        %v6335 = vunpack.c.h.b16 %v5591
        %v6336 = vunpack.c.l.b16 %v5592
        %v6337 = vunpack.c.h.b16 %v5592
        %v6338 = vunpack.c.l.b16 %v5593
        %v6339 = vunpack.c.h.b16 %v5593
        %v6340 = vunpack.c.l.b16 %v5594
        %v6341 = vunpack.c.h.b16 %v5594
        %v6342 = vunpack.c.l.b16 %v5595
        %v6343 = vunpack.c.h.b16 %v5595
        %v6344 = vunpack.c.l.b16 %v5596
        %v6345 = vunpack.c.h.b16 %v5596
        %v6346 = vunpack.c.l.b16 %v5597
        %v6347 = vunpack.c.h.b16 %v5597
        %v6348 = vunpack.c.l.b16 %v5598
        %v6349 = vunpack.c.h.b16 %v5598
        %v6350 = vunpack.c.l.b16 %v5599
        %v6351 = vunpack.c.h.b16 %v5599
        %v6352 = vunpack.c.l.b16 %v5600
        %v6353 = vunpack.c.h.b16 %v5600
        %v6354 = vunpack.c.l.b16 %v5601
        %v6355 = vunpack.c.h.b16 %v5601
        %v6356 = vunpack.c.l.b16 %v5602
        %v6357 = vunpack.c.h.b16 %v5602
        %v6358 = vunpack.c.l.b16 %v5603
        %v6359 = vunpack.c.h.b16 %v5603
        %v6360 = vunpack.c.l.b16 %v5604
        %v6361 = vunpack.c.h.b16 %v5604
        %v6362 = vunpack.c.l.b16 %v5605
        %v6363 = vunpack.c.h.b16 %v5605
        %v6364 = vunpack.c.l.b16 %v5606
        %v6365 = vunpack.c.h.b16 %v5606
        %v6366 = vunpack.c.l.b16 %v5607
        %v6367 = vunpack.c.h.b16 %v5607
        %v6368 = vunpack.c.l.b16 %v5608
        %v6369 = vunpack.c.h.b16 %v5608
        %v6370 = vunpack.c.l.b16 %v5609
        %v6371 = vunpack.c.h.b16 %v5609
        %v6372 = vunpack.c.l.b16 %v5610
        %v6373 = vunpack.c.h.b16 %v5610
        %v6374 = vunpack.c.l.b16 %v5611
        %v6375 = vunpack.c.h.b16 %v5611
        %v6376 = vunpack.c.l.b16 %v5612
        %v6377 = vunpack.c.h.b16 %v5612
        %v6378 = vunpack.c.l.b16 %v5613
        %v6379 = vunpack.c.h.b16 %v5613
        %v6380 = vunpack.c.l.b16 %v5614
        %v6381 = vunpack.c.h.b16 %v5614
        %v6382 = vunpack.c.l.b16 %v5615
        %v6383 = vunpack.c.h.b16 %v5615
        %v6384 = vunpack.c.l.b16 %v5616
        %v6385 = vunpack.c.h.b16 %v5616
        %v6386 = vunpack.c.l.b16 %v5617
        %v6387 = vunpack.c.h.b16 %v5617
        %v6388 = vunpack.c.l.b16 %v5618
        %v6389 = vunpack.c.h.b16 %v5618
        %v6390 = vunpack.c.l.b16 %v5619
        %v6391 = vunpack.c.h.b16 %v5619
        %v6392 = vunpack.c.l.b16 %v5620
        %v6393 = vunpack.c.h.b16 %v5620
        %v6394 = vunpack.c.l.b16 %v5621
        %v6395 = vunpack.c.h.b16 %v5621
        %v6396 = vunpack.c.l.b16 %v5622
        %v6397 = vunpack.c.h.b16 %v5622
        %v6398 = vunpack.c.l.b16 %v5623
        %v6399 = vunpack.c.h.b16 %v5623
        %v6400 = vunpack.c.l.b16 %v5624
        %v6401 = vunpack.c.h.b16 %v5624
        %v6402 = vunpack.c.l.b16 %v5625
        %v6403 = vunpack.c.h.b16 %v5625
        %v6404 = vunpack.c.l.b16 %v5626
        %v6405 = vunpack.c.h.b16 %v5626
        %v6406 = vunpack.c.l.b16 %v5627
        %v6407 = vunpack.c.h.b16 %v5627
        %v6408 = vunpack.c.l.b16 %v5628
        %v6409 = vunpack.c.h.b16 %v5628
        %v6410 = vunpack.c.l.b16 %v5629
        %v6411 = vunpack.c.h.b16 %v5629
        %v6412 = vunpack.c.l.b16 %v5630
        %v6413 = vunpack.c.h.b16 %v5630
        %v6414 = vunpack.c.l.b16 %v5631
        %v6415 = vunpack.c.h.b16 %v5631
        %v6416 = vunpack.c.l.b16 %v5632
        %v6417 = vunpack.c.h.b16 %v5632
        %v6418 = vunpack.c.l.b16 %v5633
        %v6419 = vunpack.c.h.b16 %v5633
        %v6420 = vunpack.c.l.b16 %v5634
        %v6421 = vunpack.c.h.b16 %v5634
        %v6422 = vunpack.c.l.b16 %v5635
        %v6423 = vunpack.c.h.b16 %v5635
        %v6424 = vunpack.c.l.b16 %v5636
        %v6425 = vunpack.c.h.b16 %v5636
        %v6426 = vunpack.c.l.b16 %v5637
        %v6427 = vunpack.c.h.b16 %v5637
        %v6428 = vunpack.c.l.b16 %v5638
        %v6429 = vunpack.c.h.b16 %v5638
        %v6430 = vunpack.c.l.b16 %v5639
        %v6431 = vunpack.c.h.b16 %v5639
        %v6432 = vunpack.c.l.b16 %v5640
        %v6433 = vunpack.c.h.b16 %v5640
        %v6434 = vunpack.c.l.b16 %v5641
        %v6435 = vunpack.c.h.b16 %v5641
        %v6436 = vunpack.c.l.b16 %v5642
        %v6437 = vunpack.c.h.b16 %v5642
        %v6438 = vunpack.c.l.b16 %v5643
        %v6439 = vunpack.c.h.b16 %v5643
        %v6440 = vunpack.c.l.b16 %v5644
        %v6441 = vunpack.c.h.b16 %v5644
        %v6442 = vunpack.c.l.b16 %v5645
        %v6443 = vunpack.c.h.b16 %v5645
        %v6444 = vunpack.c.l.b16 %v5646
        %v6445 = vunpack.c.h.b16 %v5646
        %v6446 = vunpack.c.l.b16 %v5647
        %v6447 = vunpack.c.h.b16 %v5647
        %v6448 = vunpack.c.l.b16 %v5648
        %v6449 = vunpack.c.h.b16 %v5648
        %v6450 = vunpack.c.l.b16 %v5649
        %v6451 = vunpack.c.h.b16 %v5649
        %v6452 = vunpack.c.l.b16 %v5650
        %v6453 = vunpack.c.h.b16 %v5650
        %v6454 = vunpack.c.l.b16 %v5651
        %v6455 = vunpack.c.h.b16 %v5651
        %v6456 = vunpack.c.l.b16 %v5652
        %v6457 = vunpack.c.h.b16 %v5652
        %v6458 = vunpack.c.l.b16 %v5653
        %v6459 = vunpack.c.h.b16 %v5653
        %v6460 = vunpack.c.l.b16 %v5654
        %v6461 = vunpack.c.h.b16 %v5654
        %v6462 = vunpack.c.l.b16 %v5655
        %v6463 = vunpack.c.h.b16 %v5655
        %v6464 = vunpack.c.l.b16 %v5656
        %v6465 = vunpack.c.h.b16 %v5656
        %v6466 = vunpack.c.l.b16 %v5657
        %v6467 = vunpack.c.h.b16 %v5657
        %v6468 = vunpack.c.l.b16 %v5658
        %v6469 = vunpack.c.h.b16 %v5658
        %v6470 = vunpack.c.l.b16 %v5659
        %v6471 = vunpack.c.h.b16 %v5659
        %v6472 = vunpack.c.l.b16 %v5660
        %v6473 = vunpack.c.h.b16 %v5660
        %v6474 = vunpack.c.l.b16 %v5661
        %v6475 = vunpack.c.h.b16 %v5661
        %v6476 = vunpack.c.l.b16 %v5662
        %v6477 = vunpack.c.h.b16 %v5662
        %v6478 = vunpack.c.l.b16 %v5663
        %v6479 = vunpack.c.h.b16 %v5663
        %v6480 = vunpack.c.l.b16 %v5664
        %v6481 = vunpack.c.h.b16 %v5664
        %v6482 = vunpack.c.l.b16 %v5665
        %v6483 = vunpack.c.h.b16 %v5665
        %v6484 = vunpack.c.l.b16 %v5666
        %v6485 = vunpack.c.h.b16 %v5666
        %v6486 = vunpack.c.l.b16 %v5667
        %v6487 = vunpack.c.h.b16 %v5667
        %v6488 = vunpack.c.l.b16 %v5668
        %v6489 = vunpack.c.h.b16 %v5668
        %v6490 = vunpack.c.l.b16 %v5669
        %v6491 = vunpack.c.h.b16 %v5669
        %v6492 = vunpack.c.l.b16 %v5670
        %v6493 = vunpack.c.h.b16 %v5670
        %v6494 = vunpack.c.l.b16 %v5671
        %v6495 = vunpack.c.h.b16 %v5671
        %v6496 = vunpack.c.l.b16 %v5672
        %v6497 = vunpack.c.h.b16 %v5672
        %v6498 = vunpack.c.l.b16 %v5673
        %v6499 = vunpack.c.h.b16 %v5673
        %v6500 = vunpack.c.l.b16 %v5674
        %v6501 = vunpack.c.h.b16 %v5674
        %v6502 = vunpack.c.l.b16 %v5675
        %v6503 = vunpack.c.h.b16 %v5675
        %v6504 = vunpack.c.l.b16 %v5676
        %v6505 = vunpack.c.h.b16 %v5676
        %v6506 = vunpack.c.l.b16 %v5677
        %v6507 = vunpack.c.h.b16 %v5677
        %v6508 = vunpack.c.l.b16 %v5678
        %v6509 = vunpack.c.h.b16 %v5678
        %v6510 = vunpack.c.l.b16 %v5679
        %v6511 = vunpack.c.h.b16 %v5679
        %v6512 = vunpack.c.l.b16 %v5680
        %v6513 = vunpack.c.h.b16 %v5680
        %v6514 = vunpack.c.l.b16 %v5681
        %v6515 = vunpack.c.h.b16 %v5681
        %v6516 = vunpack.c.l.b16 %v5682
        %v6517 = vunpack.c.h.b16 %v5682
        %v6518 = vunpack.c.l.b16 %v5683
        %v6519 = vunpack.c.h.b16 %v5683
        %v6520 = vunpack.c.l.b16 %v5684
        %v6521 = vunpack.c.h.b16 %v5684
        %v6522 = vunpack.c.l.b16 %v5685
        %v6523 = vunpack.c.h.b16 %v5685
        %v6524 = vunpack.c.l.b16 %v5686
        %v6525 = vunpack.c.h.b16 %v5686
        %v6526 = vunpack.c.l.b16 %v5687
        %v6527 = vunpack.c.h.b16 %v5687
        %v6528 = vunpack.c.l.b16 %v5688
        %v6529 = vunpack.c.h.b16 %v5688
        %v6530 = vunpack.c.l.b16 %v5689
        %v6531 = vunpack.c.h.b16 %v5689
        %v6532 = vunpack.c.l.b16 %v5690
        %v6533 = vunpack.c.h.b16 %v5690
        %v6534 = vunpack.c.l.b16 %v5691
        %v6535 = vunpack.c.h.b16 %v5691
        %v6536 = vunpack.c.l.b16 %v5692
        %v6537 = vunpack.c.h.b16 %v5692
        %v6538 = vunpack.c.l.b16 %v5693
        %v6539 = vunpack.c.h.b16 %v5693
        %v6540 = vunpack.c.l.b16 %v5694
        %v6541 = vunpack.c.h.b16 %v5694
        %v6542 = vunpack.c.l.b16 %v5695
        %v6543 = vunpack.c.h.b16 %v5695
        %v6544 = vunpack.c.l.b16 %v5696
        %v6545 = vunpack.c.h.b16 %v5696
        %v6546 = vunpack.c.l.b16 %v5697
        %v6547 = vunpack.c.h.b16 %v5697
        %v6548 = vunpack.c.l.b16 %v5698
        %v6549 = vunpack.c.h.b16 %v5698
        %v6550 = vunpack.c.l.b16 %v5699
        %v6551 = vunpack.c.h.b16 %v5699
        %v6552 = vunpack.c.l.b16 %v5700
        %v6553 = vunpack.c.h.b16 %v5700
        %v6554 = vunpack.c.l.b16 %v5701
        %v6555 = vunpack.c.h.b16 %v5701
        %v6556 = vunpack.c.l.b16 %v5702
        %v6557 = vunpack.c.h.b16 %v5702
        %v6558 = vunpack.c.l.b16 %v5703
        %v6559 = vunpack.c.h.b16 %v5703
        %v6560 = vunpack.c.l.b16 %v5704
        %v6561 = vunpack.c.h.b16 %v5704
        %v6562 = vunpack.c.l.b16 %v5705
        %v6563 = vunpack.c.h.b16 %v5705
        %v6564 = vunpack.c.l.b16 %v5706
        %v6565 = vunpack.c.h.b16 %v5706
        %v6566 = vunpack.c.l.b16 %v5707
        %v6567 = vunpack.c.h.b16 %v5707
        %v6568 = vunpack.c.l.b16 %v5708
        %v6569 = vunpack.c.h.b16 %v5708
        %v6570 = vunpack.c.l.b16 %v5709
        %v6571 = vunpack.c.h.b16 %v5709
        %v6572 = vunpack.c.l.b16 %v5710
        %v6573 = vunpack.c.h.b16 %v5710
        %v6574 = vunpack.c.l.b16 %v5711
        %v6575 = vunpack.c.h.b16 %v5711
        %v6576 = vunpack.c.l.b16 %v5712
        %v6577 = vunpack.c.h.b16 %v5712
        %v6578 = vunpack.c.l.b16 %v5713
        %v6579 = vunpack.c.h.b16 %v5713
        %v6580 = vunpack.c.l.b16 %v5714
        %v6581 = vunpack.c.h.b16 %v5714
        %v6582 = vunpack.c.l.b16 %v5715
        %v6583 = vunpack.c.h.b16 %v5715
        %v6584 = vunpack.c.l.b16 %v5716
        %v6585 = vunpack.c.h.b16 %v5716
        %v6586 = vunpack.c.l.b16 %v5717
        %v6587 = vunpack.c.h.b16 %v5717
        %v6588 = vunpack.c.l.b16 %v5718
        %v6589 = vunpack.c.h.b16 %v5718
        %v6590 = vunpack.c.l.b16 %v5719
        %v6591 = vunpack.c.h.b16 %v5719
        %v6592 = vunpack.c.l.b16 %v5720
        %v6593 = vunpack.c.h.b16 %v5720
        %v6594 = vunpack.c.l.b16 %v5721
        %v6595 = vunpack.c.h.b16 %v5721
        %v6596 = vunpack.c.l.b16 %v5722
        %v6597 = vunpack.c.h.b16 %v5722
        %v6598 = vunpack.c.l.b16 %v5723
        %v6599 = vunpack.c.h.b16 %v5723
        %v6600 = vunpack.c.l.b16 %v5724
        %v6601 = vunpack.c.h.b16 %v5724
        %v6602 = vunpack.c.l.b16 %v5725
        %v6603 = vunpack.c.h.b16 %v5725
        %v6604 = vunpack.c.l.b16 %v5726
        %v6605 = vunpack.c.h.b16 %v5726
        %v6606 = vunpack.c.l.b16 %v5727
        %v6607 = vunpack.c.h.b16 %v5727
        %v6608 = vunpack.c.l.b16 %v5728
        %v6609 = vunpack.c.h.b16 %v5728
        %v6610 = vunpack.c.l.b16 %v5729
        %v6611 = vunpack.c.h.b16 %v5729
        %v6612 = vunpack.c.l.b16 %v5730
        %v6613 = vunpack.c.h.b16 %v5730
        %v6614 = vunpack.c.l.b16 %v5731
        %v6615 = vunpack.c.h.b16 %v5731
        %v6616 = vunpack.c.l.b16 %v5732
        %v6617 = vunpack.c.h.b16 %v5732
        %v6618 = vunpack.c.l.b16 %v5733
        %v6619 = vunpack.c.h.b16 %v5733
        %v6620 = vunpack.c.l.b16 %v5734
        %v6621 = vunpack.c.h.b16 %v5734
        %v6622 = vunpack.c.l.b16 %v5735
        %v6623 = vunpack.c.h.b16 %v5735
        %v6624 = vunpack.c.l.b16 %v5736
        %v6625 = vunpack.c.h.b16 %v5736
        %v6626 = vunpack.c.l.b16 %v5737
        %v6627 = vunpack.c.h.b16 %v5737
        %v6628 = vunpack.c.l.b16 %v5738
        %v6629 = vunpack.c.h.b16 %v5738
        %v6630 = vunpack.c.l.b16 %v5739
        %v6631 = vunpack.c.h.b16 %v5739
        %v6632 = vunpack.c.l.b16 %v5740
        %v6633 = vunpack.c.h.b16 %v5740
        %v6634 = vunpack.c.l.b16 %v5741
        %v6635 = vunpack.c.h.b16 %v5741
        %v6636 = vunpack.c.l.b16 %v5742
        %v6637 = vunpack.c.h.b16 %v5742
        %v6638 = vunpack.c.l.b16 %v5743
        %v6639 = vunpack.c.h.b16 %v5743
        %v6640 = vunpack.c.l.b16 %v5744
        %v6641 = vunpack.c.h.b16 %v5744
        %v6642 = vunpack.c.l.b16 %v5745
        %v6643 = vunpack.c.h.b16 %v5745
        %v6644 = vunpack.c.l.b16 %v5746
        %v6645 = vunpack.c.h.b16 %v5746
        %v6646 = vpack.c.b16 %v6076, %v6070
        %v6647 = vpack.c.b16 %v6077, %v6071
        %v6648 = vpack.c.b16 %v6078, %v6072
        %v6649 = vpack.c.b16 %v6079, %v6073
        %v6650 = vpack.c.b16 %v6080, %v6074
        %v6651 = vpack.c.b16 %v6081, %v6075
        %v6652 = vpack.c.b16 %v6088, %v6082
        %v6653 = vpack.c.b16 %v6089, %v6083
        %v6654 = vpack.c.b16 %v6090, %v6084
        %v6655 = vpack.c.b16 %v6091, %v6085
        %v6656 = vpack.c.b16 %v6092, %v6086
        %v6657 = vpack.c.b16 %v6093, %v6087
        %v6658 = vpack.c.b16 %v6100, %v6094
        %v6659 = vpack.c.b16 %v6101, %v6095
        %v6660 = vpack.c.b16 %v6102, %v6096
        %v6661 = vpack.c.b16 %v6103, %v6097
        %v6662 = vpack.c.b16 %v6104, %v6098
        %v6663 = vpack.c.b16 %v6105, %v6099
        %v6664 = vpack.c.b16 %v6112, %v6106
        %v6665 = vpack.c.b16 %v6113, %v6107
        %v6666 = vpack.c.b16 %v6114, %v6108
        %v6667 = vpack.c.b16 %v6115, %v6109
        %v6668 = vpack.c.b16 %v6116, %v6110
        %v6669 = vpack.c.b16 %v6117, %v6111
        %v6670 = vpack.c.b16 %v6124, %v6118
        %v6671 = vpack.c.b16 %v6125, %v6119
        %v6672 = vpack.c.b16 %v6126, %v6120
        %v6673 = vpack.c.b16 %v6127, %v6121
        %v6674 = vpack.c.b16 %v6128, %v6122
        %v6675 = vpack.c.b16 %v6129, %v6123
        %v6676 = vpack.c.b16 %v6136, %v6130
        %v6677 = vpack.c.b16 %v6137, %v6131
        %v6678 = vpack.c.b16 %v6138, %v6132
        %v6679 = vpack.c.b16 %v6139, %v6133
        %v6680 = vpack.c.b16 %v6140, %v6134
        %v6681 = vpack.c.b16 %v6141, %v6135
        %v6682 = vpack.c.b16 %v6148, %v6142
        %v6683 = vpack.c.b16 %v6149, %v6143
        %v6684 = vpack.c.b16 %v6150, %v6144
        %v6685 = vpack.c.b16 %v6151, %v6145
        %v6686 = vpack.c.b16 %v6152, %v6146
        %v6687 = vpack.c.b16 %v6153, %v6147
        %v6688 = vpack.c.b16 %v6160, %v6154
        %v6689 = vpack.c.b16 %v6161, %v6155
        %v6690 = vpack.c.b16 %v6162, %v6156
        %v6691 = vpack.c.b16 %v6163, %v6157
        %v6692 = vpack.c.b16 %v6164, %v6158
        %v6693 = vpack.c.b16 %v6165, %v6159
        %v6694 = vpack.c.b16 %v6172, %v6166
        %v6695 = vpack.c.b16 %v6173, %v6167
        %v6696 = vpack.c.b16 %v6174, %v6168
        %v6697 = vpack.c.b16 %v6175, %v6169
        %v6698 = vpack.c.b16 %v6176, %v6170
        %v6699 = vpack.c.b16 %v6177, %v6171
        %v6700 = vpack.c.b16 %v6184, %v6178
        %v6701 = vpack.c.b16 %v6185, %v6179
        %v6702 = vpack.c.b16 %v6186, %v6180
        %v6703 = vpack.c.b16 %v6187, %v6181
        %v6704 = vpack.c.b16 %v6188, %v6182
        %v6705 = vpack.c.b16 %v6189, %v6183
        %v6706 = vpack.c.b16 %v6196, %v6190
        %v6707 = vpack.c.b16 %v6197, %v6191
        %v6708 = vpack.c.b16 %v6198, %v6192
        %v6709 = vpack.c.b16 %v6199, %v6193
        %v6710 = vpack.c.b16 %v6200, %v6194
        %v6711 = vpack.c.b16 %v6201, %v6195
        %v6712 = vpack.c.b16 %v6208, %v6202
        %v6713 = vpack.c.b16 %v6209, %v6203
        %v6714 = vpack.c.b16 %v6210, %v6204
        %v6715 = vpack.c.b16 %v6211, %v6205
        %v6716 = vpack.c.b16 %v6212, %v6206
        %v6717 = vpack.c.b16 %v6213, %v6207
        %v6718 = vpack.c.b16 %v6220, %v6214
        %v6719 = vpack.c.b16 %v6221, %v6215
        %v6720 = vpack.c.b16 %v6222, %v6216
        %v6721 = vpack.c.b16 %v6223, %v6217
        %v6722 = vpack.c.b16 %v6224, %v6218
        %v6723 = vpack.c.b16 %v6225, %v6219
        %v6724 = vpack.c.b16 %v6232, %v6226
        %v6725 = vpack.c.b16 %v6233, %v6227
        %v6726 = vpack.c.b16 %v6234, %v6228
        %v6727 = vpack.c.b16 %v6235, %v6229
        %v6728 = vpack.c.b16 %v6236, %v6230
        %v6729 = vpack.c.b16 %v6237, %v6231
        %v6730 = vpack.c.b16 %v6244, %v6238
        %v6731 = vpack.c.b16 %v6245, %v6239
        %v6732 = vpack.c.b16 %v6246, %v6240
        %v6733 = vpack.c.b16 %v6247, %v6241
        %v6734 = vpack.c.b16 %v6248, %v6242
        %v6735 = vpack.c.b16 %v6249, %v6243
        %v6736 = vpack.c.b16 %v6256, %v6250
        %v6737 = vpack.c.b16 %v6257, %v6251
        %v6738 = vpack.c.b16 %v6258, %v6252
        %v6739 = vpack.c.b16 %v6259, %v6253
        %v6740 = vpack.c.b16 %v6260, %v6254
        %v6741 = vpack.c.b16 %v6261, %v6255
        %v6742 = vpack.c.b16 %v6268, %v6262
        %v6743 = vpack.c.b16 %v6269, %v6263
        %v6744 = vpack.c.b16 %v6270, %v6264
        %v6745 = vpack.c.b16 %v6271, %v6265
        %v6746 = vpack.c.b16 %v6272, %v6266
        %v6747 = vpack.c.b16 %v6273, %v6267
        %v6748 = vpack.c.b16 %v6280, %v6274
        %v6749 = vpack.c.b16 %v6281, %v6275
        %v6750 = vpack.c.b16 %v6282, %v6276
        %v6751 = vpack.c.b16 %v6283, %v6277
        %v6752 = vpack.c.b16 %v6284, %v6278
        %v6753 = vpack.c.b16 %v6285, %v6279
        %v6754 = vpack.c.b16 %v6292, %v6286
        %v6755 = vpack.c.b16 %v6293, %v6287
        %v6756 = vpack.c.b16 %v6294, %v6288
        %v6757 = vpack.c.b16 %v6295, %v6289
        %v6758 = vpack.c.b16 %v6296, %v6290
        %v6759 = vpack.c.b16 %v6297, %v6291
        %v6760 = vpack.c.b16 %v6304, %v6298
        %v6761 = vpack.c.b16 %v6305, %v6299
        %v6762 = vpack.c.b16 %v6306, %v6300
        %v6763 = vpack.c.b16 %v6307, %v6301
        %v6764 = vpack.c.b16 %v6308, %v6302
        %v6765 = vpack.c.b16 %v6309, %v6303
        %v6766 = vpack.c.b16 %v6316, %v6310
        %v6767 = vpack.c.b16 %v6317, %v6311
        %v6768 = vpack.c.b16 %v6318, %v6312
        %v6769 = vpack.c.b16 %v6319, %v6313
        %v6770 = vpack.c.b16 %v6320, %v6314
        %v6771 = vpack.c.b16 %v6321, %v6315
        %v6772 = vpack.c.b16 %v6328, %v6322
        %v6773 = vpack.c.b16 %v6329, %v6323
        %v6774 = vpack.c.b16 %v6330, %v6324
        %v6775 = vpack.c.b16 %v6331, %v6325
        %v6776 = vpack.c.b16 %v6332, %v6326
        %v6777 = vpack.c.b16 %v6333, %v6327
        %v6778 = vpack.c.b16 %v6340, %v6334
        %v6779 = vpack.c.b16 %v6341, %v6335
        %v6780 = vpack.c.b16 %v6342, %v6336
        %v6781 = vpack.c.b16 %v6343, %v6337
        %v6782 = vpack.c.b16 %v6344, %v6338
        %v6783 = vpack.c.b16 %v6345, %v6339
        %v6784 = vpack.c.b16 %v6352, %v6346
        %v6785 = vpack.c.b16 %v6353, %v6347
        %v6786 = vpack.c.b16 %v6354, %v6348
        %v6787 = vpack.c.b16 %v6355, %v6349
        %v6788 = vpack.c.b16 %v6356, %v6350
        %v6789 = vpack.c.b16 %v6357, %v6351
        %v6790 = vpack.c.b16 %v6364, %v6358
        %v6791 = vpack.c.b16 %v6365, %v6359
        %v6792 = vpack.c.b16 %v6366, %v6360
        %v6793 = vpack.c.b16 %v6367, %v6361
        %v6794 = vpack.c.b16 %v6368, %v6362
        %v6795 = vpack.c.b16 %v6369, %v6363
        %v6796 = vpack.c.b16 %v6376, %v6370
        %v6797 = vpack.c.b16 %v6377, %v6371
        %v6798 = vpack.c.b16 %v6378, %v6372
        %v6799 = vpack.c.b16 %v6379, %v6373
        %v6800 = vpack.c.b16 %v6380, %v6374
        %v6801 = vpack.c.b16 %v6381, %v6375
        %v6802 = vpack.c.b16 %v6388, %v6382
        %v6803 = vpack.c.b16 %v6389, %v6383
        %v6804 = vpack.c.b16 %v6390, %v6384
        %v6805 = vpack.c.b16 %v6391, %v6385
        %v6806 = vpack.c.b16 %v6392, %v6386
        %v6807 = vpack.c.b16 %v6393, %v6387
        %v6808 = vpack.c.b16 %v6400, %v6394
        %v6809 = vpack.c.b16 %v6401, %v6395
        %v6810 = vpack.c.b16 %v6402, %v6396
        %v6811 = vpack.c.b16 %v6403, %v6397
        %v6812 = vpack.c.b16 %v6404, %v6398
        %v6813 = vpack.c.b16 %v6405, %v6399
        %v6814 = vpack.c.b16 %v6412, %v6406
        %v6815 = vpack.c.b16 %v6413, %v6407
        %v6816 = vpack.c.b16 %v6414, %v6408
        %v6817 = vpack.c.b16 %v6415, %v6409
        %v6818 = vpack.c.b16 %v6416, %v6410
        %v6819 = vpack.c.b16 %v6417, %v6411
        %v6820 = vpack.c.b16 %v6424, %v6418
        %v6821 = vpack.c.b16 %v6425, %v6419
        %v6822 = vpack.c.b16 %v6426, %v6420
        %v6823 = vpack.c.b16 %v6427, %v6421
        %v6824 = vpack.c.b16 %v6428, %v6422
        %v6825 = vpack.c.b16 %v6429, %v6423
        %v6826 = vpack.c.b16 %v6436, %v6430
        %v6827 = vpack.c.b16 %v6437, %v6431
        %v6828 = vpack.c.b16 %v6438, %v6432
        %v6829 = vpack.c.b16 %v6439, %v6433
        %v6830 = vpack.c.b16 %v6440, %v6434
        %v6831 = vpack.c.b16 %v6441, %v6435
        %v6832 = vpack.c.b16 %v6448, %v6442
        %v6833 = vpack.c.b16 %v6449, %v6443
        %v6834 = vpack.c.b16 %v6450, %v6444
        %v6835 = vpack.c.b16 %v6451, %v6445
        %v6836 = vpack.c.b16 %v6452, %v6446
        %v6837 = vpack.c.b16 %v6453, %v6447
        %v6838 = vpack.c.b16 %v6460, %v6454
        %v6839 = vpack.c.b16 %v6461, %v6455
        %v6840 = vpack.c.b16 %v6462, %v6456
        %v6841 = vpack.c.b16 %v6463, %v6457
        %v6842 = vpack.c.b16 %v6464, %v6458
        %v6843 = vpack.c.b16 %v6465, %v6459
        %v6844 = vpack.c.b16 %v6472, %v6466
        %v6845 = vpack.c.b16 %v6473, %v6467
        %v6846 = vpack.c.b16 %v6474, %v6468
        %v6847 = vpack.c.b16 %v6475, %v6469
        %v6848 = vpack.c.b16 %v6476, %v6470
        %v6849 = vpack.c.b16 %v6477, %v6471
        %v6850 = vpack.c.b16 %v6484, %v6478
        %v6851 = vpack.c.b16 %v6485, %v6479
        %v6852 = vpack.c.b16 %v6486, %v6480
        %v6853 = vpack.c.b16 %v6487, %v6481
        %v6854 = vpack.c.b16 %v6488, %v6482
        %v6855 = vpack.c.b16 %v6489, %v6483
        %v6856 = vpack.c.b16 %v6496, %v6490
        %v6857 = vpack.c.b16 %v6497, %v6491
        %v6858 = vpack.c.b16 %v6498, %v6492
        %v6859 = vpack.c.b16 %v6499, %v6493
        %v6860 = vpack.c.b16 %v6500, %v6494
        %v6861 = vpack.c.b16 %v6501, %v6495
        %v6862 = vpack.c.b16 %v6508, %v6502
        %v6863 = vpack.c.b16 %v6509, %v6503
        %v6864 = vpack.c.b16 %v6510, %v6504
        %v6865 = vpack.c.b16 %v6511, %v6505
        %v6866 = vpack.c.b16 %v6512, %v6506
        %v6867 = vpack.c.b16 %v6513, %v6507
        %v6868 = vpack.c.b16 %v6520, %v6514
        %v6869 = vpack.c.b16 %v6521, %v6515
        %v6870 = vpack.c.b16 %v6522, %v6516
        %v6871 = vpack.c.b16 %v6523, %v6517
        %v6872 = vpack.c.b16 %v6524, %v6518
        %v6873 = vpack.c.b16 %v6525, %v6519
        %v6874 = vpack.c.b16 %v6532, %v6526
        %v6875 = vpack.c.b16 %v6533, %v6527
        %v6876 = vpack.c.b16 %v6534, %v6528
        %v6877 = vpack.c.b16 %v6535, %v6529
        %v6878 = vpack.c.b16 %v6536, %v6530
        %v6879 = vpack.c.b16 %v6537, %v6531
        %v6880 = vpack.c.b16 %v6544, %v6538
        %v6881 = vpack.c.b16 %v6545, %v6539
        %v6882 = vpack.c.b16 %v6546, %v6540
        %v6883 = vpack.c.b16 %v6547, %v6541
        %v6884 = vpack.c.b16 %v6548, %v6542
        %v6885 = vpack.c.b16 %v6549, %v6543
        %v6886 = vpack.c.b16 %v6556, %v6550
        %v6887 = vpack.c.b16 %v6557, %v6551
        %v6888 = vpack.c.b16 %v6558, %v6552
        %v6889 = vpack.c.b16 %v6559, %v6553
        %v6890 = vpack.c.b16 %v6560, %v6554
        %v6891 = vpack.c.b16 %v6561, %v6555
        %v6892 = vpack.c.b16 %v6568, %v6562
        %v6893 = vpack.c.b16 %v6569, %v6563
        %v6894 = vpack.c.b16 %v6570, %v6564
        %v6895 = vpack.c.b16 %v6571, %v6565
        %v6896 = vpack.c.b16 %v6572, %v6566
        %v6897 = vpack.c.b16 %v6573, %v6567
        %v6898 = vpack.c.b16 %v6580, %v6574
        %v6899 = vpack.c.b16 %v6581, %v6575
        %v6900 = vpack.c.b16 %v6582, %v6576
        %v6901 = vpack.c.b16 %v6583, %v6577
        %v6902 = vpack.c.b16 %v6584, %v6578
        %v6903 = vpack.c.b16 %v6585, %v6579
        %v6904 = vpack.c.b16 %v6592, %v6586
        %v6905 = vpack.c.b16 %v6593, %v6587
        %v6906 = vpack.c.b16 %v6594, %v6588
        %v6907 = vpack.c.b16 %v6595, %v6589
        %v6908 = vpack.c.b16 %v6596, %v6590
        %v6909 = vpack.c.b16 %v6597, %v6591
        %v6910 = vpack.c.b16 %v6604, %v6598
        %v6911 = vpack.c.b16 %v6605, %v6599
        %v6912 = vpack.c.b16 %v6606, %v6600
        %v6913 = vpack.c.b16 %v6607, %v6601
        %v6914 = vpack.c.b16 %v6608, %v6602
        %v6915 = vpack.c.b16 %v6609, %v6603
        %v6916 = vpack.c.b16 %v6616, %v6610
        %v6917 = vpack.c.b16 %v6617, %v6611
        %v6918 = vpack.c.b16 %v6618, %v6612
        %v6919 = vpack.c.b16 %v6619, %v6613
        %v6920 = vpack.c.b16 %v6620, %v6614
        %v6921 = vpack.c.b16 %v6621, %v6615
        %v6922 = vpack.c.b16 %v6628, %v6622
        %v6923 = vpack.c.b16 %v6629, %v6623
        %v6924 = vpack.c.b16 %v6630, %v6624
        %v6925 = vpack.c.b16 %v6631, %v6625
        %v6926 = vpack.c.b16 %v6632, %v6626
        %v6927 = vpack.c.b16 %v6633, %v6627
        %v6928 = vpack.c.b16 %v6640, %v6634
        %v6929 = vpack.c.b16 %v6641, %v6635
        %v6930 = vpack.c.b16 %v6642, %v6636
        %v6931 = vpack.c.b16 %v6643, %v6637
        %v6932 = vpack.c.b16 %v6644, %v6638
        %v6933 = vpack.c.b16 %v6645, %v6639
        %7222 = vmatprep.subr.bf16.mxu0 %v6647
        %7223 = vmatpush1.bf16.msra.mxu0 %v6646
        %7224 = vmatprep.subr.bf16.mxu0 %v6653
        %7225 = vmatpush1.bf16.msra.mxu0 %v6652
        %7226 = vmatprep.subr.bf16.mxu0 %v6659
        %7227 = vmatpush1.bf16.msra.mxu0 %v6658
        %7228 = vmatprep.subr.bf16.mxu0 %v6665
        %7229 = vmatpush1.bf16.msra.mxu0 %v6664
        %7230 = vmatprep.subr.bf16.mxu0 %v6671
        %7231 = vmatpush1.bf16.msra.mxu0 %v6670
        %7232 = vmatprep.subr.bf16.mxu0 %v6677
        %7233 = vmatpush1.bf16.msra.mxu0 %v6676
        %7234 = vmatprep.subr.bf16.mxu0 %v6683
        %7235 = vmatpush1.bf16.msra.mxu0 %v6682
        %7236 = vmatprep.subr.bf16.mxu0 %v6689
        %7237 = vmatpush1.bf16.msra.mxu0 %v6688
        %7238 = vmatprep.subr.bf16.mxu0 %v6695
        %7239 = vmatpush1.bf16.msra.mxu0 %v6694
        %7240 = vmatprep.subr.bf16.mxu0 %v6701
        %7241 = vmatpush1.bf16.msra.mxu0 %v6700
        %7242 = vmatprep.subr.bf16.mxu0 %v6707
        %7243 = vmatpush1.bf16.msra.mxu0 %v6706
        %7244 = vmatprep.subr.bf16.mxu0 %v6713
        %7245 = vmatpush1.bf16.msra.mxu0 %v6712
        %7246 = vmatprep.subr.bf16.mxu0 %v6719
        %7247 = vmatpush1.bf16.msra.mxu0 %v6718
        %7248 = vmatprep.subr.bf16.mxu0 %v6725
        %7249 = vmatpush1.bf16.msra.mxu0 %v6724
        %7250 = vmatprep.subr.bf16.mxu0 %v6731
        %7251 = vmatpush1.bf16.msra.mxu0 %v6730
        %7252 = vmatprep.subr.bf16.mxu0 %v6737
        %7253 = vmatpush1.bf16.msra.mxu0 %v6736
        %7254 = vmatprep.mubr.bf16.mxu0 %v5364
        %7255 = vmatmul.mubr.bf16.gmra.mrb[0].mxu0 %v5363
        %v7256 = vpop.f32.mrb[0].mxu0
        %v7257 = vadd.f32 %v5755, %v7256
        %v7258 = vpop.f32.mrb[0].mxu0
        %v7259 = vadd.f32 %v5759, %v7258
        %v7260 = vpop.f32.mrb[0].mxu0
        %v7261 = vadd.f32 %v5755, %v7260
        %v7262 = vpop.f32.mrb[0].mxu0
        %v7263 = vadd.f32 %v5759, %v7262
        %7264 = vmatprep.mubr.bf16.mxu0 %v5370
        %7265 = vmatmul.mubr.bf16.gmra.mrb[0].mxu0 %v5369
        %v7266 = vpop.f32.mrb[0].mxu0
        %v7267 = vadd.f32 %v5755, %v7266
        %v7268 = vpop.f32.mrb[0].mxu0
        %v7269 = vadd.f32 %v5759, %v7268
        %v7270 = vpop.f32.mrb[0].mxu0
        %v7271 = vadd.f32 %v5755, %v7270
        %v7272 = vpop.f32.mrb[0].mxu0
        %v7273 = vadd.f32 %v5759, %v7272
        %7274 = vmatprep.mubr.bf16.mxu0 %v5376
        %7275 = vmatmul.mubr.bf16.gmra.mrb[0].mxu0 %v5375
        %v7276 = vpop.f32.mrb[0].mxu0
        %v7277 = vadd.f32 %v5755, %v7276
        %v7278 = vpop.f32.mrb[0].mxu0
        %v7279 = vadd.f32 %v5759, %v7278
        %v7280 = vpop.f32.mrb[0].mxu0
        %v7281 = vadd.f32 %v5755, %v7280
        %v7282 = vpop.f32.mrb[0].mxu0
        %v7283 = vadd.f32 %v5759, %v7282
        %7284 = vmatprep.mubr.bf16.mxu0 %v5382
        %7285 = vmatmul.mubr.bf16.gmra.mrb[0].mxu0 %v5381
        %v7286 = vpop.f32.mrb[0].mxu0
        %v7287 = vadd.f32 %v5755, %v7286
        %v7288 = vpop.f32.mrb[0].mxu0
        %v7289 = vadd.f32 %v5759, %v7288
        %v7290 = vpop.f32.mrb[0].mxu0
        %v7291 = vadd.f32 %v5755, %v7290
        %v7292 = vpop.f32.mrb[0].mxu0
        %v7293 = vadd.f32 %v5759, %v7292
        %7294 = vdwg.mxu0
        %7295 = vmatprep.subr.bf16.mxu0 %v6743
        %7296 = vmatpush1.bf16.msra.mxu0 %v6742
        %7297 = vmatprep.subr.bf16.mxu0 %v6749
        %7298 = vmatpush1.bf16.msra.mxu0 %v6748
        %7299 = vmatprep.subr.bf16.mxu0 %v6755
        %7300 = vmatpush1.bf16.msra.mxu0 %v6754
        %7301 = vmatprep.subr.bf16.mxu0 %v6761
        %7302 = vmatpush1.bf16.msra.mxu0 %v6760
        %7303 = vmatprep.subr.bf16.mxu0 %v6767
        %7304 = vmatpush1.bf16.msra.mxu0 %v6766
        %7305 = vmatprep.subr.bf16.mxu0 %v6773
        %7306 = vmatpush1.bf16.msra.mxu0 %v6772
        %7307 = vmatprep.subr.bf16.mxu0 %v6779
        %7308 = vmatpush1.bf16.msra.mxu0 %v6778
        %7309 = vmatprep.subr.bf16.mxu0 %v6785
        %7310 = vmatpush1.bf16.msra.mxu0 %v6784
        %7311 = vmatprep.subr.bf16.mxu0 %v6791
        %7312 = vmatpush1.bf16.msra.mxu0 %v6790
        %7313 = vmatprep.subr.bf16.mxu0 %v6797
        %7314 = vmatpush1.bf16.msra.mxu0 %v6796
        %7315 = vmatprep.subr.bf16.mxu0 %v6803
        %7316 = vmatpush1.bf16.msra.mxu0 %v6802
        %7317 = vmatprep.subr.bf16.mxu0 %v6809
        %7318 = vmatpush1.bf16.msra.mxu0 %v6808
        %7319 = vmatprep.subr.bf16.mxu0 %v6815
        %7320 = vmatpush1.bf16.msra.mxu0 %v6814
        %7321 = vmatprep.subr.bf16.mxu0 %v6821
        %7322 = vmatpush1.bf16.msra.mxu0 %v6820
        %7323 = vmatprep.subr.bf16.mxu0 %v6827
        %7324 = vmatpush1.bf16.msra.mxu0 %v6826
        %7325 = vmatprep.subr.bf16.mxu0 %v6833
        %7326 = vmatpush1.bf16.msra.mxu0 %v6832
        %7327 = vmatprep.mubr.bf16.mxu0 %v5366
        %7328 = vmatmul.mubr.bf16.gmra.mrb[0].mxu0 %v5365
        %v7329 = vpop.f32.mrb[0].mxu0
        %v7330 = vadd.f32 %v7257, %v7329
        %v7331 = vpop.f32.mrb[0].mxu0
        %v7332 = vadd.f32 %v7259, %v7331
        %v7333 = vpop.f32.mrb[0].mxu0
        %v7334 = vadd.f32 %v7261, %v7333
        %v7335 = vpop.f32.mrb[0].mxu0
        %v7336 = vadd.f32 %v7263, %v7335
        %7337 = vmatprep.mubr.bf16.mxu0 %v5372
        %7338 = vmatmul.mubr.bf16.gmra.mrb[0].mxu0 %v5371
        %v7339 = vpop.f32.mrb[0].mxu0
        %v7340 = vadd.f32 %v7267, %v7339
        %v7341 = vpop.f32.mrb[0].mxu0
        %v7342 = vadd.f32 %v7269, %v7341
        %v7343 = vpop.f32.mrb[0].mxu0
        %v7344 = vadd.f32 %v7271, %v7343
        %v7345 = vpop.f32.mrb[0].mxu0
        %v7346 = vadd.f32 %v7273, %v7345
        %7347 = vmatprep.mubr.bf16.mxu0 %v5378
        %7348 = vmatmul.mubr.bf16.gmra.mrb[0].mxu0 %v5377
        %v7349 = vpop.f32.mrb[0].mxu0
        %v7350 = vadd.f32 %v7277, %v7349
        %v7351 = vpop.f32.mrb[0].mxu0
        %v7352 = vadd.f32 %v7279, %v7351
        %v7353 = vpop.f32.mrb[0].mxu0
        %v7354 = vadd.f32 %v7281, %v7353
        %v7355 = vpop.f32.mrb[0].mxu0
        %v7356 = vadd.f32 %v7283, %v7355
        %7357 = vmatprep.mubr.bf16.mxu0 %v5384
        %7358 = vmatmul.mubr.bf16.gmra.mrb[0].mxu0 %v5383
        %v7359 = vpop.f32.mrb[0].mxu0
        %v7360 = vadd.f32 %v7287, %v7359
        %v7361 = vpop.f32.mrb[0].mxu0
        %v7362 = vadd.f32 %v7289, %v7361
        %v7363 = vpop.f32.mrb[0].mxu0
        %v7364 = vadd.f32 %v7291, %v7363
        %v7365 = vpop.f32.mrb[0].mxu0
        %v7366 = vadd.f32 %v7293, %v7365
        %7367 = vdwg.mxu0
        %7368 = vmatprep.subr.bf16.mxu0 %v6839
        %7369 = vmatpush1.bf16.msra.mxu0 %v6838
        %7370 = vmatprep.subr.bf16.mxu0 %v6845
        %7371 = vmatpush1.bf16.msra.mxu0 %v6844
        %7372 = vmatprep.subr.bf16.mxu0 %v6851
        %7373 = vmatpush1.bf16.msra.mxu0 %v6850
        %7374 = vmatprep.subr.bf16.mxu0 %v6857
        %7375 = vmatpush1.bf16.msra.mxu0 %v6856
        %7376 = vmatprep.subr.bf16.mxu0 %v6863
        %7377 = vmatpush1.bf16.msra.mxu0 %v6862
        %7378 = vmatprep.subr.bf16.mxu0 %v6869
        %7379 = vmatpush1.bf16.msra.mxu0 %v6868
        %7380 = vmatprep.subr.bf16.mxu0 %v6875
        %7381 = vmatpush1.bf16.msra.mxu0 %v6874
        %7382 = vmatprep.subr.bf16.mxu0 %v6881
        %7383 = vmatpush1.bf16.msra.mxu0 %v6880
        %7384 = vmatprep.subr.bf16.mxu0 %v6887
        %7385 = vmatpush1.bf16.msra.mxu0 %v6886
        %7386 = vmatprep.subr.bf16.mxu0 %v6893
        %7387 = vmatpush1.bf16.msra.mxu0 %v6892
        %7388 = vmatprep.subr.bf16.mxu0 %v6899
        %7389 = vmatpush1.bf16.msra.mxu0 %v6898
        %7390 = vmatprep.subr.bf16.mxu0 %v6905
        %7391 = vmatpush1.bf16.msra.mxu0 %v6904
        %7392 = vmatprep.subr.bf16.mxu0 %v6911
        %7393 = vmatpush1.bf16.msra.mxu0 %v6910
        %7394 = vmatprep.subr.bf16.mxu0 %v6917
        %7395 = vmatpush1.bf16.msra.mxu0 %v6916
        %7396 = vmatprep.subr.bf16.mxu0 %v6923
        %7397 = vmatpush1.bf16.msra.mxu0 %v6922
        %7398 = vmatprep.subr.bf16.mxu0 %v6929
        %7399 = vmatpush1.bf16.msra.mxu0 %v6928
        %7400 = vmatprep.mubr.bf16.mxu0 %v5368
        %7401 = vmatmul.mubr.bf16.gmra.mrb[0].mxu0 %v5367
        %v7402 = vpop.f32.mrb[0].mxu0
        %v7403 = vadd.f32 %v7330, %v7402
        %v7404 = vpop.f32.mrb[0].mxu0
        %v7405 = vadd.f32 %v7332, %v7404
        %v7406 = vpop.f32.mrb[0].mxu0
        %v7407 = vadd.f32 %v7334, %v7406
        %v7408 = vpop.f32.mrb[0].mxu0
        %v7409 = vadd.f32 %v7336, %v7408
        %7410 = vmatprep.mubr.bf16.mxu0 %v5374
        %7411 = vmatmul.mubr.bf16.gmra.mrb[0].mxu0 %v5373
        %v7412 = vpop.f32.mrb[0].mxu0
        %v7413 = vadd.f32 %v7340, %v7412
        %v7414 = vpop.f32.mrb[0].mxu0
        %v7415 = vadd.f32 %v7342, %v7414
        %v7416 = vpop.f32.mrb[0].mxu0
        %v7417 = vadd.f32 %v7344, %v7416
        %v7418 = vpop.f32.mrb[0].mxu0
        %v7419 = vadd.f32 %v7346, %v7418
        %7420 = vmatprep.mubr.bf16.mxu0 %v5380
        %7421 = vmatmul.mubr.bf16.gmra.mrb[0].mxu0 %v5379
        %v7422 = vpop.f32.mrb[0].mxu0
        %v7423 = vadd.f32 %v7350, %v7422
        %v7424 = vpop.f32.mrb[0].mxu0
        %v7425 = vadd.f32 %v7352, %v7424
        %v7426 = vpop.f32.mrb[0].mxu0
        %v7427 = vadd.f32 %v7354, %v7426
        %v7428 = vpop.f32.mrb[0].mxu0
        %v7429 = vadd.f32 %v7356, %v7428
        %7430 = vmatprep.mubr.bf16.mxu0 %v5386
        %7431 = vmatmul.mubr.bf16.gmra.mrb[0].mxu0 %v5385
        %v7432 = vpop.f32.mrb[0].mxu0
        %v7433 = vadd.f32 %v7360, %v7432
        %v7434 = vpop.f32.mrb[0].mxu0
        %v7435 = vadd.f32 %v7362, %v7434
        %v7436 = vpop.f32.mrb[0].mxu0
        %v7437 = vadd.f32 %v7364, %v7436
        %v7438 = vpop.f32.mrb[0].mxu0
        %v7439 = vadd.f32 %v7366, %v7438
        %7440 = vdwg.mxu0
        %7441 = vmatprep.subr.bf16.mxu0 %v6649
        %7442 = vmatpush1.bf16.msra.mxu0 %v6648
        %7443 = vmatprep.subr.bf16.mxu0 %v6655
        %7444 = vmatpush1.bf16.msra.mxu0 %v6654
        %7445 = vmatprep.subr.bf16.mxu0 %v6661
        %7446 = vmatpush1.bf16.msra.mxu0 %v6660
        %7447 = vmatprep.subr.bf16.mxu0 %v6667
        %7448 = vmatpush1.bf16.msra.mxu0 %v6666
        %7449 = vmatprep.subr.bf16.mxu0 %v6673
        %7450 = vmatpush1.bf16.msra.mxu0 %v6672
        %7451 = vmatprep.subr.bf16.mxu0 %v6679
        %7452 = vmatpush1.bf16.msra.mxu0 %v6678
        %7453 = vmatprep.subr.bf16.mxu0 %v6685
        %7454 = vmatpush1.bf16.msra.mxu0 %v6684
        %7455 = vmatprep.subr.bf16.mxu0 %v6691
        %7456 = vmatpush1.bf16.msra.mxu0 %v6690
        %7457 = vmatprep.subr.bf16.mxu0 %v6697
        %7458 = vmatpush1.bf16.msra.mxu0 %v6696
        %7459 = vmatprep.subr.bf16.mxu0 %v6703
        %7460 = vmatpush1.bf16.msra.mxu0 %v6702
        %7461 = vmatprep.subr.bf16.mxu0 %v6709
        %7462 = vmatpush1.bf16.msra.mxu0 %v6708
        %7463 = vmatprep.subr.bf16.mxu0 %v6715
        %7464 = vmatpush1.bf16.msra.mxu0 %v6714
        %7465 = vmatprep.subr.bf16.mxu0 %v6721
        %7466 = vmatpush1.bf16.msra.mxu0 %v6720
        %7467 = vmatprep.subr.bf16.mxu0 %v6727
        %7468 = vmatpush1.bf16.msra.mxu0 %v6726
        %7469 = vmatprep.subr.bf16.mxu0 %v6733
        %7470 = vmatpush1.bf16.msra.mxu0 %v6732
        %7471 = vmatprep.subr.bf16.mxu0 %v6739
        %7472 = vmatpush1.bf16.msra.mxu0 %v6738
        %7473 = vmatprep.mubr.bf16.mxu0 %v5364
        %7474 = vmatmul.mubr.bf16.gmra.mrb[0].mxu0 %v5363
        %v7475 = vpop.f32.mrb[0].mxu0
        %v7476 = vadd.f32 %v5763, %v7475
        %v7477 = vpop.f32.mrb[0].mxu0
        %v7478 = vadd.f32 %v5767, %v7477
        %v7479 = vpop.f32.mrb[0].mxu0
        %v7480 = vadd.f32 %v5763, %v7479
        %v7481 = vpop.f32.mrb[0].mxu0
        %v7482 = vadd.f32 %v5767, %v7481
        %7483 = vmatprep.mubr.bf16.mxu0 %v5370
        %7484 = vmatmul.mubr.bf16.gmra.mrb[0].mxu0 %v5369
        %v7485 = vpop.f32.mrb[0].mxu0
        %v7486 = vadd.f32 %v5763, %v7485
        %v7487 = vpop.f32.mrb[0].mxu0
        %v7488 = vadd.f32 %v5767, %v7487
        %v7489 = vpop.f32.mrb[0].mxu0
        %v7490 = vadd.f32 %v5763, %v7489
        %v7491 = vpop.f32.mrb[0].mxu0
        %v7492 = vadd.f32 %v5767, %v7491
        %7493 = vmatprep.mubr.bf16.mxu0 %v5376
        %7494 = vmatmul.mubr.bf16.gmra.mrb[0].mxu0 %v5375
        %v7495 = vpop.f32.mrb[0].mxu0
        %v7496 = vadd.f32 %v5763, %v7495
        %v7497 = vpop.f32.mrb[0].mxu0
        %v7498 = vadd.f32 %v5767, %v7497
        %v7499 = vpop.f32.mrb[0].mxu0
        %v7500 = vadd.f32 %v5763, %v7499
        %v7501 = vpop.f32.mrb[0].mxu0
        %v7502 = vadd.f32 %v5767, %v7501
        %7503 = vmatprep.mubr.bf16.mxu0 %v5382
        %7504 = vmatmul.mubr.bf16.gmra.mrb[0].mxu0 %v5381
        %v7505 = vpop.f32.mrb[0].mxu0
        %v7506 = vadd.f32 %v5763, %v7505
        %v7507 = vpop.f32.mrb[0].mxu0
        %v7508 = vadd.f32 %v5767, %v7507
        %v7509 = vpop.f32.mrb[0].mxu0
        %v7510 = vadd.f32 %v5763, %v7509
        %v7511 = vpop.f32.mrb[0].mxu0
        %v7512 = vadd.f32 %v5767, %v7511
        %7513 = vdwg.mxu0
        %7514 = vmatprep.subr.bf16.mxu0 %v6745
        %7515 = vmatpush1.bf16.msra.mxu0 %v6744
        %7516 = vmatprep.subr.bf16.mxu0 %v6751
        %7517 = vmatpush1.bf16.msra.mxu0 %v6750
        %7518 = vmatprep.subr.bf16.mxu0 %v6757
        %7519 = vmatpush1.bf16.msra.mxu0 %v6756
        %7520 = vmatprep.subr.bf16.mxu0 %v6763
        %7521 = vmatpush1.bf16.msra.mxu0 %v6762
        %7522 = vmatprep.subr.bf16.mxu0 %v6769
        %7523 = vmatpush1.bf16.msra.mxu0 %v6768
        %7524 = vmatprep.subr.bf16.mxu0 %v6775
        %7525 = vmatpush1.bf16.msra.mxu0 %v6774
        %7526 = vmatprep.subr.bf16.mxu0 %v6781
        %7527 = vmatpush1.bf16.msra.mxu0 %v6780
        %7528 = vmatprep.subr.bf16.mxu0 %v6787
        %7529 = vmatpush1.bf16.msra.mxu0 %v6786
        %7530 = vmatprep.subr.bf16.mxu0 %v6793
        %7531 = vmatpush1.bf16.msra.mxu0 %v6792
        %7532 = vmatprep.subr.bf16.mxu0 %v6799
        %7533 = vmatpush1.bf16.msra.mxu0 %v6798
        %7534 = vmatprep.subr.bf16.mxu0 %v6805
        %7535 = vmatpush1.bf16.msra.mxu0 %v6804
        %7536 = vmatprep.subr.bf16.mxu0 %v6811
        %7537 = vmatpush1.bf16.msra.mxu0 %v6810
        %7538 = vmatprep.subr.bf16.mxu0 %v6817
        %7539 = vmatpush1.bf16.msra.mxu0 %v6816
        %7540 = vmatprep.subr.bf16.mxu0 %v6823
        %7541 = vmatpush1.bf16.msra.mxu0 %v6822
        %7542 = vmatprep.subr.bf16.mxu0 %v6829
        %7543 = vmatpush1.bf16.msra.mxu0 %v6828
        %7544 = vmatprep.subr.bf16.mxu0 %v6835
        %7545 = vmatpush1.bf16.msra.mxu0 %v6834
        %7546 = vmatprep.mubr.bf16.mxu0 %v5366
        %7547 = vmatmul.mubr.bf16.gmra.mrb[0].mxu0 %v5365
        %v7548 = vpop.f32.mrb[0].mxu0
        %v7549 = vadd.f32 %v7476, %v7548
        %v7550 = vpop.f32.mrb[0].mxu0
        %v7551 = vadd.f32 %v7478, %v7550
        %v7552 = vpop.f32.mrb[0].mxu0
        %v7553 = vadd.f32 %v7480, %v7552
        %v7554 = vpop.f32.mrb[0].mxu0
        %v7555 = vadd.f32 %v7482, %v7554
        %7556 = vmatprep.mubr.bf16.mxu0 %v5372
        %7557 = vmatmul.mubr.bf16.gmra.mrb[0].mxu0 %v5371
        %v7558 = vpop.f32.mrb[0].mxu0
        %v7559 = vadd.f32 %v7486, %v7558
        %v7560 = vpop.f32.mrb[0].mxu0
        %v7561 = vadd.f32 %v7488, %v7560
        %v7562 = vpop.f32.mrb[0].mxu0
        %v7563 = vadd.f32 %v7490, %v7562
        %v7564 = vpop.f32.mrb[0].mxu0
        %v7565 = vadd.f32 %v7492, %v7564
        %7566 = vmatprep.mubr.bf16.mxu0 %v5378
        %7567 = vmatmul.mubr.bf16.gmra.mrb[0].mxu0 %v5377
        %v7568 = vpop.f32.mrb[0].mxu0
        %v7569 = vadd.f32 %v7496, %v7568
        %v7570 = vpop.f32.mrb[0].mxu0
        %v7571 = vadd.f32 %v7498, %v7570
        %v7572 = vpop.f32.mrb[0].mxu0
        %v7573 = vadd.f32 %v7500, %v7572
        %v7574 = vpop.f32.mrb[0].mxu0
        %v7575 = vadd.f32 %v7502, %v7574
        %7576 = vmatprep.mubr.bf16.mxu0 %v5384
        %7577 = vmatmul.mubr.bf16.gmra.mrb[0].mxu0 %v5383
        %v7578 = vpop.f32.mrb[0].mxu0
        %v7579 = vadd.f32 %v7506, %v7578
        %v7580 = vpop.f32.mrb[0].mxu0
        %v7581 = vadd.f32 %v7508, %v7580
        %v7582 = vpop.f32.mrb[0].mxu0
        %v7583 = vadd.f32 %v7510, %v7582
        %v7584 = vpop.f32.mrb[0].mxu0
        %v7585 = vadd.f32 %v7512, %v7584
        %7586 = vdwg.mxu0
        %7587 = vmatprep.subr.bf16.mxu0 %v6841
        %7588 = vmatpush1.bf16.msra.mxu0 %v6840
        %7589 = vmatprep.subr.bf16.mxu0 %v6847
        %7590 = vmatpush1.bf16.msra.mxu0 %v6846
        %7591 = vmatprep.subr.bf16.mxu0 %v6853
        %7592 = vmatpush1.bf16.msra.mxu0 %v6852
        %7593 = vmatprep.subr.bf16.mxu0 %v6859
        %7594 = vmatpush1.bf16.msra.mxu0 %v6858
        %7595 = vmatprep.subr.bf16.mxu0 %v6865
        %7596 = vmatpush1.bf16.msra.mxu0 %v6864
        %7597 = vmatprep.subr.bf16.mxu0 %v6871
        %7598 = vmatpush1.bf16.msra.mxu0 %v6870
        %7599 = vmatprep.subr.bf16.mxu0 %v6877
        %7600 = vmatpush1.bf16.msra.mxu0 %v6876
        %7601 = vmatprep.subr.bf16.mxu0 %v6883
        %7602 = vmatpush1.bf16.msra.mxu0 %v6882
        %7603 = vmatprep.subr.bf16.mxu0 %v6889
        %7604 = vmatpush1.bf16.msra.mxu0 %v6888
        %7605 = vmatprep.subr.bf16.mxu0 %v6895
        %7606 = vmatpush1.bf16.msra.mxu0 %v6894
        %7607 = vmatprep.subr.bf16.mxu0 %v6901
        %7608 = vmatpush1.bf16.msra.mxu0 %v6900
        %7609 = vmatprep.subr.bf16.mxu0 %v6907
        %7610 = vmatpush1.bf16.msra.mxu0 %v6906
        %7611 = vmatprep.subr.bf16.mxu0 %v6913
        %7612 = vmatpush1.bf16.msra.mxu0 %v6912
        %7613 = vmatprep.subr.bf16.mxu0 %v6919
        %7614 = vmatpush1.bf16.msra.mxu0 %v6918
        %7615 = vmatprep.subr.bf16.mxu0 %v6925
        %7616 = vmatpush1.bf16.msra.mxu0 %v6924
        %7617 = vmatprep.subr.bf16.mxu0 %v6931
        %7618 = vmatpush1.bf16.msra.mxu0 %v6930
        %7619 = vmatprep.mubr.bf16.mxu0 %v5368
        %7620 = vmatmul.mubr.bf16.gmra.mrb[0].mxu0 %v5367
        %v7621 = vpop.f32.mrb[0].mxu0
        %v7622 = vadd.f32 %v7549, %v7621
        %v7623 = vpop.f32.mrb[0].mxu0
        %v7624 = vadd.f32 %v7551, %v7623
        %v7625 = vpop.f32.mrb[0].mxu0
        %v7626 = vadd.f32 %v7553, %v7625
        %v7627 = vpop.f32.mrb[0].mxu0
        %v7628 = vadd.f32 %v7555, %v7627
        %7629 = vmatprep.mubr.bf16.mxu0 %v5374
        %7630 = vmatmul.mubr.bf16.gmra.mrb[0].mxu0 %v5373
        %v7631 = vpop.f32.mrb[0].mxu0
        %v7632 = vadd.f32 %v7559, %v7631
        %v7633 = vpop.f32.mrb[0].mxu0
        %v7634 = vadd.f32 %v7561, %v7633
        %v7635 = vpop.f32.mrb[0].mxu0
        %v7636 = vadd.f32 %v7563, %v7635
        %v7637 = vpop.f32.mrb[0].mxu0
        %v7638 = vadd.f32 %v7565, %v7637
        %7639 = vmatprep.mubr.bf16.mxu0 %v5380
        %7640 = vmatmul.mubr.bf16.gmra.mrb[0].mxu0 %v5379
        %v7641 = vpop.f32.mrb[0].mxu0
        %v7642 = vadd.f32 %v7569, %v7641
        %v7643 = vpop.f32.mrb[0].mxu0
        %v7644 = vadd.f32 %v7571, %v7643
        %v7645 = vpop.f32.mrb[0].mxu0
        %v7646 = vadd.f32 %v7573, %v7645
        %v7647 = vpop.f32.mrb[0].mxu0
        %v7648 = vadd.f32 %v7575, %v7647
        %7649 = vmatprep.mubr.bf16.mxu0 %v5386
        %7650 = vmatmul.mubr.bf16.gmra.mrb[0].mxu0 %v5385
        %v7651 = vpop.f32.mrb[0].mxu0
        %v7652 = vadd.f32 %v7579, %v7651
        %v7653 = vpop.f32.mrb[0].mxu0
        %v7654 = vadd.f32 %v7581, %v7653
        %v7655 = vpop.f32.mrb[0].mxu0
        %v7656 = vadd.f32 %v7583, %v7655
        %v7657 = vpop.f32.mrb[0].mxu0
        %v7658 = vadd.f32 %v7585, %v7657
        %7659 = vdwg.mxu0
        %7660 = vmatprep.subr.bf16.mxu0 %v6651
        %7661 = vmatpush1.bf16.msra.mxu0 %v6650
        %7662 = vmatprep.subr.bf16.mxu0 %v6657
        %7663 = vmatpush1.bf16.msra.mxu0 %v6656
        %7664 = vmatprep.subr.bf16.mxu0 %v6663
        %7665 = vmatpush1.bf16.msra.mxu0 %v6662
        %7666 = vmatprep.subr.bf16.mxu0 %v6669
        %7667 = vmatpush1.bf16.msra.mxu0 %v6668
        %7668 = vmatprep.subr.bf16.mxu0 %v6675
        %7669 = vmatpush1.bf16.msra.mxu0 %v6674
        %7670 = vmatprep.subr.bf16.mxu0 %v6681
        %7671 = vmatpush1.bf16.msra.mxu0 %v6680
        %7672 = vmatprep.subr.bf16.mxu0 %v6687
        %7673 = vmatpush1.bf16.msra.mxu0 %v6686
        %7674 = vmatprep.subr.bf16.mxu0 %v6693
        %7675 = vmatpush1.bf16.msra.mxu0 %v6692
        %7676 = vmatprep.subr.bf16.mxu0 %v6699
        %7677 = vmatpush1.bf16.msra.mxu0 %v6698
        %7678 = vmatprep.subr.bf16.mxu0 %v6705
        %7679 = vmatpush1.bf16.msra.mxu0 %v6704
        %7680 = vmatprep.subr.bf16.mxu0 %v6711
        %7681 = vmatpush1.bf16.msra.mxu0 %v6710
        %7682 = vmatprep.subr.bf16.mxu0 %v6717
        %7683 = vmatpush1.bf16.msra.mxu0 %v6716
        %7684 = vmatprep.subr.bf16.mxu0 %v6723
        %7685 = vmatpush1.bf16.msra.mxu0 %v6722
        %7686 = vmatprep.subr.bf16.mxu0 %v6729
        %7687 = vmatpush1.bf16.msra.mxu0 %v6728
        %7688 = vmatprep.subr.bf16.mxu0 %v6735
        %7689 = vmatpush1.bf16.msra.mxu0 %v6734
        %7690 = vmatprep.subr.bf16.mxu0 %v6741
        %7691 = vmatpush1.bf16.msra.mxu0 %v6740
        %7692 = vmatprep.mubr.bf16.mxu0 %v5364
        %7693 = vmatmul.mubr.bf16.gmra.mrb[0].mxu0 %v5363
        %v7694 = vpop.f32.mrb[0].mxu0
        %v7695 = vadd.f32 %v5771, %v7694
        %v7696 = vpop.f32.mrb[0].mxu0
        %v7697 = vadd.f32 %v5775, %v7696
        %v7698 = vpop.f32.mrb[0].mxu0
        %v7699 = vadd.f32 %v5771, %v7698
        %v7700 = vpop.f32.mrb[0].mxu0
        %v7701 = vadd.f32 %v5775, %v7700
        %7702 = vmatprep.mubr.bf16.mxu0 %v5370
        %7703 = vmatmul.mubr.bf16.gmra.mrb[0].mxu0 %v5369
        %v7704 = vpop.f32.mrb[0].mxu0
        %v7705 = vadd.f32 %v5771, %v7704
        %v7706 = vpop.f32.mrb[0].mxu0
        %v7707 = vadd.f32 %v5775, %v7706
        %v7708 = vpop.f32.mrb[0].mxu0
        %v7709 = vadd.f32 %v5771, %v7708
        %v7710 = vpop.f32.mrb[0].mxu0
        %v7711 = vadd.f32 %v5775, %v7710
        %7712 = vmatprep.mubr.bf16.mxu0 %v5376
        %7713 = vmatmul.mubr.bf16.gmra.mrb[0].mxu0 %v5375
        %v7714 = vpop.f32.mrb[0].mxu0
        %v7715 = vadd.f32 %v5771, %v7714
        %v7716 = vpop.f32.mrb[0].mxu0
        %v7717 = vadd.f32 %v5775, %v7716
        %v7718 = vpop.f32.mrb[0].mxu0
        %v7719 = vadd.f32 %v5771, %v7718
        %v7720 = vpop.f32.mrb[0].mxu0
        %v7721 = vadd.f32 %v5775, %v7720
        %7722 = vmatprep.mubr.bf16.mxu0 %v5382
        %7723 = vmatmul.mubr.bf16.gmra.mrb[0].mxu0 %v5381
        %v7724 = vpop.f32.mrb[0].mxu0
        %v7725 = vadd.f32 %v5771, %v7724
        %v7726 = vpop.f32.mrb[0].mxu0
        %v7727 = vadd.f32 %v5775, %v7726
        %v7728 = vpop.f32.mrb[0].mxu0
        %v7729 = vadd.f32 %v5771, %v7728
        %v7730 = vpop.f32.mrb[0].mxu0
        %v7731 = vadd.f32 %v5775, %v7730
        %7732 = vdwg.mxu0
        %7733 = vmatprep.subr.bf16.mxu0 %v6747
        %7734 = vmatpush1.bf16.msra.mxu0 %v6746
        %7735 = vmatprep.subr.bf16.mxu0 %v6753
        %7736 = vmatpush1.bf16.msra.mxu0 %v6752
        %7737 = vmatprep.subr.bf16.mxu0 %v6759
        %7738 = vmatpush1.bf16.msra.mxu0 %v6758
        %7739 = vmatprep.subr.bf16.mxu0 %v6765
        %7740 = vmatpush1.bf16.msra.mxu0 %v6764
        %7741 = vmatprep.subr.bf16.mxu0 %v6771
        %7742 = vmatpush1.bf16.msra.mxu0 %v6770
        %7743 = vmatprep.subr.bf16.mxu0 %v6777
        %7744 = vmatpush1.bf16.msra.mxu0 %v6776
        %7745 = vmatprep.subr.bf16.mxu0 %v6783
        %7746 = vmatpush1.bf16.msra.mxu0 %v6782
        %7747 = vmatprep.subr.bf16.mxu0 %v6789
        %7748 = vmatpush1.bf16.msra.mxu0 %v6788
        %7749 = vmatprep.subr.bf16.mxu0 %v6795
        %7750 = vmatpush1.bf16.msra.mxu0 %v6794
        %7751 = vmatprep.subr.bf16.mxu0 %v6801
        %7752 = vmatpush1.bf16.msra.mxu0 %v6800
        %7753 = vmatprep.subr.bf16.mxu0 %v6807
        %7754 = vmatpush1.bf16.msra.mxu0 %v6806
        %7755 = vmatprep.subr.bf16.mxu0 %v6813
        %7756 = vmatpush1.bf16.msra.mxu0 %v6812
        %7757 = vmatprep.subr.bf16.mxu0 %v6819
        %7758 = vmatpush1.bf16.msra.mxu0 %v6818
        %7759 = vmatprep.subr.bf16.mxu0 %v6825
        %7760 = vmatpush1.bf16.msra.mxu0 %v6824
        %7761 = vmatprep.subr.bf16.mxu0 %v6831
        %7762 = vmatpush1.bf16.msra.mxu0 %v6830
        %7763 = vmatprep.subr.bf16.mxu0 %v6837
        %7764 = vmatpush1.bf16.msra.mxu0 %v6836
        %7765 = vmatprep.mubr.bf16.mxu0 %v5366
        %7766 = vmatmul.mubr.bf16.gmra.mrb[0].mxu0 %v5365
        %v7767 = vpop.f32.mrb[0].mxu0
        %v7768 = vadd.f32 %v7695, %v7767
        %v7769 = vpop.f32.mrb[0].mxu0
        %v7770 = vadd.f32 %v7697, %v7769
        %v7771 = vpop.f32.mrb[0].mxu0
        %v7772 = vadd.f32 %v7699, %v7771
        %v7773 = vpop.f32.mrb[0].mxu0
        %v7774 = vadd.f32 %v7701, %v7773
        %7775 = vmatprep.mubr.bf16.mxu0 %v5372
        %7776 = vmatmul.mubr.bf16.gmra.mrb[0].mxu0 %v5371
        %v7777 = vpop.f32.mrb[0].mxu0
        %v7778 = vadd.f32 %v7705, %v7777
        %v7779 = vpop.f32.mrb[0].mxu0
        %v7780 = vadd.f32 %v7707, %v7779
        %v7781 = vpop.f32.mrb[0].mxu0
        %v7782 = vadd.f32 %v7709, %v7781
        %v7783 = vpop.f32.mrb[0].mxu0
        %v7784 = vadd.f32 %v7711, %v7783
        %7785 = vmatprep.mubr.bf16.mxu0 %v5378
        %7786 = vmatmul.mubr.bf16.gmra.mrb[0].mxu0 %v5377
        %v7787 = vpop.f32.mrb[0].mxu0
        %v7788 = vadd.f32 %v7715, %v7787
        %v7789 = vpop.f32.mrb[0].mxu0
        %v7790 = vadd.f32 %v7717, %v7789
        %v7791 = vpop.f32.mrb[0].mxu0
        %v7792 = vadd.f32 %v7719, %v7791
        %v7793 = vpop.f32.mrb[0].mxu0
        %v7794 = vadd.f32 %v7721, %v7793
        %7795 = vmatprep.mubr.bf16.mxu0 %v5384
        %7796 = vmatmul.mubr.bf16.gmra.mrb[0].mxu0 %v5383
        %v7797 = vpop.f32.mrb[0].mxu0
        %v7798 = vadd.f32 %v7725, %v7797
        %v7799 = vpop.f32.mrb[0].mxu0
        %v7800 = vadd.f32 %v7727, %v7799
        %v7801 = vpop.f32.mrb[0].mxu0
        %v7802 = vadd.f32 %v7729, %v7801
        %v7803 = vpop.f32.mrb[0].mxu0
        %v7804 = vadd.f32 %v7731, %v7803
        %7805 = vdwg.mxu0
        %7806 = vmatprep.subr.bf16.mxu0 %v6843
        %7807 = vmatpush1.bf16.msra.mxu0 %v6842
        %7808 = vmatprep.subr.bf16.mxu0 %v6849
        %7809 = vmatpush1.bf16.msra.mxu0 %v6848
        %7810 = vmatprep.subr.bf16.mxu0 %v6855
        %7811 = vmatpush1.bf16.msra.mxu0 %v6854
        %7812 = vmatprep.subr.bf16.mxu0 %v6861
        %7813 = vmatpush1.bf16.msra.mxu0 %v6860
        %7814 = vmatprep.subr.bf16.mxu0 %v6867
        %7815 = vmatpush1.bf16.msra.mxu0 %v6866
        %7816 = vmatprep.subr.bf16.mxu0 %v6873
        %7817 = vmatpush1.bf16.msra.mxu0 %v6872
        %7818 = vmatprep.subr.bf16.mxu0 %v6879
        %7819 = vmatpush1.bf16.msra.mxu0 %v6878
        %7820 = vmatprep.subr.bf16.mxu0 %v6885
        %7821 = vmatpush1.bf16.msra.mxu0 %v6884
        %7822 = vmatprep.subr.bf16.mxu0 %v6891
        %7823 = vmatpush1.bf16.msra.mxu0 %v6890
        %7824 = vmatprep.subr.bf16.mxu0 %v6897
        %7825 = vmatpush1.bf16.msra.mxu0 %v6896
        %7826 = vmatprep.subr.bf16.mxu0 %v6903
        %7827 = vmatpush1.bf16.msra.mxu0 %v6902
        %7828 = vmatprep.subr.bf16.mxu0 %v6909
        %7829 = vmatpush1.bf16.msra.mxu0 %v6908
        %7830 = vmatprep.subr.bf16.mxu0 %v6915
        %7831 = vmatpush1.bf16.msra.mxu0 %v6914
        %7832 = vmatprep.subr.bf16.mxu0 %v6921
        %7833 = vmatpush1.bf16.msra.mxu0 %v6920
        %7834 = vmatprep.subr.bf16.mxu0 %v6927
        %7835 = vmatpush1.bf16.msra.mxu0 %v6926
        %7836 = vmatprep.subr.bf16.mxu0 %v6933
        %7837 = vmatpush1.bf16.msra.mxu0 %v6932
        %7838 = vmatprep.mubr.bf16.mxu0 %v5368
        %7839 = vmatmul.mubr.bf16.gmra.mrb[0].mxu0 %v5367
        %v7840 = vpop.f32.mrb[0].mxu0
        %v7841 = vadd.f32 %v7768, %v7840
        %v7842 = vpop.f32.mrb[0].mxu0
        %v7843 = vadd.f32 %v7770, %v7842
        %v7844 = vpop.f32.mrb[0].mxu0
        %v7845 = vadd.f32 %v7772, %v7844
        %v7846 = vpop.f32.mrb[0].mxu0
        %v7847 = vadd.f32 %v7774, %v7846
        %7848 = vmatprep.mubr.bf16.mxu0 %v5374
        %7849 = vmatmul.mubr.bf16.gmra.mrb[0].mxu0 %v5373
        %v7850 = vpop.f32.mrb[0].mxu0
        %v7851 = vadd.f32 %v7778, %v7850
        %v7852 = vpop.f32.mrb[0].mxu0
        %v7853 = vadd.f32 %v7780, %v7852
        %v7854 = vpop.f32.mrb[0].mxu0
        %v7855 = vadd.f32 %v7782, %v7854
        %v7856 = vpop.f32.mrb[0].mxu0
        %v7857 = vadd.f32 %v7784, %v7856
        %7858 = vmatprep.mubr.bf16.mxu0 %v5380
        %7859 = vmatmul.mubr.bf16.gmra.mrb[0].mxu0 %v5379
        %v7860 = vpop.f32.mrb[0].mxu0
        %v7861 = vadd.f32 %v7788, %v7860
        %v7862 = vpop.f32.mrb[0].mxu0
        %v7863 = vadd.f32 %v7790, %v7862
        %v7864 = vpop.f32.mrb[0].mxu0
        %v7865 = vadd.f32 %v7792, %v7864
        %v7866 = vpop.f32.mrb[0].mxu0
        %v7867 = vadd.f32 %v7794, %v7866
        %7868 = vmatprep.mubr.bf16.mxu0 %v5386
        %7869 = vmatmul.mubr.bf16.gmra.mrb[0].mxu0 %v5385
        %v7870 = vpop.f32.mrb[0].mxu0
        %v7871 = vadd.f32 %v7798, %v7870
        %v7872 = vpop.f32.mrb[0].mxu0
        %v7873 = vadd.f32 %v7800, %v7872
        %v7874 = vpop.f32.mrb[0].mxu0
        %v7875 = vadd.f32 %v7802, %v7874
        %v7876 = vpop.f32.mrb[0].mxu0
        %v7877 = vadd.f32 %v7804, %v7876
        %7878 = vdwg.mxu0
        %v7879 = vmax.f32 %v7403, 0.0
        %v7880 = vmax.f32 %v7405, 0.0
        %v7881 = vmax.f32 %v7622, 0.0
        %v7882 = vmax.f32 %v7624, 0.0
        %v7883 = vmax.f32 %v7841, 0.0
        %v7884 = vmax.f32 %v7843, 0.0
        %v7885 = vmax.f32 %v7407, 0.0
        %v7886 = vmax.f32 %v7409, 0.0
        %v7887 = vmax.f32 %v7626, 0.0
        %v7888 = vmax.f32 %v7628, 0.0
        %v7889 = vmax.f32 %v7845, 0.0
        %v7890 = vmax.f32 %v7847, 0.0
        %v7891 = vmax.f32 %v7413, 0.0
        %v7892 = vmax.f32 %v7415, 0.0
        %v7893 = vmax.f32 %v7632, 0.0
        %v7894 = vmax.f32 %v7634, 0.0
        %v7895 = vmax.f32 %v7851, 0.0
        %v7896 = vmax.f32 %v7853, 0.0
        %v7897 = vmax.f32 %v7417, 0.0
        %v7898 = vmax.f32 %v7419, 0.0
        %v7899 = vmax.f32 %v7636, 0.0
        %v7900 = vmax.f32 %v7638, 0.0
        %v7901 = vmax.f32 %v7855, 0.0
        %v7902 = vmax.f32 %v7857, 0.0
        %v7903 = vmax.f32 %v7423, 0.0
        %v7904 = vmax.f32 %v7425, 0.0
        %v7905 = vmax.f32 %v7642, 0.0
        %v7906 = vmax.f32 %v7644, 0.0
        %v7907 = vmax.f32 %v7861, 0.0
        %v7908 = vmax.f32 %v7863, 0.0
        %v7909 = vmax.f32 %v7427, 0.0
        %v7910 = vmax.f32 %v7429, 0.0
        %v7911 = vmax.f32 %v7646, 0.0
        %v7912 = vmax.f32 %v7648, 0.0
        %v7913 = vmax.f32 %v7865, 0.0
        %v7914 = vmax.f32 %v7867, 0.0
        %v7915 = vmax.f32 %v7433, 0.0
        %v7916 = vmax.f32 %v7435, 0.0
        %v7917 = vmax.f32 %v7652, 0.0
        %v7918 = vmax.f32 %v7654, 0.0
        %v7919 = vmax.f32 %v7871, 0.0
        %v7920 = vmax.f32 %v7873, 0.0
        %v7921 = vmax.f32 %v7437, 0.0
        %v7922 = vmax.f32 %v7439, 0.0
        %v7923 = vmax.f32 %v7656, 0.0
        %v7924 = vmax.f32 %v7658, 0.0
        %v7925 = vmax.f32 %v7875, 0.0
        %v7926 = vmax.f32 %v7877, 0.0
        %7927 = vst [vmem:[%s618] sm:$0xff] %v7879
        %7928 = vst [vmem:[%s618 + $0x8] sm:$0xff] %v7880
        %7929 = vst [vmem:[%s618 + $0x10] sm:$0xff] %v7881
        %7930 = vst [vmem:[%s618 + $0x18] sm:$0xff] %v7882
        %7931 = vst [vmem:[%s618 + $0x20] sm:$0xff] %v7883
        %7932 = vst [vmem:[%s618 + $0x28] sm:$0xff] %v7884
        %7933 = vst [vmem:[%s618 + $0x30] sm:$0xff] %v7885
        %7934 = vst [vmem:[%s618 + $0x38] sm:$0xff] %v7886
        %7935 = vst [vmem:[%s618 + $0x40] sm:$0xff] %v7887
        %7936 = vst [vmem:[%s618 + $0x48] sm:$0xff] %v7888
        %7937 = vst [vmem:[%s618 + $0x50] sm:$0xff] %v7889
        %7938 = vst [vmem:[%s618 + $0x58] sm:$0xff] %v7890
        %7939 = vst [vmem:[%s618 + $0x60] sm:$0xff] %v7891
        %7940 = vst [vmem:[%s618 + $0x68] sm:$0xff] %v7892
        %7941 = vst [vmem:[%s618 + $0x70] sm:$0xff] %v7893
        %7942 = vst [vmem:[%s618 + $0x78] sm:$0xff] %v7894
        %7943 = vst [vmem:[%s618 + $0x80] sm:$0xff] %v7895
        %7944 = vst [vmem:[%s618 + $0x88] sm:$0xff] %v7896
        %7945 = vst [vmem:[%s618 + $0x90] sm:$0xff] %v7897
        %7946 = vst [vmem:[%s618 + $0x98] sm:$0xff] %v7898
        %7947 = vst [vmem:[%s618 + $0xa0] sm:$0xff] %v7899
        %7948 = vst [vmem:[%s618 + $0xa8] sm:$0xff] %v7900
        %7949 = vst [vmem:[%s618 + $0xb0] sm:$0xff] %v7901
        %7950 = vst [vmem:[%s618 + $0xb8] sm:$0xff] %v7902
        %7951 = vst [vmem:[%s618 + $0xc0] sm:$0xff] %v7903
        %7952 = vst [vmem:[%s618 + $0xc8] sm:$0xff] %v7904
        %7953 = vst [vmem:[%s618 + $0xd0] sm:$0xff] %v7905
        %7954 = vst [vmem:[%s618 + $0xd8] sm:$0xff] %v7906
        %7955 = vst [vmem:[%s618 + $0xe0] sm:$0xff] %v7907
        %7956 = vst [vmem:[%s618 + $0xe8] sm:$0xff] %v7908
        %7957 = vst [vmem:[%s618 + $0xf0] sm:$0xff] %v7909
        %7958 = vst [vmem:[%s618 + $0xf8] sm:$0xff] %v7910
        %7959 = vst [vmem:[%s618 + $0x100] sm:$0xff] %v7911
        %7960 = vst [vmem:[%s618 + $0x108] sm:$0xff] %v7912
        %7961 = vst [vmem:[%s618 + $0x110] sm:$0xff] %v7913
        %7962 = vst [vmem:[%s618 + $0x118] sm:$0xff] %v7914
        %7963 = vst [vmem:[%s618 + $0x120] sm:$0xff] %v7915
        %7964 = vst [vmem:[%s618 + $0x128] sm:$0xff] %v7916
        %7965 = vst [vmem:[%s618 + $0x130] sm:$0xff] %v7917
        %7966 = vst [vmem:[%s618 + $0x138] sm:$0xff] %v7918
        %7967 = vst [vmem:[%s618 + $0x140] sm:$0xff] %v7919
        %7968 = vst [vmem:[%s618 + $0x148] sm:$0xff] %v7920
        %7969 = vst [vmem:[%s618 + $0x150] sm:$0xff] %v7921
        %7970 = vst [vmem:[%s618 + $0x158] sm:$0xff] %v7922
        %7971 = vst [vmem:[%s618 + $0x160] sm:$0xff] %v7923
        %7972 = vst [vmem:[%s618 + $0x168] sm:$0xff] %v7924
        %7973 = vst [vmem:[%s618 + $0x170] sm:$0xff] %v7925
        %7974 = vst [vmem:[%s618 + $0x178] sm:$0xff] %v7926
        %7975 = vmatprep.subr.bf16.mxu0 %v6647
        %7976 = vmatpush1.bf16.msra.mxu0 %v6646
        %7977 = vmatprep.subr.bf16.mxu0 %v6653
        %7978 = vmatpush1.bf16.msra.mxu0 %v6652
        %7979 = vmatprep.subr.bf16.mxu0 %v6659
        %7980 = vmatpush1.bf16.msra.mxu0 %v6658
        %7981 = vmatprep.subr.bf16.mxu0 %v6665
        %7982 = vmatpush1.bf16.msra.mxu0 %v6664
        %7983 = vmatprep.subr.bf16.mxu0 %v6671
        %7984 = vmatpush1.bf16.msra.mxu0 %v6670
        %7985 = vmatprep.subr.bf16.mxu0 %v6677
        %7986 = vmatpush1.bf16.msra.mxu0 %v6676
        %7987 = vmatprep.subr.bf16.mxu0 %v6683
        %7988 = vmatpush1.bf16.msra.mxu0 %v6682
        %7989 = vmatprep.subr.bf16.mxu0 %v6689
        %7990 = vmatpush1.bf16.msra.mxu0 %v6688
        %7991 = vmatprep.subr.bf16.mxu0 %v6695
        %7992 = vmatpush1.bf16.msra.mxu0 %v6694
        %7993 = vmatprep.subr.bf16.mxu0 %v6701
        %7994 = vmatpush1.bf16.msra.mxu0 %v6700
        %7995 = vmatprep.subr.bf16.mxu0 %v6707
        %7996 = vmatpush1.bf16.msra.mxu0 %v6706
        %7997 = vmatprep.subr.bf16.mxu0 %v6713
        %7998 = vmatpush1.bf16.msra.mxu0 %v6712
        %7999 = vmatprep.subr.bf16.mxu0 %v6719
        %8000 = vmatpush1.bf16.msra.mxu0 %v6718
        %8001 = vmatprep.subr.bf16.mxu0 %v6725
        %8002 = vmatpush1.bf16.msra.mxu0 %v6724
        %8003 = vmatprep.subr.bf16.mxu0 %v6731
        %8004 = vmatpush1.bf16.msra.mxu0 %v6730
        %8005 = vmatprep.subr.bf16.mxu0 %v6737
        %8006 = vmatpush1.bf16.msra.mxu0 %v6736
        %8007 = vmatprep.mubr.bf16.mxu0 %v5436
        %8008 = vmatmul.mubr.bf16.gmra.mrb[0].mxu0 %v5435
        %v8009 = vpop.f32.mrb[0].mxu0
        %v8010 = vadd.f32 %v5755, %v8009
        %v8011 = vpop.f32.mrb[0].mxu0
        %v8012 = vadd.f32 %v5759, %v8011
        %v8013 = vpop.f32.mrb[0].mxu0
        %v8014 = vadd.f32 %v5755, %v8013
        %v8015 = vpop.f32.mrb[0].mxu0
        %v8016 = vadd.f32 %v5759, %v8015
        %8017 = vmatprep.mubr.bf16.mxu0 %v5442
        %8018 = vmatmul.mubr.bf16.gmra.mrb[0].mxu0 %v5441
        %v8019 = vpop.f32.mrb[0].mxu0
        %v8020 = vadd.f32 %v5755, %v8019
        %v8021 = vpop.f32.mrb[0].mxu0
        %v8022 = vadd.f32 %v5759, %v8021
        %v8023 = vpop.f32.mrb[0].mxu0
        %v8024 = vadd.f32 %v5755, %v8023
        %v8025 = vpop.f32.mrb[0].mxu0
        %v8026 = vadd.f32 %v5759, %v8025
        %8027 = vmatprep.mubr.bf16.mxu0 %v5448
        %8028 = vmatmul.mubr.bf16.gmra.mrb[0].mxu0 %v5447
        %v8029 = vpop.f32.mrb[0].mxu0
        %v8030 = vadd.f32 %v5755, %v8029
        %v8031 = vpop.f32.mrb[0].mxu0
        %v8032 = vadd.f32 %v5759, %v8031
        %v8033 = vpop.f32.mrb[0].mxu0
        %v8034 = vadd.f32 %v5755, %v8033
        %v8035 = vpop.f32.mrb[0].mxu0
        %v8036 = vadd.f32 %v5759, %v8035
        %8037 = vmatprep.mubr.bf16.mxu0 %v5454
        %8038 = vmatmul.mubr.bf16.gmra.mrb[0].mxu0 %v5453
        %v8039 = vpop.f32.mrb[0].mxu0
        %v8040 = vadd.f32 %v5755, %v8039
        %v8041 = vpop.f32.mrb[0].mxu0
        %v8042 = vadd.f32 %v5759, %v8041
        %v8043 = vpop.f32.mrb[0].mxu0
        %v8044 = vadd.f32 %v5755, %v8043
        %v8045 = vpop.f32.mrb[0].mxu0
        %v8046 = vadd.f32 %v5759, %v8045
        %8047 = vdwg.mxu0
        %8048 = vmatprep.subr.bf16.mxu0 %v6743
        %8049 = vmatpush1.bf16.msra.mxu0 %v6742
        %8050 = vmatprep.subr.bf16.mxu0 %v6749
        %8051 = vmatpush1.bf16.msra.mxu0 %v6748
        %8052 = vmatprep.subr.bf16.mxu0 %v6755
        %8053 = vmatpush1.bf16.msra.mxu0 %v6754
        %8054 = vmatprep.subr.bf16.mxu0 %v6761
        %8055 = vmatpush1.bf16.msra.mxu0 %v6760
        %8056 = vmatprep.subr.bf16.mxu0 %v6767
        %8057 = vmatpush1.bf16.msra.mxu0 %v6766
        %8058 = vmatprep.subr.bf16.mxu0 %v6773
        %8059 = vmatpush1.bf16.msra.mxu0 %v6772
        %8060 = vmatprep.subr.bf16.mxu0 %v6779
        %8061 = vmatpush1.bf16.msra.mxu0 %v6778
        %8062 = vmatprep.subr.bf16.mxu0 %v6785
        %8063 = vmatpush1.bf16.msra.mxu0 %v6784
        %8064 = vmatprep.subr.bf16.mxu0 %v6791
        %8065 = vmatpush1.bf16.msra.mxu0 %v6790
        %8066 = vmatprep.subr.bf16.mxu0 %v6797
        %8067 = vmatpush1.bf16.msra.mxu0 %v6796
        %8068 = vmatprep.subr.bf16.mxu0 %v6803
        %8069 = vmatpush1.bf16.msra.mxu0 %v6802
        %8070 = vmatprep.subr.bf16.mxu0 %v6809
        %8071 = vmatpush1.bf16.msra.mxu0 %v6808
        %8072 = vmatprep.subr.bf16.mxu0 %v6815
        %8073 = vmatpush1.bf16.msra.mxu0 %v6814
        %8074 = vmatprep.subr.bf16.mxu0 %v6821
        %8075 = vmatpush1.bf16.msra.mxu0 %v6820
        %8076 = vmatprep.subr.bf16.mxu0 %v6827
        %8077 = vmatpush1.bf16.msra.mxu0 %v6826
        %8078 = vmatprep.subr.bf16.mxu0 %v6833
        %8079 = vmatpush1.bf16.msra.mxu0 %v6832
        %8080 = vmatprep.mubr.bf16.mxu0 %v5438
        %8081 = vmatmul.mubr.bf16.gmra.mrb[0].mxu0 %v5437
        %v8082 = vpop.f32.mrb[0].mxu0
        %v8083 = vadd.f32 %v8010, %v8082
        %v8084 = vpop.f32.mrb[0].mxu0
        %v8085 = vadd.f32 %v8012, %v8084
        %v8086 = vpop.f32.mrb[0].mxu0
        %v8087 = vadd.f32 %v8014, %v8086
        %v8088 = vpop.f32.mrb[0].mxu0
        %v8089 = vadd.f32 %v8016, %v8088
        %8090 = vmatprep.mubr.bf16.mxu0 %v5444
        %8091 = vmatmul.mubr.bf16.gmra.mrb[0].mxu0 %v5443
        %v8092 = vpop.f32.mrb[0].mxu0
        %v8093 = vadd.f32 %v8020, %v8092
        %v8094 = vpop.f32.mrb[0].mxu0
        %v8095 = vadd.f32 %v8022, %v8094
        %v8096 = vpop.f32.mrb[0].mxu0
        %v8097 = vadd.f32 %v8024, %v8096
        %v8098 = vpop.f32.mrb[0].mxu0
        %v8099 = vadd.f32 %v8026, %v8098
        %8100 = vmatprep.mubr.bf16.mxu0 %v5450
        %8101 = vmatmul.mubr.bf16.gmra.mrb[0].mxu0 %v5449
        %v8102 = vpop.f32.mrb[0].mxu0
        %v8103 = vadd.f32 %v8030, %v8102
        %v8104 = vpop.f32.mrb[0].mxu0
        %v8105 = vadd.f32 %v8032, %v8104
        %v8106 = vpop.f32.mrb[0].mxu0
        %v8107 = vadd.f32 %v8034, %v8106
        %v8108 = vpop.f32.mrb[0].mxu0
        %v8109 = vadd.f32 %v8036, %v8108
        %8110 = vmatprep.mubr.bf16.mxu0 %v5456
        %8111 = vmatmul.mubr.bf16.gmra.mrb[0].mxu0 %v5455
        %v8112 = vpop.f32.mrb[0].mxu0
        %v8113 = vadd.f32 %v8040, %v8112
        %v8114 = vpop.f32.mrb[0].mxu0
        %v8115 = vadd.f32 %v8042, %v8114
        %v8116 = vpop.f32.mrb[0].mxu0
        %v8117 = vadd.f32 %v8044, %v8116
        %v8118 = vpop.f32.mrb[0].mxu0
        %v8119 = vadd.f32 %v8046, %v8118
        %8120 = vdwg.mxu0
        %8121 = vmatprep.subr.bf16.mxu0 %v6839
        %8122 = vmatpush1.bf16.msra.mxu0 %v6838
        %8123 = vmatprep.subr.bf16.mxu0 %v6845
        %8124 = vmatpush1.bf16.msra.mxu0 %v6844
        %8125 = vmatprep.subr.bf16.mxu0 %v6851
        %8126 = vmatpush1.bf16.msra.mxu0 %v6850
        %8127 = vmatprep.subr.bf16.mxu0 %v6857
        %8128 = vmatpush1.bf16.msra.mxu0 %v6856
        %8129 = vmatprep.subr.bf16.mxu0 %v6863
        %8130 = vmatpush1.bf16.msra.mxu0 %v6862
        %8131 = vmatprep.subr.bf16.mxu0 %v6869
        %8132 = vmatpush1.bf16.msra.mxu0 %v6868
        %8133 = vmatprep.subr.bf16.mxu0 %v6875
        %8134 = vmatpush1.bf16.msra.mxu0 %v6874
        %8135 = vmatprep.subr.bf16.mxu0 %v6881
        %8136 = vmatpush1.bf16.msra.mxu0 %v6880
        %8137 = vmatprep.subr.bf16.mxu0 %v6887
        %8138 = vmatpush1.bf16.msra.mxu0 %v6886
        %8139 = vmatprep.subr.bf16.mxu0 %v6893
        %8140 = vmatpush1.bf16.msra.mxu0 %v6892
        %8141 = vmatprep.subr.bf16.mxu0 %v6899
        %8142 = vmatpush1.bf16.msra.mxu0 %v6898
        %8143 = vmatprep.subr.bf16.mxu0 %v6905
        %8144 = vmatpush1.bf16.msra.mxu0 %v6904
        %8145 = vmatprep.subr.bf16.mxu0 %v6911
        %8146 = vmatpush1.bf16.msra.mxu0 %v6910
        %8147 = vmatprep.subr.bf16.mxu0 %v6917
        %8148 = vmatpush1.bf16.msra.mxu0 %v6916
        %8149 = vmatprep.subr.bf16.mxu0 %v6923
        %8150 = vmatpush1.bf16.msra.mxu0 %v6922
        %8151 = vmatprep.subr.bf16.mxu0 %v6929
        %8152 = vmatpush1.bf16.msra.mxu0 %v6928
        %8153 = vmatprep.mubr.bf16.mxu0 %v5440
        %8154 = vmatmul.mubr.bf16.gmra.mrb[0].mxu0 %v5439
        %v8155 = vpop.f32.mrb[0].mxu0
        %v8156 = vadd.f32 %v8083, %v8155
        %v8157 = vpop.f32.mrb[0].mxu0
        %v8158 = vadd.f32 %v8085, %v8157
        %v8159 = vpop.f32.mrb[0].mxu0
        %v8160 = vadd.f32 %v8087, %v8159
        %v8161 = vpop.f32.mrb[0].mxu0
        %v8162 = vadd.f32 %v8089, %v8161
        %8163 = vmatprep.mubr.bf16.mxu0 %v5446
        %8164 = vmatmul.mubr.bf16.gmra.mrb[0].mxu0 %v5445
        %v8165 = vpop.f32.mrb[0].mxu0
        %v8166 = vadd.f32 %v8093, %v8165
        %v8167 = vpop.f32.mrb[0].mxu0
        %v8168 = vadd.f32 %v8095, %v8167
        %v8169 = vpop.f32.mrb[0].mxu0
        %v8170 = vadd.f32 %v8097, %v8169
        %v8171 = vpop.f32.mrb[0].mxu0
        %v8172 = vadd.f32 %v8099, %v8171
        %8173 = vmatprep.mubr.bf16.mxu0 %v5452
        %8174 = vmatmul.mubr.bf16.gmra.mrb[0].mxu0 %v5451
        %v8175 = vpop.f32.mrb[0].mxu0
        %v8176 = vadd.f32 %v8103, %v8175
        %v8177 = vpop.f32.mrb[0].mxu0
        %v8178 = vadd.f32 %v8105, %v8177
        %v8179 = vpop.f32.mrb[0].mxu0
        %v8180 = vadd.f32 %v8107, %v8179
        %v8181 = vpop.f32.mrb[0].mxu0
        %v8182 = vadd.f32 %v8109, %v8181
        %8183 = vmatprep.mubr.bf16.mxu0 %v5458
        %8184 = vmatmul.mubr.bf16.gmra.mrb[0].mxu0 %v5457
        %v8185 = vpop.f32.mrb[0].mxu0
        %v8186 = vadd.f32 %v8113, %v8185
        %v8187 = vpop.f32.mrb[0].mxu0
        %v8188 = vadd.f32 %v8115, %v8187
        %v8189 = vpop.f32.mrb[0].mxu0
        %v8190 = vadd.f32 %v8117, %v8189
        %v8191 = vpop.f32.mrb[0].mxu0
        %v8192 = vadd.f32 %v8119, %v8191
        %8193 = vdwg.mxu0
        %8194 = vmatprep.subr.bf16.mxu0 %v6649
        %8195 = vmatpush1.bf16.msra.mxu0 %v6648
        %8196 = vmatprep.subr.bf16.mxu0 %v6655
        %8197 = vmatpush1.bf16.msra.mxu0 %v6654
        %8198 = vmatprep.subr.bf16.mxu0 %v6661
        %8199 = vmatpush1.bf16.msra.mxu0 %v6660
        %8200 = vmatprep.subr.bf16.mxu0 %v6667
        %8201 = vmatpush1.bf16.msra.mxu0 %v6666
        %8202 = vmatprep.subr.bf16.mxu0 %v6673
        %8203 = vmatpush1.bf16.msra.mxu0 %v6672
        %8204 = vmatprep.subr.bf16.mxu0 %v6679
        %8205 = vmatpush1.bf16.msra.mxu0 %v6678
        %8206 = vmatprep.subr.bf16.mxu0 %v6685
        %8207 = vmatpush1.bf16.msra.mxu0 %v6684
        %8208 = vmatprep.subr.bf16.mxu0 %v6691
        %8209 = vmatpush1.bf16.msra.mxu0 %v6690
        %8210 = vmatprep.subr.bf16.mxu0 %v6697
        %8211 = vmatpush1.bf16.msra.mxu0 %v6696
        %8212 = vmatprep.subr.bf16.mxu0 %v6703
        %8213 = vmatpush1.bf16.msra.mxu0 %v6702
        %8214 = vmatprep.subr.bf16.mxu0 %v6709
        %8215 = vmatpush1.bf16.msra.mxu0 %v6708
        %8216 = vmatprep.subr.bf16.mxu0 %v6715
        %8217 = vmatpush1.bf16.msra.mxu0 %v6714
        %8218 = vmatprep.subr.bf16.mxu0 %v6721
        %8219 = vmatpush1.bf16.msra.mxu0 %v6720
        %8220 = vmatprep.subr.bf16.mxu0 %v6727
        %8221 = vmatpush1.bf16.msra.mxu0 %v6726
        %8222 = vmatprep.subr.bf16.mxu0 %v6733
        %8223 = vmatpush1.bf16.msra.mxu0 %v6732
        %8224 = vmatprep.subr.bf16.mxu0 %v6739
        %8225 = vmatpush1.bf16.msra.mxu0 %v6738
        %8226 = vmatprep.mubr.bf16.mxu0 %v5436
        %8227 = vmatmul.mubr.bf16.gmra.mrb[0].mxu0 %v5435
        %v8228 = vpop.f32.mrb[0].mxu0
        %v8229 = vadd.f32 %v5763, %v8228
        %v8230 = vpop.f32.mrb[0].mxu0
        %v8231 = vadd.f32 %v5767, %v8230
        %v8232 = vpop.f32.mrb[0].mxu0
        %v8233 = vadd.f32 %v5763, %v8232
        %v8234 = vpop.f32.mrb[0].mxu0
        %v8235 = vadd.f32 %v5767, %v8234
        %8236 = vmatprep.mubr.bf16.mxu0 %v5442
        %8237 = vmatmul.mubr.bf16.gmra.mrb[0].mxu0 %v5441
        %v8238 = vpop.f32.mrb[0].mxu0
        %v8239 = vadd.f32 %v5763, %v8238
        %v8240 = vpop.f32.mrb[0].mxu0
        %v8241 = vadd.f32 %v5767, %v8240
        %v8242 = vpop.f32.mrb[0].mxu0
        %v8243 = vadd.f32 %v5763, %v8242
        %v8244 = vpop.f32.mrb[0].mxu0
        %v8245 = vadd.f32 %v5767, %v8244
        %8246 = vmatprep.mubr.bf16.mxu0 %v5448
        %8247 = vmatmul.mubr.bf16.gmra.mrb[0].mxu0 %v5447
        %v8248 = vpop.f32.mrb[0].mxu0
        %v8249 = vadd.f32 %v5763, %v8248
        %v8250 = vpop.f32.mrb[0].mxu0
        %v8251 = vadd.f32 %v5767, %v8250
        %v8252 = vpop.f32.mrb[0].mxu0
        %v8253 = vadd.f32 %v5763, %v8252
        %v8254 = vpop.f32.mrb[0].mxu0
        %v8255 = vadd.f32 %v5767, %v8254
        %8256 = vmatprep.mubr.bf16.mxu0 %v5454
        %8257 = vmatmul.mubr.bf16.gmra.mrb[0].mxu0 %v5453
        %v8258 = vpop.f32.mrb[0].mxu0
        %v8259 = vadd.f32 %v5763, %v8258
        %v8260 = vpop.f32.mrb[0].mxu0
        %v8261 = vadd.f32 %v5767, %v8260
        %v8262 = vpop.f32.mrb[0].mxu0
        %v8263 = vadd.f32 %v5763, %v8262
        %v8264 = vpop.f32.mrb[0].mxu0
        %v8265 = vadd.f32 %v5767, %v8264
        %8266 = vdwg.mxu0
        %8267 = vmatprep.subr.bf16.mxu0 %v6745
        %8268 = vmatpush1.bf16.msra.mxu0 %v6744
        %8269 = vmatprep.subr.bf16.mxu0 %v6751
        %8270 = vmatpush1.bf16.msra.mxu0 %v6750
        %8271 = vmatprep.subr.bf16.mxu0 %v6757
        %8272 = vmatpush1.bf16.msra.mxu0 %v6756
        %8273 = vmatprep.subr.bf16.mxu0 %v6763
        %8274 = vmatpush1.bf16.msra.mxu0 %v6762
        %8275 = vmatprep.subr.bf16.mxu0 %v6769
        %8276 = vmatpush1.bf16.msra.mxu0 %v6768
        %8277 = vmatprep.subr.bf16.mxu0 %v6775
        %8278 = vmatpush1.bf16.msra.mxu0 %v6774
        %8279 = vmatprep.subr.bf16.mxu0 %v6781
        %8280 = vmatpush1.bf16.msra.mxu0 %v6780
        %8281 = vmatprep.subr.bf16.mxu0 %v6787
        %8282 = vmatpush1.bf16.msra.mxu0 %v6786
        %8283 = vmatprep.subr.bf16.mxu0 %v6793
        %8284 = vmatpush1.bf16.msra.mxu0 %v6792
        %8285 = vmatprep.subr.bf16.mxu0 %v6799
        %8286 = vmatpush1.bf16.msra.mxu0 %v6798
        %8287 = vmatprep.subr.bf16.mxu0 %v6805
        %8288 = vmatpush1.bf16.msra.mxu0 %v6804
        %8289 = vmatprep.subr.bf16.mxu0 %v6811
        %8290 = vmatpush1.bf16.msra.mxu0 %v6810
        %8291 = vmatprep.subr.bf16.mxu0 %v6817
        %8292 = vmatpush1.bf16.msra.mxu0 %v6816
        %8293 = vmatprep.subr.bf16.mxu0 %v6823
        %8294 = vmatpush1.bf16.msra.mxu0 %v6822
        %8295 = vmatprep.subr.bf16.mxu0 %v6829
        %8296 = vmatpush1.bf16.msra.mxu0 %v6828
        %8297 = vmatprep.subr.bf16.mxu0 %v6835
        %8298 = vmatpush1.bf16.msra.mxu0 %v6834
        %8299 = vmatprep.mubr.bf16.mxu0 %v5438
        %8300 = vmatmul.mubr.bf16.gmra.mrb[0].mxu0 %v5437
        %v8301 = vpop.f32.mrb[0].mxu0
        %v8302 = vadd.f32 %v8229, %v8301
        %v8303 = vpop.f32.mrb[0].mxu0
        %v8304 = vadd.f32 %v8231, %v8303
        %v8305 = vpop.f32.mrb[0].mxu0
        %v8306 = vadd.f32 %v8233, %v8305
        %v8307 = vpop.f32.mrb[0].mxu0
        %v8308 = vadd.f32 %v8235, %v8307
        %8309 = vmatprep.mubr.bf16.mxu0 %v5444
        %8310 = vmatmul.mubr.bf16.gmra.mrb[0].mxu0 %v5443
        %v8311 = vpop.f32.mrb[0].mxu0
        %v8312 = vadd.f32 %v8239, %v8311
        %v8313 = vpop.f32.mrb[0].mxu0
        %v8314 = vadd.f32 %v8241, %v8313
        %v8315 = vpop.f32.mrb[0].mxu0
        %v8316 = vadd.f32 %v8243, %v8315
        %v8317 = vpop.f32.mrb[0].mxu0
        %v8318 = vadd.f32 %v8245, %v8317
        %8319 = vmatprep.mubr.bf16.mxu0 %v5450
        %8320 = vmatmul.mubr.bf16.gmra.mrb[0].mxu0 %v5449
        %v8321 = vpop.f32.mrb[0].mxu0
        %v8322 = vadd.f32 %v8249, %v8321
        %v8323 = vpop.f32.mrb[0].mxu0
        %v8324 = vadd.f32 %v8251, %v8323
        %v8325 = vpop.f32.mrb[0].mxu0
        %v8326 = vadd.f32 %v8253, %v8325
        %v8327 = vpop.f32.mrb[0].mxu0
        %v8328 = vadd.f32 %v8255, %v8327
        %8329 = vmatprep.mubr.bf16.mxu0 %v5456
        %8330 = vmatmul.mubr.bf16.gmra.mrb[0].mxu0 %v5455
        %v8331 = vpop.f32.mrb[0].mxu0
        %v8332 = vadd.f32 %v8259, %v8331
        %v8333 = vpop.f32.mrb[0].mxu0
        %v8334 = vadd.f32 %v8261, %v8333
        %v8335 = vpop.f32.mrb[0].mxu0
        %v8336 = vadd.f32 %v8263, %v8335
        %v8337 = vpop.f32.mrb[0].mxu0
        %v8338 = vadd.f32 %v8265, %v8337
        %8339 = vdwg.mxu0
        %8340 = vmatprep.subr.bf16.mxu0 %v6841
        %8341 = vmatpush1.bf16.msra.mxu0 %v6840
        %8342 = vmatprep.subr.bf16.mxu0 %v6847
        %8343 = vmatpush1.bf16.msra.mxu0 %v6846
        %8344 = vmatprep.subr.bf16.mxu0 %v6853
        %8345 = vmatpush1.bf16.msra.mxu0 %v6852
        %8346 = vmatprep.subr.bf16.mxu0 %v6859
        %8347 = vmatpush1.bf16.msra.mxu0 %v6858
        %8348 = vmatprep.subr.bf16.mxu0 %v6865
        %8349 = vmatpush1.bf16.msra.mxu0 %v6864
        %8350 = vmatprep.subr.bf16.mxu0 %v6871
        %8351 = vmatpush1.bf16.msra.mxu0 %v6870
        %8352 = vmatprep.subr.bf16.mxu0 %v6877
        %8353 = vmatpush1.bf16.msra.mxu0 %v6876
        %8354 = vmatprep.subr.bf16.mxu0 %v6883
        %8355 = vmatpush1.bf16.msra.mxu0 %v6882
        %8356 = vmatprep.subr.bf16.mxu0 %v6889
        %8357 = vmatpush1.bf16.msra.mxu0 %v6888
        %8358 = vmatprep.subr.bf16.mxu0 %v6895
        %8359 = vmatpush1.bf16.msra.mxu0 %v6894
        %8360 = vmatprep.subr.bf16.mxu0 %v6901
        %8361 = vmatpush1.bf16.msra.mxu0 %v6900
        %8362 = vmatprep.subr.bf16.mxu0 %v6907
        %8363 = vmatpush1.bf16.msra.mxu0 %v6906
        %8364 = vmatprep.subr.bf16.mxu0 %v6913
        %8365 = vmatpush1.bf16.msra.mxu0 %v6912
        %8366 = vmatprep.subr.bf16.mxu0 %v6919
        %8367 = vmatpush1.bf16.msra.mxu0 %v6918
        %8368 = vmatprep.subr.bf16.mxu0 %v6925
        %8369 = vmatpush1.bf16.msra.mxu0 %v6924
        %8370 = vmatprep.subr.bf16.mxu0 %v6931
        %8371 = vmatpush1.bf16.msra.mxu0 %v6930
        %8372 = vmatprep.mubr.bf16.mxu0 %v5440
        %8373 = vmatmul.mubr.bf16.gmra.mrb[0].mxu0 %v5439
        %v8374 = vpop.f32.mrb[0].mxu0
        %v8375 = vadd.f32 %v8302, %v8374
        %v8376 = vpop.f32.mrb[0].mxu0
        %v8377 = vadd.f32 %v8304, %v8376
        %v8378 = vpop.f32.mrb[0].mxu0
        %v8379 = vadd.f32 %v8306, %v8378
        %v8380 = vpop.f32.mrb[0].mxu0
        %v8381 = vadd.f32 %v8308, %v8380
        %8382 = vmatprep.mubr.bf16.mxu0 %v5446
        %8383 = vmatmul.mubr.bf16.gmra.mrb[0].mxu0 %v5445
        %v8384 = vpop.f32.mrb[0].mxu0
        %v8385 = vadd.f32 %v8312, %v8384
        %v8386 = vpop.f32.mrb[0].mxu0
        %v8387 = vadd.f32 %v8314, %v8386
        %v8388 = vpop.f32.mrb[0].mxu0
        %v8389 = vadd.f32 %v8316, %v8388
        %v8390 = vpop.f32.mrb[0].mxu0
        %v8391 = vadd.f32 %v8318, %v8390
        %8392 = vmatprep.mubr.bf16.mxu0 %v5452
        %8393 = vmatmul.mubr.bf16.gmra.mrb[0].mxu0 %v5451
        %v8394 = vpop.f32.mrb[0].mxu0
        %v8395 = vadd.f32 %v8322, %v8394
        %v8396 = vpop.f32.mrb[0].mxu0
        %v8397 = vadd.f32 %v8324, %v8396
        %v8398 = vpop.f32.mrb[0].mxu0
        %v8399 = vadd.f32 %v8326, %v8398
        %v8400 = vpop.f32.mrb[0].mxu0
        %v8401 = vadd.f32 %v8328, %v8400
        %8402 = vmatprep.mubr.bf16.mxu0 %v5458
        %8403 = vmatmul.mubr.bf16.gmra.mrb[0].mxu0 %v5457
        %v8404 = vpop.f32.mrb[0].mxu0
        %v8405 = vadd.f32 %v8332, %v8404
        %v8406 = vpop.f32.mrb[0].mxu0
        %v8407 = vadd.f32 %v8334, %v8406
        %v8408 = vpop.f32.mrb[0].mxu0
        %v8409 = vadd.f32 %v8336, %v8408
        %v8410 = vpop.f32.mrb[0].mxu0
        %v8411 = vadd.f32 %v8338, %v8410
        %8412 = vdwg.mxu0
        %8413 = vmatprep.subr.bf16.mxu0 %v6651
        %8414 = vmatpush1.bf16.msra.mxu0 %v6650
        %8415 = vmatprep.subr.bf16.mxu0 %v6657
        %8416 = vmatpush1.bf16.msra.mxu0 %v6656
        %8417 = vmatprep.subr.bf16.mxu0 %v6663
        %8418 = vmatpush1.bf16.msra.mxu0 %v6662
        %8419 = vmatprep.subr.bf16.mxu0 %v6669
        %8420 = vmatpush1.bf16.msra.mxu0 %v6668
        %8421 = vmatprep.subr.bf16.mxu0 %v6675
        %8422 = vmatpush1.bf16.msra.mxu0 %v6674
        %8423 = vmatprep.subr.bf16.mxu0 %v6681
        %8424 = vmatpush1.bf16.msra.mxu0 %v6680
        %8425 = vmatprep.subr.bf16.mxu0 %v6687
        %8426 = vmatpush1.bf16.msra.mxu0 %v6686
        %8427 = vmatprep.subr.bf16.mxu0 %v6693
        %8428 = vmatpush1.bf16.msra.mxu0 %v6692
        %8429 = vmatprep.subr.bf16.mxu0 %v6699
        %8430 = vmatpush1.bf16.msra.mxu0 %v6698
        %8431 = vmatprep.subr.bf16.mxu0 %v6705
        %8432 = vmatpush1.bf16.msra.mxu0 %v6704
        %8433 = vmatprep.subr.bf16.mxu0 %v6711
        %8434 = vmatpush1.bf16.msra.mxu0 %v6710
        %8435 = vmatprep.subr.bf16.mxu0 %v6717
        %8436 = vmatpush1.bf16.msra.mxu0 %v6716
        %8437 = vmatprep.subr.bf16.mxu0 %v6723
        %8438 = vmatpush1.bf16.msra.mxu0 %v6722
        %8439 = vmatprep.subr.bf16.mxu0 %v6729
        %8440 = vmatpush1.bf16.msra.mxu0 %v6728
        %8441 = vmatprep.subr.bf16.mxu0 %v6735
        %8442 = vmatpush1.bf16.msra.mxu0 %v6734
        %8443 = vmatprep.subr.bf16.mxu0 %v6741
        %8444 = vmatpush1.bf16.msra.mxu0 %v6740
        %8445 = vmatprep.mubr.bf16.mxu0 %v5436
        %8446 = vmatmul.mubr.bf16.gmra.mrb[0].mxu0 %v5435
        %v8447 = vpop.f32.mrb[0].mxu0
        %v8448 = vadd.f32 %v5771, %v8447
        %v8449 = vpop.f32.mrb[0].mxu0
        %v8450 = vadd.f32 %v5775, %v8449
        %v8451 = vpop.f32.mrb[0].mxu0
        %v8452 = vadd.f32 %v5771, %v8451
        %v8453 = vpop.f32.mrb[0].mxu0
        %v8454 = vadd.f32 %v5775, %v8453
        %8455 = vmatprep.mubr.bf16.mxu0 %v5442
        %8456 = vmatmul.mubr.bf16.gmra.mrb[0].mxu0 %v5441
        %v8457 = vpop.f32.mrb[0].mxu0
        %v8458 = vadd.f32 %v5771, %v8457
        %v8459 = vpop.f32.mrb[0].mxu0
        %v8460 = vadd.f32 %v5775, %v8459
        %v8461 = vpop.f32.mrb[0].mxu0
        %v8462 = vadd.f32 %v5771, %v8461
        %v8463 = vpop.f32.mrb[0].mxu0
        %v8464 = vadd.f32 %v5775, %v8463
        %8465 = vmatprep.mubr.bf16.mxu0 %v5448
        %8466 = vmatmul.mubr.bf16.gmra.mrb[0].mxu0 %v5447
        %v8467 = vpop.f32.mrb[0].mxu0
        %v8468 = vadd.f32 %v5771, %v8467
        %v8469 = vpop.f32.mrb[0].mxu0
        %v8470 = vadd.f32 %v5775, %v8469
        %v8471 = vpop.f32.mrb[0].mxu0
        %v8472 = vadd.f32 %v5771, %v8471
        %v8473 = vpop.f32.mrb[0].mxu0
        %v8474 = vadd.f32 %v5775, %v8473
        %8475 = vmatprep.mubr.bf16.mxu0 %v5454
        %8476 = vmatmul.mubr.bf16.gmra.mrb[0].mxu0 %v5453
        %v8477 = vpop.f32.mrb[0].mxu0
        %v8478 = vadd.f32 %v5771, %v8477
        %v8479 = vpop.f32.mrb[0].mxu0
        %v8480 = vadd.f32 %v5775, %v8479
        %v8481 = vpop.f32.mrb[0].mxu0
        %v8482 = vadd.f32 %v5771, %v8481
        %v8483 = vpop.f32.mrb[0].mxu0
        %v8484 = vadd.f32 %v5775, %v8483
        %8485 = vdwg.mxu0
        %8486 = vmatprep.subr.bf16.mxu0 %v6747
        %8487 = vmatpush1.bf16.msra.mxu0 %v6746
        %8488 = vmatprep.subr.bf16.mxu0 %v6753
        %8489 = vmatpush1.bf16.msra.mxu0 %v6752
        %8490 = vmatprep.subr.bf16.mxu0 %v6759
        %8491 = vmatpush1.bf16.msra.mxu0 %v6758
        %8492 = vmatprep.subr.bf16.mxu0 %v6765
        %8493 = vmatpush1.bf16.msra.mxu0 %v6764
        %8494 = vmatprep.subr.bf16.mxu0 %v6771
        %8495 = vmatpush1.bf16.msra.mxu0 %v6770
        %8496 = vmatprep.subr.bf16.mxu0 %v6777
        %8497 = vmatpush1.bf16.msra.mxu0 %v6776
        %8498 = vmatprep.subr.bf16.mxu0 %v6783
        %8499 = vmatpush1.bf16.msra.mxu0 %v6782
        %8500 = vmatprep.subr.bf16.mxu0 %v6789
        %8501 = vmatpush1.bf16.msra.mxu0 %v6788
        %8502 = vmatprep.subr.bf16.mxu0 %v6795
        %8503 = vmatpush1.bf16.msra.mxu0 %v6794
        %8504 = vmatprep.subr.bf16.mxu0 %v6801
        %8505 = vmatpush1.bf16.msra.mxu0 %v6800
        %8506 = vmatprep.subr.bf16.mxu0 %v6807
        %8507 = vmatpush1.bf16.msra.mxu0 %v6806
        %8508 = vmatprep.subr.bf16.mxu0 %v6813
        %8509 = vmatpush1.bf16.msra.mxu0 %v6812
        %8510 = vmatprep.subr.bf16.mxu0 %v6819
        %8511 = vmatpush1.bf16.msra.mxu0 %v6818
        %8512 = vmatprep.subr.bf16.mxu0 %v6825
        %8513 = vmatpush1.bf16.msra.mxu0 %v6824
        %8514 = vmatprep.subr.bf16.mxu0 %v6831
        %8515 = vmatpush1.bf16.msra.mxu0 %v6830
        %8516 = vmatprep.subr.bf16.mxu0 %v6837
        %8517 = vmatpush1.bf16.msra.mxu0 %v6836
        %8518 = vmatprep.mubr.bf16.mxu0 %v5438
        %8519 = vmatmul.mubr.bf16.gmra.mrb[0].mxu0 %v5437
        %v8520 = vpop.f32.mrb[0].mxu0
        %v8521 = vadd.f32 %v8448, %v8520
        %v8522 = vpop.f32.mrb[0].mxu0
        %v8523 = vadd.f32 %v8450, %v8522
        %v8524 = vpop.f32.mrb[0].mxu0
        %v8525 = vadd.f32 %v8452, %v8524
        %v8526 = vpop.f32.mrb[0].mxu0
        %v8527 = vadd.f32 %v8454, %v8526
        %8528 = vmatprep.mubr.bf16.mxu0 %v5444
        %8529 = vmatmul.mubr.bf16.gmra.mrb[0].mxu0 %v5443
        %v8530 = vpop.f32.mrb[0].mxu0
        %v8531 = vadd.f32 %v8458, %v8530
        %v8532 = vpop.f32.mrb[0].mxu0
        %v8533 = vadd.f32 %v8460, %v8532
        %v8534 = vpop.f32.mrb[0].mxu0
        %v8535 = vadd.f32 %v8462, %v8534
        %v8536 = vpop.f32.mrb[0].mxu0
        %v8537 = vadd.f32 %v8464, %v8536
        %8538 = vmatprep.mubr.bf16.mxu0 %v5450
        %8539 = vmatmul.mubr.bf16.gmra.mrb[0].mxu0 %v5449
        %v8540 = vpop.f32.mrb[0].mxu0
        %v8541 = vadd.f32 %v8468, %v8540
        %v8542 = vpop.f32.mrb[0].mxu0
        %v8543 = vadd.f32 %v8470, %v8542
        %v8544 = vpop.f32.mrb[0].mxu0
        %v8545 = vadd.f32 %v8472, %v8544
        %v8546 = vpop.f32.mrb[0].mxu0
        %v8547 = vadd.f32 %v8474, %v8546
        %8548 = vmatprep.mubr.bf16.mxu0 %v5456
        %8549 = vmatmul.mubr.bf16.gmra.mrb[0].mxu0 %v5455
        %v8550 = vpop.f32.mrb[0].mxu0
        %v8551 = vadd.f32 %v8478, %v8550
        %v8552 = vpop.f32.mrb[0].mxu0
        %v8553 = vadd.f32 %v8480, %v8552
        %v8554 = vpop.f32.mrb[0].mxu0
        %v8555 = vadd.f32 %v8482, %v8554
        %v8556 = vpop.f32.mrb[0].mxu0
        %v8557 = vadd.f32 %v8484, %v8556
        %8558 = vdwg.mxu0
        %8559 = vmatprep.subr.bf16.mxu0 %v6843
        %8560 = vmatpush1.bf16.msra.mxu0 %v6842
        %8561 = vmatprep.subr.bf16.mxu0 %v6849
        %8562 = vmatpush1.bf16.msra.mxu0 %v6848
        %8563 = vmatprep.subr.bf16.mxu0 %v6855
        %8564 = vmatpush1.bf16.msra.mxu0 %v6854
        %8565 = vmatprep.subr.bf16.mxu0 %v6861
        %8566 = vmatpush1.bf16.msra.mxu0 %v6860
        %8567 = vmatprep.subr.bf16.mxu0 %v6867
        %8568 = vmatpush1.bf16.msra.mxu0 %v6866
        %8569 = vmatprep.subr.bf16.mxu0 %v6873
        %8570 = vmatpush1.bf16.msra.mxu0 %v6872
        %8571 = vmatprep.subr.bf16.mxu0 %v6879
        %8572 = vmatpush1.bf16.msra.mxu0 %v6878
        %8573 = vmatprep.subr.bf16.mxu0 %v6885
        %8574 = vmatpush1.bf16.msra.mxu0 %v6884
        %8575 = vmatprep.subr.bf16.mxu0 %v6891
        %8576 = vmatpush1.bf16.msra.mxu0 %v6890
        %8577 = vmatprep.subr.bf16.mxu0 %v6897
        %8578 = vmatpush1.bf16.msra.mxu0 %v6896
        %8579 = vmatprep.subr.bf16.mxu0 %v6903
        %8580 = vmatpush1.bf16.msra.mxu0 %v6902
        %8581 = vmatprep.subr.bf16.mxu0 %v6909
        %8582 = vmatpush1.bf16.msra.mxu0 %v6908
        %8583 = vmatprep.subr.bf16.mxu0 %v6915
        %8584 = vmatpush1.bf16.msra.mxu0 %v6914
        %8585 = vmatprep.subr.bf16.mxu0 %v6921
        %8586 = vmatpush1.bf16.msra.mxu0 %v6920
        %8587 = vmatprep.subr.bf16.mxu0 %v6927
        %8588 = vmatpush1.bf16.msra.mxu0 %v6926
        %8589 = vmatprep.subr.bf16.mxu0 %v6933
        %8590 = vmatpush1.bf16.msra.mxu0 %v6932
        %8591 = vmatprep.mubr.bf16.mxu0 %v5440
        %8592 = vmatmul.mubr.bf16.gmra.mrb[0].mxu0 %v5439
        %v8593 = vpop.f32.mrb[0].mxu0
        %v8594 = vadd.f32 %v8521, %v8593
        %v8595 = vpop.f32.mrb[0].mxu0
        %v8596 = vadd.f32 %v8523, %v8595
        %v8597 = vpop.f32.mrb[0].mxu0
        %v8598 = vadd.f32 %v8525, %v8597
        %v8599 = vpop.f32.mrb[0].mxu0
        %v8600 = vadd.f32 %v8527, %v8599
        %8601 = vmatprep.mubr.bf16.mxu0 %v5446
        %8602 = vmatmul.mubr.bf16.gmra.mrb[0].mxu0 %v5445
        %v8603 = vpop.f32.mrb[0].mxu0
        %v8604 = vadd.f32 %v8531, %v8603
        %v8605 = vpop.f32.mrb[0].mxu0
        %v8606 = vadd.f32 %v8533, %v8605
        %v8607 = vpop.f32.mrb[0].mxu0
        %v8608 = vadd.f32 %v8535, %v8607
        %v8609 = vpop.f32.mrb[0].mxu0
        %v8610 = vadd.f32 %v8537, %v8609
        %8611 = vmatprep.mubr.bf16.mxu0 %v5452
        %8612 = vmatmul.mubr.bf16.gmra.mrb[0].mxu0 %v5451
        %v8613 = vpop.f32.mrb[0].mxu0
        %v8614 = vadd.f32 %v8541, %v8613
        %v8615 = vpop.f32.mrb[0].mxu0
        %v8616 = vadd.f32 %v8543, %v8615
        %v8617 = vpop.f32.mrb[0].mxu0
        %v8618 = vadd.f32 %v8545, %v8617
        %v8619 = vpop.f32.mrb[0].mxu0
        %v8620 = vadd.f32 %v8547, %v8619
        %8621 = vmatprep.mubr.bf16.mxu0 %v5458
        %8622 = vmatmul.mubr.bf16.gmra.mrb[0].mxu0 %v5457
        %v8623 = vpop.f32.mrb[0].mxu0
        %v8624 = vadd.f32 %v8551, %v8623
        %v8625 = vpop.f32.mrb[0].mxu0
        %v8626 = vadd.f32 %v8553, %v8625
        %v8627 = vpop.f32.mrb[0].mxu0
        %v8628 = vadd.f32 %v8555, %v8627
        %v8629 = vpop.f32.mrb[0].mxu0
        %v8630 = vadd.f32 %v8557, %v8629
        %8631 = vdwg.mxu0
        %v8632 = vmax.f32 %v8156, 0.0
        %v8633 = vmax.f32 %v8158, 0.0
        %v8634 = vmax.f32 %v8375, 0.0
        %v8635 = vmax.f32 %v8377, 0.0
        %v8636 = vmax.f32 %v8594, 0.0
        %v8637 = vmax.f32 %v8596, 0.0
        %v8638 = vmax.f32 %v8160, 0.0
        %v8639 = vmax.f32 %v8162, 0.0
        %v8640 = vmax.f32 %v8379, 0.0
        %v8641 = vmax.f32 %v8381, 0.0
        %v8642 = vmax.f32 %v8598, 0.0
        %v8643 = vmax.f32 %v8600, 0.0
        %v8644 = vmax.f32 %v8166, 0.0
        %v8645 = vmax.f32 %v8168, 0.0
        %v8646 = vmax.f32 %v8385, 0.0
        %v8647 = vmax.f32 %v8387, 0.0
        %v8648 = vmax.f32 %v8604, 0.0
        %v8649 = vmax.f32 %v8606, 0.0
        %v8650 = vmax.f32 %v8170, 0.0
        %v8651 = vmax.f32 %v8172, 0.0
        %v8652 = vmax.f32 %v8389, 0.0
        %v8653 = vmax.f32 %v8391, 0.0
        %v8654 = vmax.f32 %v8608, 0.0
        %v8655 = vmax.f32 %v8610, 0.0
        %v8656 = vmax.f32 %v8176, 0.0
        %v8657 = vmax.f32 %v8178, 0.0
        %v8658 = vmax.f32 %v8395, 0.0
        %v8659 = vmax.f32 %v8397, 0.0
        %v8660 = vmax.f32 %v8614, 0.0
        %v8661 = vmax.f32 %v8616, 0.0
        %v8662 = vmax.f32 %v8180, 0.0
        %v8663 = vmax.f32 %v8182, 0.0
        %v8664 = vmax.f32 %v8399, 0.0
        %v8665 = vmax.f32 %v8401, 0.0
        %v8666 = vmax.f32 %v8618, 0.0
        %v8667 = vmax.f32 %v8620, 0.0
        %v8668 = vmax.f32 %v8186, 0.0
        %v8669 = vmax.f32 %v8188, 0.0
        %v8670 = vmax.f32 %v8405, 0.0
        %v8671 = vmax.f32 %v8407, 0.0
        %v8672 = vmax.f32 %v8624, 0.0
        %v8673 = vmax.f32 %v8626, 0.0
        %v8674 = vmax.f32 %v8190, 0.0
        %v8675 = vmax.f32 %v8192, 0.0
        %v8676 = vmax.f32 %v8409, 0.0
        %v8677 = vmax.f32 %v8411, 0.0
        %v8678 = vmax.f32 %v8628, 0.0
        %v8679 = vmax.f32 %v8630, 0.0
        %8680 = vst [vmem:[%s618 + $0x180] sm:$0xff] %v8632
        %8681 = vst [vmem:[%s618 + $0x188] sm:$0xff] %v8633
        %8682 = vst [vmem:[%s618 + $0x190] sm:$0xff] %v8634
        %8683 = vst [vmem:[%s618 + $0x198] sm:$0xff] %v8635
        %8684 = vst [vmem:[%s618 + $0x1a0] sm:$0xff] %v8636
        %8685 = vst [vmem:[%s618 + $0x1a8] sm:$0xff] %v8637
        %8686 = vst [vmem:[%s618 + $0x1b0] sm:$0xff] %v8638
        %8687 = vst [vmem:[%s618 + $0x1b8] sm:$0xff] %v8639
        %8688 = vst [vmem:[%s618 + $0x1c0] sm:$0xff] %v8640
        %8689 = vst [vmem:[%s618 + $0x1c8] sm:$0xff] %v8641
        %8690 = vst [vmem:[%s618 + $0x1d0] sm:$0xff] %v8642
        %8691 = vst [vmem:[%s618 + $0x1d8] sm:$0xff] %v8643
        %8692 = vst [vmem:[%s618 + $0x1e0] sm:$0xff] %v8644
        %8693 = vst [vmem:[%s618 + $0x1e8] sm:$0xff] %v8645
        %8694 = vst [vmem:[%s618 + $0x1f0] sm:$0xff] %v8646
        %8695 = vst [vmem:[%s618 + $0x1f8] sm:$0xff] %v8647
        %8696 = vst [vmem:[%s618 + $0x200] sm:$0xff] %v8648
        %8697 = vst [vmem:[%s618 + $0x208] sm:$0xff] %v8649
        %8698 = vst [vmem:[%s618 + $0x210] sm:$0xff] %v8650
        %8699 = vst [vmem:[%s618 + $0x218] sm:$0xff] %v8651
        %8700 = vst [vmem:[%s618 + $0x220] sm:$0xff] %v8652
        %8701 = vst [vmem:[%s618 + $0x228] sm:$0xff] %v8653
        %8702 = vst [vmem:[%s618 + $0x230] sm:$0xff] %v8654
        %8703 = vst [vmem:[%s618 + $0x238] sm:$0xff] %v8655
        %8704 = vst [vmem:[%s618 + $0x240] sm:$0xff] %v8656
        %8705 = vst [vmem:[%s618 + $0x248] sm:$0xff] %v8657
        %8706 = vst [vmem:[%s618 + $0x250] sm:$0xff] %v8658
        %8707 = vst [vmem:[%s618 + $0x258] sm:$0xff] %v8659
        %8708 = vst [vmem:[%s618 + $0x260] sm:$0xff] %v8660
        %8709 = vst [vmem:[%s618 + $0x268] sm:$0xff] %v8661
        %8710 = vst [vmem:[%s618 + $0x270] sm:$0xff] %v8662
        %8711 = vst [vmem:[%s618 + $0x278] sm:$0xff] %v8663
        %8712 = vst [vmem:[%s618 + $0x280] sm:$0xff] %v8664
        %8713 = vst [vmem:[%s618 + $0x288] sm:$0xff] %v8665
        %8714 = vst [vmem:[%s618 + $0x290] sm:$0xff] %v8666
        %8715 = vst [vmem:[%s618 + $0x298] sm:$0xff] %v8667
        %8716 = vst [vmem:[%s618 + $0x2a0] sm:$0xff] %v8668
        %8717 = vst [vmem:[%s618 + $0x2a8] sm:$0xff] %v8669
        %8718 = vst [vmem:[%s618 + $0x2b0] sm:$0xff] %v8670
        %8719 = vst [vmem:[%s618 + $0x2b8] sm:$0xff] %v8671
        %8720 = vst [vmem:[%s618 + $0x2c0] sm:$0xff] %v8672
        %8721 = vst [vmem:[%s618 + $0x2c8] sm:$0xff] %v8673
        %8722 = vst [vmem:[%s618 + $0x2d0] sm:$0xff] %v8674
        %8723 = vst [vmem:[%s618 + $0x2d8] sm:$0xff] %v8675
        %8724 = vst [vmem:[%s618 + $0x2e0] sm:$0xff] %v8676
        %8725 = vst [vmem:[%s618 + $0x2e8] sm:$0xff] %v8677
        %8726 = vst [vmem:[%s618 + $0x2f0] sm:$0xff] %v8678
        %8727 = vst [vmem:[%s618 + $0x2f8] sm:$0xff] %v8679
        %s8728 = smul.u32 16, %s31
        %p8729 = scmp.lt.s32.totalorder %s8728, 31
        %s8730 = scalar_select %p8729, %s8728, 31
        %s8731 = smul.addr %s8730, 6
        %s8732 = smul.addr %s8731, 8
        %s8733 = scalar_lea.vmem %s13, %s8732
        // Predicated region
        $region121: #{fc_net_v2_forward.1} parent=71 // pred_check
          %p8734 = pneg %p327
        $region122: #{fc_net_v2_forward.1} parent=71 // pred_check_branch
          %8736 = sbr.rel (%p8734) target = $region124
        $region123: #{fc_net_v2_forward.1} parent=71 // pred_region
          %s8737 = smul.u32 16, %s31
        $region124: #{fc_net_v2_forward.1} parent=71 // pred_fallthru
          _
      $region72: #{fc_net_v2_forward.1} parent=5 // pred_fallthru
        _
      %p8738 = scmp.le.s32.totalorder 2, %s26
      // Predicated region
      $region125: #{fc_net_v2_forward.1} parent=5 // pred_check
        %p8739 = pneg %p8738
      $region126: #{fc_net_v2_forward.1} parent=5 // pred_check_branch
        %8741 = sbr.rel (%p8739) target = $region128
      $region127: #{fc_net_v2_forward.1} parent=5 // pred_region
        %s8742 = ssub.s32 %s26, 2
        // Predicated region
        $region129: #{fc_net_v2_forward.1} parent=127 // pred_check
          %p8743 = pneg %p333
        $region130: #{fc_net_v2_forward.1} parent=127 // pred_check_branch
          %8745 = sbr.rel (%p8743) target = $region132
        $region131: #{fc_net_v2_forward.1} parent=127 // pred_region
          %s8746 = smul.u32 16, %s32
          %p8747 = scmp.lt.s32.totalorder %s8746, 31
          %s8748 = scalar_select %p8747, %s8746, 31
          %s8749 = smul.addr %s8748, 6
          %s8750 = smul.addr %s8749, 8
          %s8751 = scalar_lea.vmem %s13, %s8750
        $region132: #{fc_net_v2_forward.1} parent=127 // pred_fallthru
          _
      $region128: #{fc_net_v2_forward.1} parent=5 // pred_fallthru
        _
    $region6: #{fc_net_v2_forward.1} parent=1 // loop_footer
      %s30 = sadd.s32 1, %s26
    $region7: #{fc_net_v2_forward.1} parent=1 // loop_footer_branch
      %25 = sbr.rel target = $region3
    $region8: #{fc_net_v2_forward.1} parent=1 // loop_exit
      _
    %8752 = vsyncpa [#allocation3], 1
    %s8753 = scalar_lea.sflag [#allocation3], 1
    %8754 = vsyncpa %s8753, 1
    %8755 = vsyncpa [#allocation5], 1
    %8756 = vsyncpa [#allocation8], 1
    %8757 = vsyncpa [#allocation11], 1
    %8758 = vsyncpa [#allocation14], 1
    %8759 = vsyncpa [#allocation17], 1
    %8760 = vsyncpa [#allocation20], 1

</llo_original>
